<compile_context>
chip_gen: v7x
topology: tpu7x:2x2x1
jax: 0.10.0
libtpu: 0.0.40
codegen_flags: <defaults>
</compile_context>

<pallas_src>
import functools

import jax
import jax.numpy as jnp
from jax.experimental import pallas as pl
from jax.experimental.pallas import tpu as pltpu

# ----------------------------- config ---------------------------------------
EMBED_DIM = 32
N_HEADS = 4
HEAD_DIM = EMBED_DIM // N_HEADS
N_LAYERS = 2
MLP_HIDDEN = 64
VOCAB = 64
VOCAB_PAD = 128                      # lane-dense logits / padded embed table
SEQ = 16
BATCH = 2
BS = BATCH * SEQ
IMG_C, IMG_HW, PATCH = 3, 16, 8
N_PATCH = (IMG_HW // PATCH) ** 2     # 4 image tokens per image
PATCH_DIM = IMG_C * PATCH * PATCH    # 192
IMG_START_ID = 60
IMG_END_ID = 61
EPS = 1e-6
NEG_INF = -1e30
LANE = 128


# ----------------------------- in-kernel helpers ----------------------------
def _rmsnorm(x, w):
    ms = jnp.mean(x * x, axis=-1, keepdims=True)
    return x * jax.lax.rsqrt(ms + EPS) * w


def _mm(a_f32, w_bf16):
    # bf16 MXU pass, f32 accumulation; weights are pre-cast to bf16 in params.
    return jnp.dot(a_f32.astype(jnp.bfloat16), w_bf16,
                   preferred_element_type=jnp.float32)


# ----------------------------- the fused kernel -----------------------------
def _blinky_kernel(has_image, *refs):
    if has_image:
        (ids_ref, patches_ref,
         vpw_ref, vpos_ref, vln_ref, vproj_ref, *text_refs) = refs
    else:
        (ids_ref, *text_refs) = refs
    (attn_norm_ref, wq_ref, wk_ref, wv_ref, wo_ref,
     mlp_norm_ref, wgu_ref, wd_ref, final_norm_ref, emb_ref,
     logits_ref) = text_refs

    bf16 = jnp.bfloat16
    f32 = jnp.float32

    # ---- token embeddings: one-hot @ (tied, zero-padded) embedding table ----
    ids_col = ids_ref[...]                                        # (BS, 1) int32
    vocab_iota = jax.lax.broadcasted_iota(jnp.int32, (BS, VOCAB_PAD), 1)
    one_hot = (ids_col == vocab_iota)                             # (BS, 128) bool
    x = jnp.dot(one_hot.astype(bf16), emb_ref[...],
                preferred_element_type=f32)                       # (BS, D) f32

    if has_image:
        # ---- vision encoder (patch embed + pos + rmsnorm + proj) ----
        t = _mm(patches_ref[...], vpw_ref[...])                   # (B*NP, D)
        t = (t.reshape(BATCH, N_PATCH, EMBED_DIM) + vpos_ref[...][None]
             ).reshape(BATCH * N_PATCH, EMBED_DIM)                # broadcast add, no tile
        t = _rmsnorm(t, vln_ref[...])
        img3 = _mm(t, vproj_ref[...]).reshape(BATCH, N_PATCH, EMBED_DIM)

        # ---- splice image tokens after <img_start> (all in-kernel) ----
        ids3 = ids_col.reshape(BATCH, SEQ, 1)                     # (B, S, 1)
        s_iota = jax.lax.broadcasted_iota(jnp.int32, (BATCH, SEQ, 1), 1)
        matchpos = jnp.where(ids3 == IMG_START_ID, s_iota.astype(f32), float(SEQ))
        start3 = (jnp.min(matchpos, axis=1, keepdims=True) + 1.0).astype(jnp.int32)
        s_iota3 = jax.lax.broadcasted_iota(jnp.int32, (BATCH, SEQ, N_PATCH), 1)
        p_iota3 = jax.lax.broadcasted_iota(jnp.int32, (BATCH, SEQ, N_PATCH), 2)
        sel = (s_iota3 == start3 + p_iota3)                       # (B,S,NP) one-hot rows
        spliced = jnp.einsum('bsp,bpd->bsd', sel.astype(bf16), img3.astype(bf16),
                             preferred_element_type=f32)          # (B,S,D)
        in_span = jnp.sum(sel.astype(f32), axis=2, keepdims=True) > 0.0
        x = jnp.where(in_span, spliced,
                      x.reshape(BATCH, SEQ, EMBED_DIM)).reshape(BS, EMBED_DIM)

    # ---- transformer layers ----
    scale = 1.0 / (HEAD_DIM ** 0.5)
    qi = jax.lax.broadcasted_iota(jnp.int32, (SEQ, SEQ), 0)
    ki = jax.lax.broadcasted_iota(jnp.int32, (SEQ, SEQ), 1)
    causal_bias = jnp.where(ki <= qi, 0.0, NEG_INF).astype(f32)   # hoisted additive mask

    for l in range(N_LAYERS):                                     # static unroll
        # -------- attention (per-head weights, batched over BATCH) --------
        xn = _rmsnorm(x, attn_norm_ref[l]).astype(bf16)           # (BS, D) bf16 once
        attn = None
        for hh in range(N_HEADS):                                 # static unroll (4)
            qh = jnp.dot(xn, wq_ref[l, hh], preferred_element_type=f32)
            kh = jnp.dot(xn, wk_ref[l, hh], preferred_element_type=f32)
            vh = jnp.dot(xn, wv_ref[l, hh], preferred_element_type=f32)
            qh = qh.reshape(BATCH, SEQ, HEAD_DIM)                 # leading split, cheap
            kh = kh.reshape(BATCH, SEQ, HEAD_DIM)
            vh = vh.reshape(BATCH, SEQ, HEAD_DIM)
            s = jnp.einsum('bqd,bkd->bqk', qh.astype(bf16), kh.astype(bf16),
                           preferred_element_type=f32) * scale    # (B,S,S)
            s = s + causal_bias
            m = jnp.max(s, axis=-1, keepdims=True)
            e = jnp.exp(s - m)
            p = e * pl.reciprocal(jnp.sum(e, axis=-1, keepdims=True), approx=True)
            oh = jnp.einsum('bqk,bkd->bqd', p.astype(bf16), vh.astype(bf16),
                            preferred_element_type=f32)           # (B,S,Dh)
            oh = oh.reshape(BS, HEAD_DIM)
            # per-head output projection; summing == concat(heads) @ Wo
            contrib = _mm(oh, wo_ref[l, hh])                      # (BS, D)
            attn = contrib if attn is None else attn + contrib
        x = x + attn

        # -------- SwiGLU MLP (fused, 128-lane-aligned gate/up) --------
        hm = _rmsnorm(x, mlp_norm_ref[l])
        gu = _mm(hm, wgu_ref[l])                                  # (BS, 2*128)
        g = gu[:, 0 * LANE:0 * LANE + MLP_HIDDEN]                 # tile-aligned slices
        u = gu[:, 1 * LANE:1 * LANE + MLP_HIDDEN]
        act = g * jax.nn.sigmoid(g) * u
        x = x + _mm(act, wd_ref[l])

    # ---- final norm + tied lm_head (trans_b dot vs. padded embed table) ----
    xf = _rmsnorm(x, final_norm_ref[...])
    logits_ref[...] = jax.lax.dot_general(
        xf.astype(bf16), emb_ref[...],
        (((1,), (1,)), ((), ())), preferred_element_type=f32)     # (BS, 128) lane-dense


def _fused_forward(ids_col, patches, params):
    text_args = (params["attn_norm"], params["wq"], params["wk"], params["wv"],
                 params["wo"], params["mlp_norm"], params["wgu"], params["wd"],
                 params["final_norm"], params["embed"])
    has_image = patches is not None
    if has_image:
        vp = params["vision"]
        args = (ids_col, patches,
                vp["patch_w"], vp["pos"], vp["ln"], vp["proj"]) + text_args
    else:
        args = (ids_col,) + text_args
    return pl.pallas_call(
        functools.partial(_blinky_kernel, has_image),
        out_shape=jax.ShapeDtypeStruct((BS, VOCAB_PAD), jnp.float32),
        compiler_params=pltpu.CompilerParams(vmem_limit_bytes=32 * 1024 * 1024),
    )(*args)


# ----------------------------- parameters -----------------------------------
def init_params(key):
    keys = jax.random.split(key, 11)
    bf16 = jnp.bfloat16

    def nrm(k, shape, scale=0.02):
        return scale * jax.random.normal(k, shape, jnp.float32)

    # tied embedding / lm_head table, zero-padded to 128 rows (lane-dense logits)
    embed = jnp.zeros((VOCAB_PAD, EMBED_DIM), jnp.float32).at[:VOCAB].set(
        nrm(keys[0], (VOCAB, EMBED_DIM)))

    # fused gate/up, zero-padded so each projection starts on a 128-lane boundary
    wgu = jnp.zeros((N_LAYERS, EMBED_DIM, 2 * LANE), jnp.float32)
    wgu = (wgu.at[:, :, 0 * LANE:0 * LANE + MLP_HIDDEN].set(
               nrm(keys[4], (N_LAYERS, EMBED_DIM, MLP_HIDDEN)))
              .at[:, :, 1 * LANE:1 * LANE + MLP_HIDDEN].set(
               nrm(keys[5], (N_LAYERS, EMBED_DIM, MLP_HIDDEN))))

    return {
        "embed": embed.astype(bf16),
        "attn_norm": jnp.ones((N_LAYERS, 1, EMBED_DIM), jnp.float32),
        # per-head projection weights: no lane slicing anywhere in attention
        "wq": nrm(keys[1], (N_LAYERS, N_HEADS, EMBED_DIM, HEAD_DIM)).astype(bf16),
        "wk": nrm(keys[2], (N_LAYERS, N_HEADS, EMBED_DIM, HEAD_DIM)).astype(bf16),
        "wv": nrm(keys[3], (N_LAYERS, N_HEADS, EMBED_DIM, HEAD_DIM)).astype(bf16),
        "wo": nrm(keys[6], (N_LAYERS, N_HEADS, HEAD_DIM, EMBED_DIM)).astype(bf16),
        "mlp_norm": jnp.ones((N_LAYERS, 1, EMBED_DIM), jnp.float32),
        "wgu": wgu.astype(bf16),
        "wd": nrm(keys[7], (N_LAYERS, MLP_HIDDEN, EMBED_DIM)).astype(bf16),
        "final_norm": jnp.ones((1, EMBED_DIM), jnp.float32),
        "vision": {
            "patch_w": nrm(keys[8], (PATCH_DIM, EMBED_DIM)).astype(bf16),
            "pos": nrm(keys[9], (N_PATCH, EMBED_DIM)),
            "ln": jnp.ones((1, EMBED_DIM), jnp.float32),
            "proj": nrm(keys[10], (EMBED_DIM, EMBED_DIM)).astype(bf16),
        },
    }


# ----------------------------- full forward ---------------------------------
def _patchify(pixel_values):
    # (B, C, H, W) NCHW -> (B*N_PATCH, C*P*P).  Pure layout glue kept in JAX.
    B = pixel_values.shape[0]
    p = PATCH
    x = pixel_values.reshape(B, IMG_C, IMG_HW // p, p, IMG_HW // p, p)
    return x.transpose(0, 2, 4, 1, 3, 5).reshape(B * N_PATCH, PATCH_DIM)


def blinky_forward(params, input_ids, pixel_values=None, labels=None):
    # TODO(synk): torch NaN-check prints are pure diagnostics and are omitted.
    ids_col = input_ids.reshape(BS, 1).astype(jnp.int32)
    patches = _patchify(pixel_values) if pixel_values is not None else None

    logits_pad = _fused_forward(ids_col, patches, params)          # (BS, 128)
    logits = logits_pad[:, :VOCAB].reshape(BATCH, SEQ, VOCAB)

    if labels is not None:
        logp = jax.nn.log_softmax(logits, axis=-1)
        nll = -jnp.take_along_axis(logp, labels[..., None], axis=-1)
        return jnp.mean(nll)
    return logits


# ----------------------------- main ------------------------------------------
if __name__ == "__main__":
    root = jax.random.PRNGKey(0)
    k_param, k_ids, k_pix = jax.random.split(root, 3)

    params = init_params(k_param)

    base_ids = jax.random.randint(k_ids, (BATCH, SEQ), 0, 50, dtype=jnp.int32)
    input_ids = (base_ids.at[:, 1].set(IMG_START_ID)
                          .at[:, 2:2 + N_PATCH].set(0)
                          .at[:, 2 + N_PATCH].set(IMG_END_ID))

    pixel_values = jax.random.normal(k_pix, (BATCH, IMG_C, IMG_HW, IMG_HW),
                                     jnp.float32)

    fwd = jax.jit(blinky_forward)
    logits = fwd(params, input_ids, pixel_values)
    jax.block_until_ready(logits)

    assert logits.shape == (BATCH, SEQ, VOCAB)
    assert not bool(jnp.isnan(logits).any())
    print("KERNEL_OK")
</pallas_src>

<mosaic_0001>
module attributes {stable_mosaic.version = 11 : i64} {
  func.func @_blinky_kernel(%arg0: memref<32x1xi32, #tpu.memory_space<vmem>>, %arg1: memref<8x192xf32, #tpu.memory_space<vmem>>, %arg2: memref<192x32xbf16, #tpu.memory_space<vmem>>, %arg3: memref<4x32xf32, #tpu.memory_space<vmem>>, %arg4: memref<1x32xf32, #tpu.memory_space<vmem>>, %arg5: memref<32x32xbf16, #tpu.memory_space<vmem>>, %arg6: memref<2x1x32xf32, #tpu.memory_space<vmem>>, %arg7: memref<2x4x32x8xbf16, #tpu.memory_space<vmem>>, %arg8: memref<2x4x32x8xbf16, #tpu.memory_space<vmem>>, %arg9: memref<2x4x32x8xbf16, #tpu.memory_space<vmem>>, %arg10: memref<2x4x8x32xbf16, #tpu.memory_space<vmem>>, %arg11: memref<2x1x32xf32, #tpu.memory_space<vmem>>, %arg12: memref<2x32x256xbf16, #tpu.memory_space<vmem>>, %arg13: memref<2x64x32xbf16, #tpu.memory_space<vmem>>, %arg14: memref<1x32xf32, #tpu.memory_space<vmem>>, %arg15: memref<128x32xbf16, #tpu.memory_space<vmem>>, %arg16: memref<32x128xf32, #tpu.memory_space<vmem>>) attributes {dimension_semantics = [], scalar_prefetch = 0 : i64, scratch_operands = 0 : i64, tpu.core_type = #tpu.core_type<tc>} {
    %c0 = arith.constant 0 : index
    %c0_0 = arith.constant 0 : index
    %0 = vector.load %arg0[%c0, %c0_0] : memref<32x1xi32, #tpu.memory_space<vmem>>, vector<32x1xi32>
    %1 = tpu.iota {dimensions = array<i32: 1>} : vector<32x128xi32>
    %2 = vector.broadcast %0 : vector<32x1xi32> to vector<32x128xi32>
    %3 = arith.cmpi eq, %2, %1 : vector<32x128xi32>
    %4 = arith.extui %3 : vector<32x128xi1> to vector<32x128xi32>
    %5 = arith.sitofp %4 : vector<32x128xi32> to vector<32x128xf32>
    %6 = arith.truncf %5 : vector<32x128xf32> to vector<32x128xbf16>
    %c0_1 = arith.constant 0 : index
    %c0_2 = arith.constant 0 : index
    %7 = vector.load %arg15[%c0_1, %c0_2] : memref<128x32xbf16, #tpu.memory_space<vmem>>, vector<128x32xbf16>
    %cst = arith.constant dense<0.000000e+00> : vector<32x32xf32>
    %8 = tpu.matmul %6, %7, %cst {dimension_numbers = #tpu.dot_dimension_numbers<[1], [0], [0], [1], [0, 0, 1, 1], [], []>} : vector<32x128xbf16>, vector<128x32xbf16>, vector<32x32xf32> -> vector<32x32xf32>
    %c0_3 = arith.constant 0 : index
    %c0_4 = arith.constant 0 : index
    %9 = vector.load %arg1[%c0_3, %c0_4] : memref<8x192xf32, #tpu.memory_space<vmem>>, vector<8x192xf32>
    %c0_5 = arith.constant 0 : index
    %c0_6 = arith.constant 0 : index
    %10 = vector.load %arg2[%c0_5, %c0_6] : memref<192x32xbf16, #tpu.memory_space<vmem>>, vector<192x32xbf16>
    %11 = arith.truncf %9 : vector<8x192xf32> to vector<8x192xbf16>
    %cst_7 = arith.constant dense<0.000000e+00> : vector<8x32xf32>
    %12 = tpu.matmul %11, %10, %cst_7 {dimension_numbers = #tpu.dot_dimension_numbers<[1], [0], [0], [1], [0, 0, 1, 1], [], []>} : vector<8x192xbf16>, vector<192x32xbf16>, vector<8x32xf32> -> vector<8x32xf32>
    %13 = vector.shape_cast %12 : vector<8x32xf32> to vector<2x4x32xf32>
    %c0_8 = arith.constant 0 : index
    %c0_9 = arith.constant 0 : index
    %14 = vector.load %arg3[%c0_8, %c0_9] : memref<4x32xf32, #tpu.memory_space<vmem>>, vector<4x32xf32>
    %15 = vector.shape_cast %14 : vector<4x32xf32> to vector<1x4x32xf32>
    %16 = vector.broadcast %15 : vector<1x4x32xf32> to vector<2x4x32xf32>
    %17 = arith.addf %13, %16 : vector<2x4x32xf32>
    %18 = vector.shape_cast %17 : vector<2x4x32xf32> to vector<8x32xf32>
    %c0_10 = arith.constant 0 : index
    %c0_11 = arith.constant 0 : index
    %19 = vector.load %arg4[%c0_10, %c0_11] : memref<1x32xf32, #tpu.memory_space<vmem>>, vector<1x32xf32>
    %20 = arith.mulf %18, %18 : vector<8x32xf32>
    %cst_12 = arith.constant dense<0.000000e+00> : vector<8xf32>
    %21 = vector.multi_reduction <add>, %20, %cst_12 [1] : vector<8x32xf32> to vector<8xf32>
    %22 = vector.shape_cast %21 : vector<8xf32> to vector<8x1xf32>
    %cst_13 = arith.constant 3.200000e+01 : f32
    %23 = vector.broadcast %cst_13 : f32 to vector<8x1xf32>
    %24 = arith.divf %22, %23 : vector<8x1xf32>
    %cst_14 = arith.constant 9.99999997E-7 : f32
    %25 = vector.broadcast %cst_14 : f32 to vector<8x1xf32>
    %26 = arith.addf %24, %25 : vector<8x1xf32>
    %27 = math.rsqrt %26 : vector<8x1xf32>
    %28 = vector.broadcast %27 : vector<8x1xf32> to vector<8x32xf32>
    %29 = arith.mulf %18, %28 : vector<8x32xf32>
    %30 = vector.broadcast %19 : vector<1x32xf32> to vector<8x32xf32>
    %31 = arith.mulf %29, %30 : vector<8x32xf32>
    %c0_15 = arith.constant 0 : index
    %c0_16 = arith.constant 0 : index
    %32 = vector.load %arg5[%c0_15, %c0_16] : memref<32x32xbf16, #tpu.memory_space<vmem>>, vector<32x32xbf16>
    %33 = arith.truncf %31 : vector<8x32xf32> to vector<8x32xbf16>
    %cst_17 = arith.constant dense<0.000000e+00> : vector<8x32xf32>
    %34 = tpu.matmul %33, %32, %cst_17 {dimension_numbers = #tpu.dot_dimension_numbers<[1], [0], [0], [1], [0, 0, 1, 1], [], []>} : vector<8x32xbf16>, vector<32x32xbf16>, vector<8x32xf32> -> vector<8x32xf32>
    %35 = vector.shape_cast %34 : vector<8x32xf32> to vector<2x4x32xf32>
    %36 = vector.shape_cast %0 : vector<32x1xi32> to vector<2x16x1xi32>
    %37 = tpu.iota {dimensions = array<i32: 1>} : vector<2x16x1xi32>
    %c60_i32 = arith.constant 60 : i32
    %38 = vector.broadcast %c60_i32 : i32 to vector<2x16x1xi32>
    %39 = arith.cmpi eq, %36, %38 : vector<2x16x1xi32>
    %40 = arith.sitofp %37 : vector<2x16x1xi32> to vector<2x16x1xf32>
    %cst_18 = arith.constant 1.600000e+01 : f32
    %41 = vector.broadcast %cst_18 : f32 to vector<2x16x1xf32>
    %42 = arith.select %39, %40, %41 : vector<2x16x1xi1>, vector<2x16x1xf32>
    %cst_19 = arith.constant dense<0x7F800000> : vector<2x1xf32>
    %43 = vector.multi_reduction <minimumf>, %42, %cst_19 [1] : vector<2x16x1xf32> to vector<2x1xf32>
    %44 = vector.shape_cast %43 : vector<2x1xf32> to vector<2x1x1xf32>
    %cst_20 = arith.constant 1.000000e+00 : f32
    %45 = vector.broadcast %cst_20 : f32 to vector<2x1x1xf32>
    %46 = arith.addf %44, %45 : vector<2x1x1xf32>
    %47 = arith.fptosi %46 : vector<2x1x1xf32> to vector<2x1x1xi32>
    %48 = tpu.iota {dimensions = array<i32: 1>} : vector<2x16x4xi32>
    %49 = tpu.iota {dimensions = array<i32: 2>} : vector<2x16x4xi32>
    %50 = vector.broadcast %47 : vector<2x1x1xi32> to vector<2x16x4xi32>
    %51 = arith.addi %50, %49 : vector<2x16x4xi32>
    %52 = arith.cmpi eq, %48, %51 : vector<2x16x4xi32>
    %53 = arith.extui %52 : vector<2x16x4xi1> to vector<2x16x4xi32>
    %54 = arith.sitofp %53 : vector<2x16x4xi32> to vector<2x16x4xf32>
    %55 = arith.truncf %54 : vector<2x16x4xf32> to vector<2x16x4xbf16>
    %56 = arith.truncf %35 : vector<2x4x32xf32> to vector<2x4x32xbf16>
    "tpu.trace_start"() <{level = 10 : i32, message = "bsp,bpd->bsd"}> : () -> ()
    %cst_21 = arith.constant dense<0.000000e+00> : vector<2x16x32xf32>
    %57 = tpu.matmul %55, %56, %cst_21 {dimension_numbers = #tpu.dot_dimension_numbers<[2], [1], [1], [2], [0, 0, 0, 1, 1, 2], [0], [0]>} : vector<2x16x4xbf16>, vector<2x4x32xbf16>, vector<2x16x32xf32> -> vector<2x16x32xf32>
    "tpu.trace_stop"() : () -> ()
    %58 = arith.extui %52 : vector<2x16x4xi1> to vector<2x16x4xi32>
    %59 = arith.sitofp %58 : vector<2x16x4xi32> to vector<2x16x4xf32>
    %cst_22 = arith.constant dense<0.000000e+00> : vector<2x16xf32>
    %60 = vector.multi_reduction <add>, %59, %cst_22 [2] : vector<2x16x4xf32> to vector<2x16xf32>
    %61 = vector.shape_cast %60 : vector<2x16xf32> to vector<2x16x1xf32>
    %cst_23 = arith.constant 0.000000e+00 : f32
    %62 = vector.broadcast %cst_23 : f32 to vector<2x16x1xf32>
    %63 = arith.cmpf ogt, %61, %62 : vector<2x16x1xf32>
    %64 = vector.shape_cast %8 : vector<32x32xf32> to vector<2x16x32xf32>
    %65 = vector.shape_cast %63 : vector<2x16x1xi1> to vector<2x16x1xi1>
    %66 = vector.broadcast %65 : vector<2x16x1xi1> to vector<2x16x32xi1>
    %67 = arith.select %66, %57, %64 : vector<2x16x32xi1>, vector<2x16x32xf32>
    %68 = vector.shape_cast %67 : vector<2x16x32xf32> to vector<32x32xf32>
    %69 = tpu.iota {dimensions = array<i32: 0>} : vector<16x16xi32>
    %70 = tpu.iota {dimensions = array<i32: 1>} : vector<16x16xi32>
    %71 = arith.cmpi sle, %70, %69 : vector<16x16xi32>
    %cst_24 = arith.constant 0.000000e+00 : f32
    %cst_25 = arith.constant -1.000000e+30 : f32
    %72 = vector.broadcast %cst_24 : f32 to vector<16x16xf32>
    %73 = vector.broadcast %cst_25 : f32 to vector<16x16xf32>
    %74 = arith.select %71, %72, %73 : vector<16x16xi1>, vector<16x16xf32>
    %c0_26 = arith.constant 0 : index
    %c0_27 = arith.constant 0 : index
    %c0_28 = arith.constant 0 : index
    %75 = vector.load %arg6[%c0_26, %c0_27, %c0_28] : memref<2x1x32xf32, #tpu.memory_space<vmem>>, vector<1x1x32xf32>
    %76 = vector.shape_cast %75 : vector<1x1x32xf32> to vector<1x32xf32>
    %77 = arith.mulf %68, %68 : vector<32x32xf32>
    %cst_29 = arith.constant dense<0.000000e+00> : vector<32xf32>
    %78 = vector.multi_reduction <add>, %77, %cst_29 [1] : vector<32x32xf32> to vector<32xf32>
    %79 = vector.shape_cast %78 : vector<32xf32> to vector<32x1xf32>
    %cst_30 = arith.constant 3.200000e+01 : f32
    %80 = vector.broadcast %cst_30 : f32 to vector<32x1xf32>
    %81 = arith.divf %79, %80 : vector<32x1xf32>
    %cst_31 = arith.constant 9.99999997E-7 : f32
    %82 = vector.broadcast %cst_31 : f32 to vector<32x1xf32>
    %83 = arith.addf %81, %82 : vector<32x1xf32>
    %84 = math.rsqrt %83 : vector<32x1xf32>
    %85 = vector.broadcast %84 : vector<32x1xf32> to vector<32x32xf32>
    %86 = arith.mulf %68, %85 : vector<32x32xf32>
    %87 = vector.broadcast %76 : vector<1x32xf32> to vector<32x32xf32>
    %88 = arith.mulf %86, %87 : vector<32x32xf32>
    %89 = arith.truncf %88 : vector<32x32xf32> to vector<32x32xbf16>
    %c0_32 = arith.constant 0 : index
    %c0_33 = arith.constant 0 : index
    %c0_34 = arith.constant 0 : index
    %c0_35 = arith.constant 0 : index
    %90 = vector.load %arg7[%c0_32, %c0_33, %c0_34, %c0_35] : memref<2x4x32x8xbf16, #tpu.memory_space<vmem>>, vector<1x1x32x8xbf16>
    %91 = vector.shape_cast %90 : vector<1x1x32x8xbf16> to vector<32x8xbf16>
    %cst_36 = arith.constant dense<0.000000e+00> : vector<32x8xf32>
    %92 = tpu.matmul %89, %91, %cst_36 {dimension_numbers = #tpu.dot_dimension_numbers<[1], [0], [0], [1], [0, 0, 1, 1], [], []>} : vector<32x32xbf16>, vector<32x8xbf16>, vector<32x8xf32> -> vector<32x8xf32>
    %c0_37 = arith.constant 0 : index
    %c0_38 = arith.constant 0 : index
    %c0_39 = arith.constant 0 : index
    %c0_40 = arith.constant 0 : index
    %93 = vector.load %arg8[%c0_37, %c0_38, %c0_39, %c0_40] : memref<2x4x32x8xbf16, #tpu.memory_space<vmem>>, vector<1x1x32x8xbf16>
    %94 = vector.shape_cast %93 : vector<1x1x32x8xbf16> to vector<32x8xbf16>
    %cst_41 = arith.constant dense<0.000000e+00> : vector<32x8xf32>
    %95 = tpu.matmul %89, %94, %cst_41 {dimension_numbers = #tpu.dot_dimension_numbers<[1], [0], [0], [1], [0, 0, 1, 1], [], []>} : vector<32x32xbf16>, vector<32x8xbf16>, vector<32x8xf32> -> vector<32x8xf32>
    %c0_42 = arith.constant 0 : index
    %c0_43 = arith.constant 0 : index
    %c0_44 = arith.constant 0 : index
    %c0_45 = arith.constant 0 : index
    %96 = vector.load %arg9[%c0_42, %c0_43, %c0_44, %c0_45] : memref<2x4x32x8xbf16, #tpu.memory_space<vmem>>, vector<1x1x32x8xbf16>
    %97 = vector.shape_cast %96 : vector<1x1x32x8xbf16> to vector<32x8xbf16>
    %cst_46 = arith.constant dense<0.000000e+00> : vector<32x8xf32>
    %98 = tpu.matmul %89, %97, %cst_46 {dimension_numbers = #tpu.dot_dimension_numbers<[1], [0], [0], [1], [0, 0, 1, 1], [], []>} : vector<32x32xbf16>, vector<32x8xbf16>, vector<32x8xf32> -> vector<32x8xf32>
    %99 = vector.shape_cast %92 : vector<32x8xf32> to vector<2x16x8xf32>
    %100 = vector.shape_cast %95 : vector<32x8xf32> to vector<2x16x8xf32>
    %101 = vector.shape_cast %98 : vector<32x8xf32> to vector<2x16x8xf32>
    %102 = arith.truncf %99 : vector<2x16x8xf32> to vector<2x16x8xbf16>
    %103 = arith.truncf %100 : vector<2x16x8xf32> to vector<2x16x8xbf16>
    "tpu.trace_start"() <{level = 10 : i32, message = "bqd,bkd->bqk"}> : () -> ()
    %cst_47 = arith.constant dense<0.000000e+00> : vector<2x16x16xf32>
    %104 = tpu.matmul %102, %103, %cst_47 {dimension_numbers = #tpu.dot_dimension_numbers<[2], [2], [1], [1], [0, 0, 0, 1, 1, 1], [0], [0]>} : vector<2x16x8xbf16>, vector<2x16x8xbf16>, vector<2x16x16xf32> -> vector<2x16x16xf32>
    "tpu.trace_stop"() : () -> ()
    %cst_48 = arith.constant 0.353553385 : f32
    %105 = vector.broadcast %cst_48 : f32 to vector<2x16x16xf32>
    %106 = arith.mulf %104, %105 : vector<2x16x16xf32>
    %107 = vector.shape_cast %74 : vector<16x16xf32> to vector<1x16x16xf32>
    %108 = vector.broadcast %107 : vector<1x16x16xf32> to vector<2x16x16xf32>
    %109 = arith.addf %106, %108 : vector<2x16x16xf32>
    %cst_49 = arith.constant dense<0xFF800000> : vector<2x16xf32>
    %110 = vector.multi_reduction <maximumf>, %109, %cst_49 [2] : vector<2x16x16xf32> to vector<2x16xf32>
    %111 = vector.shape_cast %110 : vector<2x16xf32> to vector<2x16x1xf32>
    %112 = vector.broadcast %111 : vector<2x16x1xf32> to vector<2x16x16xf32>
    %113 = arith.subf %109, %112 : vector<2x16x16xf32>
    %114 = math.exp %113 : vector<2x16x16xf32>
    %cst_50 = arith.constant dense<0.000000e+00> : vector<2x16xf32>
    %115 = vector.multi_reduction <add>, %114, %cst_50 [2] : vector<2x16x16xf32> to vector<2x16xf32>
    %116 = vector.shape_cast %115 : vector<2x16xf32> to vector<2x16x1xf32>
    %117 = tpu.reciprocal %116 {approx = true} : vector<2x16x1xf32> -> vector<2x16x1xf32>
    %118 = vector.broadcast %117 : vector<2x16x1xf32> to vector<2x16x16xf32>
    %119 = arith.mulf %114, %118 : vector<2x16x16xf32>
    %120 = arith.truncf %119 : vector<2x16x16xf32> to vector<2x16x16xbf16>
    %121 = arith.truncf %101 : vector<2x16x8xf32> to vector<2x16x8xbf16>
    "tpu.trace_start"() <{level = 10 : i32, message = "bqk,bkd->bqd"}> : () -> ()
    %cst_51 = arith.constant dense<0.000000e+00> : vector<2x16x8xf32>
    %122 = tpu.matmul %120, %121, %cst_51 {dimension_numbers = #tpu.dot_dimension_numbers<[2], [1], [1], [2], [0, 0, 0, 1, 1, 2], [0], [0]>} : vector<2x16x16xbf16>, vector<2x16x8xbf16>, vector<2x16x8xf32> -> vector<2x16x8xf32>
    "tpu.trace_stop"() : () -> ()
    %123 = vector.shape_cast %122 : vector<2x16x8xf32> to vector<32x8xf32>
    %c0_52 = arith.constant 0 : index
    %c0_53 = arith.constant 0 : index
    %c0_54 = arith.constant 0 : index
    %c0_55 = arith.constant 0 : index
    %124 = vector.load %arg10[%c0_52, %c0_53, %c0_54, %c0_55] : memref<2x4x8x32xbf16, #tpu.memory_space<vmem>>, vector<1x1x8x32xbf16>
    %125 = vector.shape_cast %124 : vector<1x1x8x32xbf16> to vector<8x32xbf16>
    %126 = arith.truncf %123 : vector<32x8xf32> to vector<32x8xbf16>
    %cst_56 = arith.constant dense<0.000000e+00> : vector<32x32xf32>
    %127 = tpu.matmul %126, %125, %cst_56 {dimension_numbers = #tpu.dot_dimension_numbers<[1], [0], [0], [1], [0, 0, 1, 1], [], []>} : vector<32x8xbf16>, vector<8x32xbf16>, vector<32x32xf32> -> vector<32x32xf32>
    %c0_57 = arith.constant 0 : index
    %c1 = arith.constant 1 : index
    %c0_58 = arith.constant 0 : index
    %c0_59 = arith.constant 0 : index
    %128 = vector.load %arg7[%c0_57, %c1, %c0_58, %c0_59] : memref<2x4x32x8xbf16, #tpu.memory_space<vmem>>, vector<1x1x32x8xbf16>
    %129 = vector.shape_cast %128 : vector<1x1x32x8xbf16> to vector<32x8xbf16>
    %cst_60 = arith.constant dense<0.000000e+00> : vector<32x8xf32>
    %130 = tpu.matmul %89, %129, %cst_60 {dimension_numbers = #tpu.dot_dimension_numbers<[1], [0], [0], [1], [0, 0, 1, 1], [], []>} : vector<32x32xbf16>, vector<32x8xbf16>, vector<32x8xf32> -> vector<32x8xf32>
    %c0_61 = arith.constant 0 : index
    %c1_62 = arith.constant 1 : index
    %c0_63 = arith.constant 0 : index
    %c0_64 = arith.constant 0 : index
    %131 = vector.load %arg8[%c0_61, %c1_62, %c0_63, %c0_64] : memref<2x4x32x8xbf16, #tpu.memory_space<vmem>>, vector<1x1x32x8xbf16>
    %132 = vector.shape_cast %131 : vector<1x1x32x8xbf16> to vector<32x8xbf16>
    %cst_65 = arith.constant dense<0.000000e+00> : vector<32x8xf32>
    %133 = tpu.matmul %89, %132, %cst_65 {dimension_numbers = #tpu.dot_dimension_numbers<[1], [0], [0], [1], [0, 0, 1, 1], [], []>} : vector<32x32xbf16>, vector<32x8xbf16>, vector<32x8xf32> -> vector<32x8xf32>
    %c0_66 = arith.constant 0 : index
    %c1_67 = arith.constant 1 : index
    %c0_68 = arith.constant 0 : index
    %c0_69 = arith.constant 0 : index
    %134 = vector.load %arg9[%c0_66, %c1_67, %c0_68, %c0_69] : memref<2x4x32x8xbf16, #tpu.memory_space<vmem>>, vector<1x1x32x8xbf16>
    %135 = vector.shape_cast %134 : vector<1x1x32x8xbf16> to vector<32x8xbf16>
    %cst_70 = arith.constant dense<0.000000e+00> : vector<32x8xf32>
    %136 = tpu.matmul %89, %135, %cst_70 {dimension_numbers = #tpu.dot_dimension_numbers<[1], [0], [0], [1], [0, 0, 1, 1], [], []>} : vector<32x32xbf16>, vector<32x8xbf16>, vector<32x8xf32> -> vector<32x8xf32>
    %137 = vector.shape_cast %130 : vector<32x8xf32> to vector<2x16x8xf32>
    %138 = vector.shape_cast %133 : vector<32x8xf32> to vector<2x16x8xf32>
    %139 = vector.shape_cast %136 : vector<32x8xf32> to vector<2x16x8xf32>
    %140 = arith.truncf %137 : vector<2x16x8xf32> to vector<2x16x8xbf16>
    %141 = arith.truncf %138 : vector<2x16x8xf32> to vector<2x16x8xbf16>
    "tpu.trace_start"() <{level = 10 : i32, message = "bqd,bkd->bqk"}> : () -> ()
    %cst_71 = arith.constant dense<0.000000e+00> : vector<2x16x16xf32>
    %142 = tpu.matmul %140, %141, %cst_71 {dimension_numbers = #tpu.dot_dimension_numbers<[2], [2], [1], [1], [0, 0, 0, 1, 1, 1], [0], [0]>} : vector<2x16x8xbf16>, vector<2x16x8xbf16>, vector<2x16x16xf32> -> vector<2x16x16xf32>
    "tpu.trace_stop"() : () -> ()
    %cst_72 = arith.constant 0.353553385 : f32
    %143 = vector.broadcast %cst_72 : f32 to vector<2x16x16xf32>
    %144 = arith.mulf %142, %143 : vector<2x16x16xf32>
    %145 = vector.shape_cast %74 : vector<16x16xf32> to vector<1x16x16xf32>
    %146 = vector.broadcast %145 : vector<1x16x16xf32> to vector<2x16x16xf32>
    %147 = arith.addf %144, %146 : vector<2x16x16xf32>
    %cst_73 = arith.constant dense<0xFF800000> : vector<2x16xf32>
    %148 = vector.multi_reduction <maximumf>, %147, %cst_73 [2] : vector<2x16x16xf32> to vector<2x16xf32>
    %149 = vector.shape_cast %148 : vector<2x16xf32> to vector<2x16x1xf32>
    %150 = vector.broadcast %149 : vector<2x16x1xf32> to vector<2x16x16xf32>
    %151 = arith.subf %147, %150 : vector<2x16x16xf32>
    %152 = math.exp %151 : vector<2x16x16xf32>
    %cst_74 = arith.constant dense<0.000000e+00> : vector<2x16xf32>
    %153 = vector.multi_reduction <add>, %152, %cst_74 [2] : vector<2x16x16xf32> to vector<2x16xf32>
    %154 = vector.shape_cast %153 : vector<2x16xf32> to vector<2x16x1xf32>
    %155 = tpu.reciprocal %154 {approx = true} : vector<2x16x1xf32> -> vector<2x16x1xf32>
    %156 = vector.broadcast %155 : vector<2x16x1xf32> to vector<2x16x16xf32>
    %157 = arith.mulf %152, %156 : vector<2x16x16xf32>
    %158 = arith.truncf %157 : vector<2x16x16xf32> to vector<2x16x16xbf16>
    %159 = arith.truncf %139 : vector<2x16x8xf32> to vector<2x16x8xbf16>
    "tpu.trace_start"() <{level = 10 : i32, message = "bqk,bkd->bqd"}> : () -> ()
    %cst_75 = arith.constant dense<0.000000e+00> : vector<2x16x8xf32>
    %160 = tpu.matmul %158, %159, %cst_75 {dimension_numbers = #tpu.dot_dimension_numbers<[2], [1], [1], [2], [0, 0, 0, 1, 1, 2], [0], [0]>} : vector<2x16x16xbf16>, vector<2x16x8xbf16>, vector<2x16x8xf32> -> vector<2x16x8xf32>
    "tpu.trace_stop"() : () -> ()
    %161 = vector.shape_cast %160 : vector<2x16x8xf32> to vector<32x8xf32>
    %c0_76 = arith.constant 0 : index
    %c1_77 = arith.constant 1 : index
    %c0_78 = arith.constant 0 : index
    %c0_79 = arith.constant 0 : index
    %162 = vector.load %arg10[%c0_76, %c1_77, %c0_78, %c0_79] : memref<2x4x8x32xbf16, #tpu.memory_space<vmem>>, vector<1x1x8x32xbf16>
    %163 = vector.shape_cast %162 : vector<1x1x8x32xbf16> to vector<8x32xbf16>
    %164 = arith.truncf %161 : vector<32x8xf32> to vector<32x8xbf16>
    %cst_80 = arith.constant dense<0.000000e+00> : vector<32x32xf32>
    %165 = tpu.matmul %164, %163, %cst_80 {dimension_numbers = #tpu.dot_dimension_numbers<[1], [0], [0], [1], [0, 0, 1, 1], [], []>} : vector<32x8xbf16>, vector<8x32xbf16>, vector<32x32xf32> -> vector<32x32xf32>
    %166 = arith.addf %127, %165 : vector<32x32xf32>
    %c0_81 = arith.constant 0 : index
    %c2 = arith.constant 2 : index
    %c0_82 = arith.constant 0 : index
    %c0_83 = arith.constant 0 : index
    %167 = vector.load %arg7[%c0_81, %c2, %c0_82, %c0_83] : memref<2x4x32x8xbf16, #tpu.memory_space<vmem>>, vector<1x1x32x8xbf16>
    %168 = vector.shape_cast %167 : vector<1x1x32x8xbf16> to vector<32x8xbf16>
    %cst_84 = arith.constant dense<0.000000e+00> : vector<32x8xf32>
    %169 = tpu.matmul %89, %168, %cst_84 {dimension_numbers = #tpu.dot_dimension_numbers<[1], [0], [0], [1], [0, 0, 1, 1], [], []>} : vector<32x32xbf16>, vector<32x8xbf16>, vector<32x8xf32> -> vector<32x8xf32>
    %c0_85 = arith.constant 0 : index
    %c2_86 = arith.constant 2 : index
    %c0_87 = arith.constant 0 : index
    %c0_88 = arith.constant 0 : index
    %170 = vector.load %arg8[%c0_85, %c2_86, %c0_87, %c0_88] : memref<2x4x32x8xbf16, #tpu.memory_space<vmem>>, vector<1x1x32x8xbf16>
    %171 = vector.shape_cast %170 : vector<1x1x32x8xbf16> to vector<32x8xbf16>
    %cst_89 = arith.constant dense<0.000000e+00> : vector<32x8xf32>
    %172 = tpu.matmul %89, %171, %cst_89 {dimension_numbers = #tpu.dot_dimension_numbers<[1], [0], [0], [1], [0, 0, 1, 1], [], []>} : vector<32x32xbf16>, vector<32x8xbf16>, vector<32x8xf32> -> vector<32x8xf32>
    %c0_90 = arith.constant 0 : index
    %c2_91 = arith.constant 2 : index
    %c0_92 = arith.constant 0 : index
    %c0_93 = arith.constant 0 : index
    %173 = vector.load %arg9[%c0_90, %c2_91, %c0_92, %c0_93] : memref<2x4x32x8xbf16, #tpu.memory_space<vmem>>, vector<1x1x32x8xbf16>
    %174 = vector.shape_cast %173 : vector<1x1x32x8xbf16> to vector<32x8xbf16>
    %cst_94 = arith.constant dense<0.000000e+00> : vector<32x8xf32>
    %175 = tpu.matmul %89, %174, %cst_94 {dimension_numbers = #tpu.dot_dimension_numbers<[1], [0], [0], [1], [0, 0, 1, 1], [], []>} : vector<32x32xbf16>, vector<32x8xbf16>, vector<32x8xf32> -> vector<32x8xf32>
    %176 = vector.shape_cast %169 : vector<32x8xf32> to vector<2x16x8xf32>
    %177 = vector.shape_cast %172 : vector<32x8xf32> to vector<2x16x8xf32>
    %178 = vector.shape_cast %175 : vector<32x8xf32> to vector<2x16x8xf32>
    %179 = arith.truncf %176 : vector<2x16x8xf32> to vector<2x16x8xbf16>
    %180 = arith.truncf %177 : vector<2x16x8xf32> to vector<2x16x8xbf16>
    "tpu.trace_start"() <{level = 10 : i32, message = "bqd,bkd->bqk"}> : () -> ()
    %cst_95 = arith.constant dense<0.000000e+00> : vector<2x16x16xf32>
    %181 = tpu.matmul %179, %180, %cst_95 {dimension_numbers = #tpu.dot_dimension_numbers<[2], [2], [1], [1], [0, 0, 0, 1, 1, 1], [0], [0]>} : vector<2x16x8xbf16>, vector<2x16x8xbf16>, vector<2x16x16xf32> -> vector<2x16x16xf32>
    "tpu.trace_stop"() : () -> ()
    %cst_96 = arith.constant 0.353553385 : f32
    %182 = vector.broadcast %cst_96 : f32 to vector<2x16x16xf32>
    %183 = arith.mulf %181, %182 : vector<2x16x16xf32>
    %184 = vector.shape_cast %74 : vector<16x16xf32> to vector<1x16x16xf32>
    %185 = vector.broadcast %184 : vector<1x16x16xf32> to vector<2x16x16xf32>
    %186 = arith.addf %183, %185 : vector<2x16x16xf32>
    %cst_97 = arith.constant dense<0xFF800000> : vector<2x16xf32>
    %187 = vector.multi_reduction <maximumf>, %186, %cst_97 [2] : vector<2x16x16xf32> to vector<2x16xf32>
    %188 = vector.shape_cast %187 : vector<2x16xf32> to vector<2x16x1xf32>
    %189 = vector.broadcast %188 : vector<2x16x1xf32> to vector<2x16x16xf32>
    %190 = arith.subf %186, %189 : vector<2x16x16xf32>
    %191 = math.exp %190 : vector<2x16x16xf32>
    %cst_98 = arith.constant dense<0.000000e+00> : vector<2x16xf32>
    %192 = vector.multi_reduction <add>, %191, %cst_98 [2] : vector<2x16x16xf32> to vector<2x16xf32>
    %193 = vector.shape_cast %192 : vector<2x16xf32> to vector<2x16x1xf32>
    %194 = tpu.reciprocal %193 {approx = true} : vector<2x16x1xf32> -> vector<2x16x1xf32>
    %195 = vector.broadcast %194 : vector<2x16x1xf32> to vector<2x16x16xf32>
    %196 = arith.mulf %191, %195 : vector<2x16x16xf32>
    %197 = arith.truncf %196 : vector<2x16x16xf32> to vector<2x16x16xbf16>
    %198 = arith.truncf %178 : vector<2x16x8xf32> to vector<2x16x8xbf16>
    "tpu.trace_start"() <{level = 10 : i32, message = "bqk,bkd->bqd"}> : () -> ()
    %cst_99 = arith.constant dense<0.000000e+00> : vector<2x16x8xf32>
    %199 = tpu.matmul %197, %198, %cst_99 {dimension_numbers = #tpu.dot_dimension_numbers<[2], [1], [1], [2], [0, 0, 0, 1, 1, 2], [0], [0]>} : vector<2x16x16xbf16>, vector<2x16x8xbf16>, vector<2x16x8xf32> -> vector<2x16x8xf32>
    "tpu.trace_stop"() : () -> ()
    %200 = vector.shape_cast %199 : vector<2x16x8xf32> to vector<32x8xf32>
    %c0_100 = arith.constant 0 : index
    %c2_101 = arith.constant 2 : index
    %c0_102 = arith.constant 0 : index
    %c0_103 = arith.constant 0 : index
    %201 = vector.load %arg10[%c0_100, %c2_101, %c0_102, %c0_103] : memref<2x4x8x32xbf16, #tpu.memory_space<vmem>>, vector<1x1x8x32xbf16>
    %202 = vector.shape_cast %201 : vector<1x1x8x32xbf16> to vector<8x32xbf16>
    %203 = arith.truncf %200 : vector<32x8xf32> to vector<32x8xbf16>
    %cst_104 = arith.constant dense<0.000000e+00> : vector<32x32xf32>
    %204 = tpu.matmul %203, %202, %cst_104 {dimension_numbers = #tpu.dot_dimension_numbers<[1], [0], [0], [1], [0, 0, 1, 1], [], []>} : vector<32x8xbf16>, vector<8x32xbf16>, vector<32x32xf32> -> vector<32x32xf32>
    %205 = arith.addf %166, %204 : vector<32x32xf32>
    %c0_105 = arith.constant 0 : index
    %c3 = arith.constant 3 : index
    %c0_106 = arith.constant 0 : index
    %c0_107 = arith.constant 0 : index
    %206 = vector.load %arg7[%c0_105, %c3, %c0_106, %c0_107] : memref<2x4x32x8xbf16, #tpu.memory_space<vmem>>, vector<1x1x32x8xbf16>
    %207 = vector.shape_cast %206 : vector<1x1x32x8xbf16> to vector<32x8xbf16>
    %cst_108 = arith.constant dense<0.000000e+00> : vector<32x8xf32>
    %208 = tpu.matmul %89, %207, %cst_108 {dimension_numbers = #tpu.dot_dimension_numbers<[1], [0], [0], [1], [0, 0, 1, 1], [], []>} : vector<32x32xbf16>, vector<32x8xbf16>, vector<32x8xf32> -> vector<32x8xf32>
    %c0_109 = arith.constant 0 : index
    %c3_110 = arith.constant 3 : index
    %c0_111 = arith.constant 0 : index
    %c0_112 = arith.constant 0 : index
    %209 = vector.load %arg8[%c0_109, %c3_110, %c0_111, %c0_112] : memref<2x4x32x8xbf16, #tpu.memory_space<vmem>>, vector<1x1x32x8xbf16>
    %210 = vector.shape_cast %209 : vector<1x1x32x8xbf16> to vector<32x8xbf16>
    %cst_113 = arith.constant dense<0.000000e+00> : vector<32x8xf32>
    %211 = tpu.matmul %89, %210, %cst_113 {dimension_numbers = #tpu.dot_dimension_numbers<[1], [0], [0], [1], [0, 0, 1, 1], [], []>} : vector<32x32xbf16>, vector<32x8xbf16>, vector<32x8xf32> -> vector<32x8xf32>
    %c0_114 = arith.constant 0 : index
    %c3_115 = arith.constant 3 : index
    %c0_116 = arith.constant 0 : index
    %c0_117 = arith.constant 0 : index
    %212 = vector.load %arg9[%c0_114, %c3_115, %c0_116, %c0_117] : memref<2x4x32x8xbf16, #tpu.memory_space<vmem>>, vector<1x1x32x8xbf16>
    %213 = vector.shape_cast %212 : vector<1x1x32x8xbf16> to vector<32x8xbf16>
    %cst_118 = arith.constant dense<0.000000e+00> : vector<32x8xf32>
    %214 = tpu.matmul %89, %213, %cst_118 {dimension_numbers = #tpu.dot_dimension_numbers<[1], [0], [0], [1], [0, 0, 1, 1], [], []>} : vector<32x32xbf16>, vector<32x8xbf16>, vector<32x8xf32> -> vector<32x8xf32>
    %215 = vector.shape_cast %208 : vector<32x8xf32> to vector<2x16x8xf32>
    %216 = vector.shape_cast %211 : vector<32x8xf32> to vector<2x16x8xf32>
    %217 = vector.shape_cast %214 : vector<32x8xf32> to vector<2x16x8xf32>
    %218 = arith.truncf %215 : vector<2x16x8xf32> to vector<2x16x8xbf16>
    %219 = arith.truncf %216 : vector<2x16x8xf32> to vector<2x16x8xbf16>
    "tpu.trace_start"() <{level = 10 : i32, message = "bqd,bkd->bqk"}> : () -> ()
    %cst_119 = arith.constant dense<0.000000e+00> : vector<2x16x16xf32>
    %220 = tpu.matmul %218, %219, %cst_119 {dimension_numbers = #tpu.dot_dimension_numbers<[2], [2], [1], [1], [0, 0, 0, 1, 1, 1], [0], [0]>} : vector<2x16x8xbf16>, vector<2x16x8xbf16>, vector<2x16x16xf32> -> vector<2x16x16xf32>
    "tpu.trace_stop"() : () -> ()
    %cst_120 = arith.constant 0.353553385 : f32
    %221 = vector.broadcast %cst_120 : f32 to vector<2x16x16xf32>
    %222 = arith.mulf %220, %221 : vector<2x16x16xf32>
    %223 = vector.shape_cast %74 : vector<16x16xf32> to vector<1x16x16xf32>
    %224 = vector.broadcast %223 : vector<1x16x16xf32> to vector<2x16x16xf32>
    %225 = arith.addf %222, %224 : vector<2x16x16xf32>
    %cst_121 = arith.constant dense<0xFF800000> : vector<2x16xf32>
    %226 = vector.multi_reduction <maximumf>, %225, %cst_121 [2] : vector<2x16x16xf32> to vector<2x16xf32>
    %227 = vector.shape_cast %226 : vector<2x16xf32> to vector<2x16x1xf32>
    %228 = vector.broadcast %227 : vector<2x16x1xf32> to vector<2x16x16xf32>
    %229 = arith.subf %225, %228 : vector<2x16x16xf32>
    %230 = math.exp %229 : vector<2x16x16xf32>
    %cst_122 = arith.constant dense<0.000000e+00> : vector<2x16xf32>
    %231 = vector.multi_reduction <add>, %230, %cst_122 [2] : vector<2x16x16xf32> to vector<2x16xf32>
    %232 = vector.shape_cast %231 : vector<2x16xf32> to vector<2x16x1xf32>
    %233 = tpu.reciprocal %232 {approx = true} : vector<2x16x1xf32> -> vector<2x16x1xf32>
    %234 = vector.broadcast %233 : vector<2x16x1xf32> to vector<2x16x16xf32>
    %235 = arith.mulf %230, %234 : vector<2x16x16xf32>
    %236 = arith.truncf %235 : vector<2x16x16xf32> to vector<2x16x16xbf16>
    %237 = arith.truncf %217 : vector<2x16x8xf32> to vector<2x16x8xbf16>
    "tpu.trace_start"() <{level = 10 : i32, message = "bqk,bkd->bqd"}> : () -> ()
    %cst_123 = arith.constant dense<0.000000e+00> : vector<2x16x8xf32>
    %238 = tpu.matmul %236, %237, %cst_123 {dimension_numbers = #tpu.dot_dimension_numbers<[2], [1], [1], [2], [0, 0, 0, 1, 1, 2], [0], [0]>} : vector<2x16x16xbf16>, vector<2x16x8xbf16>, vector<2x16x8xf32> -> vector<2x16x8xf32>
    "tpu.trace_stop"() : () -> ()
    %239 = vector.shape_cast %238 : vector<2x16x8xf32> to vector<32x8xf32>
    %c0_124 = arith.constant 0 : index
    %c3_125 = arith.constant 3 : index
    %c0_126 = arith.constant 0 : index
    %c0_127 = arith.constant 0 : index
    %240 = vector.load %arg10[%c0_124, %c3_125, %c0_126, %c0_127] : memref<2x4x8x32xbf16, #tpu.memory_space<vmem>>, vector<1x1x8x32xbf16>
    %241 = vector.shape_cast %240 : vector<1x1x8x32xbf16> to vector<8x32xbf16>
    %242 = arith.truncf %239 : vector<32x8xf32> to vector<32x8xbf16>
    %cst_128 = arith.constant dense<0.000000e+00> : vector<32x32xf32>
    %243 = tpu.matmul %242, %241, %cst_128 {dimension_numbers = #tpu.dot_dimension_numbers<[1], [0], [0], [1], [0, 0, 1, 1], [], []>} : vector<32x8xbf16>, vector<8x32xbf16>, vector<32x32xf32> -> vector<32x32xf32>
    %244 = arith.addf %205, %243 : vector<32x32xf32>
    %245 = arith.addf %68, %244 : vector<32x32xf32>
    %c0_129 = arith.constant 0 : index
    %c0_130 = arith.constant 0 : index
    %c0_131 = arith.constant 0 : index
    %246 = vector.load %arg11[%c0_129, %c0_130, %c0_131] : memref<2x1x32xf32, #tpu.memory_space<vmem>>, vector<1x1x32xf32>
    %247 = vector.shape_cast %246 : vector<1x1x32xf32> to vector<1x32xf32>
    %248 = arith.mulf %245, %245 : vector<32x32xf32>
    %cst_132 = arith.constant dense<0.000000e+00> : vector<32xf32>
    %249 = vector.multi_reduction <add>, %248, %cst_132 [1] : vector<32x32xf32> to vector<32xf32>
    %250 = vector.shape_cast %249 : vector<32xf32> to vector<32x1xf32>
    %cst_133 = arith.constant 3.200000e+01 : f32
    %251 = vector.broadcast %cst_133 : f32 to vector<32x1xf32>
    %252 = arith.divf %250, %251 : vector<32x1xf32>
    %cst_134 = arith.constant 9.99999997E-7 : f32
    %253 = vector.broadcast %cst_134 : f32 to vector<32x1xf32>
    %254 = arith.addf %252, %253 : vector<32x1xf32>
    %255 = math.rsqrt %254 : vector<32x1xf32>
    %256 = vector.broadcast %255 : vector<32x1xf32> to vector<32x32xf32>
    %257 = arith.mulf %245, %256 : vector<32x32xf32>
    %258 = vector.broadcast %247 : vector<1x32xf32> to vector<32x32xf32>
    %259 = arith.mulf %257, %258 : vector<32x32xf32>
    %c0_135 = arith.constant 0 : index
    %c0_136 = arith.constant 0 : index
    %c0_137 = arith.constant 0 : index
    %260 = vector.load %arg12[%c0_135, %c0_136, %c0_137] : memref<2x32x256xbf16, #tpu.memory_space<vmem>>, vector<1x32x256xbf16>
    %261 = vector.shape_cast %260 : vector<1x32x256xbf16> to vector<32x256xbf16>
    %262 = arith.truncf %259 : vector<32x32xf32> to vector<32x32xbf16>
    %cst_138 = arith.constant dense<0.000000e+00> : vector<32x256xf32>
    %263 = tpu.matmul %262, %261, %cst_138 {dimension_numbers = #tpu.dot_dimension_numbers<[1], [0], [0], [1], [0, 0, 1, 1], [], []>} : vector<32x32xbf16>, vector<32x256xbf16>, vector<32x256xf32> -> vector<32x256xf32>
    %264 = vector.extract_strided_slice %263 {offsets = [0, 0], sizes = [32, 64], strides = [1, 1]} : vector<32x256xf32> to vector<32x64xf32>
    %265 = vector.extract_strided_slice %263 {offsets = [0, 128], sizes = [32, 64], strides = [1, 1]} : vector<32x256xf32> to vector<32x64xf32>
    %266 = arith.negf %264 : vector<32x64xf32>
    %267 = math.exp %266 : vector<32x64xf32>
    %cst_139 = arith.constant 1.000000e+00 : f32
    %268 = vector.broadcast %cst_139 : f32 to vector<32x64xf32>
    %269 = arith.addf %268, %267 : vector<32x64xf32>
    %270 = arith.divf %268, %269 : vector<32x64xf32>
    %271 = arith.mulf %264, %270 : vector<32x64xf32>
    %272 = arith.mulf %271, %265 : vector<32x64xf32>
    %c0_140 = arith.constant 0 : index
    %c0_141 = arith.constant 0 : index
    %c0_142 = arith.constant 0 : index
    %273 = vector.load %arg13[%c0_140, %c0_141, %c0_142] : memref<2x64x32xbf16, #tpu.memory_space<vmem>>, vector<1x64x32xbf16>
    %274 = vector.shape_cast %273 : vector<1x64x32xbf16> to vector<64x32xbf16>
    %275 = arith.truncf %272 : vector<32x64xf32> to vector<32x64xbf16>
    %cst_143 = arith.constant dense<0.000000e+00> : vector<32x32xf32>
    %276 = tpu.matmul %275, %274, %cst_143 {dimension_numbers = #tpu.dot_dimension_numbers<[1], [0], [0], [1], [0, 0, 1, 1], [], []>} : vector<32x64xbf16>, vector<64x32xbf16>, vector<32x32xf32> -> vector<32x32xf32>
    %277 = arith.addf %245, %276 : vector<32x32xf32>
    %c1_144 = arith.constant 1 : index
    %c0_145 = arith.constant 0 : index
    %c0_146 = arith.constant 0 : index
    %278 = vector.load %arg6[%c1_144, %c0_145, %c0_146] : memref<2x1x32xf32, #tpu.memory_space<vmem>>, vector<1x1x32xf32>
    %279 = vector.shape_cast %278 : vector<1x1x32xf32> to vector<1x32xf32>
    %280 = arith.mulf %277, %277 : vector<32x32xf32>
    %cst_147 = arith.constant dense<0.000000e+00> : vector<32xf32>
    %281 = vector.multi_reduction <add>, %280, %cst_147 [1] : vector<32x32xf32> to vector<32xf32>
    %282 = vector.shape_cast %281 : vector<32xf32> to vector<32x1xf32>
    %cst_148 = arith.constant 3.200000e+01 : f32
    %283 = vector.broadcast %cst_148 : f32 to vector<32x1xf32>
    %284 = arith.divf %282, %283 : vector<32x1xf32>
    %cst_149 = arith.constant 9.99999997E-7 : f32
    %285 = vector.broadcast %cst_149 : f32 to vector<32x1xf32>
    %286 = arith.addf %284, %285 : vector<32x1xf32>
    %287 = math.rsqrt %286 : vector<32x1xf32>
    %288 = vector.broadcast %287 : vector<32x1xf32> to vector<32x32xf32>
    %289 = arith.mulf %277, %288 : vector<32x32xf32>
    %290 = vector.broadcast %279 : vector<1x32xf32> to vector<32x32xf32>
    %291 = arith.mulf %289, %290 : vector<32x32xf32>
    %292 = arith.truncf %291 : vector<32x32xf32> to vector<32x32xbf16>
    %c1_150 = arith.constant 1 : index
    %c0_151 = arith.constant 0 : index
    %c0_152 = arith.constant 0 : index
    %c0_153 = arith.constant 0 : index
    %293 = vector.load %arg7[%c1_150, %c0_151, %c0_152, %c0_153] : memref<2x4x32x8xbf16, #tpu.memory_space<vmem>>, vector<1x1x32x8xbf16>
    %294 = vector.shape_cast %293 : vector<1x1x32x8xbf16> to vector<32x8xbf16>
    %cst_154 = arith.constant dense<0.000000e+00> : vector<32x8xf32>
    %295 = tpu.matmul %292, %294, %cst_154 {dimension_numbers = #tpu.dot_dimension_numbers<[1], [0], [0], [1], [0, 0, 1, 1], [], []>} : vector<32x32xbf16>, vector<32x8xbf16>, vector<32x8xf32> -> vector<32x8xf32>
    %c1_155 = arith.constant 1 : index
    %c0_156 = arith.constant 0 : index
    %c0_157 = arith.constant 0 : index
    %c0_158 = arith.constant 0 : index
    %296 = vector.load %arg8[%c1_155, %c0_156, %c0_157, %c0_158] : memref<2x4x32x8xbf16, #tpu.memory_space<vmem>>, vector<1x1x32x8xbf16>
    %297 = vector.shape_cast %296 : vector<1x1x32x8xbf16> to vector<32x8xbf16>
    %cst_159 = arith.constant dense<0.000000e+00> : vector<32x8xf32>
    %298 = tpu.matmul %292, %297, %cst_159 {dimension_numbers = #tpu.dot_dimension_numbers<[1], [0], [0], [1], [0, 0, 1, 1], [], []>} : vector<32x32xbf16>, vector<32x8xbf16>, vector<32x8xf32> -> vector<32x8xf32>
    %c1_160 = arith.constant 1 : index
    %c0_161 = arith.constant 0 : index
    %c0_162 = arith.constant 0 : index
    %c0_163 = arith.constant 0 : index
    %299 = vector.load %arg9[%c1_160, %c0_161, %c0_162, %c0_163] : memref<2x4x32x8xbf16, #tpu.memory_space<vmem>>, vector<1x1x32x8xbf16>
    %300 = vector.shape_cast %299 : vector<1x1x32x8xbf16> to vector<32x8xbf16>
    %cst_164 = arith.constant dense<0.000000e+00> : vector<32x8xf32>
    %301 = tpu.matmul %292, %300, %cst_164 {dimension_numbers = #tpu.dot_dimension_numbers<[1], [0], [0], [1], [0, 0, 1, 1], [], []>} : vector<32x32xbf16>, vector<32x8xbf16>, vector<32x8xf32> -> vector<32x8xf32>
    %302 = vector.shape_cast %295 : vector<32x8xf32> to vector<2x16x8xf32>
    %303 = vector.shape_cast %298 : vector<32x8xf32> to vector<2x16x8xf32>
    %304 = vector.shape_cast %301 : vector<32x8xf32> to vector<2x16x8xf32>
    %305 = arith.truncf %302 : vector<2x16x8xf32> to vector<2x16x8xbf16>
    %306 = arith.truncf %303 : vector<2x16x8xf32> to vector<2x16x8xbf16>
    "tpu.trace_start"() <{level = 10 : i32, message = "bqd,bkd->bqk"}> : () -> ()
    %cst_165 = arith.constant dense<0.000000e+00> : vector<2x16x16xf32>
    %307 = tpu.matmul %305, %306, %cst_165 {dimension_numbers = #tpu.dot_dimension_numbers<[2], [2], [1], [1], [0, 0, 0, 1, 1, 1], [0], [0]>} : vector<2x16x8xbf16>, vector<2x16x8xbf16>, vector<2x16x16xf32> -> vector<2x16x16xf32>
    "tpu.trace_stop"() : () -> ()
    %cst_166 = arith.constant 0.353553385 : f32
    %308 = vector.broadcast %cst_166 : f32 to vector<2x16x16xf32>
    %309 = arith.mulf %307, %308 : vector<2x16x16xf32>
    %310 = vector.shape_cast %74 : vector<16x16xf32> to vector<1x16x16xf32>
    %311 = vector.broadcast %310 : vector<1x16x16xf32> to vector<2x16x16xf32>
    %312 = arith.addf %309, %311 : vector<2x16x16xf32>
    %cst_167 = arith.constant dense<0xFF800000> : vector<2x16xf32>
    %313 = vector.multi_reduction <maximumf>, %312, %cst_167 [2] : vector<2x16x16xf32> to vector<2x16xf32>
    %314 = vector.shape_cast %313 : vector<2x16xf32> to vector<2x16x1xf32>
    %315 = vector.broadcast %314 : vector<2x16x1xf32> to vector<2x16x16xf32>
    %316 = arith.subf %312, %315 : vector<2x16x16xf32>
    %317 = math.exp %316 : vector<2x16x16xf32>
    %cst_168 = arith.constant dense<0.000000e+00> : vector<2x16xf32>
    %318 = vector.multi_reduction <add>, %317, %cst_168 [2] : vector<2x16x16xf32> to vector<2x16xf32>
    %319 = vector.shape_cast %318 : vector<2x16xf32> to vector<2x16x1xf32>
    %320 = tpu.reciprocal %319 {approx = true} : vector<2x16x1xf32> -> vector<2x16x1xf32>
    %321 = vector.broadcast %320 : vector<2x16x1xf32> to vector<2x16x16xf32>
    %322 = arith.mulf %317, %321 : vector<2x16x16xf32>
    %323 = arith.truncf %322 : vector<2x16x16xf32> to vector<2x16x16xbf16>
    %324 = arith.truncf %304 : vector<2x16x8xf32> to vector<2x16x8xbf16>
    "tpu.trace_start"() <{level = 10 : i32, message = "bqk,bkd->bqd"}> : () -> ()
    %cst_169 = arith.constant dense<0.000000e+00> : vector<2x16x8xf32>
    %325 = tpu.matmul %323, %324, %cst_169 {dimension_numbers = #tpu.dot_dimension_numbers<[2], [1], [1], [2], [0, 0, 0, 1, 1, 2], [0], [0]>} : vector<2x16x16xbf16>, vector<2x16x8xbf16>, vector<2x16x8xf32> -> vector<2x16x8xf32>
    "tpu.trace_stop"() : () -> ()
    %326 = vector.shape_cast %325 : vector<2x16x8xf32> to vector<32x8xf32>
    %c1_170 = arith.constant 1 : index
    %c0_171 = arith.constant 0 : index
    %c0_172 = arith.constant 0 : index
    %c0_173 = arith.constant 0 : index
    %327 = vector.load %arg10[%c1_170, %c0_171, %c0_172, %c0_173] : memref<2x4x8x32xbf16, #tpu.memory_space<vmem>>, vector<1x1x8x32xbf16>
    %328 = vector.shape_cast %327 : vector<1x1x8x32xbf16> to vector<8x32xbf16>
    %329 = arith.truncf %326 : vector<32x8xf32> to vector<32x8xbf16>
    %cst_174 = arith.constant dense<0.000000e+00> : vector<32x32xf32>
    %330 = tpu.matmul %329, %328, %cst_174 {dimension_numbers = #tpu.dot_dimension_numbers<[1], [0], [0], [1], [0, 0, 1, 1], [], []>} : vector<32x8xbf16>, vector<8x32xbf16>, vector<32x32xf32> -> vector<32x32xf32>
    %c1_175 = arith.constant 1 : index
    %c1_176 = arith.constant 1 : index
    %c0_177 = arith.constant 0 : index
    %c0_178 = arith.constant 0 : index
    %331 = vector.load %arg7[%c1_175, %c1_176, %c0_177, %c0_178] : memref<2x4x32x8xbf16, #tpu.memory_space<vmem>>, vector<1x1x32x8xbf16>
    %332 = vector.shape_cast %331 : vector<1x1x32x8xbf16> to vector<32x8xbf16>
    %cst_179 = arith.constant dense<0.000000e+00> : vector<32x8xf32>
    %333 = tpu.matmul %292, %332, %cst_179 {dimension_numbers = #tpu.dot_dimension_numbers<[1], [0], [0], [1], [0, 0, 1, 1], [], []>} : vector<32x32xbf16>, vector<32x8xbf16>, vector<32x8xf32> -> vector<32x8xf32>
    %c1_180 = arith.constant 1 : index
    %c1_181 = arith.constant 1 : index
    %c0_182 = arith.constant 0 : index
    %c0_183 = arith.constant 0 : index
    %334 = vector.load %arg8[%c1_180, %c1_181, %c0_182, %c0_183] : memref<2x4x32x8xbf16, #tpu.memory_space<vmem>>, vector<1x1x32x8xbf16>
    %335 = vector.shape_cast %334 : vector<1x1x32x8xbf16> to vector<32x8xbf16>
    %cst_184 = arith.constant dense<0.000000e+00> : vector<32x8xf32>
    %336 = tpu.matmul %292, %335, %cst_184 {dimension_numbers = #tpu.dot_dimension_numbers<[1], [0], [0], [1], [0, 0, 1, 1], [], []>} : vector<32x32xbf16>, vector<32x8xbf16>, vector<32x8xf32> -> vector<32x8xf32>
    %c1_185 = arith.constant 1 : index
    %c1_186 = arith.constant 1 : index
    %c0_187 = arith.constant 0 : index
    %c0_188 = arith.constant 0 : index
    %337 = vector.load %arg9[%c1_185, %c1_186, %c0_187, %c0_188] : memref<2x4x32x8xbf16, #tpu.memory_space<vmem>>, vector<1x1x32x8xbf16>
    %338 = vector.shape_cast %337 : vector<1x1x32x8xbf16> to vector<32x8xbf16>
    %cst_189 = arith.constant dense<0.000000e+00> : vector<32x8xf32>
    %339 = tpu.matmul %292, %338, %cst_189 {dimension_numbers = #tpu.dot_dimension_numbers<[1], [0], [0], [1], [0, 0, 1, 1], [], []>} : vector<32x32xbf16>, vector<32x8xbf16>, vector<32x8xf32> -> vector<32x8xf32>
    %340 = vector.shape_cast %333 : vector<32x8xf32> to vector<2x16x8xf32>
    %341 = vector.shape_cast %336 : vector<32x8xf32> to vector<2x16x8xf32>
    %342 = vector.shape_cast %339 : vector<32x8xf32> to vector<2x16x8xf32>
    %343 = arith.truncf %340 : vector<2x16x8xf32> to vector<2x16x8xbf16>
    %344 = arith.truncf %341 : vector<2x16x8xf32> to vector<2x16x8xbf16>
    "tpu.trace_start"() <{level = 10 : i32, message = "bqd,bkd->bqk"}> : () -> ()
    %cst_190 = arith.constant dense<0.000000e+00> : vector<2x16x16xf32>
    %345 = tpu.matmul %343, %344, %cst_190 {dimension_numbers = #tpu.dot_dimension_numbers<[2], [2], [1], [1], [0, 0, 0, 1, 1, 1], [0], [0]>} : vector<2x16x8xbf16>, vector<2x16x8xbf16>, vector<2x16x16xf32> -> vector<2x16x16xf32>
    "tpu.trace_stop"() : () -> ()
    %cst_191 = arith.constant 0.353553385 : f32
    %346 = vector.broadcast %cst_191 : f32 to vector<2x16x16xf32>
    %347 = arith.mulf %345, %346 : vector<2x16x16xf32>
    %348 = vector.shape_cast %74 : vector<16x16xf32> to vector<1x16x16xf32>
    %349 = vector.broadcast %348 : vector<1x16x16xf32> to vector<2x16x16xf32>
    %350 = arith.addf %347, %349 : vector<2x16x16xf32>
    %cst_192 = arith.constant dense<0xFF800000> : vector<2x16xf32>
    %351 = vector.multi_reduction <maximumf>, %350, %cst_192 [2] : vector<2x16x16xf32> to vector<2x16xf32>
    %352 = vector.shape_cast %351 : vector<2x16xf32> to vector<2x16x1xf32>
    %353 = vector.broadcast %352 : vector<2x16x1xf32> to vector<2x16x16xf32>
    %354 = arith.subf %350, %353 : vector<2x16x16xf32>
    %355 = math.exp %354 : vector<2x16x16xf32>
    %cst_193 = arith.constant dense<0.000000e+00> : vector<2x16xf32>
    %356 = vector.multi_reduction <add>, %355, %cst_193 [2] : vector<2x16x16xf32> to vector<2x16xf32>
    %357 = vector.shape_cast %356 : vector<2x16xf32> to vector<2x16x1xf32>
    %358 = tpu.reciprocal %357 {approx = true} : vector<2x16x1xf32> -> vector<2x16x1xf32>
    %359 = vector.broadcast %358 : vector<2x16x1xf32> to vector<2x16x16xf32>
    %360 = arith.mulf %355, %359 : vector<2x16x16xf32>
    %361 = arith.truncf %360 : vector<2x16x16xf32> to vector<2x16x16xbf16>
    %362 = arith.truncf %342 : vector<2x16x8xf32> to vector<2x16x8xbf16>
    "tpu.trace_start"() <{level = 10 : i32, message = "bqk,bkd->bqd"}> : () -> ()
    %cst_194 = arith.constant dense<0.000000e+00> : vector<2x16x8xf32>
    %363 = tpu.matmul %361, %362, %cst_194 {dimension_numbers = #tpu.dot_dimension_numbers<[2], [1], [1], [2], [0, 0, 0, 1, 1, 2], [0], [0]>} : vector<2x16x16xbf16>, vector<2x16x8xbf16>, vector<2x16x8xf32> -> vector<2x16x8xf32>
    "tpu.trace_stop"() : () -> ()
    %364 = vector.shape_cast %363 : vector<2x16x8xf32> to vector<32x8xf32>
    %c1_195 = arith.constant 1 : index
    %c1_196 = arith.constant 1 : index
    %c0_197 = arith.constant 0 : index
    %c0_198 = arith.constant 0 : index
    %365 = vector.load %arg10[%c1_195, %c1_196, %c0_197, %c0_198] : memref<2x4x8x32xbf16, #tpu.memory_space<vmem>>, vector<1x1x8x32xbf16>
    %366 = vector.shape_cast %365 : vector<1x1x8x32xbf16> to vector<8x32xbf16>
    %367 = arith.truncf %364 : vector<32x8xf32> to vector<32x8xbf16>
    %cst_199 = arith.constant dense<0.000000e+00> : vector<32x32xf32>
    %368 = tpu.matmul %367, %366, %cst_199 {dimension_numbers = #tpu.dot_dimension_numbers<[1], [0], [0], [1], [0, 0, 1, 1], [], []>} : vector<32x8xbf16>, vector<8x32xbf16>, vector<32x32xf32> -> vector<32x32xf32>
    %369 = arith.addf %330, %368 : vector<32x32xf32>
    %c1_200 = arith.constant 1 : index
    %c2_201 = arith.constant 2 : index
    %c0_202 = arith.constant 0 : index
    %c0_203 = arith.constant 0 : index
    %370 = vector.load %arg7[%c1_200, %c2_201, %c0_202, %c0_203] : memref<2x4x32x8xbf16, #tpu.memory_space<vmem>>, vector<1x1x32x8xbf16>
    %371 = vector.shape_cast %370 : vector<1x1x32x8xbf16> to vector<32x8xbf16>
    %cst_204 = arith.constant dense<0.000000e+00> : vector<32x8xf32>
    %372 = tpu.matmul %292, %371, %cst_204 {dimension_numbers = #tpu.dot_dimension_numbers<[1], [0], [0], [1], [0, 0, 1, 1], [], []>} : vector<32x32xbf16>, vector<32x8xbf16>, vector<32x8xf32> -> vector<32x8xf32>
    %c1_205 = arith.constant 1 : index
    %c2_206 = arith.constant 2 : index
    %c0_207 = arith.constant 0 : index
    %c0_208 = arith.constant 0 : index
    %373 = vector.load %arg8[%c1_205, %c2_206, %c0_207, %c0_208] : memref<2x4x32x8xbf16, #tpu.memory_space<vmem>>, vector<1x1x32x8xbf16>
    %374 = vector.shape_cast %373 : vector<1x1x32x8xbf16> to vector<32x8xbf16>
    %cst_209 = arith.constant dense<0.000000e+00> : vector<32x8xf32>
    %375 = tpu.matmul %292, %374, %cst_209 {dimension_numbers = #tpu.dot_dimension_numbers<[1], [0], [0], [1], [0, 0, 1, 1], [], []>} : vector<32x32xbf16>, vector<32x8xbf16>, vector<32x8xf32> -> vector<32x8xf32>
    %c1_210 = arith.constant 1 : index
    %c2_211 = arith.constant 2 : index
    %c0_212 = arith.constant 0 : index
    %c0_213 = arith.constant 0 : index
    %376 = vector.load %arg9[%c1_210, %c2_211, %c0_212, %c0_213] : memref<2x4x32x8xbf16, #tpu.memory_space<vmem>>, vector<1x1x32x8xbf16>
    %377 = vector.shape_cast %376 : vector<1x1x32x8xbf16> to vector<32x8xbf16>
    %cst_214 = arith.constant dense<0.000000e+00> : vector<32x8xf32>
    %378 = tpu.matmul %292, %377, %cst_214 {dimension_numbers = #tpu.dot_dimension_numbers<[1], [0], [0], [1], [0, 0, 1, 1], [], []>} : vector<32x32xbf16>, vector<32x8xbf16>, vector<32x8xf32> -> vector<32x8xf32>
    %379 = vector.shape_cast %372 : vector<32x8xf32> to vector<2x16x8xf32>
    %380 = vector.shape_cast %375 : vector<32x8xf32> to vector<2x16x8xf32>
    %381 = vector.shape_cast %378 : vector<32x8xf32> to vector<2x16x8xf32>
    %382 = arith.truncf %379 : vector<2x16x8xf32> to vector<2x16x8xbf16>
    %383 = arith.truncf %380 : vector<2x16x8xf32> to vector<2x16x8xbf16>
    "tpu.trace_start"() <{level = 10 : i32, message = "bqd,bkd->bqk"}> : () -> ()
    %cst_215 = arith.constant dense<0.000000e+00> : vector<2x16x16xf32>
    %384 = tpu.matmul %382, %383, %cst_215 {dimension_numbers = #tpu.dot_dimension_numbers<[2], [2], [1], [1], [0, 0, 0, 1, 1, 1], [0], [0]>} : vector<2x16x8xbf16>, vector<2x16x8xbf16>, vector<2x16x16xf32> -> vector<2x16x16xf32>
    "tpu.trace_stop"() : () -> ()
    %cst_216 = arith.constant 0.353553385 : f32
    %385 = vector.broadcast %cst_216 : f32 to vector<2x16x16xf32>
    %386 = arith.mulf %384, %385 : vector<2x16x16xf32>
    %387 = vector.shape_cast %74 : vector<16x16xf32> to vector<1x16x16xf32>
    %388 = vector.broadcast %387 : vector<1x16x16xf32> to vector<2x16x16xf32>
    %389 = arith.addf %386, %388 : vector<2x16x16xf32>
    %cst_217 = arith.constant dense<0xFF800000> : vector<2x16xf32>
    %390 = vector.multi_reduction <maximumf>, %389, %cst_217 [2] : vector<2x16x16xf32> to vector<2x16xf32>
    %391 = vector.shape_cast %390 : vector<2x16xf32> to vector<2x16x1xf32>
    %392 = vector.broadcast %391 : vector<2x16x1xf32> to vector<2x16x16xf32>
    %393 = arith.subf %389, %392 : vector<2x16x16xf32>
    %394 = math.exp %393 : vector<2x16x16xf32>
    %cst_218 = arith.constant dense<0.000000e+00> : vector<2x16xf32>
    %395 = vector.multi_reduction <add>, %394, %cst_218 [2] : vector<2x16x16xf32> to vector<2x16xf32>
    %396 = vector.shape_cast %395 : vector<2x16xf32> to vector<2x16x1xf32>
    %397 = tpu.reciprocal %396 {approx = true} : vector<2x16x1xf32> -> vector<2x16x1xf32>
    %398 = vector.broadcast %397 : vector<2x16x1xf32> to vector<2x16x16xf32>
    %399 = arith.mulf %394, %398 : vector<2x16x16xf32>
    %400 = arith.truncf %399 : vector<2x16x16xf32> to vector<2x16x16xbf16>
    %401 = arith.truncf %381 : vector<2x16x8xf32> to vector<2x16x8xbf16>
    "tpu.trace_start"() <{level = 10 : i32, message = "bqk,bkd->bqd"}> : () -> ()
    %cst_219 = arith.constant dense<0.000000e+00> : vector<2x16x8xf32>
    %402 = tpu.matmul %400, %401, %cst_219 {dimension_numbers = #tpu.dot_dimension_numbers<[2], [1], [1], [2], [0, 0, 0, 1, 1, 2], [0], [0]>} : vector<2x16x16xbf16>, vector<2x16x8xbf16>, vector<2x16x8xf32> -> vector<2x16x8xf32>
    "tpu.trace_stop"() : () -> ()
    %403 = vector.shape_cast %402 : vector<2x16x8xf32> to vector<32x8xf32>
    %c1_220 = arith.constant 1 : index
    %c2_221 = arith.constant 2 : index
    %c0_222 = arith.constant 0 : index
    %c0_223 = arith.constant 0 : index
    %404 = vector.load %arg10[%c1_220, %c2_221, %c0_222, %c0_223] : memref<2x4x8x32xbf16, #tpu.memory_space<vmem>>, vector<1x1x8x32xbf16>
    %405 = vector.shape_cast %404 : vector<1x1x8x32xbf16> to vector<8x32xbf16>
    %406 = arith.truncf %403 : vector<32x8xf32> to vector<32x8xbf16>
    %cst_224 = arith.constant dense<0.000000e+00> : vector<32x32xf32>
    %407 = tpu.matmul %406, %405, %cst_224 {dimension_numbers = #tpu.dot_dimension_numbers<[1], [0], [0], [1], [0, 0, 1, 1], [], []>} : vector<32x8xbf16>, vector<8x32xbf16>, vector<32x32xf32> -> vector<32x32xf32>
    %408 = arith.addf %369, %407 : vector<32x32xf32>
    %c1_225 = arith.constant 1 : index
    %c3_226 = arith.constant 3 : index
    %c0_227 = arith.constant 0 : index
    %c0_228 = arith.constant 0 : index
    %409 = vector.load %arg7[%c1_225, %c3_226, %c0_227, %c0_228] : memref<2x4x32x8xbf16, #tpu.memory_space<vmem>>, vector<1x1x32x8xbf16>
    %410 = vector.shape_cast %409 : vector<1x1x32x8xbf16> to vector<32x8xbf16>
    %cst_229 = arith.constant dense<0.000000e+00> : vector<32x8xf32>
    %411 = tpu.matmul %292, %410, %cst_229 {dimension_numbers = #tpu.dot_dimension_numbers<[1], [0], [0], [1], [0, 0, 1, 1], [], []>} : vector<32x32xbf16>, vector<32x8xbf16>, vector<32x8xf32> -> vector<32x8xf32>
    %c1_230 = arith.constant 1 : index
    %c3_231 = arith.constant 3 : index
    %c0_232 = arith.constant 0 : index
    %c0_233 = arith.constant 0 : index
    %412 = vector.load %arg8[%c1_230, %c3_231, %c0_232, %c0_233] : memref<2x4x32x8xbf16, #tpu.memory_space<vmem>>, vector<1x1x32x8xbf16>
    %413 = vector.shape_cast %412 : vector<1x1x32x8xbf16> to vector<32x8xbf16>
    %cst_234 = arith.constant dense<0.000000e+00> : vector<32x8xf32>
    %414 = tpu.matmul %292, %413, %cst_234 {dimension_numbers = #tpu.dot_dimension_numbers<[1], [0], [0], [1], [0, 0, 1, 1], [], []>} : vector<32x32xbf16>, vector<32x8xbf16>, vector<32x8xf32> -> vector<32x8xf32>
    %c1_235 = arith.constant 1 : index
    %c3_236 = arith.constant 3 : index
    %c0_237 = arith.constant 0 : index
    %c0_238 = arith.constant 0 : index
    %415 = vector.load %arg9[%c1_235, %c3_236, %c0_237, %c0_238] : memref<2x4x32x8xbf16, #tpu.memory_space<vmem>>, vector<1x1x32x8xbf16>
    %416 = vector.shape_cast %415 : vector<1x1x32x8xbf16> to vector<32x8xbf16>
    %cst_239 = arith.constant dense<0.000000e+00> : vector<32x8xf32>
    %417 = tpu.matmul %292, %416, %cst_239 {dimension_numbers = #tpu.dot_dimension_numbers<[1], [0], [0], [1], [0, 0, 1, 1], [], []>} : vector<32x32xbf16>, vector<32x8xbf16>, vector<32x8xf32> -> vector<32x8xf32>
    %418 = vector.shape_cast %411 : vector<32x8xf32> to vector<2x16x8xf32>
    %419 = vector.shape_cast %414 : vector<32x8xf32> to vector<2x16x8xf32>
    %420 = vector.shape_cast %417 : vector<32x8xf32> to vector<2x16x8xf32>
    %421 = arith.truncf %418 : vector<2x16x8xf32> to vector<2x16x8xbf16>
    %422 = arith.truncf %419 : vector<2x16x8xf32> to vector<2x16x8xbf16>
    "tpu.trace_start"() <{level = 10 : i32, message = "bqd,bkd->bqk"}> : () -> ()
    %cst_240 = arith.constant dense<0.000000e+00> : vector<2x16x16xf32>
    %423 = tpu.matmul %421, %422, %cst_240 {dimension_numbers = #tpu.dot_dimension_numbers<[2], [2], [1], [1], [0, 0, 0, 1, 1, 1], [0], [0]>} : vector<2x16x8xbf16>, vector<2x16x8xbf16>, vector<2x16x16xf32> -> vector<2x16x16xf32>
    "tpu.trace_stop"() : () -> ()
    %cst_241 = arith.constant 0.353553385 : f32
    %424 = vector.broadcast %cst_241 : f32 to vector<2x16x16xf32>
    %425 = arith.mulf %423, %424 : vector<2x16x16xf32>
    %426 = vector.shape_cast %74 : vector<16x16xf32> to vector<1x16x16xf32>
    %427 = vector.broadcast %426 : vector<1x16x16xf32> to vector<2x16x16xf32>
    %428 = arith.addf %425, %427 : vector<2x16x16xf32>
    %cst_242 = arith.constant dense<0xFF800000> : vector<2x16xf32>
    %429 = vector.multi_reduction <maximumf>, %428, %cst_242 [2] : vector<2x16x16xf32> to vector<2x16xf32>
    %430 = vector.shape_cast %429 : vector<2x16xf32> to vector<2x16x1xf32>
    %431 = vector.broadcast %430 : vector<2x16x1xf32> to vector<2x16x16xf32>
    %432 = arith.subf %428, %431 : vector<2x16x16xf32>
    %433 = math.exp %432 : vector<2x16x16xf32>
    %cst_243 = arith.constant dense<0.000000e+00> : vector<2x16xf32>
    %434 = vector.multi_reduction <add>, %433, %cst_243 [2] : vector<2x16x16xf32> to vector<2x16xf32>
    %435 = vector.shape_cast %434 : vector<2x16xf32> to vector<2x16x1xf32>
    %436 = tpu.reciprocal %435 {approx = true} : vector<2x16x1xf32> -> vector<2x16x1xf32>
    %437 = vector.broadcast %436 : vector<2x16x1xf32> to vector<2x16x16xf32>
    %438 = arith.mulf %433, %437 : vector<2x16x16xf32>
    %439 = arith.truncf %438 : vector<2x16x16xf32> to vector<2x16x16xbf16>
    %440 = arith.truncf %420 : vector<2x16x8xf32> to vector<2x16x8xbf16>
    "tpu.trace_start"() <{level = 10 : i32, message = "bqk,bkd->bqd"}> : () -> ()
    %cst_244 = arith.constant dense<0.000000e+00> : vector<2x16x8xf32>
    %441 = tpu.matmul %439, %440, %cst_244 {dimension_numbers = #tpu.dot_dimension_numbers<[2], [1], [1], [2], [0, 0, 0, 1, 1, 2], [0], [0]>} : vector<2x16x16xbf16>, vector<2x16x8xbf16>, vector<2x16x8xf32> -> vector<2x16x8xf32>
    "tpu.trace_stop"() : () -> ()
    %442 = vector.shape_cast %441 : vector<2x16x8xf32> to vector<32x8xf32>
    %c1_245 = arith.constant 1 : index
    %c3_246 = arith.constant 3 : index
    %c0_247 = arith.constant 0 : index
    %c0_248 = arith.constant 0 : index
    %443 = vector.load %arg10[%c1_245, %c3_246, %c0_247, %c0_248] : memref<2x4x8x32xbf16, #tpu.memory_space<vmem>>, vector<1x1x8x32xbf16>
    %444 = vector.shape_cast %443 : vector<1x1x8x32xbf16> to vector<8x32xbf16>
    %445 = arith.truncf %442 : vector<32x8xf32> to vector<32x8xbf16>
    %cst_249 = arith.constant dense<0.000000e+00> : vector<32x32xf32>
    %446 = tpu.matmul %445, %444, %cst_249 {dimension_numbers = #tpu.dot_dimension_numbers<[1], [0], [0], [1], [0, 0, 1, 1], [], []>} : vector<32x8xbf16>, vector<8x32xbf16>, vector<32x32xf32> -> vector<32x32xf32>
    %447 = arith.addf %408, %446 : vector<32x32xf32>
    %448 = arith.addf %277, %447 : vector<32x32xf32>
    %c1_250 = arith.constant 1 : index
    %c0_251 = arith.constant 0 : index
    %c0_252 = arith.constant 0 : index
    %449 = vector.load %arg11[%c1_250, %c0_251, %c0_252] : memref<2x1x32xf32, #tpu.memory_space<vmem>>, vector<1x1x32xf32>
    %450 = vector.shape_cast %449 : vector<1x1x32xf32> to vector<1x32xf32>
    %451 = arith.mulf %448, %448 : vector<32x32xf32>
    %cst_253 = arith.constant dense<0.000000e+00> : vector<32xf32>
    %452 = vector.multi_reduction <add>, %451, %cst_253 [1] : vector<32x32xf32> to vector<32xf32>
    %453 = vector.shape_cast %452 : vector<32xf32> to vector<32x1xf32>
    %cst_254 = arith.constant 3.200000e+01 : f32
    %454 = vector.broadcast %cst_254 : f32 to vector<32x1xf32>
    %455 = arith.divf %453, %454 : vector<32x1xf32>
    %cst_255 = arith.constant 9.99999997E-7 : f32
    %456 = vector.broadcast %cst_255 : f32 to vector<32x1xf32>
    %457 = arith.addf %455, %456 : vector<32x1xf32>
    %458 = math.rsqrt %457 : vector<32x1xf32>
    %459 = vector.broadcast %458 : vector<32x1xf32> to vector<32x32xf32>
    %460 = arith.mulf %448, %459 : vector<32x32xf32>
    %461 = vector.broadcast %450 : vector<1x32xf32> to vector<32x32xf32>
    %462 = arith.mulf %460, %461 : vector<32x32xf32>
    %c1_256 = arith.constant 1 : index
    %c0_257 = arith.constant 0 : index
    %c0_258 = arith.constant 0 : index
    %463 = vector.load %arg12[%c1_256, %c0_257, %c0_258] : memref<2x32x256xbf16, #tpu.memory_space<vmem>>, vector<1x32x256xbf16>
    %464 = vector.shape_cast %463 : vector<1x32x256xbf16> to vector<32x256xbf16>
    %465 = arith.truncf %462 : vector<32x32xf32> to vector<32x32xbf16>
    %cst_259 = arith.constant dense<0.000000e+00> : vector<32x256xf32>
    %466 = tpu.matmul %465, %464, %cst_259 {dimension_numbers = #tpu.dot_dimension_numbers<[1], [0], [0], [1], [0, 0, 1, 1], [], []>} : vector<32x32xbf16>, vector<32x256xbf16>, vector<32x256xf32> -> vector<32x256xf32>
    %467 = vector.extract_strided_slice %466 {offsets = [0, 0], sizes = [32, 64], strides = [1, 1]} : vector<32x256xf32> to vector<32x64xf32>
    %468 = vector.extract_strided_slice %466 {offsets = [0, 128], sizes = [32, 64], strides = [1, 1]} : vector<32x256xf32> to vector<32x64xf32>
    %469 = arith.negf %467 : vector<32x64xf32>
    %470 = math.exp %469 : vector<32x64xf32>
    %cst_260 = arith.constant 1.000000e+00 : f32
    %471 = vector.broadcast %cst_260 : f32 to vector<32x64xf32>
    %472 = arith.addf %471, %470 : vector<32x64xf32>
    %473 = arith.divf %471, %472 : vector<32x64xf32>
    %474 = arith.mulf %467, %473 : vector<32x64xf32>
    %475 = arith.mulf %474, %468 : vector<32x64xf32>
    %c1_261 = arith.constant 1 : index
    %c0_262 = arith.constant 0 : index
    %c0_263 = arith.constant 0 : index
    %476 = vector.load %arg13[%c1_261, %c0_262, %c0_263] : memref<2x64x32xbf16, #tpu.memory_space<vmem>>, vector<1x64x32xbf16>
    %477 = vector.shape_cast %476 : vector<1x64x32xbf16> to vector<64x32xbf16>
    %478 = arith.truncf %475 : vector<32x64xf32> to vector<32x64xbf16>
    %cst_264 = arith.constant dense<0.000000e+00> : vector<32x32xf32>
    %479 = tpu.matmul %478, %477, %cst_264 {dimension_numbers = #tpu.dot_dimension_numbers<[1], [0], [0], [1], [0, 0, 1, 1], [], []>} : vector<32x64xbf16>, vector<64x32xbf16>, vector<32x32xf32> -> vector<32x32xf32>
    %480 = arith.addf %448, %479 : vector<32x32xf32>
    %c0_265 = arith.constant 0 : index
    %c0_266 = arith.constant 0 : index
    %481 = vector.load %arg14[%c0_265, %c0_266] : memref<1x32xf32, #tpu.memory_space<vmem>>, vector<1x32xf32>
    %482 = arith.mulf %480, %480 : vector<32x32xf32>
    %cst_267 = arith.constant dense<0.000000e+00> : vector<32xf32>
    %483 = vector.multi_reduction <add>, %482, %cst_267 [1] : vector<32x32xf32> to vector<32xf32>
    %484 = vector.shape_cast %483 : vector<32xf32> to vector<32x1xf32>
    %cst_268 = arith.constant 3.200000e+01 : f32
    %485 = vector.broadcast %cst_268 : f32 to vector<32x1xf32>
    %486 = arith.divf %484, %485 : vector<32x1xf32>
    %cst_269 = arith.constant 9.99999997E-7 : f32
    %487 = vector.broadcast %cst_269 : f32 to vector<32x1xf32>
    %488 = arith.addf %486, %487 : vector<32x1xf32>
    %489 = math.rsqrt %488 : vector<32x1xf32>
    %490 = vector.broadcast %489 : vector<32x1xf32> to vector<32x32xf32>
    %491 = arith.mulf %480, %490 : vector<32x32xf32>
    %492 = vector.broadcast %481 : vector<1x32xf32> to vector<32x32xf32>
    %493 = arith.mulf %491, %492 : vector<32x32xf32>
    %494 = arith.truncf %493 : vector<32x32xf32> to vector<32x32xbf16>
    %c0_270 = arith.constant 0 : index
    %c0_271 = arith.constant 0 : index
    %495 = vector.load %arg15[%c0_270, %c0_271] : memref<128x32xbf16, #tpu.memory_space<vmem>>, vector<128x32xbf16>
    %cst_272 = arith.constant dense<0.000000e+00> : vector<32x128xf32>
    %496 = tpu.matmul %494, %495, %cst_272 {dimension_numbers = #tpu.dot_dimension_numbers<[1], [1], [0], [0], [0, 0, 1, 0], [], []>} : vector<32x32xbf16>, vector<128x32xbf16>, vector<32x128xf32> -> vector<32x128xf32>
    %c0_273 = arith.constant 0 : index
    %c0_274 = arith.constant 0 : index
    %497 = vector.load %arg16[%c0_273, %c0_274] : memref<32x128xf32, #tpu.memory_space<vmem>>, vector<32x128xf32>
    tpu.vector_store %arg16[%c0_273, %c0_274], %496 {strides = array<i32>} : memref<32x128xf32, #tpu.memory_space<vmem>>, vector<32x128xf32>,
    return
  }
}

</mosaic_0001>

<llo_original>
// kernel: blinky_forward.1
$region0: #{blinky_forward.1}
  #allocation0 [shape = 'u32[]', space=smem, size = 0x4, offset = 0x4, fixed_abs, tag = 'smem constant byte address 0x4 - core index']
  #allocation1 [shape = 'u32[144,128]{1,0:T(1,128)}', space=vmem, size = 0x12000, scoped, tag = 'internal scratch']
  %s0 = inlined_call_operand.vmem [shape: s32[32,1], index: 0, kind: input, shape index: {}]
  %s1 = inlined_call_operand.vmem [shape: f32[8,192], index: 1, kind: input, shape index: {}]
  %s2 = inlined_call_operand.vmem [shape: bf16[192,32], index: 2, kind: input, shape index: {}]
  %s3 = inlined_call_operand.vmem [shape: f32[4,32], index: 3, kind: input, shape index: {}]
  %s4 = inlined_call_operand.vmem [shape: f32[1,32], index: 4, kind: input, shape index: {}]
  %s5 = inlined_call_operand.vmem [shape: bf16[32,32], index: 5, kind: input, shape index: {}]
  %s6 = inlined_call_operand.vmem [shape: f32[2,1,32], index: 6, kind: input, shape index: {}]
  %s7 = inlined_call_operand.vmem [shape: bf16[2,4,32,8], index: 7, kind: input, shape index: {}]
  %s8 = inlined_call_operand.vmem [shape: bf16[2,4,32,8], index: 8, kind: input, shape index: {}]
  %s9 = inlined_call_operand.vmem [shape: bf16[2,4,32,8], index: 9, kind: input, shape index: {}]
  %s10 = inlined_call_operand.vmem [shape: bf16[2,4,8,32], index: 10, kind: input, shape index: {}]
  %s11 = inlined_call_operand.vmem [shape: f32[2,1,32], index: 11, kind: input, shape index: {}]
  %s12 = inlined_call_operand.vmem [shape: bf16[2,32,256], index: 12, kind: input, shape index: {}]
  %s13 = inlined_call_operand.vmem [shape: bf16[2,64,32], index: 13, kind: input, shape index: {}]
  %s14 = inlined_call_operand.vmem [shape: f32[1,32], index: 14, kind: input, shape index: {}]
  %s15 = inlined_call_operand.vmem [shape: bf16[128,32], index: 15, kind: input, shape index: {}]
  %s16 = inlined_call_operand.hbm [shape: f32[32,128], index: 16, kind: output, shape index: {}]
  %s17 = sld [smem:[#allocation0]]
  $region74: #{blinky_forward.1} parent=0
    _
  %s19 = ssub.s32 1, %s17
  %s20 = scalar_select 0, %s19, %s17
  $region1: #{blinky_forward.1} parent=0
    #allocation2 [shape = 'u8[16384]{0}', space=vmem, size = 0x4000, scoped, tag = 'output window, operand 0, single buffered']
    #allocation3 [shape = 's32[1]{0}', space=sflag, size = 0x4, scoped, tag = 'scoped memory for blinky_forward.1']
    %21 = vsyncpa [#allocation3], 0
    // Predicated region
    $region2: #{blinky_forward.1} parent=1 // pred_check
      _
    $region3: #{blinky_forward.1} parent=1 // pred_check_branch
      %23 = sbr.rel (0) target = $region5
    $region4: #{blinky_forward.1} parent=1 // pred_region
      _
    $region5: #{blinky_forward.1} parent=1 // pred_fallthru
      _
    // Predicated region
    $region6: #{blinky_forward.1} parent=1 // pred_check
      _
    $region7: #{blinky_forward.1} parent=1 // pred_check_branch
      %25 = sbr.rel (0) target = $region9
    $region8: #{blinky_forward.1} parent=1 // pred_region
      _
    $region9: #{blinky_forward.1} parent=1 // pred_fallthru
      _
    // Predicated region
    $region10: #{blinky_forward.1} parent=1 // pred_check
      _
    $region11: #{blinky_forward.1} parent=1 // pred_check_branch
      %27 = sbr.rel (0) target = $region13
    $region12: #{blinky_forward.1} parent=1 // pred_region
      _
    $region13: #{blinky_forward.1} parent=1 // pred_fallthru
      _
    // Predicated region
    $region14: #{blinky_forward.1} parent=1 // pred_check
      _
    $region15: #{blinky_forward.1} parent=1 // pred_check_branch
      %29 = sbr.rel (0) target = $region17
    $region16: #{blinky_forward.1} parent=1 // pred_region
      _
    $region17: #{blinky_forward.1} parent=1 // pred_fallthru
      _
    // Predicated region
    $region18: #{blinky_forward.1} parent=1 // pred_check
      _
    $region19: #{blinky_forward.1} parent=1 // pred_check_branch
      %31 = sbr.rel (0) target = $region21
    $region20: #{blinky_forward.1} parent=1 // pred_region
      _
    $region21: #{blinky_forward.1} parent=1 // pred_fallthru
      _
    // Predicated region
    $region22: #{blinky_forward.1} parent=1 // pred_check
      _
    $region23: #{blinky_forward.1} parent=1 // pred_check_branch
      %33 = sbr.rel (0) target = $region25
    $region24: #{blinky_forward.1} parent=1 // pred_region
      _
    $region25: #{blinky_forward.1} parent=1 // pred_fallthru
      _
    // Predicated region
    $region26: #{blinky_forward.1} parent=1 // pred_check
      _
    $region27: #{blinky_forward.1} parent=1 // pred_check_branch
      %35 = sbr.rel (0) target = $region29
    $region28: #{blinky_forward.1} parent=1 // pred_region
      _
    $region29: #{blinky_forward.1} parent=1 // pred_fallthru
      _
    // Predicated region
    $region30: #{blinky_forward.1} parent=1 // pred_check
      _
    $region31: #{blinky_forward.1} parent=1 // pred_check_branch
      %37 = sbr.rel (0) target = $region33
    $region32: #{blinky_forward.1} parent=1 // pred_region
      _
    $region33: #{blinky_forward.1} parent=1 // pred_fallthru
      _
    // Predicated region
    $region34: #{blinky_forward.1} parent=1 // pred_check
      _
    $region35: #{blinky_forward.1} parent=1 // pred_check_branch
      %39 = sbr.rel (0) target = $region37
    $region36: #{blinky_forward.1} parent=1 // pred_region
      _
    $region37: #{blinky_forward.1} parent=1 // pred_fallthru
      _
    // Predicated region
    $region38: #{blinky_forward.1} parent=1 // pred_check
      _
    $region39: #{blinky_forward.1} parent=1 // pred_check_branch
      %41 = sbr.rel (0) target = $region41
    $region40: #{blinky_forward.1} parent=1 // pred_region
      _
    $region41: #{blinky_forward.1} parent=1 // pred_fallthru
      _
    // Predicated region
    $region42: #{blinky_forward.1} parent=1 // pred_check
      _
    $region43: #{blinky_forward.1} parent=1 // pred_check_branch
      %43 = sbr.rel (0) target = $region45
    $region44: #{blinky_forward.1} parent=1 // pred_region
      _
    $region45: #{blinky_forward.1} parent=1 // pred_fallthru
      _
    // Predicated region
    $region46: #{blinky_forward.1} parent=1 // pred_check
      _
    $region47: #{blinky_forward.1} parent=1 // pred_check_branch
      %45 = sbr.rel (0) target = $region49
    $region48: #{blinky_forward.1} parent=1 // pred_region
      _
    $region49: #{blinky_forward.1} parent=1 // pred_fallthru
      _
    // Predicated region
    $region50: #{blinky_forward.1} parent=1 // pred_check
      _
    $region51: #{blinky_forward.1} parent=1 // pred_check_branch
      %47 = sbr.rel (0) target = $region53
    $region52: #{blinky_forward.1} parent=1 // pred_region
      _
    $region53: #{blinky_forward.1} parent=1 // pred_fallthru
      _
    // Predicated region
    $region54: #{blinky_forward.1} parent=1 // pred_check
      _
    $region55: #{blinky_forward.1} parent=1 // pred_check_branch
      %49 = sbr.rel (0) target = $region57
    $region56: #{blinky_forward.1} parent=1 // pred_region
      _
    $region57: #{blinky_forward.1} parent=1 // pred_fallthru
      _
    // Predicated region
    $region58: #{blinky_forward.1} parent=1 // pred_check
      _
    $region59: #{blinky_forward.1} parent=1 // pred_check_branch
      %51 = sbr.rel (0) target = $region61
    $region60: #{blinky_forward.1} parent=1 // pred_region
      _
    $region61: #{blinky_forward.1} parent=1 // pred_fallthru
      _
    // Predicated region
    $region62: #{blinky_forward.1} parent=1 // pred_check
      _
    $region63: #{blinky_forward.1} parent=1 // pred_check_branch
      %53 = sbr.rel (0) target = $region65
    $region64: #{blinky_forward.1} parent=1 // pred_region
      _
    $region65: #{blinky_forward.1} parent=1 // pred_fallthru
      _
    %v55 = vld [vmem:[%s0] sm:$0xff]
    %v56 = vld [vmem:[%s0 + $0x8] sm:$0xff]
    %v57 = vld [vmem:[%s0 + $0x10] sm:$0xff]
    %v58 = vld [vmem:[%s0 + $0x18] sm:$0xff]
    %v59 = vlaneseq
    %v60 = vand.u32 %v59, 127
    %61 = vset.pattern.permute.xlu0 0
    %62 = vperm.xlu0 %61, %v55
    %v63 = vpop.permute.xlu0 %62
    %64 = vset.pattern.permute.xlu0 0
    %65 = vperm.xlu0 %64, %v56
    %v66 = vpop.permute.xlu0 %65
    %67 = vset.pattern.permute.xlu0 0
    %68 = vperm.xlu0 %67, %v57
    %v69 = vpop.permute.xlu0 %68
    %70 = vset.pattern.permute.xlu0 0
    %71 = vperm.xlu0 %70, %v58
    %v72 = vpop.permute.xlu0 %71
    %vm73 = vcmp.eq.s32.totalorder %v63, %v60
    %vm74 = vcmp.eq.s32.totalorder %v66, %v60
    %vm75 = vcmp.eq.s32.totalorder %v69, %v60
    %vm76 = vcmp.eq.s32.totalorder %v72, %v60
    %v77 = vsel %vm73, 1, 0
    %v78 = vsel %vm74, 1, 0
    %v79 = vsel %vm75, 1, 0
    %v80 = vsel %vm76, 1, 0
    %v81 = vcvt.s32.f32 %v77
    %v82 = vcvt.s32.f32 %v78
    %v83 = vcvt.s32.f32 %v79
    %v84 = vcvt.s32.f32 %v80
    %v85 = vpack.c.bf16 %v82, %v81
    %v86 = vpack.c.bf16 %v84, %v83
    %v87 = vld [vmem:[%s15] sm:$0xf]
    %v88 = vld [vmem:[%s15 + $0x4] sm:$0xf]
    %v89 = vld [vmem:[%s15 + $0x8] sm:$0xf]
    %v90 = vld [vmem:[%s15 + $0xc] sm:$0xf]
    %v91 = vld [vmem:[%s15 + $0x10] sm:$0xf]
    %v92 = vld [vmem:[%s15 + $0x14] sm:$0xf]
    %v93 = vld [vmem:[%s15 + $0x18] sm:$0xf]
    %v94 = vld [vmem:[%s15 + $0x1c] sm:$0xf]
    %v95 = vld [vmem:[%s15 + $0x20] sm:$0xf]
    %v96 = vld [vmem:[%s15 + $0x24] sm:$0xf]
    %v97 = vld [vmem:[%s15 + $0x28] sm:$0xf]
    %v98 = vld [vmem:[%s15 + $0x2c] sm:$0xf]
    %v99 = vld [vmem:[%s15 + $0x30] sm:$0xf]
    %v100 = vld [vmem:[%s15 + $0x34] sm:$0xf]
    %v101 = vld [vmem:[%s15 + $0x38] sm:$0xf]
    %v102 = vld [vmem:[%s15 + $0x3c] sm:$0xf]
    %v119 = vunpack.c.l.b16 %v87
    %v120 = vunpack.c.l.b16 %v88
    %v121 = vunpack.c.l.b16 %v89
    %v122 = vunpack.c.l.b16 %v90
    %v123 = vunpack.c.l.b16 %v91
    %v124 = vunpack.c.l.b16 %v92
    %v125 = vunpack.c.l.b16 %v93
    %v126 = vunpack.c.l.b16 %v94
    %v127 = vunpack.c.l.b16 %v95
    %v128 = vunpack.c.l.b16 %v96
    %v129 = vunpack.c.l.b16 %v97
    %v130 = vunpack.c.l.b16 %v98
    %v131 = vunpack.c.l.b16 %v99
    %v132 = vunpack.c.l.b16 %v100
    %v133 = vunpack.c.l.b16 %v101
    %v134 = vunpack.c.l.b16 %v102
    %v135 = vpack.c.b16 %v120, %v119
    %v136 = vpack.c.b16 %v122, %v121
    %v137 = vpack.c.b16 %v124, %v123
    %v138 = vpack.c.b16 %v126, %v125
    %v139 = vpack.c.b16 %v128, %v127
    %v140 = vpack.c.b16 %v130, %v129
    %v141 = vpack.c.b16 %v132, %v131
    %v142 = vpack.c.b16 %v134, %v133
    %151 = vmatprep.subr.bf16.mxu0 0
    %152 = vmatpush1.bf16.msra.mxu0 %v135
    %153 = vmatprep.subr.bf16.mxu0 0
    %154 = vmatpush1.bf16.msra.mxu0 %v136
    %155 = vmatprep.subr.bf16.mxu0 0
    %156 = vmatpush1.bf16.msra.mxu0 %v137
    %157 = vmatprep.subr.bf16.mxu0 0
    %158 = vmatpush1.bf16.msra.mxu0 %v138
    %159 = vmatprep.subr.bf16.mxu0 0
    %160 = vmatpush1.bf16.msra.mxu0 %v139
    %161 = vmatprep.subr.bf16.mxu0 0
    %162 = vmatpush1.bf16.msra.mxu0 %v140
    %163 = vmatprep.subr.bf16.mxu0 0
    %164 = vmatpush1.bf16.msra.mxu0 %v141
    %165 = vmatprep.subr.bf16.mxu0 0
    %166 = vmatpush1.bf16.msra.mxu0 %v142
    %167 = vmatprep.subr.bf16.mxu0 0
    %168 = vmatpush1.bf16.msra.mxu0 0
    %169 = vmatprep.subr.bf16.mxu0 0
    %170 = vmatpush1.bf16.msra.mxu0 0
    %171 = vmatprep.subr.bf16.mxu0 0
    %172 = vmatpush1.bf16.msra.mxu0 0
    %173 = vmatprep.subr.bf16.mxu0 0
    %174 = vmatpush1.bf16.msra.mxu0 0
    %175 = vmatprep.subr.bf16.mxu0 0
    %176 = vmatpush1.bf16.msra.mxu0 0
    %177 = vmatprep.subr.bf16.mxu0 0
    %178 = vmatpush1.bf16.msra.mxu0 0
    %179 = vmatprep.subr.bf16.mxu0 0
    %180 = vmatpush1.bf16.msra.mxu0 0
    %181 = vmatprep.subr.bf16.mxu0 0
    %182 = vmatpush1.bf16.msra.mxu0 0
    %183 = vmatprep.mubr.bf16.mxu0 0
    %184 = vmatmul.mubr.bf16.gmra.mrb[0].mxu0 %v85
    %v185 = vpop.f32.mrb[0].mxu0
    %v186 = vadd.f32 0.0, %v185
    %v187 = vpop.f32.mrb[0].mxu0
    %v188 = vpop.f32.mrb[0].mxu0
    %v189 = vadd.f32 0.0, %v188
    %v190 = vpop.f32.mrb[0].mxu0
    %191 = vmatprep.mubr.bf16.mxu0 0
    %192 = vmatmul.mubr.bf16.gmra.mrb[0].mxu0 %v86
    %v193 = vpop.f32.mrb[0].mxu0
    %v194 = vadd.f32 0.0, %v193
    %v195 = vpop.f32.mrb[0].mxu0
    %v196 = vpop.f32.mrb[0].mxu0
    %v197 = vadd.f32 0.0, %v196
    %v198 = vpop.f32.mrb[0].mxu0
    %199 = vdwg.mxu0
    %v200 = vld [vmem:[%s1] sm:$0xff]
    %v201 = vld [vmem:[%s1 + $0x8] sm:$0xff]
    %v202 = vld [vmem:[%s2] sm:$0xf]
    %v203 = vld [vmem:[%s2 + $0x4] sm:$0xf]
    %v204 = vld [vmem:[%s2 + $0x8] sm:$0xf]
    %v205 = vld [vmem:[%s2 + $0xc] sm:$0xf]
    %v206 = vld [vmem:[%s2 + $0x10] sm:$0xf]
    %v207 = vld [vmem:[%s2 + $0x14] sm:$0xf]
    %v208 = vld [vmem:[%s2 + $0x18] sm:$0xf]
    %v209 = vld [vmem:[%s2 + $0x1c] sm:$0xf]
    %v210 = vld [vmem:[%s2 + $0x20] sm:$0xf]
    %v211 = vld [vmem:[%s2 + $0x24] sm:$0xf]
    %v212 = vld [vmem:[%s2 + $0x28] sm:$0xf]
    %v213 = vld [vmem:[%s2 + $0x2c] sm:$0xf]
    %v214 = vld [vmem:[%s2 + $0x30] sm:$0xf]
    %v215 = vld [vmem:[%s2 + $0x34] sm:$0xf]
    %v216 = vld [vmem:[%s2 + $0x38] sm:$0xf]
    %v217 = vld [vmem:[%s2 + $0x3c] sm:$0xf]
    %v218 = vld [vmem:[%s2 + $0x40] sm:$0xf]
    %v219 = vld [vmem:[%s2 + $0x44] sm:$0xf]
    %v220 = vld [vmem:[%s2 + $0x48] sm:$0xf]
    %v221 = vld [vmem:[%s2 + $0x4c] sm:$0xf]
    %v222 = vld [vmem:[%s2 + $0x50] sm:$0xf]
    %v223 = vld [vmem:[%s2 + $0x54] sm:$0xf]
    %v224 = vld [vmem:[%s2 + $0x58] sm:$0xf]
    %v225 = vld [vmem:[%s2 + $0x5c] sm:$0xf]
    %v226 = vpack.c.bf16 %v200, %v200
    %v227 = vpack.c.bf16 %v201, %v201
    %v252 = vunpack.c.l.b16 %v202
    %v253 = vunpack.c.l.b16 %v203
    %v254 = vunpack.c.l.b16 %v204
    %v255 = vunpack.c.l.b16 %v205
    %v256 = vunpack.c.l.b16 %v206
    %v257 = vunpack.c.l.b16 %v207
    %v258 = vunpack.c.l.b16 %v208
    %v259 = vunpack.c.l.b16 %v209
    %v260 = vunpack.c.l.b16 %v210
    %v261 = vunpack.c.l.b16 %v211
    %v262 = vunpack.c.l.b16 %v212
    %v263 = vunpack.c.l.b16 %v213
    %v264 = vunpack.c.l.b16 %v214
    %v265 = vunpack.c.l.b16 %v215
    %v266 = vunpack.c.l.b16 %v216
    %v267 = vunpack.c.l.b16 %v217
    %v268 = vunpack.c.l.b16 %v218
    %v269 = vunpack.c.l.b16 %v219
    %v270 = vunpack.c.l.b16 %v220
    %v271 = vunpack.c.l.b16 %v221
    %v272 = vunpack.c.l.b16 %v222
    %v273 = vunpack.c.l.b16 %v223
    %v274 = vunpack.c.l.b16 %v224
    %v275 = vunpack.c.l.b16 %v225
    %v276 = vpack.c.b16 %v253, %v252
    %v277 = vpack.c.b16 %v255, %v254
    %v278 = vpack.c.b16 %v257, %v256
    %v279 = vpack.c.b16 %v259, %v258
    %v280 = vpack.c.b16 %v261, %v260
    %v281 = vpack.c.b16 %v263, %v262
    %v282 = vpack.c.b16 %v265, %v264
    %v283 = vpack.c.b16 %v267, %v266
    %v284 = vpack.c.b16 %v269, %v268
    %v285 = vpack.c.b16 %v271, %v270
    %v286 = vpack.c.b16 %v273, %v272
    %v287 = vpack.c.b16 %v275, %v274
    %vm300 = vcmask 523264
    %v302 = vsel %vm300, %v227, 0
    %304 = vmatprep.subr.bf16.mxu0 0
    %305 = vmatpush1.bf16.msra.mxu0 %v276
    %306 = vmatprep.subr.bf16.mxu0 0
    %307 = vmatpush1.bf16.msra.mxu0 %v277
    %308 = vmatprep.subr.bf16.mxu0 0
    %309 = vmatpush1.bf16.msra.mxu0 %v278
    %310 = vmatprep.subr.bf16.mxu0 0
    %311 = vmatpush1.bf16.msra.mxu0 %v279
    %312 = vmatprep.subr.bf16.mxu0 0
    %313 = vmatpush1.bf16.msra.mxu0 %v280
    %314 = vmatprep.subr.bf16.mxu0 0
    %315 = vmatpush1.bf16.msra.mxu0 %v281
    %316 = vmatprep.subr.bf16.mxu0 0
    %317 = vmatpush1.bf16.msra.mxu0 %v282
    %318 = vmatprep.subr.bf16.mxu0 0
    %319 = vmatpush1.bf16.msra.mxu0 %v283
    %320 = vmatprep.subr.bf16.mxu0 0
    %321 = vmatpush1.bf16.msra.mxu0 %v284
    %322 = vmatprep.subr.bf16.mxu0 0
    %323 = vmatpush1.bf16.msra.mxu0 %v285
    %324 = vmatprep.subr.bf16.mxu0 0
    %325 = vmatpush1.bf16.msra.mxu0 %v286
    %326 = vmatprep.subr.bf16.mxu0 0
    %327 = vmatpush1.bf16.msra.mxu0 %v287
    %328 = vmatprep.subr.bf16.mxu0 0
    %329 = vmatpush1.bf16.msra.mxu0 0
    %330 = vmatprep.subr.bf16.mxu0 0
    %331 = vmatpush1.bf16.msra.mxu0 0
    %332 = vmatprep.subr.bf16.mxu0 0
    %333 = vmatpush1.bf16.msra.mxu0 0
    %334 = vmatprep.subr.bf16.mxu0 0
    %335 = vmatpush1.bf16.msra.mxu0 0
    %336 = vmatprep.mubr.bf16.mxu0 %v302
    %337 = vmatmul.mubr.bf16.gmra.mrb[0].mxu0 %v226
    %v338 = vpop.f32.mrb[0].mxu0
    %v339 = vadd.f32 0.0, %v338
    %v340 = vpop.f32.mrb[0].mxu0
    %v341 = vpop.f32.mrb[0].mxu0
    %v342 = vpop.f32.mrb[0].mxu0
    %343 = vdwg.mxu0
    %v345 = vcombine.high %v339, %v339
    %v347 = vld [vmem:[%s3] sm:$0xf]
    %v348 = vadd.f32 %v339, %v347
    %v349 = vadd.f32 %v345, %v347
    %v350 = vld [vmem:[%s4] sm:$0x1]
    %v351 = vmul.f32 %v348, %v348
    %v352 = vmul.f32 %v349, %v349
    %v355 = vcombine.low %v351, %v352
    %vm357 = vcmask 261120
    %v358 = vsel %vm357, %v355, 0.0
    %359 = vadd.xlane.f32.xlu0 %v358
    %v360 = vpop.xlane.xlu0 %359
    %v361 = vrcp.pop 32.0
    %v362 = vmul.f32 %v360, %v361
    %v363 = vadd.f32 %v362, 1e-06
    %v364 = vrsqrt.pop %v363
    %v367 = vunpack.c.l.s4 839922192
    %v368 = vunpack.c.0.s8 %v367
    %v369 = vlaneseq
    %v370 = vshrl.u32 %v369, 7
    %v371 = vsub.s32 %v368, %v370
    %v372 = vrot.slane %v364, %v371
    %v374 = vunpack.c.l.s4 1985246804
    %v375 = vunpack.c.0.s8 %v374
    %v376 = vlaneseq
    %v377 = vshrl.u32 %v376, 7
    %v378 = vsub.s32 %v375, %v377
    %v379 = vrot.slane %v364, %v378
    %v382 = vmul.f32 %v348, %v372
    %v383 = vmul.f32 %v349, %v379
    %v385 = vlaneseq
    %v386 = vshrl.u32 %v385, 7
    %v387 = vsub.s32 0, %v386
    %v388 = vrot.slane %v350, %v387
    %v390 = vcombine.high %v388, %v388
    %v392 = vmul.f32 %v382, %v388
    %v393 = vmul.f32 %v383, %v390
    %v394 = vld [vmem:[%s5] sm:$0xf]
    %v395 = vld [vmem:[%s5 + $0x4] sm:$0xf]
    %v396 = vld [vmem:[%s5 + $0x8] sm:$0xf]
    %v397 = vld [vmem:[%s5 + $0xc] sm:$0xf]
    %v400 = vcombine.low %v392, %v393
    %v402 = vpack.c.bf16 %v400, %v400
    %v407 = vunpack.c.l.b16 %v394
    %v408 = vunpack.c.l.b16 %v395
    %v409 = vunpack.c.l.b16 %v396
    %v410 = vunpack.c.l.b16 %v397
    %v411 = vpack.c.b16 %v408, %v407
    %v412 = vpack.c.b16 %v410, %v409
    %v416 = vsel %vm357, %v402, 0
    %418 = vmatprep.subr.bf16.mxu0 0
    %419 = vmatpush1.bf16.msra.mxu0 %v411
    %420 = vmatprep.subr.bf16.mxu0 0
    %421 = vmatpush1.bf16.msra.mxu0 %v412
    %422 = vmatprep.subr.bf16.mxu0 0
    %423 = vmatpush1.bf16.msra.mxu0 0
    %424 = vmatprep.subr.bf16.mxu0 0
    %425 = vmatpush1.bf16.msra.mxu0 0
    %426 = vmatprep.subr.bf16.mxu0 0
    %427 = vmatpush1.bf16.msra.mxu0 0
    %428 = vmatprep.subr.bf16.mxu0 0
    %429 = vmatpush1.bf16.msra.mxu0 0
    %430 = vmatprep.subr.bf16.mxu0 0
    %431 = vmatpush1.bf16.msra.mxu0 0
    %432 = vmatprep.subr.bf16.mxu0 0
    %433 = vmatpush1.bf16.msra.mxu0 0
    %434 = vmatprep.subr.bf16.mxu0 0
    %435 = vmatpush1.bf16.msra.mxu0 0
    %436 = vmatprep.subr.bf16.mxu0 0
    %437 = vmatpush1.bf16.msra.mxu0 0
    %438 = vmatprep.subr.bf16.mxu0 0
    %439 = vmatpush1.bf16.msra.mxu0 0
    %440 = vmatprep.subr.bf16.mxu0 0
    %441 = vmatpush1.bf16.msra.mxu0 0
    %442 = vmatprep.subr.bf16.mxu0 0
    %443 = vmatpush1.bf16.msra.mxu0 0
    %444 = vmatprep.subr.bf16.mxu0 0
    %445 = vmatpush1.bf16.msra.mxu0 0
    %446 = vmatprep.subr.bf16.mxu0 0
    %447 = vmatpush1.bf16.msra.mxu0 0
    %448 = vmatprep.subr.bf16.mxu0 0
    %449 = vmatpush1.bf16.msra.mxu0 0
    %450 = vmatprep.mubr.bf16.mxu0 0
    %451 = vmatmul.mubr.bf16.gmra.mrb[0].mxu0 %v416
    %v452 = vpop.f32.mrb[0].mxu0
    %v453 = vadd.f32 0.0, %v452
    %v454 = vpop.f32.mrb[0].mxu0
    %v455 = vpop.f32.mrb[0].mxu0
    %v456 = vpop.f32.mrb[0].mxu0
    %457 = vdwg.mxu0
    %v459 = vcombine.high %v453, %v453
    %v461 = vlaneseq
    %v462 = vshrl.u32 %v461, 7
    %v463 = vadd.s32 %v462, 8
    %vm464 = vcmp.eq.s32.totalorder %v55, 60
    %vm465 = vcmp.eq.s32.totalorder %v56, 60
    %vm466 = vcmp.eq.s32.totalorder %v57, 60
    %vm467 = vcmp.eq.s32.totalorder %v58, 60
    %v468 = vcvt.s32.f32 %v462
    %v469 = vcvt.s32.f32 %v463
    %v470 = vsel %vm464, %v468, 16.0
    %v471 = vsel %vm465, %v469, 16.0
    %v472 = vsel %vm466, %v468, 16.0
    %v473 = vsel %vm467, %v469, 16.0
    %vm474 = vcmask 7168
    %v475 = vsel %vm474, %v470, inf
    %v476 = vsel %vm474, %v471, inf
    %v477 = vmin.f32 %v475, %v476
    %v478 = vrot.slane %v477, 4
    %v479 = vmin.f32 %v477, %v478
    %v480 = vrot.slane %v479, 2
    %v481 = vmin.f32 %v479, %v480
    %v482 = vrot.slane %v481, 1
    %v483 = vmin.f32 %v481, %v482
    %v484 = vsel %vm474, %v472, inf
    %v485 = vsel %vm474, %v473, inf
    %v486 = vmin.f32 %v484, %v485
    %v487 = vrot.slane %v486, 4
    %v488 = vmin.f32 %v486, %v487
    %v489 = vrot.slane %v488, 2
    %v490 = vmin.f32 %v488, %v489
    %v491 = vrot.slane %v490, 1
    %v492 = vmin.f32 %v490, %v491
    %v493 = vadd.f32 %v483, 1.0
    %v494 = vadd.f32 %v492, 1.0
    %v495 = vcvt.f32.s32.to.zero.pseudo %v493
    %v496 = vcvt.f32.s32.to.zero.pseudo %v494
    %497 = vset.pattern.permute.xlu0 0
    %498 = vperm.xlu0 %497, %v495
    %v499 = vpop.permute.xlu0 %498
    %500 = vset.pattern.permute.xlu0 0
    %501 = vperm.xlu0 %500, %v496
    %v502 = vpop.permute.xlu0 %501
    %v503 = vadd.s32 %v499, %v60
    %v504 = vadd.s32 %v502, %v60
    %vm505 = vcmp.eq.s32.totalorder %v462, %v503
    %vm506 = vcmp.eq.s32.totalorder %v463, %v503
    %vm507 = vcmp.eq.s32.totalorder %v462, %v504
    %vm508 = vcmp.eq.s32.totalorder %v463, %v504
    %v509 = vsel %vm505, 1, 0
    %v510 = vsel %vm506, 1, 0
    %v511 = vsel %vm507, 1, 0
    %v512 = vsel %vm508, 1, 0
    %v513 = vcvt.s32.f32 %v509
    %v514 = vcvt.s32.f32 %v510
    %v515 = vcvt.s32.f32 %v511
    %v516 = vcvt.s32.f32 %v512
    %v517 = vpack.c.bf16 %v514, %v513
    %v518 = vpack.c.bf16 %v516, %v515
    %v519 = vpack.c.bf16 %v453, %v453
    %v520 = vpack.c.bf16 %v459, %v459
    %vm521 = vcmask 31744
    %v523 = vsel %vm521, %v517, 0
    %vm525 = vcmask 1041408
    %v527 = vsel %vm525, %v519, 0
    %529 = vmatprep.subr.bf16.mxu0 0
    %530 = vmatpush1.bf16.msra.mxu0 %v527
    %531 = vmatprep.subr.bf16.mxu0 0
    %532 = vmatpush1.bf16.msra.mxu0 0
    %533 = vmatprep.subr.bf16.mxu0 0
    %534 = vmatpush1.bf16.msra.mxu0 0
    %535 = vmatprep.subr.bf16.mxu0 0
    %536 = vmatpush1.bf16.msra.mxu0 0
    %537 = vmatprep.subr.bf16.mxu0 0
    %538 = vmatpush1.bf16.msra.mxu0 0
    %539 = vmatprep.subr.bf16.mxu0 0
    %540 = vmatpush1.bf16.msra.mxu0 0
    %541 = vmatprep.subr.bf16.mxu0 0
    %542 = vmatpush1.bf16.msra.mxu0 0
    %543 = vmatprep.subr.bf16.mxu0 0
    %544 = vmatpush1.bf16.msra.mxu0 0
    %545 = vmatprep.subr.bf16.mxu0 0
    %546 = vmatpush1.bf16.msra.mxu0 0
    %547 = vmatprep.subr.bf16.mxu0 0
    %548 = vmatpush1.bf16.msra.mxu0 0
    %549 = vmatprep.subr.bf16.mxu0 0
    %550 = vmatpush1.bf16.msra.mxu0 0
    %551 = vmatprep.subr.bf16.mxu0 0
    %552 = vmatpush1.bf16.msra.mxu0 0
    %553 = vmatprep.subr.bf16.mxu0 0
    %554 = vmatpush1.bf16.msra.mxu0 0
    %555 = vmatprep.subr.bf16.mxu0 0
    %556 = vmatpush1.bf16.msra.mxu0 0
    %557 = vmatprep.subr.bf16.mxu0 0
    %558 = vmatpush1.bf16.msra.mxu0 0
    %559 = vmatprep.subr.bf16.mxu0 0
    %560 = vmatpush1.bf16.msra.mxu0 0
    %561 = vmatprep.mubr.bf16.mxu0 0
    %562 = vmatmul.mubr.bf16.gmra.mrb[0].mxu0 %v523
    %v563 = vpop.f32.mrb[0].mxu0
    %v564 = vadd.f32 0.0, %v563
    %v565 = vpop.f32.mrb[0].mxu0
    %v566 = vpop.f32.mrb[0].mxu0
    %v567 = vadd.f32 0.0, %v566
    %v568 = vpop.f32.mrb[0].mxu0
    %569 = vdwg.mxu0
    %v571 = vsel %vm521, %v518, 0
    %v574 = vsel %vm525, %v520, 0
    %576 = vmatprep.subr.bf16.mxu0 0
    %577 = vmatpush1.bf16.msra.mxu0 %v574
    %578 = vmatprep.subr.bf16.mxu0 0
    %579 = vmatpush1.bf16.msra.mxu0 0
    %580 = vmatprep.subr.bf16.mxu0 0
    %581 = vmatpush1.bf16.msra.mxu0 0
    %582 = vmatprep.subr.bf16.mxu0 0
    %583 = vmatpush1.bf16.msra.mxu0 0
    %584 = vmatprep.subr.bf16.mxu0 0
    %585 = vmatpush1.bf16.msra.mxu0 0
    %586 = vmatprep.subr.bf16.mxu0 0
    %587 = vmatpush1.bf16.msra.mxu0 0
    %588 = vmatprep.subr.bf16.mxu0 0
    %589 = vmatpush1.bf16.msra.mxu0 0
    %590 = vmatprep.subr.bf16.mxu0 0
    %591 = vmatpush1.bf16.msra.mxu0 0
    %592 = vmatprep.subr.bf16.mxu0 0
    %593 = vmatpush1.bf16.msra.mxu0 0
    %594 = vmatprep.subr.bf16.mxu0 0
    %595 = vmatpush1.bf16.msra.mxu0 0
    %596 = vmatprep.subr.bf16.mxu0 0
    %597 = vmatpush1.bf16.msra.mxu0 0
    %598 = vmatprep.subr.bf16.mxu0 0
    %599 = vmatpush1.bf16.msra.mxu0 0
    %600 = vmatprep.subr.bf16.mxu0 0
    %601 = vmatpush1.bf16.msra.mxu0 0
    %602 = vmatprep.subr.bf16.mxu0 0
    %603 = vmatpush1.bf16.msra.mxu0 0
    %604 = vmatprep.subr.bf16.mxu0 0
    %605 = vmatpush1.bf16.msra.mxu0 0
    %606 = vmatprep.subr.bf16.mxu0 0
    %607 = vmatpush1.bf16.msra.mxu0 0
    %608 = vmatprep.mubr.bf16.mxu0 0
    %609 = vmatmul.mubr.bf16.gmra.mrb[0].mxu0 %v571
    %v610 = vpop.f32.mrb[0].mxu0
    %v611 = vadd.f32 0.0, %v610
    %v612 = vpop.f32.mrb[0].mxu0
    %v613 = vpop.f32.mrb[0].mxu0
    %v614 = vadd.f32 0.0, %v613
    %v615 = vpop.f32.mrb[0].mxu0
    %616 = vdwg.mxu0
    %v617 = vsel %vm521, %v513, 0.0
    %618 = vadd.xlane.f32.xlu0 %v617
    %v619 = vpop.xlane.xlu0 %618
    %v620 = vsel %vm521, %v514, 0.0
    %621 = vadd.xlane.f32.xlu0 %v620
    %v622 = vpop.xlane.xlu0 %621
    %v623 = vsel %vm521, %v515, 0.0
    %624 = vadd.xlane.f32.xlu0 %v623
    %v625 = vpop.xlane.xlu0 %624
    %v626 = vsel %vm521, %v516, 0.0
    %627 = vadd.xlane.f32.xlu0 %v626
    %v628 = vpop.xlane.xlu0 %627
    %vm629 = vcmp.gt.f32.partialorder %v619, 0.0
    %vm630 = vcmp.gt.f32.partialorder %v622, 0.0
    %vm631 = vcmp.gt.f32.partialorder %v625, 0.0
    %vm632 = vcmp.gt.f32.partialorder %v628, 0.0
    %v633 = vsel %vm629, 1, 0
    %v634 = vsel %vm630, 1, 0
    %v635 = vsel %vm631, 1, 0
    %v636 = vsel %vm632, 1, 0
    %vm637 = vcmp.eq.s32.totalorder %v633, 1
    %vm638 = vcmp.eq.s32.totalorder %v634, 1
    %vm639 = vcmp.eq.s32.totalorder %v635, 1
    %vm640 = vcmp.eq.s32.totalorder %v636, 1
    %v641 = vsel %vm637, %v564, %v186
    %v642 = vsel %vm638, %v567, %v189
    %v643 = vsel %vm639, %v611, %v194
    %v644 = vsel %vm640, %v614, %v197
    %vm645 = vcmp.le.s32.totalorder %v60, %v462
    %vm646 = vcmp.le.s32.totalorder %v60, %v463
    %v647 = vsel %vm645, 0.0, -1e+30
    %v648 = vsel %vm646, 0.0, -1e+30
    %v649 = vld [vmem:[%s6] sm:$0x1]
    %v650 = vmul.f32 %v641, %v641
    %v651 = vmul.f32 %v642, %v642
    %v652 = vmul.f32 %v643, %v643
    %v653 = vmul.f32 %v644, %v644
    %v654 = vsel %vm357, %v650, 0.0
    %655 = vadd.xlane.f32.xlu0 %v654
    %v656 = vpop.xlane.xlu0 %655
    %v657 = vsel %vm357, %v651, 0.0
    %658 = vadd.xlane.f32.xlu0 %v657
    %v659 = vpop.xlane.xlu0 %658
    %v660 = vsel %vm357, %v652, 0.0
    %661 = vadd.xlane.f32.xlu0 %v660
    %v662 = vpop.xlane.xlu0 %661
    %v663 = vsel %vm357, %v653, 0.0
    %664 = vadd.xlane.f32.xlu0 %v663
    %v665 = vpop.xlane.xlu0 %664
    %v666 = vmul.f32 %v656, %v361
    %v667 = vmul.f32 %v659, %v361
    %v668 = vmul.f32 %v662, %v361
    %v669 = vmul.f32 %v665, %v361
    %v670 = vadd.f32 %v666, 1e-06
    %v671 = vadd.f32 %v667, 1e-06
    %v672 = vadd.f32 %v668, 1e-06
    %v673 = vadd.f32 %v669, 1e-06
    %v674 = vrsqrt.pop %v670
    %v675 = vrsqrt.pop %v671
    %v676 = vrsqrt.pop %v672
    %v677 = vrsqrt.pop %v673
    %v678 = vmul.f32 %v641, %v674
    %v679 = vmul.f32 %v642, %v675
    %v680 = vmul.f32 %v643, %v676
    %v681 = vmul.f32 %v644, %v677
    %v683 = vlaneseq
    %v684 = vshrl.u32 %v683, 7
    %v685 = vsub.s32 0, %v684
    %v686 = vrot.slane %v649, %v685
    %v688 = vmul.f32 %v678, %v686
    %v689 = vmul.f32 %v679, %v686
    %v690 = vmul.f32 %v680, %v686
    %v691 = vmul.f32 %v681, %v686
    %v692 = vpack.c.bf16 %v689, %v688
    %v693 = vpack.c.bf16 %v691, %v690
    %v694 = vld [vmem:[%s7] sm:$0xf]
    %v695 = vld [vmem:[%s7 + $0x4] sm:$0xf]
    %v696 = vld [vmem:[%s7 + $0x8] sm:$0xf]
    %v697 = vld [vmem:[%s7 + $0xc] sm:$0xf]
    %v702 = vunpack.c.l.b16 %v694
    %v703 = vunpack.c.l.b16 %v695
    %v704 = vunpack.c.l.b16 %v696
    %v705 = vunpack.c.l.b16 %v697
    %v706 = vpack.c.b16 %v703, %v702
    %v707 = vpack.c.b16 %v705, %v704
    %v711 = vsel %vm357, %v692, 0
    %v714 = vsel %vm357, %v693, 0
    %716 = vmatprep.subr.bf16.mxu0 0
    %717 = vmatpush1.bf16.msra.mxu0 %v706
    %718 = vmatprep.subr.bf16.mxu0 0
    %719 = vmatpush1.bf16.msra.mxu0 %v707
    %720 = vmatprep.subr.bf16.mxu0 0
    %721 = vmatpush1.bf16.msra.mxu0 0
    %722 = vmatprep.subr.bf16.mxu0 0
    %723 = vmatpush1.bf16.msra.mxu0 0
    %724 = vmatprep.subr.bf16.mxu0 0
    %725 = vmatpush1.bf16.msra.mxu0 0
    %726 = vmatprep.subr.bf16.mxu0 0
    %727 = vmatpush1.bf16.msra.mxu0 0
    %728 = vmatprep.subr.bf16.mxu0 0
    %729 = vmatpush1.bf16.msra.mxu0 0
    %730 = vmatprep.subr.bf16.mxu0 0
    %731 = vmatpush1.bf16.msra.mxu0 0
    %732 = vmatprep.subr.bf16.mxu0 0
    %733 = vmatpush1.bf16.msra.mxu0 0
    %734 = vmatprep.subr.bf16.mxu0 0
    %735 = vmatpush1.bf16.msra.mxu0 0
    %736 = vmatprep.subr.bf16.mxu0 0
    %737 = vmatpush1.bf16.msra.mxu0 0
    %738 = vmatprep.subr.bf16.mxu0 0
    %739 = vmatpush1.bf16.msra.mxu0 0
    %740 = vmatprep.subr.bf16.mxu0 0
    %741 = vmatpush1.bf16.msra.mxu0 0
    %742 = vmatprep.subr.bf16.mxu0 0
    %743 = vmatpush1.bf16.msra.mxu0 0
    %744 = vmatprep.subr.bf16.mxu0 0
    %745 = vmatpush1.bf16.msra.mxu0 0
    %746 = vmatprep.subr.bf16.mxu0 0
    %747 = vmatpush1.bf16.msra.mxu0 0
    %748 = vmatprep.mubr.bf16.mxu0 0
    %749 = vmatmul.mubr.bf16.gmra.mrb[0].mxu0 %v711
    %v750 = vpop.f32.mrb[0].mxu0
    %v751 = vadd.f32 0.0, %v750
    %v752 = vpop.f32.mrb[0].mxu0
    %v753 = vpop.f32.mrb[0].mxu0
    %v754 = vadd.f32 0.0, %v753
    %v755 = vpop.f32.mrb[0].mxu0
    %756 = vmatprep.mubr.bf16.mxu0 0
    %757 = vmatmul.mubr.bf16.gmra.mrb[0].mxu0 %v714
    %v758 = vpop.f32.mrb[0].mxu0
    %v759 = vadd.f32 0.0, %v758
    %v760 = vpop.f32.mrb[0].mxu0
    %v761 = vpop.f32.mrb[0].mxu0
    %v762 = vadd.f32 0.0, %v761
    %v763 = vpop.f32.mrb[0].mxu0
    %764 = vdwg.mxu0
    %v765 = vld [vmem:[%s8] sm:$0xf]
    %v766 = vld [vmem:[%s8 + $0x4] sm:$0xf]
    %v767 = vld [vmem:[%s8 + $0x8] sm:$0xf]
    %v768 = vld [vmem:[%s8 + $0xc] sm:$0xf]
    %v773 = vunpack.c.l.b16 %v765
    %v774 = vunpack.c.l.b16 %v766
    %v775 = vunpack.c.l.b16 %v767
    %v776 = vunpack.c.l.b16 %v768
    %v777 = vpack.c.b16 %v774, %v773
    %v778 = vpack.c.b16 %v776, %v775
    %781 = vmatprep.subr.bf16.mxu0 0
    %782 = vmatpush1.bf16.msra.mxu0 %v777
    %783 = vmatprep.subr.bf16.mxu0 0
    %784 = vmatpush1.bf16.msra.mxu0 %v778
    %785 = vmatprep.subr.bf16.mxu0 0
    %786 = vmatpush1.bf16.msra.mxu0 0
    %787 = vmatprep.subr.bf16.mxu0 0
    %788 = vmatpush1.bf16.msra.mxu0 0
    %789 = vmatprep.subr.bf16.mxu0 0
    %790 = vmatpush1.bf16.msra.mxu0 0
    %791 = vmatprep.subr.bf16.mxu0 0
    %792 = vmatpush1.bf16.msra.mxu0 0
    %793 = vmatprep.subr.bf16.mxu0 0
    %794 = vmatpush1.bf16.msra.mxu0 0
    %795 = vmatprep.subr.bf16.mxu0 0
    %796 = vmatpush1.bf16.msra.mxu0 0
    %797 = vmatprep.subr.bf16.mxu0 0
    %798 = vmatpush1.bf16.msra.mxu0 0
    %799 = vmatprep.subr.bf16.mxu0 0
    %800 = vmatpush1.bf16.msra.mxu0 0
    %801 = vmatprep.subr.bf16.mxu0 0
    %802 = vmatpush1.bf16.msra.mxu0 0
    %803 = vmatprep.subr.bf16.mxu0 0
    %804 = vmatpush1.bf16.msra.mxu0 0
    %805 = vmatprep.subr.bf16.mxu0 0
    %806 = vmatpush1.bf16.msra.mxu0 0
    %807 = vmatprep.subr.bf16.mxu0 0
    %808 = vmatpush1.bf16.msra.mxu0 0
    %809 = vmatprep.subr.bf16.mxu0 0
    %810 = vmatpush1.bf16.msra.mxu0 0
    %811 = vmatprep.subr.bf16.mxu0 0
    %812 = vmatpush1.bf16.msra.mxu0 0
    %813 = vmatprep.mubr.bf16.mxu0 0
    %814 = vmatmul.mubr.bf16.gmra.mrb[0].mxu0 %v711
    %v815 = vpop.f32.mrb[0].mxu0
    %v816 = vadd.f32 0.0, %v815
    %v817 = vpop.f32.mrb[0].mxu0
    %v818 = vpop.f32.mrb[0].mxu0
    %v819 = vadd.f32 0.0, %v818
    %v820 = vpop.f32.mrb[0].mxu0
    %821 = vmatprep.mubr.bf16.mxu0 0
    %822 = vmatmul.mubr.bf16.gmra.mrb[0].mxu0 %v714
    %v823 = vpop.f32.mrb[0].mxu0
    %v824 = vadd.f32 0.0, %v823
    %v825 = vpop.f32.mrb[0].mxu0
    %v826 = vpop.f32.mrb[0].mxu0
    %v827 = vadd.f32 0.0, %v826
    %v828 = vpop.f32.mrb[0].mxu0
    %829 = vdwg.mxu0
    %v830 = vld [vmem:[%s9] sm:$0xf]
    %v831 = vld [vmem:[%s9 + $0x4] sm:$0xf]
    %v832 = vld [vmem:[%s9 + $0x8] sm:$0xf]
    %v833 = vld [vmem:[%s9 + $0xc] sm:$0xf]
    %v838 = vunpack.c.l.b16 %v830
    %v839 = vunpack.c.l.b16 %v831
    %v840 = vunpack.c.l.b16 %v832
    %v841 = vunpack.c.l.b16 %v833
    %v842 = vpack.c.b16 %v839, %v838
    %v843 = vpack.c.b16 %v841, %v840
    %846 = vmatprep.subr.bf16.mxu0 0
    %847 = vmatpush1.bf16.msra.mxu0 %v842
    %848 = vmatprep.subr.bf16.mxu0 0
    %849 = vmatpush1.bf16.msra.mxu0 %v843
    %850 = vmatprep.subr.bf16.mxu0 0
    %851 = vmatpush1.bf16.msra.mxu0 0
    %852 = vmatprep.subr.bf16.mxu0 0
    %853 = vmatpush1.bf16.msra.mxu0 0
    %854 = vmatprep.subr.bf16.mxu0 0
    %855 = vmatpush1.bf16.msra.mxu0 0
    %856 = vmatprep.subr.bf16.mxu0 0
    %857 = vmatpush1.bf16.msra.mxu0 0
    %858 = vmatprep.subr.bf16.mxu0 0
    %859 = vmatpush1.bf16.msra.mxu0 0
    %860 = vmatprep.subr.bf16.mxu0 0
    %861 = vmatpush1.bf16.msra.mxu0 0
    %862 = vmatprep.subr.bf16.mxu0 0
    %863 = vmatpush1.bf16.msra.mxu0 0
    %864 = vmatprep.subr.bf16.mxu0 0
    %865 = vmatpush1.bf16.msra.mxu0 0
    %866 = vmatprep.subr.bf16.mxu0 0
    %867 = vmatpush1.bf16.msra.mxu0 0
    %868 = vmatprep.subr.bf16.mxu0 0
    %869 = vmatpush1.bf16.msra.mxu0 0
    %870 = vmatprep.subr.bf16.mxu0 0
    %871 = vmatpush1.bf16.msra.mxu0 0
    %872 = vmatprep.subr.bf16.mxu0 0
    %873 = vmatpush1.bf16.msra.mxu0 0
    %874 = vmatprep.subr.bf16.mxu0 0
    %875 = vmatpush1.bf16.msra.mxu0 0
    %876 = vmatprep.subr.bf16.mxu0 0
    %877 = vmatpush1.bf16.msra.mxu0 0
    %878 = vmatprep.mubr.bf16.mxu0 0
    %879 = vmatmul.mubr.bf16.gmra.mrb[0].mxu0 %v711
    %v880 = vpop.f32.mrb[0].mxu0
    %v881 = vadd.f32 0.0, %v880
    %v882 = vpop.f32.mrb[0].mxu0
    %v883 = vpop.f32.mrb[0].mxu0
    %v884 = vadd.f32 0.0, %v883
    %v885 = vpop.f32.mrb[0].mxu0
    %886 = vmatprep.mubr.bf16.mxu0 0
    %887 = vmatmul.mubr.bf16.gmra.mrb[0].mxu0 %v714
    %v888 = vpop.f32.mrb[0].mxu0
    %v889 = vadd.f32 0.0, %v888
    %v890 = vpop.f32.mrb[0].mxu0
    %v891 = vpop.f32.mrb[0].mxu0
    %v892 = vadd.f32 0.0, %v891
    %v893 = vpop.f32.mrb[0].mxu0
    %894 = vdwg.mxu0
    %v895 = vpack.c.bf16 %v754, %v751
    %v896 = vpack.c.bf16 %v762, %v759
    %v897 = vpack.c.bf16 %v819, %v816
    %v898 = vpack.c.bf16 %v827, %v824
    %vm899 = vcmask 64512
    %v901 = vsel %vm899, %v895, 0
    %v904 = vsel %vm899, %v897, 0
    %906 = vmatprep.subr.bf16.mxu0 0
    %907 = vmatpush1.bf16.xpose.msra.mxu0 %v904
    %908 = vmatprep.subr.bf16.mxu0 0
    %909 = vmatpush1.bf16.xpose.msra.mxu0 0
    %910 = vmatprep.subr.bf16.mxu0 0
    %911 = vmatpush1.bf16.xpose.msra.mxu0 0
    %912 = vmatprep.subr.bf16.mxu0 0
    %913 = vmatpush1.bf16.xpose.msra.mxu0 0
    %914 = vmatprep.subr.bf16.mxu0 0
    %915 = vmatpush1.bf16.xpose.msra.mxu0 0
    %916 = vmatprep.subr.bf16.mxu0 0
    %917 = vmatpush1.bf16.xpose.msra.mxu0 0
    %918 = vmatprep.subr.bf16.mxu0 0
    %919 = vmatpush1.bf16.xpose.msra.mxu0 0
    %920 = vmatprep.subr.bf16.mxu0 0
    %921 = vmatpush1.bf16.xpose.msra.mxu0 0
    %922 = vmatprep.subr.bf16.mxu0 0
    %923 = vmatpush1.bf16.xpose.msra.mxu0 0
    %924 = vmatprep.subr.bf16.mxu0 0
    %925 = vmatpush1.bf16.xpose.msra.mxu0 0
    %926 = vmatprep.subr.bf16.mxu0 0
    %927 = vmatpush1.bf16.xpose.msra.mxu0 0
    %928 = vmatprep.subr.bf16.mxu0 0
    %929 = vmatpush1.bf16.xpose.msra.mxu0 0
    %930 = vmatprep.subr.bf16.mxu0 0
    %931 = vmatpush1.bf16.xpose.msra.mxu0 0
    %932 = vmatprep.subr.bf16.mxu0 0
    %933 = vmatpush1.bf16.xpose.msra.mxu0 0
    %934 = vmatprep.subr.bf16.mxu0 0
    %935 = vmatpush1.bf16.xpose.msra.mxu0 0
    %936 = vmatprep.subr.bf16.mxu0 0
    %937 = vmatpush1.bf16.xpose.msra.mxu0 0
    %938 = vmatprep.mubr.bf16.mxu0 0
    %939 = vmatmul.mubr.bf16.gmra.mrb[0].mxu0 %v901
    %v940 = vpop.f32.mrb[0].mxu0
    %v941 = vadd.f32 0.0, %v940
    %v942 = vpop.f32.mrb[0].mxu0
    %v943 = vpop.f32.mrb[0].mxu0
    %v944 = vadd.f32 0.0, %v943
    %v945 = vpop.f32.mrb[0].mxu0
    %946 = vdwg.mxu0
    %v948 = vsel %vm899, %v896, 0
    %v951 = vsel %vm899, %v898, 0
    %953 = vmatprep.subr.bf16.mxu0 0
    %954 = vmatpush1.bf16.xpose.msra.mxu0 %v951
    %955 = vmatprep.subr.bf16.mxu0 0
    %956 = vmatpush1.bf16.xpose.msra.mxu0 0
    %957 = vmatprep.subr.bf16.mxu0 0
    %958 = vmatpush1.bf16.xpose.msra.mxu0 0
    %959 = vmatprep.subr.bf16.mxu0 0
    %960 = vmatpush1.bf16.xpose.msra.mxu0 0
    %961 = vmatprep.subr.bf16.mxu0 0
    %962 = vmatpush1.bf16.xpose.msra.mxu0 0
    %963 = vmatprep.subr.bf16.mxu0 0
    %964 = vmatpush1.bf16.xpose.msra.mxu0 0
    %965 = vmatprep.subr.bf16.mxu0 0
    %966 = vmatpush1.bf16.xpose.msra.mxu0 0
    %967 = vmatprep.subr.bf16.mxu0 0
    %968 = vmatpush1.bf16.xpose.msra.mxu0 0
    %969 = vmatprep.subr.bf16.mxu0 0
    %970 = vmatpush1.bf16.xpose.msra.mxu0 0
    %971 = vmatprep.subr.bf16.mxu0 0
    %972 = vmatpush1.bf16.xpose.msra.mxu0 0
    %973 = vmatprep.subr.bf16.mxu0 0
    %974 = vmatpush1.bf16.xpose.msra.mxu0 0
    %975 = vmatprep.subr.bf16.mxu0 0
    %976 = vmatpush1.bf16.xpose.msra.mxu0 0
    %977 = vmatprep.subr.bf16.mxu0 0
    %978 = vmatpush1.bf16.xpose.msra.mxu0 0
    %979 = vmatprep.subr.bf16.mxu0 0
    %980 = vmatpush1.bf16.xpose.msra.mxu0 0
    %981 = vmatprep.subr.bf16.mxu0 0
    %982 = vmatpush1.bf16.xpose.msra.mxu0 0
    %983 = vmatprep.subr.bf16.mxu0 0
    %984 = vmatpush1.bf16.xpose.msra.mxu0 0
    %985 = vmatprep.mubr.bf16.mxu0 0
    %986 = vmatmul.mubr.bf16.gmra.mrb[0].mxu0 %v948
    %v987 = vpop.f32.mrb[0].mxu0
    %v988 = vadd.f32 0.0, %v987
    %v989 = vpop.f32.mrb[0].mxu0
    %v990 = vpop.f32.mrb[0].mxu0
    %v991 = vadd.f32 0.0, %v990
    %v992 = vpop.f32.mrb[0].mxu0
    %993 = vdwg.mxu0
    %v994 = vmul.f32 %v941, 0.35355338
    %v995 = vmul.f32 %v944, 0.35355338
    %v996 = vmul.f32 %v988, 0.35355338
    %v997 = vmul.f32 %v991, 0.35355338
    %v998 = vadd.f32 %v994, %v647
    %v999 = vadd.f32 %v995, %v648
    %v1000 = vadd.f32 %v996, %v647
    %v1001 = vadd.f32 %v997, %v648
    %vm1002 = vcmask 130048
    %v1003 = vsel %vm1002, %v998, -inf
    %1004 = vmax.xlane.f32.xlu0 %v1003
    %v1005 = vpop.xlane.xlu0 %1004
    %v1006 = vsel %vm1002, %v999, -inf
    %1007 = vmax.xlane.f32.xlu0 %v1006
    %v1008 = vpop.xlane.xlu0 %1007
    %v1009 = vsel %vm1002, %v1000, -inf
    %1010 = vmax.xlane.f32.xlu0 %v1009
    %v1011 = vpop.xlane.xlu0 %1010
    %v1012 = vsel %vm1002, %v1001, -inf
    %1013 = vmax.xlane.f32.xlu0 %v1012
    %v1014 = vpop.xlane.xlu0 %1013
    %v1015 = vsub.f32 %v998, %v1005
    %v1016 = vsub.f32 %v999, %v1008
    %v1017 = vsub.f32 %v1000, %v1011
    %v1018 = vsub.f32 %v1001, %v1014
    %v1019 = vmul.f32 %v1015, 1.442695
    %v1020 = vpow.pop %v1019
    %v1021 = vmul.f32 %v1016, 1.442695
    %v1022 = vpow.pop %v1021
    %v1023 = vmul.f32 %v1017, 1.442695
    %v1024 = vpow.pop %v1023
    %v1025 = vmul.f32 %v1018, 1.442695
    %v1026 = vpow.pop %v1025
    %v1027 = vsel %vm1002, %v1020, 0.0
    %1028 = vadd.xlane.f32.xlu0 %v1027
    %v1029 = vpop.xlane.xlu0 %1028
    %v1030 = vsel %vm1002, %v1022, 0.0
    %1031 = vadd.xlane.f32.xlu0 %v1030
    %v1032 = vpop.xlane.xlu0 %1031
    %v1033 = vsel %vm1002, %v1024, 0.0
    %1034 = vadd.xlane.f32.xlu0 %v1033
    %v1035 = vpop.xlane.xlu0 %1034
    %v1036 = vsel %vm1002, %v1026, 0.0
    %1037 = vadd.xlane.f32.xlu0 %v1036
    %v1038 = vpop.xlane.xlu0 %1037
    %v1039 = vrcp.pop %v1029
    %v1040 = vrcp.pop %v1032
    %v1041 = vrcp.pop %v1035
    %v1042 = vrcp.pop %v1038
    %v1043 = vmul.f32 %v1020, %v1039
    %v1044 = vmul.f32 %v1022, %v1040
    %v1045 = vmul.f32 %v1024, %v1041
    %v1046 = vmul.f32 %v1026, %v1042
    %v1047 = vpack.c.bf16 %v1044, %v1043
    %v1048 = vpack.c.bf16 %v1046, %v1045
    %v1049 = vpack.c.bf16 %v884, %v881
    %v1050 = vpack.c.bf16 %v892, %v889
    %v1052 = vsel %vm1002, %v1047, 0
    %1054 = vmatprep.subr.bf16.mxu0 0
    %1055 = vmatpush1.bf16.msra.mxu0 %v1049
    %1056 = vmatprep.subr.bf16.mxu0 0
    %1057 = vmatpush1.bf16.msra.mxu0 0
    %1058 = vmatprep.subr.bf16.mxu0 0
    %1059 = vmatpush1.bf16.msra.mxu0 0
    %1060 = vmatprep.subr.bf16.mxu0 0
    %1061 = vmatpush1.bf16.msra.mxu0 0
    %1062 = vmatprep.subr.bf16.mxu0 0
    %1063 = vmatpush1.bf16.msra.mxu0 0
    %1064 = vmatprep.subr.bf16.mxu0 0
    %1065 = vmatpush1.bf16.msra.mxu0 0
    %1066 = vmatprep.subr.bf16.mxu0 0
    %1067 = vmatpush1.bf16.msra.mxu0 0
    %1068 = vmatprep.subr.bf16.mxu0 0
    %1069 = vmatpush1.bf16.msra.mxu0 0
    %1070 = vmatprep.subr.bf16.mxu0 0
    %1071 = vmatpush1.bf16.msra.mxu0 0
    %1072 = vmatprep.subr.bf16.mxu0 0
    %1073 = vmatpush1.bf16.msra.mxu0 0
    %1074 = vmatprep.subr.bf16.mxu0 0
    %1075 = vmatpush1.bf16.msra.mxu0 0
    %1076 = vmatprep.subr.bf16.mxu0 0
    %1077 = vmatpush1.bf16.msra.mxu0 0
    %1078 = vmatprep.subr.bf16.mxu0 0
    %1079 = vmatpush1.bf16.msra.mxu0 0
    %1080 = vmatprep.subr.bf16.mxu0 0
    %1081 = vmatpush1.bf16.msra.mxu0 0
    %1082 = vmatprep.subr.bf16.mxu0 0
    %1083 = vmatpush1.bf16.msra.mxu0 0
    %1084 = vmatprep.subr.bf16.mxu0 0
    %1085 = vmatpush1.bf16.msra.mxu0 0
    %1086 = vmatprep.mubr.bf16.mxu0 0
    %1087 = vmatmul.mubr.bf16.gmra.mrb[0].mxu0 %v1052
    %v1088 = vpop.f32.mrb[0].mxu0
    %v1089 = vadd.f32 0.0, %v1088
    %v1090 = vpop.f32.mrb[0].mxu0
    %v1091 = vpop.f32.mrb[0].mxu0
    %v1092 = vadd.f32 0.0, %v1091
    %v1093 = vpop.f32.mrb[0].mxu0
    %1094 = vdwg.mxu0
    %v1096 = vsel %vm1002, %v1048, 0
    %1098 = vmatprep.subr.bf16.mxu0 0
    %1099 = vmatpush1.bf16.msra.mxu0 %v1050
    %1100 = vmatprep.subr.bf16.mxu0 0
    %1101 = vmatpush1.bf16.msra.mxu0 0
    %1102 = vmatprep.subr.bf16.mxu0 0
    %1103 = vmatpush1.bf16.msra.mxu0 0
    %1104 = vmatprep.subr.bf16.mxu0 0
    %1105 = vmatpush1.bf16.msra.mxu0 0
    %1106 = vmatprep.subr.bf16.mxu0 0
    %1107 = vmatpush1.bf16.msra.mxu0 0
    %1108 = vmatprep.subr.bf16.mxu0 0
    %1109 = vmatpush1.bf16.msra.mxu0 0
    %1110 = vmatprep.subr.bf16.mxu0 0
    %1111 = vmatpush1.bf16.msra.mxu0 0
    %1112 = vmatprep.subr.bf16.mxu0 0
    %1113 = vmatpush1.bf16.msra.mxu0 0
    %1114 = vmatprep.subr.bf16.mxu0 0
    %1115 = vmatpush1.bf16.msra.mxu0 0
    %1116 = vmatprep.subr.bf16.mxu0 0
    %1117 = vmatpush1.bf16.msra.mxu0 0
    %1118 = vmatprep.subr.bf16.mxu0 0
    %1119 = vmatpush1.bf16.msra.mxu0 0
    %1120 = vmatprep.subr.bf16.mxu0 0
    %1121 = vmatpush1.bf16.msra.mxu0 0
    %1122 = vmatprep.subr.bf16.mxu0 0
    %1123 = vmatpush1.bf16.msra.mxu0 0
    %1124 = vmatprep.subr.bf16.mxu0 0
    %1125 = vmatpush1.bf16.msra.mxu0 0
    %1126 = vmatprep.subr.bf16.mxu0 0
    %1127 = vmatpush1.bf16.msra.mxu0 0
    %1128 = vmatprep.subr.bf16.mxu0 0
    %1129 = vmatpush1.bf16.msra.mxu0 0
    %1130 = vmatprep.mubr.bf16.mxu0 0
    %1131 = vmatmul.mubr.bf16.gmra.mrb[0].mxu0 %v1096
    %v1132 = vpop.f32.mrb[0].mxu0
    %v1133 = vadd.f32 0.0, %v1132
    %v1134 = vpop.f32.mrb[0].mxu0
    %v1135 = vpop.f32.mrb[0].mxu0
    %v1136 = vadd.f32 0.0, %v1135
    %v1137 = vpop.f32.mrb[0].mxu0
    %1138 = vdwg.mxu0
    %v1139 = vld [vmem:[%s10] sm:$0xf]
    %v1140 = vpack.c.bf16 %v1092, %v1089
    %v1141 = vpack.c.bf16 %v1136, %v1133
    %s1142 = scalar_lea.vmem %s7, 16
    %v1143 = vld [vmem:[%s1142] sm:$0xf]
    %v1144 = vld [vmem:[%s1142 + $0x4] sm:$0xf]
    %v1145 = vld [vmem:[%s1142 + $0x8] sm:$0xf]
    %v1146 = vld [vmem:[%s1142 + $0xc] sm:$0xf]
    %v1151 = vunpack.c.l.b16 %v1143
    %v1152 = vunpack.c.l.b16 %v1144
    %v1153 = vunpack.c.l.b16 %v1145
    %v1154 = vunpack.c.l.b16 %v1146
    %v1155 = vpack.c.b16 %v1152, %v1151
    %v1156 = vpack.c.b16 %v1154, %v1153
    %1159 = vmatprep.subr.bf16.mxu0 0
    %1160 = vmatpush1.bf16.msra.mxu0 %v1155
    %1161 = vmatprep.subr.bf16.mxu0 0
    %1162 = vmatpush1.bf16.msra.mxu0 %v1156
    %1163 = vmatprep.subr.bf16.mxu0 0
    %1164 = vmatpush1.bf16.msra.mxu0 0
    %1165 = vmatprep.subr.bf16.mxu0 0
    %1166 = vmatpush1.bf16.msra.mxu0 0
    %1167 = vmatprep.subr.bf16.mxu0 0
    %1168 = vmatpush1.bf16.msra.mxu0 0
    %1169 = vmatprep.subr.bf16.mxu0 0
    %1170 = vmatpush1.bf16.msra.mxu0 0
    %1171 = vmatprep.subr.bf16.mxu0 0
    %1172 = vmatpush1.bf16.msra.mxu0 0
    %1173 = vmatprep.subr.bf16.mxu0 0
    %1174 = vmatpush1.bf16.msra.mxu0 0
    %1175 = vmatprep.subr.bf16.mxu0 0
    %1176 = vmatpush1.bf16.msra.mxu0 0
    %1177 = vmatprep.subr.bf16.mxu0 0
    %1178 = vmatpush1.bf16.msra.mxu0 0
    %1179 = vmatprep.subr.bf16.mxu0 0
    %1180 = vmatpush1.bf16.msra.mxu0 0
    %1181 = vmatprep.subr.bf16.mxu0 0
    %1182 = vmatpush1.bf16.msra.mxu0 0
    %1183 = vmatprep.subr.bf16.mxu0 0
    %1184 = vmatpush1.bf16.msra.mxu0 0
    %1185 = vmatprep.subr.bf16.mxu0 0
    %1186 = vmatpush1.bf16.msra.mxu0 0
    %1187 = vmatprep.subr.bf16.mxu0 0
    %1188 = vmatpush1.bf16.msra.mxu0 0
    %1189 = vmatprep.subr.bf16.mxu0 0
    %1190 = vmatpush1.bf16.msra.mxu0 0
    %1191 = vmatprep.mubr.bf16.mxu0 0
    %1192 = vmatmul.mubr.bf16.gmra.mrb[0].mxu0 %v711
    %v1193 = vpop.f32.mrb[0].mxu0
    %v1194 = vadd.f32 0.0, %v1193
    %v1195 = vpop.f32.mrb[0].mxu0
    %v1196 = vpop.f32.mrb[0].mxu0
    %v1197 = vadd.f32 0.0, %v1196
    %v1198 = vpop.f32.mrb[0].mxu0
    %1199 = vmatprep.mubr.bf16.mxu0 0
    %1200 = vmatmul.mubr.bf16.gmra.mrb[0].mxu0 %v714
    %v1201 = vpop.f32.mrb[0].mxu0
    %v1202 = vadd.f32 0.0, %v1201
    %v1203 = vpop.f32.mrb[0].mxu0
    %v1204 = vpop.f32.mrb[0].mxu0
    %v1205 = vadd.f32 0.0, %v1204
    %v1206 = vpop.f32.mrb[0].mxu0
    %1207 = vdwg.mxu0
    %s1208 = scalar_lea.vmem %s8, 16
    %v1209 = vld [vmem:[%s1208] sm:$0xf]
    %v1210 = vld [vmem:[%s1208 + $0x4] sm:$0xf]
    %v1211 = vld [vmem:[%s1208 + $0x8] sm:$0xf]
    %v1212 = vld [vmem:[%s1208 + $0xc] sm:$0xf]
    %v1217 = vunpack.c.l.b16 %v1209
    %v1218 = vunpack.c.l.b16 %v1210
    %v1219 = vunpack.c.l.b16 %v1211
    %v1220 = vunpack.c.l.b16 %v1212
    %v1221 = vpack.c.b16 %v1218, %v1217
    %v1222 = vpack.c.b16 %v1220, %v1219
    %1225 = vmatprep.subr.bf16.mxu0 0
    %1226 = vmatpush1.bf16.msra.mxu0 %v1221
    %1227 = vmatprep.subr.bf16.mxu0 0
    %1228 = vmatpush1.bf16.msra.mxu0 %v1222
    %1229 = vmatprep.subr.bf16.mxu0 0
    %1230 = vmatpush1.bf16.msra.mxu0 0
    %1231 = vmatprep.subr.bf16.mxu0 0
    %1232 = vmatpush1.bf16.msra.mxu0 0
    %1233 = vmatprep.subr.bf16.mxu0 0
    %1234 = vmatpush1.bf16.msra.mxu0 0
    %1235 = vmatprep.subr.bf16.mxu0 0
    %1236 = vmatpush1.bf16.msra.mxu0 0
    %1237 = vmatprep.subr.bf16.mxu0 0
    %1238 = vmatpush1.bf16.msra.mxu0 0
    %1239 = vmatprep.subr.bf16.mxu0 0
    %1240 = vmatpush1.bf16.msra.mxu0 0
    %1241 = vmatprep.subr.bf16.mxu0 0
    %1242 = vmatpush1.bf16.msra.mxu0 0
    %1243 = vmatprep.subr.bf16.mxu0 0
    %1244 = vmatpush1.bf16.msra.mxu0 0
    %1245 = vmatprep.subr.bf16.mxu0 0
    %1246 = vmatpush1.bf16.msra.mxu0 0
    %1247 = vmatprep.subr.bf16.mxu0 0
    %1248 = vmatpush1.bf16.msra.mxu0 0
    %1249 = vmatprep.subr.bf16.mxu0 0
    %1250 = vmatpush1.bf16.msra.mxu0 0
    %1251 = vmatprep.subr.bf16.mxu0 0
    %1252 = vmatpush1.bf16.msra.mxu0 0
    %1253 = vmatprep.subr.bf16.mxu0 0
    %1254 = vmatpush1.bf16.msra.mxu0 0
    %1255 = vmatprep.subr.bf16.mxu0 0
    %1256 = vmatpush1.bf16.msra.mxu0 0
    %1257 = vmatprep.mubr.bf16.mxu0 0
    %1258 = vmatmul.mubr.bf16.gmra.mrb[0].mxu0 %v711
    %v1259 = vpop.f32.mrb[0].mxu0
    %v1260 = vadd.f32 0.0, %v1259
    %v1261 = vpop.f32.mrb[0].mxu0
    %v1262 = vpop.f32.mrb[0].mxu0
    %v1263 = vadd.f32 0.0, %v1262
    %v1264 = vpop.f32.mrb[0].mxu0
    %1265 = vmatprep.mubr.bf16.mxu0 0
    %1266 = vmatmul.mubr.bf16.gmra.mrb[0].mxu0 %v714
    %v1267 = vpop.f32.mrb[0].mxu0
    %v1268 = vadd.f32 0.0, %v1267
    %v1269 = vpop.f32.mrb[0].mxu0
    %v1270 = vpop.f32.mrb[0].mxu0
    %v1271 = vadd.f32 0.0, %v1270
    %v1272 = vpop.f32.mrb[0].mxu0
    %1273 = vdwg.mxu0
    %s1274 = scalar_lea.vmem %s9, 16
    %v1275 = vld [vmem:[%s1274] sm:$0xf]
    %v1276 = vld [vmem:[%s1274 + $0x4] sm:$0xf]
    %v1277 = vld [vmem:[%s1274 + $0x8] sm:$0xf]
    %v1278 = vld [vmem:[%s1274 + $0xc] sm:$0xf]
    %v1283 = vunpack.c.l.b16 %v1275
    %v1284 = vunpack.c.l.b16 %v1276
    %v1285 = vunpack.c.l.b16 %v1277
    %v1286 = vunpack.c.l.b16 %v1278
    %v1287 = vpack.c.b16 %v1284, %v1283
    %v1288 = vpack.c.b16 %v1286, %v1285
    %1291 = vmatprep.subr.bf16.mxu0 0
    %1292 = vmatpush1.bf16.msra.mxu0 %v1287
    %1293 = vmatprep.subr.bf16.mxu0 0
    %1294 = vmatpush1.bf16.msra.mxu0 %v1288
    %1295 = vmatprep.subr.bf16.mxu0 0
    %1296 = vmatpush1.bf16.msra.mxu0 0
    %1297 = vmatprep.subr.bf16.mxu0 0
    %1298 = vmatpush1.bf16.msra.mxu0 0
    %1299 = vmatprep.subr.bf16.mxu0 0
    %1300 = vmatpush1.bf16.msra.mxu0 0
    %1301 = vmatprep.subr.bf16.mxu0 0
    %1302 = vmatpush1.bf16.msra.mxu0 0
    %1303 = vmatprep.subr.bf16.mxu0 0
    %1304 = vmatpush1.bf16.msra.mxu0 0
    %1305 = vmatprep.subr.bf16.mxu0 0
    %1306 = vmatpush1.bf16.msra.mxu0 0
    %1307 = vmatprep.subr.bf16.mxu0 0
    %1308 = vmatpush1.bf16.msra.mxu0 0
    %1309 = vmatprep.subr.bf16.mxu0 0
    %1310 = vmatpush1.bf16.msra.mxu0 0
    %1311 = vmatprep.subr.bf16.mxu0 0
    %1312 = vmatpush1.bf16.msra.mxu0 0
    %1313 = vmatprep.subr.bf16.mxu0 0
    %1314 = vmatpush1.bf16.msra.mxu0 0
    %1315 = vmatprep.subr.bf16.mxu0 0
    %1316 = vmatpush1.bf16.msra.mxu0 0
    %1317 = vmatprep.subr.bf16.mxu0 0
    %1318 = vmatpush1.bf16.msra.mxu0 0
    %1319 = vmatprep.subr.bf16.mxu0 0
    %1320 = vmatpush1.bf16.msra.mxu0 0
    %1321 = vmatprep.subr.bf16.mxu0 0
    %1322 = vmatpush1.bf16.msra.mxu0 0
    %1323 = vmatprep.mubr.bf16.mxu0 0
    %1324 = vmatmul.mubr.bf16.gmra.mrb[0].mxu0 %v711
    %v1325 = vpop.f32.mrb[0].mxu0
    %v1326 = vadd.f32 0.0, %v1325
    %v1327 = vpop.f32.mrb[0].mxu0
    %v1328 = vpop.f32.mrb[0].mxu0
    %v1329 = vadd.f32 0.0, %v1328
    %v1330 = vpop.f32.mrb[0].mxu0
    %1331 = vmatprep.mubr.bf16.mxu0 0
    %1332 = vmatmul.mubr.bf16.gmra.mrb[0].mxu0 %v714
    %v1333 = vpop.f32.mrb[0].mxu0
    %v1334 = vadd.f32 0.0, %v1333
    %v1335 = vpop.f32.mrb[0].mxu0
    %v1336 = vpop.f32.mrb[0].mxu0
    %v1337 = vadd.f32 0.0, %v1336
    %v1338 = vpop.f32.mrb[0].mxu0
    %1339 = vdwg.mxu0
    %v1340 = vpack.c.bf16 %v1197, %v1194
    %v1341 = vpack.c.bf16 %v1205, %v1202
    %v1342 = vpack.c.bf16 %v1263, %v1260
    %v1343 = vpack.c.bf16 %v1271, %v1268
    %v1345 = vsel %vm899, %v1340, 0
    %v1348 = vsel %vm899, %v1342, 0
    %1350 = vmatprep.subr.bf16.mxu0 0
    %1351 = vmatpush1.bf16.xpose.msra.mxu0 %v1348
    %1352 = vmatprep.subr.bf16.mxu0 0
    %1353 = vmatpush1.bf16.xpose.msra.mxu0 0
    %1354 = vmatprep.subr.bf16.mxu0 0
    %1355 = vmatpush1.bf16.xpose.msra.mxu0 0
    %1356 = vmatprep.subr.bf16.mxu0 0
    %1357 = vmatpush1.bf16.xpose.msra.mxu0 0
    %1358 = vmatprep.subr.bf16.mxu0 0
    %1359 = vmatpush1.bf16.xpose.msra.mxu0 0
    %1360 = vmatprep.subr.bf16.mxu0 0
    %1361 = vmatpush1.bf16.xpose.msra.mxu0 0
    %1362 = vmatprep.subr.bf16.mxu0 0
    %1363 = vmatpush1.bf16.xpose.msra.mxu0 0
    %1364 = vmatprep.subr.bf16.mxu0 0
    %1365 = vmatpush1.bf16.xpose.msra.mxu0 0
    %1366 = vmatprep.subr.bf16.mxu0 0
    %1367 = vmatpush1.bf16.xpose.msra.mxu0 0
    %1368 = vmatprep.subr.bf16.mxu0 0
    %1369 = vmatpush1.bf16.xpose.msra.mxu0 0
    %1370 = vmatprep.subr.bf16.mxu0 0
    %1371 = vmatpush1.bf16.xpose.msra.mxu0 0
    %1372 = vmatprep.subr.bf16.mxu0 0
    %1373 = vmatpush1.bf16.xpose.msra.mxu0 0
    %1374 = vmatprep.subr.bf16.mxu0 0
    %1375 = vmatpush1.bf16.xpose.msra.mxu0 0
    %1376 = vmatprep.subr.bf16.mxu0 0
    %1377 = vmatpush1.bf16.xpose.msra.mxu0 0
    %1378 = vmatprep.subr.bf16.mxu0 0
    %1379 = vmatpush1.bf16.xpose.msra.mxu0 0
    %1380 = vmatprep.subr.bf16.mxu0 0
    %1381 = vmatpush1.bf16.xpose.msra.mxu0 0
    %1382 = vmatprep.mubr.bf16.mxu0 0
    %1383 = vmatmul.mubr.bf16.gmra.mrb[0].mxu0 %v1345
    %v1384 = vpop.f32.mrb[0].mxu0
    %v1385 = vadd.f32 0.0, %v1384
    %v1386 = vpop.f32.mrb[0].mxu0
    %v1387 = vpop.f32.mrb[0].mxu0
    %v1388 = vadd.f32 0.0, %v1387
    %v1389 = vpop.f32.mrb[0].mxu0
    %1390 = vdwg.mxu0
    %v1392 = vsel %vm899, %v1341, 0
    %v1395 = vsel %vm899, %v1343, 0
    %1397 = vmatprep.subr.bf16.mxu0 0
    %1398 = vmatpush1.bf16.xpose.msra.mxu0 %v1395
    %1399 = vmatprep.subr.bf16.mxu0 0
    %1400 = vmatpush1.bf16.xpose.msra.mxu0 0
    %1401 = vmatprep.subr.bf16.mxu0 0
    %1402 = vmatpush1.bf16.xpose.msra.mxu0 0
    %1403 = vmatprep.subr.bf16.mxu0 0
    %1404 = vmatpush1.bf16.xpose.msra.mxu0 0
    %1405 = vmatprep.subr.bf16.mxu0 0
    %1406 = vmatpush1.bf16.xpose.msra.mxu0 0
    %1407 = vmatprep.subr.bf16.mxu0 0
    %1408 = vmatpush1.bf16.xpose.msra.mxu0 0
    %1409 = vmatprep.subr.bf16.mxu0 0
    %1410 = vmatpush1.bf16.xpose.msra.mxu0 0
    %1411 = vmatprep.subr.bf16.mxu0 0
    %1412 = vmatpush1.bf16.xpose.msra.mxu0 0
    %1413 = vmatprep.subr.bf16.mxu0 0
    %1414 = vmatpush1.bf16.xpose.msra.mxu0 0
    %1415 = vmatprep.subr.bf16.mxu0 0
    %1416 = vmatpush1.bf16.xpose.msra.mxu0 0
    %1417 = vmatprep.subr.bf16.mxu0 0
    %1418 = vmatpush1.bf16.xpose.msra.mxu0 0
    %1419 = vmatprep.subr.bf16.mxu0 0
    %1420 = vmatpush1.bf16.xpose.msra.mxu0 0
    %1421 = vmatprep.subr.bf16.mxu0 0
    %1422 = vmatpush1.bf16.xpose.msra.mxu0 0
    %1423 = vmatprep.subr.bf16.mxu0 0
    %1424 = vmatpush1.bf16.xpose.msra.mxu0 0
    %1425 = vmatprep.subr.bf16.mxu0 0
    %1426 = vmatpush1.bf16.xpose.msra.mxu0 0
    %1427 = vmatprep.subr.bf16.mxu0 0
    %1428 = vmatpush1.bf16.xpose.msra.mxu0 0
    %1429 = vmatprep.mubr.bf16.mxu0 0
    %1430 = vmatmul.mubr.bf16.gmra.mrb[0].mxu0 %v1392
    %v1431 = vpop.f32.mrb[0].mxu0
    %v1432 = vadd.f32 0.0, %v1431
    %v1433 = vpop.f32.mrb[0].mxu0
    %v1434 = vpop.f32.mrb[0].mxu0
    %v1435 = vadd.f32 0.0, %v1434
    %v1436 = vpop.f32.mrb[0].mxu0
    %1437 = vdwg.mxu0
    %v1438 = vmul.f32 %v1385, 0.35355338
    %v1439 = vmul.f32 %v1388, 0.35355338
    %v1440 = vmul.f32 %v1432, 0.35355338
    %v1441 = vmul.f32 %v1435, 0.35355338
    %v1442 = vadd.f32 %v1438, %v647
    %v1443 = vadd.f32 %v1439, %v648
    %v1444 = vadd.f32 %v1440, %v647
    %v1445 = vadd.f32 %v1441, %v648
    %v1446 = vsel %vm1002, %v1442, -inf
    %1447 = vmax.xlane.f32.xlu0 %v1446
    %v1448 = vpop.xlane.xlu0 %1447
    %v1449 = vsel %vm1002, %v1443, -inf
    %1450 = vmax.xlane.f32.xlu0 %v1449
    %v1451 = vpop.xlane.xlu0 %1450
    %v1452 = vsel %vm1002, %v1444, -inf
    %1453 = vmax.xlane.f32.xlu0 %v1452
    %v1454 = vpop.xlane.xlu0 %1453
    %v1455 = vsel %vm1002, %v1445, -inf
    %1456 = vmax.xlane.f32.xlu0 %v1455
    %v1457 = vpop.xlane.xlu0 %1456
    %v1458 = vsub.f32 %v1442, %v1448
    %v1459 = vsub.f32 %v1443, %v1451
    %v1460 = vsub.f32 %v1444, %v1454
    %v1461 = vsub.f32 %v1445, %v1457
    %v1462 = vmul.f32 %v1458, 1.442695
    %v1463 = vpow.pop %v1462
    %v1464 = vmul.f32 %v1459, 1.442695
    %v1465 = vpow.pop %v1464
    %v1466 = vmul.f32 %v1460, 1.442695
    %v1467 = vpow.pop %v1466
    %v1468 = vmul.f32 %v1461, 1.442695
    %v1469 = vpow.pop %v1468
    %v1470 = vsel %vm1002, %v1463, 0.0
    %1471 = vadd.xlane.f32.xlu0 %v1470
    %v1472 = vpop.xlane.xlu0 %1471
    %v1473 = vsel %vm1002, %v1465, 0.0
    %1474 = vadd.xlane.f32.xlu0 %v1473
    %v1475 = vpop.xlane.xlu0 %1474
    %v1476 = vsel %vm1002, %v1467, 0.0
    %1477 = vadd.xlane.f32.xlu0 %v1476
    %v1478 = vpop.xlane.xlu0 %1477
    %v1479 = vsel %vm1002, %v1469, 0.0
    %1480 = vadd.xlane.f32.xlu0 %v1479
    %v1481 = vpop.xlane.xlu0 %1480
    %v1482 = vrcp.pop %v1472
    %v1483 = vrcp.pop %v1475
    %v1484 = vrcp.pop %v1478
    %v1485 = vrcp.pop %v1481
    %v1486 = vmul.f32 %v1463, %v1482
    %v1487 = vmul.f32 %v1465, %v1483
    %v1488 = vmul.f32 %v1467, %v1484
    %v1489 = vmul.f32 %v1469, %v1485
    %v1490 = vpack.c.bf16 %v1487, %v1486
    %v1491 = vpack.c.bf16 %v1489, %v1488
    %v1492 = vpack.c.bf16 %v1329, %v1326
    %v1493 = vpack.c.bf16 %v1337, %v1334
    %v1495 = vsel %vm1002, %v1490, 0
    %1497 = vmatprep.subr.bf16.mxu0 0
    %1498 = vmatpush1.bf16.msra.mxu0 %v1492
    %1499 = vmatprep.subr.bf16.mxu0 0
    %1500 = vmatpush1.bf16.msra.mxu0 0
    %1501 = vmatprep.subr.bf16.mxu0 0
    %1502 = vmatpush1.bf16.msra.mxu0 0
    %1503 = vmatprep.subr.bf16.mxu0 0
    %1504 = vmatpush1.bf16.msra.mxu0 0
    %1505 = vmatprep.subr.bf16.mxu0 0
    %1506 = vmatpush1.bf16.msra.mxu0 0
    %1507 = vmatprep.subr.bf16.mxu0 0
    %1508 = vmatpush1.bf16.msra.mxu0 0
    %1509 = vmatprep.subr.bf16.mxu0 0
    %1510 = vmatpush1.bf16.msra.mxu0 0
    %1511 = vmatprep.subr.bf16.mxu0 0
    %1512 = vmatpush1.bf16.msra.mxu0 0
    %1513 = vmatprep.subr.bf16.mxu0 0
    %1514 = vmatpush1.bf16.msra.mxu0 0
    %1515 = vmatprep.subr.bf16.mxu0 0
    %1516 = vmatpush1.bf16.msra.mxu0 0
    %1517 = vmatprep.subr.bf16.mxu0 0
    %1518 = vmatpush1.bf16.msra.mxu0 0
    %1519 = vmatprep.subr.bf16.mxu0 0
    %1520 = vmatpush1.bf16.msra.mxu0 0
    %1521 = vmatprep.subr.bf16.mxu0 0
    %1522 = vmatpush1.bf16.msra.mxu0 0
    %1523 = vmatprep.subr.bf16.mxu0 0
    %1524 = vmatpush1.bf16.msra.mxu0 0
    %1525 = vmatprep.subr.bf16.mxu0 0
    %1526 = vmatpush1.bf16.msra.mxu0 0
    %1527 = vmatprep.subr.bf16.mxu0 0
    %1528 = vmatpush1.bf16.msra.mxu0 0
    %1529 = vmatprep.mubr.bf16.mxu0 0
    %1530 = vmatmul.mubr.bf16.gmra.mrb[0].mxu0 %v1495
    %v1531 = vpop.f32.mrb[0].mxu0
    %v1532 = vadd.f32 0.0, %v1531
    %v1533 = vpop.f32.mrb[0].mxu0
    %v1534 = vpop.f32.mrb[0].mxu0
    %v1535 = vadd.f32 0.0, %v1534
    %v1536 = vpop.f32.mrb[0].mxu0
    %1537 = vdwg.mxu0
    %v1539 = vsel %vm1002, %v1491, 0
    %1541 = vmatprep.subr.bf16.mxu0 0
    %1542 = vmatpush1.bf16.msra.mxu0 %v1493
    %1543 = vmatprep.subr.bf16.mxu0 0
    %1544 = vmatpush1.bf16.msra.mxu0 0
    %1545 = vmatprep.subr.bf16.mxu0 0
    %1546 = vmatpush1.bf16.msra.mxu0 0
    %1547 = vmatprep.subr.bf16.mxu0 0
    %1548 = vmatpush1.bf16.msra.mxu0 0
    %1549 = vmatprep.subr.bf16.mxu0 0
    %1550 = vmatpush1.bf16.msra.mxu0 0
    %1551 = vmatprep.subr.bf16.mxu0 0
    %1552 = vmatpush1.bf16.msra.mxu0 0
    %1553 = vmatprep.subr.bf16.mxu0 0
    %1554 = vmatpush1.bf16.msra.mxu0 0
    %1555 = vmatprep.subr.bf16.mxu0 0
    %1556 = vmatpush1.bf16.msra.mxu0 0
    %1557 = vmatprep.subr.bf16.mxu0 0
    %1558 = vmatpush1.bf16.msra.mxu0 0
    %1559 = vmatprep.subr.bf16.mxu0 0
    %1560 = vmatpush1.bf16.msra.mxu0 0
    %1561 = vmatprep.subr.bf16.mxu0 0
    %1562 = vmatpush1.bf16.msra.mxu0 0
    %1563 = vmatprep.subr.bf16.mxu0 0
    %1564 = vmatpush1.bf16.msra.mxu0 0
    %1565 = vmatprep.subr.bf16.mxu0 0
    %1566 = vmatpush1.bf16.msra.mxu0 0
    %1567 = vmatprep.subr.bf16.mxu0 0
    %1568 = vmatpush1.bf16.msra.mxu0 0
    %1569 = vmatprep.subr.bf16.mxu0 0
    %1570 = vmatpush1.bf16.msra.mxu0 0
    %1571 = vmatprep.subr.bf16.mxu0 0
    %1572 = vmatpush1.bf16.msra.mxu0 0
    %1573 = vmatprep.mubr.bf16.mxu0 0
    %1574 = vmatmul.mubr.bf16.gmra.mrb[0].mxu0 %v1539
    %v1575 = vpop.f32.mrb[0].mxu0
    %v1576 = vadd.f32 0.0, %v1575
    %v1577 = vpop.f32.mrb[0].mxu0
    %v1578 = vpop.f32.mrb[0].mxu0
    %v1579 = vadd.f32 0.0, %v1578
    %v1580 = vpop.f32.mrb[0].mxu0
    %1581 = vdwg.mxu0
    %s1582 = scalar_lea.vmem %s10, 4
    %v1583 = vld [vmem:[%s1582] sm:$0xf]
    %v1584 = vpack.c.bf16 %v1535, %v1532
    %v1585 = vpack.c.bf16 %v1579, %v1576
    %v1587 = vsel %vm899, %v1584, 0
    %v1590 = vsel %vm899, %v1585, 0
    %vm1592 = vcmask 1043456
    %v1594 = vsel %vm1592, %v1583, 0
    %1596 = vmatprep.subr.bf16.mxu0 0
    %1597 = vmatpush1.bf16.msra.mxu0 %v1594
    %1598 = vmatprep.subr.bf16.mxu0 0
    %1599 = vmatpush1.bf16.msra.mxu0 0
    %1600 = vmatprep.subr.bf16.mxu0 0
    %1601 = vmatpush1.bf16.msra.mxu0 0
    %1602 = vmatprep.subr.bf16.mxu0 0
    %1603 = vmatpush1.bf16.msra.mxu0 0
    %1604 = vmatprep.subr.bf16.mxu0 0
    %1605 = vmatpush1.bf16.msra.mxu0 0
    %1606 = vmatprep.subr.bf16.mxu0 0
    %1607 = vmatpush1.bf16.msra.mxu0 0
    %1608 = vmatprep.subr.bf16.mxu0 0
    %1609 = vmatpush1.bf16.msra.mxu0 0
    %1610 = vmatprep.subr.bf16.mxu0 0
    %1611 = vmatpush1.bf16.msra.mxu0 0
    %1612 = vmatprep.subr.bf16.mxu0 0
    %1613 = vmatpush1.bf16.msra.mxu0 0
    %1614 = vmatprep.subr.bf16.mxu0 0
    %1615 = vmatpush1.bf16.msra.mxu0 0
    %1616 = vmatprep.subr.bf16.mxu0 0
    %1617 = vmatpush1.bf16.msra.mxu0 0
    %1618 = vmatprep.subr.bf16.mxu0 0
    %1619 = vmatpush1.bf16.msra.mxu0 0
    %1620 = vmatprep.subr.bf16.mxu0 0
    %1621 = vmatpush1.bf16.msra.mxu0 0
    %1622 = vmatprep.subr.bf16.mxu0 0
    %1623 = vmatpush1.bf16.msra.mxu0 0
    %1624 = vmatprep.subr.bf16.mxu0 0
    %1625 = vmatpush1.bf16.msra.mxu0 0
    %1626 = vmatprep.subr.bf16.mxu0 0
    %1627 = vmatpush1.bf16.msra.mxu0 0
    %1628 = vmatprep.mubr.bf16.mxu0 0
    %1629 = vmatmul.mubr.bf16.gmra.mrb[0].mxu0 %v1587
    %v1630 = vpop.f32.mrb[0].mxu0
    %v1631 = vadd.f32 0.0, %v1630
    %v1632 = vpop.f32.mrb[0].mxu0
    %v1633 = vpop.f32.mrb[0].mxu0
    %v1634 = vadd.f32 0.0, %v1633
    %v1635 = vpop.f32.mrb[0].mxu0
    %1636 = vmatprep.mubr.bf16.mxu0 0
    %1637 = vmatmul.mubr.bf16.gmra.mrb[0].mxu0 %v1590
    %v1638 = vpop.f32.mrb[0].mxu0
    %v1639 = vadd.f32 0.0, %v1638
    %v1640 = vpop.f32.mrb[0].mxu0
    %v1641 = vpop.f32.mrb[0].mxu0
    %v1642 = vadd.f32 0.0, %v1641
    %v1643 = vpop.f32.mrb[0].mxu0
    %1644 = vdwg.mxu0
    %v1646 = vsel %vm899, %v1140, 0
    %v1649 = vsel %vm899, %v1141, 0
    %v1652 = vsel %vm1592, %v1139, 0
    %1654 = vmatprep.subr.bf16.mxu0 0
    %1655 = vmatpush1.bf16.msra.mxu0 %v1652
    %1656 = vmatprep.subr.bf16.mxu0 0
    %1657 = vmatpush1.bf16.msra.mxu0 0
    %1658 = vmatprep.subr.bf16.mxu0 0
    %1659 = vmatpush1.bf16.msra.mxu0 0
    %1660 = vmatprep.subr.bf16.mxu0 0
    %1661 = vmatpush1.bf16.msra.mxu0 0
    %1662 = vmatprep.subr.bf16.mxu0 0
    %1663 = vmatpush1.bf16.msra.mxu0 0
    %1664 = vmatprep.subr.bf16.mxu0 0
    %1665 = vmatpush1.bf16.msra.mxu0 0
    %1666 = vmatprep.subr.bf16.mxu0 0
    %1667 = vmatpush1.bf16.msra.mxu0 0
    %1668 = vmatprep.subr.bf16.mxu0 0
    %1669 = vmatpush1.bf16.msra.mxu0 0
    %1670 = vmatprep.subr.bf16.mxu0 0
    %1671 = vmatpush1.bf16.msra.mxu0 0
    %1672 = vmatprep.subr.bf16.mxu0 0
    %1673 = vmatpush1.bf16.msra.mxu0 0
    %1674 = vmatprep.subr.bf16.mxu0 0
    %1675 = vmatpush1.bf16.msra.mxu0 0
    %1676 = vmatprep.subr.bf16.mxu0 0
    %1677 = vmatpush1.bf16.msra.mxu0 0
    %1678 = vmatprep.subr.bf16.mxu0 0
    %1679 = vmatpush1.bf16.msra.mxu0 0
    %1680 = vmatprep.subr.bf16.mxu0 0
    %1681 = vmatpush1.bf16.msra.mxu0 0
    %1682 = vmatprep.subr.bf16.mxu0 0
    %1683 = vmatpush1.bf16.msra.mxu0 0
    %1684 = vmatprep.subr.bf16.mxu0 0
    %1685 = vmatpush1.bf16.msra.mxu0 0
    %1686 = vmatprep.mubr.bf16.mxu0 0
    %1687 = vmatmul.mubr.bf16.gmra.mrb[0].mxu0 %v1646
    %v1688 = vpop.f32.mrb[0].mxu0
    %v1689 = vadd.f32 %v1631, %v1688
    %v1690 = vpop.f32.mrb[0].mxu0
    %v1691 = vpop.f32.mrb[0].mxu0
    %v1692 = vadd.f32 %v1634, %v1691
    %v1693 = vpop.f32.mrb[0].mxu0
    %1694 = vmatprep.mubr.bf16.mxu0 0
    %1695 = vmatmul.mubr.bf16.gmra.mrb[0].mxu0 %v1649
    %v1696 = vpop.f32.mrb[0].mxu0
    %v1697 = vadd.f32 %v1639, %v1696
    %v1698 = vpop.f32.mrb[0].mxu0
    %v1699 = vpop.f32.mrb[0].mxu0
    %v1700 = vadd.f32 %v1642, %v1699
    %v1701 = vpop.f32.mrb[0].mxu0
    %1702 = vdwg.mxu0
    %s1703 = scalar_lea.vmem %s7, 32
    %v1704 = vld [vmem:[%s1703] sm:$0xf]
    %v1705 = vld [vmem:[%s1703 + $0x4] sm:$0xf]
    %v1706 = vld [vmem:[%s1703 + $0x8] sm:$0xf]
    %v1707 = vld [vmem:[%s1703 + $0xc] sm:$0xf]
    %v1712 = vunpack.c.l.b16 %v1704
    %v1713 = vunpack.c.l.b16 %v1705
    %v1714 = vunpack.c.l.b16 %v1706
    %v1715 = vunpack.c.l.b16 %v1707
    %v1716 = vpack.c.b16 %v1713, %v1712
    %v1717 = vpack.c.b16 %v1715, %v1714
    %1720 = vmatprep.subr.bf16.mxu0 0
    %1721 = vmatpush1.bf16.msra.mxu0 %v1716
    %1722 = vmatprep.subr.bf16.mxu0 0
    %1723 = vmatpush1.bf16.msra.mxu0 %v1717
    %1724 = vmatprep.subr.bf16.mxu0 0
    %1725 = vmatpush1.bf16.msra.mxu0 0
    %1726 = vmatprep.subr.bf16.mxu0 0
    %1727 = vmatpush1.bf16.msra.mxu0 0
    %1728 = vmatprep.subr.bf16.mxu0 0
    %1729 = vmatpush1.bf16.msra.mxu0 0
    %1730 = vmatprep.subr.bf16.mxu0 0
    %1731 = vmatpush1.bf16.msra.mxu0 0
    %1732 = vmatprep.subr.bf16.mxu0 0
    %1733 = vmatpush1.bf16.msra.mxu0 0
    %1734 = vmatprep.subr.bf16.mxu0 0
    %1735 = vmatpush1.bf16.msra.mxu0 0
    %1736 = vmatprep.subr.bf16.mxu0 0
    %1737 = vmatpush1.bf16.msra.mxu0 0
    %1738 = vmatprep.subr.bf16.mxu0 0
    %1739 = vmatpush1.bf16.msra.mxu0 0
    %1740 = vmatprep.subr.bf16.mxu0 0
    %1741 = vmatpush1.bf16.msra.mxu0 0
    %1742 = vmatprep.subr.bf16.mxu0 0
    %1743 = vmatpush1.bf16.msra.mxu0 0
    %1744 = vmatprep.subr.bf16.mxu0 0
    %1745 = vmatpush1.bf16.msra.mxu0 0
    %1746 = vmatprep.subr.bf16.mxu0 0
    %1747 = vmatpush1.bf16.msra.mxu0 0
    %1748 = vmatprep.subr.bf16.mxu0 0
    %1749 = vmatpush1.bf16.msra.mxu0 0
    %1750 = vmatprep.subr.bf16.mxu0 0
    %1751 = vmatpush1.bf16.msra.mxu0 0
    %1752 = vmatprep.mubr.bf16.mxu0 0
    %1753 = vmatmul.mubr.bf16.gmra.mrb[0].mxu0 %v711
    %v1754 = vpop.f32.mrb[0].mxu0
    %v1755 = vadd.f32 0.0, %v1754
    %v1756 = vpop.f32.mrb[0].mxu0
    %v1757 = vpop.f32.mrb[0].mxu0
    %v1758 = vadd.f32 0.0, %v1757
    %v1759 = vpop.f32.mrb[0].mxu0
    %1760 = vmatprep.mubr.bf16.mxu0 0
    %1761 = vmatmul.mubr.bf16.gmra.mrb[0].mxu0 %v714
    %v1762 = vpop.f32.mrb[0].mxu0
    %v1763 = vadd.f32 0.0, %v1762
    %v1764 = vpop.f32.mrb[0].mxu0
    %v1765 = vpop.f32.mrb[0].mxu0
    %v1766 = vadd.f32 0.0, %v1765
    %v1767 = vpop.f32.mrb[0].mxu0
    %1768 = vdwg.mxu0
    %s1769 = scalar_lea.vmem %s8, 32
    %v1770 = vld [vmem:[%s1769] sm:$0xf]
    %v1771 = vld [vmem:[%s1769 + $0x4] sm:$0xf]
    %v1772 = vld [vmem:[%s1769 + $0x8] sm:$0xf]
    %v1773 = vld [vmem:[%s1769 + $0xc] sm:$0xf]
    %v1778 = vunpack.c.l.b16 %v1770
    %v1779 = vunpack.c.l.b16 %v1771
    %v1780 = vunpack.c.l.b16 %v1772
    %v1781 = vunpack.c.l.b16 %v1773
    %v1782 = vpack.c.b16 %v1779, %v1778
    %v1783 = vpack.c.b16 %v1781, %v1780
    %1786 = vmatprep.subr.bf16.mxu0 0
    %1787 = vmatpush1.bf16.msra.mxu0 %v1782
    %1788 = vmatprep.subr.bf16.mxu0 0
    %1789 = vmatpush1.bf16.msra.mxu0 %v1783
    %1790 = vmatprep.subr.bf16.mxu0 0
    %1791 = vmatpush1.bf16.msra.mxu0 0
    %1792 = vmatprep.subr.bf16.mxu0 0
    %1793 = vmatpush1.bf16.msra.mxu0 0
    %1794 = vmatprep.subr.bf16.mxu0 0
    %1795 = vmatpush1.bf16.msra.mxu0 0
    %1796 = vmatprep.subr.bf16.mxu0 0
    %1797 = vmatpush1.bf16.msra.mxu0 0
    %1798 = vmatprep.subr.bf16.mxu0 0
    %1799 = vmatpush1.bf16.msra.mxu0 0
    %1800 = vmatprep.subr.bf16.mxu0 0
    %1801 = vmatpush1.bf16.msra.mxu0 0
    %1802 = vmatprep.subr.bf16.mxu0 0
    %1803 = vmatpush1.bf16.msra.mxu0 0
    %1804 = vmatprep.subr.bf16.mxu0 0
    %1805 = vmatpush1.bf16.msra.mxu0 0
    %1806 = vmatprep.subr.bf16.mxu0 0
    %1807 = vmatpush1.bf16.msra.mxu0 0
    %1808 = vmatprep.subr.bf16.mxu0 0
    %1809 = vmatpush1.bf16.msra.mxu0 0
    %1810 = vmatprep.subr.bf16.mxu0 0
    %1811 = vmatpush1.bf16.msra.mxu0 0
    %1812 = vmatprep.subr.bf16.mxu0 0
    %1813 = vmatpush1.bf16.msra.mxu0 0
    %1814 = vmatprep.subr.bf16.mxu0 0
    %1815 = vmatpush1.bf16.msra.mxu0 0
    %1816 = vmatprep.subr.bf16.mxu0 0
    %1817 = vmatpush1.bf16.msra.mxu0 0
    %1818 = vmatprep.mubr.bf16.mxu0 0
    %1819 = vmatmul.mubr.bf16.gmra.mrb[0].mxu0 %v711
    %v1820 = vpop.f32.mrb[0].mxu0
    %v1821 = vadd.f32 0.0, %v1820
    %v1822 = vpop.f32.mrb[0].mxu0
    %v1823 = vpop.f32.mrb[0].mxu0
    %v1824 = vadd.f32 0.0, %v1823
    %v1825 = vpop.f32.mrb[0].mxu0
    %1826 = vmatprep.mubr.bf16.mxu0 0
    %1827 = vmatmul.mubr.bf16.gmra.mrb[0].mxu0 %v714
    %v1828 = vpop.f32.mrb[0].mxu0
    %v1829 = vadd.f32 0.0, %v1828
    %v1830 = vpop.f32.mrb[0].mxu0
    %v1831 = vpop.f32.mrb[0].mxu0
    %v1832 = vadd.f32 0.0, %v1831
    %v1833 = vpop.f32.mrb[0].mxu0
    %1834 = vdwg.mxu0
    %s1835 = scalar_lea.vmem %s9, 32
    %v1836 = vld [vmem:[%s1835] sm:$0xf]
    %v1837 = vld [vmem:[%s1835 + $0x4] sm:$0xf]
    %v1838 = vld [vmem:[%s1835 + $0x8] sm:$0xf]
    %v1839 = vld [vmem:[%s1835 + $0xc] sm:$0xf]
    %v1844 = vunpack.c.l.b16 %v1836
    %v1845 = vunpack.c.l.b16 %v1837
    %v1846 = vunpack.c.l.b16 %v1838
    %v1847 = vunpack.c.l.b16 %v1839
    %v1848 = vpack.c.b16 %v1845, %v1844
    %v1849 = vpack.c.b16 %v1847, %v1846
    %1852 = vmatprep.subr.bf16.mxu0 0
    %1853 = vmatpush1.bf16.msra.mxu0 %v1848
    %1854 = vmatprep.subr.bf16.mxu0 0
    %1855 = vmatpush1.bf16.msra.mxu0 %v1849
    %1856 = vmatprep.subr.bf16.mxu0 0
    %1857 = vmatpush1.bf16.msra.mxu0 0
    %1858 = vmatprep.subr.bf16.mxu0 0
    %1859 = vmatpush1.bf16.msra.mxu0 0
    %1860 = vmatprep.subr.bf16.mxu0 0
    %1861 = vmatpush1.bf16.msra.mxu0 0
    %1862 = vmatprep.subr.bf16.mxu0 0
    %1863 = vmatpush1.bf16.msra.mxu0 0
    %1864 = vmatprep.subr.bf16.mxu0 0
    %1865 = vmatpush1.bf16.msra.mxu0 0
    %1866 = vmatprep.subr.bf16.mxu0 0
    %1867 = vmatpush1.bf16.msra.mxu0 0
    %1868 = vmatprep.subr.bf16.mxu0 0
    %1869 = vmatpush1.bf16.msra.mxu0 0
    %1870 = vmatprep.subr.bf16.mxu0 0
    %1871 = vmatpush1.bf16.msra.mxu0 0
    %1872 = vmatprep.subr.bf16.mxu0 0
    %1873 = vmatpush1.bf16.msra.mxu0 0
    %1874 = vmatprep.subr.bf16.mxu0 0
    %1875 = vmatpush1.bf16.msra.mxu0 0
    %1876 = vmatprep.subr.bf16.mxu0 0
    %1877 = vmatpush1.bf16.msra.mxu0 0
    %1878 = vmatprep.subr.bf16.mxu0 0
    %1879 = vmatpush1.bf16.msra.mxu0 0
    %1880 = vmatprep.subr.bf16.mxu0 0
    %1881 = vmatpush1.bf16.msra.mxu0 0
    %1882 = vmatprep.subr.bf16.mxu0 0
    %1883 = vmatpush1.bf16.msra.mxu0 0
    %1884 = vmatprep.mubr.bf16.mxu0 0
    %1885 = vmatmul.mubr.bf16.gmra.mrb[0].mxu0 %v711
    %v1886 = vpop.f32.mrb[0].mxu0
    %v1887 = vadd.f32 0.0, %v1886
    %v1888 = vpop.f32.mrb[0].mxu0
    %v1889 = vpop.f32.mrb[0].mxu0
    %v1890 = vadd.f32 0.0, %v1889
    %v1891 = vpop.f32.mrb[0].mxu0
    %1892 = vmatprep.mubr.bf16.mxu0 0
    %1893 = vmatmul.mubr.bf16.gmra.mrb[0].mxu0 %v714
    %v1894 = vpop.f32.mrb[0].mxu0
    %v1895 = vadd.f32 0.0, %v1894
    %v1896 = vpop.f32.mrb[0].mxu0
    %v1897 = vpop.f32.mrb[0].mxu0
    %v1898 = vadd.f32 0.0, %v1897
    %v1899 = vpop.f32.mrb[0].mxu0
    %1900 = vdwg.mxu0
    %v1901 = vpack.c.bf16 %v1758, %v1755
    %v1902 = vpack.c.bf16 %v1766, %v1763
    %v1903 = vpack.c.bf16 %v1824, %v1821
    %v1904 = vpack.c.bf16 %v1832, %v1829
    %v1906 = vsel %vm899, %v1901, 0
    %v1909 = vsel %vm899, %v1903, 0
    %1911 = vmatprep.subr.bf16.mxu0 0
    %1912 = vmatpush1.bf16.xpose.msra.mxu0 %v1909
    %1913 = vmatprep.subr.bf16.mxu0 0
    %1914 = vmatpush1.bf16.xpose.msra.mxu0 0
    %1915 = vmatprep.subr.bf16.mxu0 0
    %1916 = vmatpush1.bf16.xpose.msra.mxu0 0
    %1917 = vmatprep.subr.bf16.mxu0 0
    %1918 = vmatpush1.bf16.xpose.msra.mxu0 0
    %1919 = vmatprep.subr.bf16.mxu0 0
    %1920 = vmatpush1.bf16.xpose.msra.mxu0 0
    %1921 = vmatprep.subr.bf16.mxu0 0
    %1922 = vmatpush1.bf16.xpose.msra.mxu0 0
    %1923 = vmatprep.subr.bf16.mxu0 0
    %1924 = vmatpush1.bf16.xpose.msra.mxu0 0
    %1925 = vmatprep.subr.bf16.mxu0 0
    %1926 = vmatpush1.bf16.xpose.msra.mxu0 0
    %1927 = vmatprep.subr.bf16.mxu0 0
    %1928 = vmatpush1.bf16.xpose.msra.mxu0 0
    %1929 = vmatprep.subr.bf16.mxu0 0
    %1930 = vmatpush1.bf16.xpose.msra.mxu0 0
    %1931 = vmatprep.subr.bf16.mxu0 0
    %1932 = vmatpush1.bf16.xpose.msra.mxu0 0
    %1933 = vmatprep.subr.bf16.mxu0 0
    %1934 = vmatpush1.bf16.xpose.msra.mxu0 0
    %1935 = vmatprep.subr.bf16.mxu0 0
    %1936 = vmatpush1.bf16.xpose.msra.mxu0 0
    %1937 = vmatprep.subr.bf16.mxu0 0
    %1938 = vmatpush1.bf16.xpose.msra.mxu0 0
    %1939 = vmatprep.subr.bf16.mxu0 0
    %1940 = vmatpush1.bf16.xpose.msra.mxu0 0
    %1941 = vmatprep.subr.bf16.mxu0 0
    %1942 = vmatpush1.bf16.xpose.msra.mxu0 0
    %1943 = vmatprep.mubr.bf16.mxu0 0
    %1944 = vmatmul.mubr.bf16.gmra.mrb[0].mxu0 %v1906
    %v1945 = vpop.f32.mrb[0].mxu0
    %v1946 = vadd.f32 0.0, %v1945
    %v1947 = vpop.f32.mrb[0].mxu0
    %v1948 = vpop.f32.mrb[0].mxu0
    %v1949 = vadd.f32 0.0, %v1948
    %v1950 = vpop.f32.mrb[0].mxu0
    %1951 = vdwg.mxu0
    %v1953 = vsel %vm899, %v1902, 0
    %v1956 = vsel %vm899, %v1904, 0
    %1958 = vmatprep.subr.bf16.mxu0 0
    %1959 = vmatpush1.bf16.xpose.msra.mxu0 %v1956
    %1960 = vmatprep.subr.bf16.mxu0 0
    %1961 = vmatpush1.bf16.xpose.msra.mxu0 0
    %1962 = vmatprep.subr.bf16.mxu0 0
    %1963 = vmatpush1.bf16.xpose.msra.mxu0 0
    %1964 = vmatprep.subr.bf16.mxu0 0
    %1965 = vmatpush1.bf16.xpose.msra.mxu0 0
    %1966 = vmatprep.subr.bf16.mxu0 0
    %1967 = vmatpush1.bf16.xpose.msra.mxu0 0
    %1968 = vmatprep.subr.bf16.mxu0 0
    %1969 = vmatpush1.bf16.xpose.msra.mxu0 0
    %1970 = vmatprep.subr.bf16.mxu0 0
    %1971 = vmatpush1.bf16.xpose.msra.mxu0 0
    %1972 = vmatprep.subr.bf16.mxu0 0
    %1973 = vmatpush1.bf16.xpose.msra.mxu0 0
    %1974 = vmatprep.subr.bf16.mxu0 0
    %1975 = vmatpush1.bf16.xpose.msra.mxu0 0
    %1976 = vmatprep.subr.bf16.mxu0 0
    %1977 = vmatpush1.bf16.xpose.msra.mxu0 0
    %1978 = vmatprep.subr.bf16.mxu0 0
    %1979 = vmatpush1.bf16.xpose.msra.mxu0 0
    %1980 = vmatprep.subr.bf16.mxu0 0
    %1981 = vmatpush1.bf16.xpose.msra.mxu0 0
    %1982 = vmatprep.subr.bf16.mxu0 0
    %1983 = vmatpush1.bf16.xpose.msra.mxu0 0
    %1984 = vmatprep.subr.bf16.mxu0 0
    %1985 = vmatpush1.bf16.xpose.msra.mxu0 0
    %1986 = vmatprep.subr.bf16.mxu0 0
    %1987 = vmatpush1.bf16.xpose.msra.mxu0 0
    %1988 = vmatprep.subr.bf16.mxu0 0
    %1989 = vmatpush1.bf16.xpose.msra.mxu0 0
    %1990 = vmatprep.mubr.bf16.mxu0 0
    %1991 = vmatmul.mubr.bf16.gmra.mrb[0].mxu0 %v1953
    %v1992 = vpop.f32.mrb[0].mxu0
    %v1993 = vadd.f32 0.0, %v1992
    %v1994 = vpop.f32.mrb[0].mxu0
    %v1995 = vpop.f32.mrb[0].mxu0
    %v1996 = vadd.f32 0.0, %v1995
    %v1997 = vpop.f32.mrb[0].mxu0
    %1998 = vdwg.mxu0
    %v1999 = vmul.f32 %v1946, 0.35355338
    %v2000 = vmul.f32 %v1949, 0.35355338
    %v2001 = vmul.f32 %v1993, 0.35355338
    %v2002 = vmul.f32 %v1996, 0.35355338
    %v2003 = vadd.f32 %v1999, %v647
    %v2004 = vadd.f32 %v2000, %v648
    %v2005 = vadd.f32 %v2001, %v647
    %v2006 = vadd.f32 %v2002, %v648
    %v2007 = vsel %vm1002, %v2003, -inf
    %2008 = vmax.xlane.f32.xlu0 %v2007
    %v2009 = vpop.xlane.xlu0 %2008
    %v2010 = vsel %vm1002, %v2004, -inf
    %2011 = vmax.xlane.f32.xlu0 %v2010
    %v2012 = vpop.xlane.xlu0 %2011
    %v2013 = vsel %vm1002, %v2005, -inf
    %2014 = vmax.xlane.f32.xlu0 %v2013
    %v2015 = vpop.xlane.xlu0 %2014
    %v2016 = vsel %vm1002, %v2006, -inf
    %2017 = vmax.xlane.f32.xlu0 %v2016
    %v2018 = vpop.xlane.xlu0 %2017
    %v2019 = vsub.f32 %v2003, %v2009
    %v2020 = vsub.f32 %v2004, %v2012
    %v2021 = vsub.f32 %v2005, %v2015
    %v2022 = vsub.f32 %v2006, %v2018
    %v2023 = vmul.f32 %v2019, 1.442695
    %v2024 = vpow.pop %v2023
    %v2025 = vmul.f32 %v2020, 1.442695
    %v2026 = vpow.pop %v2025
    %v2027 = vmul.f32 %v2021, 1.442695
    %v2028 = vpow.pop %v2027
    %v2029 = vmul.f32 %v2022, 1.442695
    %v2030 = vpow.pop %v2029
    %v2031 = vsel %vm1002, %v2024, 0.0
    %2032 = vadd.xlane.f32.xlu0 %v2031
    %v2033 = vpop.xlane.xlu0 %2032
    %v2034 = vsel %vm1002, %v2026, 0.0
    %2035 = vadd.xlane.f32.xlu0 %v2034
    %v2036 = vpop.xlane.xlu0 %2035
    %v2037 = vsel %vm1002, %v2028, 0.0
    %2038 = vadd.xlane.f32.xlu0 %v2037
    %v2039 = vpop.xlane.xlu0 %2038
    %v2040 = vsel %vm1002, %v2030, 0.0
    %2041 = vadd.xlane.f32.xlu0 %v2040
    %v2042 = vpop.xlane.xlu0 %2041
    %v2043 = vrcp.pop %v2033
    %v2044 = vrcp.pop %v2036
    %v2045 = vrcp.pop %v2039
    %v2046 = vrcp.pop %v2042
    %v2047 = vmul.f32 %v2024, %v2043
    %v2048 = vmul.f32 %v2026, %v2044
    %v2049 = vmul.f32 %v2028, %v2045
    %v2050 = vmul.f32 %v2030, %v2046
    %v2051 = vpack.c.bf16 %v2048, %v2047
    %v2052 = vpack.c.bf16 %v2050, %v2049
    %v2053 = vpack.c.bf16 %v1890, %v1887
    %v2054 = vpack.c.bf16 %v1898, %v1895
    %v2056 = vsel %vm1002, %v2051, 0
    %2058 = vmatprep.subr.bf16.mxu0 0
    %2059 = vmatpush1.bf16.msra.mxu0 %v2053
    %2060 = vmatprep.subr.bf16.mxu0 0
    %2061 = vmatpush1.bf16.msra.mxu0 0
    %2062 = vmatprep.subr.bf16.mxu0 0
    %2063 = vmatpush1.bf16.msra.mxu0 0
    %2064 = vmatprep.subr.bf16.mxu0 0
    %2065 = vmatpush1.bf16.msra.mxu0 0
    %2066 = vmatprep.subr.bf16.mxu0 0
    %2067 = vmatpush1.bf16.msra.mxu0 0
    %2068 = vmatprep.subr.bf16.mxu0 0
    %2069 = vmatpush1.bf16.msra.mxu0 0
    %2070 = vmatprep.subr.bf16.mxu0 0
    %2071 = vmatpush1.bf16.msra.mxu0 0
    %2072 = vmatprep.subr.bf16.mxu0 0
    %2073 = vmatpush1.bf16.msra.mxu0 0
    %2074 = vmatprep.subr.bf16.mxu0 0
    %2075 = vmatpush1.bf16.msra.mxu0 0
    %2076 = vmatprep.subr.bf16.mxu0 0
    %2077 = vmatpush1.bf16.msra.mxu0 0
    %2078 = vmatprep.subr.bf16.mxu0 0
    %2079 = vmatpush1.bf16.msra.mxu0 0
    %2080 = vmatprep.subr.bf16.mxu0 0
    %2081 = vmatpush1.bf16.msra.mxu0 0
    %2082 = vmatprep.subr.bf16.mxu0 0
    %2083 = vmatpush1.bf16.msra.mxu0 0
    %2084 = vmatprep.subr.bf16.mxu0 0
    %2085 = vmatpush1.bf16.msra.mxu0 0
    %2086 = vmatprep.subr.bf16.mxu0 0
    %2087 = vmatpush1.bf16.msra.mxu0 0
    %2088 = vmatprep.subr.bf16.mxu0 0
    %2089 = vmatpush1.bf16.msra.mxu0 0
    %2090 = vmatprep.mubr.bf16.mxu0 0
    %2091 = vmatmul.mubr.bf16.gmra.mrb[0].mxu0 %v2056
    %v2092 = vpop.f32.mrb[0].mxu0
    %v2093 = vadd.f32 0.0, %v2092
    %v2094 = vpop.f32.mrb[0].mxu0
    %v2095 = vpop.f32.mrb[0].mxu0
    %v2096 = vadd.f32 0.0, %v2095
    %v2097 = vpop.f32.mrb[0].mxu0
    %2098 = vdwg.mxu0
    %v2100 = vsel %vm1002, %v2052, 0
    %2102 = vmatprep.subr.bf16.mxu0 0
    %2103 = vmatpush1.bf16.msra.mxu0 %v2054
    %2104 = vmatprep.subr.bf16.mxu0 0
    %2105 = vmatpush1.bf16.msra.mxu0 0
    %2106 = vmatprep.subr.bf16.mxu0 0
    %2107 = vmatpush1.bf16.msra.mxu0 0
    %2108 = vmatprep.subr.bf16.mxu0 0
    %2109 = vmatpush1.bf16.msra.mxu0 0
    %2110 = vmatprep.subr.bf16.mxu0 0
    %2111 = vmatpush1.bf16.msra.mxu0 0
    %2112 = vmatprep.subr.bf16.mxu0 0
    %2113 = vmatpush1.bf16.msra.mxu0 0
    %2114 = vmatprep.subr.bf16.mxu0 0
    %2115 = vmatpush1.bf16.msra.mxu0 0
    %2116 = vmatprep.subr.bf16.mxu0 0
    %2117 = vmatpush1.bf16.msra.mxu0 0
    %2118 = vmatprep.subr.bf16.mxu0 0
    %2119 = vmatpush1.bf16.msra.mxu0 0
    %2120 = vmatprep.subr.bf16.mxu0 0
    %2121 = vmatpush1.bf16.msra.mxu0 0
    %2122 = vmatprep.subr.bf16.mxu0 0
    %2123 = vmatpush1.bf16.msra.mxu0 0
    %2124 = vmatprep.subr.bf16.mxu0 0
    %2125 = vmatpush1.bf16.msra.mxu0 0
    %2126 = vmatprep.subr.bf16.mxu0 0
    %2127 = vmatpush1.bf16.msra.mxu0 0
    %2128 = vmatprep.subr.bf16.mxu0 0
    %2129 = vmatpush1.bf16.msra.mxu0 0
    %2130 = vmatprep.subr.bf16.mxu0 0
    %2131 = vmatpush1.bf16.msra.mxu0 0
    %2132 = vmatprep.subr.bf16.mxu0 0
    %2133 = vmatpush1.bf16.msra.mxu0 0
    %2134 = vmatprep.mubr.bf16.mxu0 0
    %2135 = vmatmul.mubr.bf16.gmra.mrb[0].mxu0 %v2100
    %v2136 = vpop.f32.mrb[0].mxu0
    %v2137 = vadd.f32 0.0, %v2136
    %v2138 = vpop.f32.mrb[0].mxu0
    %v2139 = vpop.f32.mrb[0].mxu0
    %v2140 = vadd.f32 0.0, %v2139
    %v2141 = vpop.f32.mrb[0].mxu0
    %2142 = vdwg.mxu0
    %s2143 = scalar_lea.vmem %s10, 8
    %v2144 = vld [vmem:[%s2143] sm:$0xf]
    %v2145 = vpack.c.bf16 %v2096, %v2093
    %v2146 = vpack.c.bf16 %v2140, %v2137
    %v2148 = vsel %vm899, %v2145, 0
    %v2151 = vsel %vm899, %v2146, 0
    %v2154 = vsel %vm1592, %v2144, 0
    %2156 = vmatprep.subr.bf16.mxu0 0
    %2157 = vmatpush1.bf16.msra.mxu0 %v2154
    %2158 = vmatprep.subr.bf16.mxu0 0
    %2159 = vmatpush1.bf16.msra.mxu0 0
    %2160 = vmatprep.subr.bf16.mxu0 0
    %2161 = vmatpush1.bf16.msra.mxu0 0
    %2162 = vmatprep.subr.bf16.mxu0 0
    %2163 = vmatpush1.bf16.msra.mxu0 0
    %2164 = vmatprep.subr.bf16.mxu0 0
    %2165 = vmatpush1.bf16.msra.mxu0 0
    %2166 = vmatprep.subr.bf16.mxu0 0
    %2167 = vmatpush1.bf16.msra.mxu0 0
    %2168 = vmatprep.subr.bf16.mxu0 0
    %2169 = vmatpush1.bf16.msra.mxu0 0
    %2170 = vmatprep.subr.bf16.mxu0 0
    %2171 = vmatpush1.bf16.msra.mxu0 0
    %2172 = vmatprep.subr.bf16.mxu0 0
    %2173 = vmatpush1.bf16.msra.mxu0 0
    %2174 = vmatprep.subr.bf16.mxu0 0
    %2175 = vmatpush1.bf16.msra.mxu0 0
    %2176 = vmatprep.subr.bf16.mxu0 0
    %2177 = vmatpush1.bf16.msra.mxu0 0
    %2178 = vmatprep.subr.bf16.mxu0 0
    %2179 = vmatpush1.bf16.msra.mxu0 0
    %2180 = vmatprep.subr.bf16.mxu0 0
    %2181 = vmatpush1.bf16.msra.mxu0 0
    %2182 = vmatprep.subr.bf16.mxu0 0
    %2183 = vmatpush1.bf16.msra.mxu0 0
    %2184 = vmatprep.subr.bf16.mxu0 0
    %2185 = vmatpush1.bf16.msra.mxu0 0
    %2186 = vmatprep.subr.bf16.mxu0 0
    %2187 = vmatpush1.bf16.msra.mxu0 0
    %2188 = vmatprep.mubr.bf16.mxu0 0
    %2189 = vmatmul.mubr.bf16.gmra.mrb[0].mxu0 %v2148
    %v2190 = vpop.f32.mrb[0].mxu0
    %v2191 = vadd.f32 0.0, %v2190
    %v2192 = vpop.f32.mrb[0].mxu0
    %v2193 = vpop.f32.mrb[0].mxu0
    %v2194 = vadd.f32 0.0, %v2193
    %v2195 = vpop.f32.mrb[0].mxu0
    %2196 = vmatprep.mubr.bf16.mxu0 0
    %2197 = vmatmul.mubr.bf16.gmra.mrb[0].mxu0 %v2151
    %v2198 = vpop.f32.mrb[0].mxu0
    %v2199 = vadd.f32 0.0, %v2198
    %v2200 = vpop.f32.mrb[0].mxu0
    %v2201 = vpop.f32.mrb[0].mxu0
    %v2202 = vadd.f32 0.0, %v2201
    %v2203 = vpop.f32.mrb[0].mxu0
    %2204 = vdwg.mxu0
    %v2205 = vadd.f32 %v1689, %v2191
    %v2206 = vadd.f32 %v1692, %v2194
    %v2207 = vadd.f32 %v1697, %v2199
    %v2208 = vadd.f32 %v1700, %v2202
    %s2209 = scalar_lea.vmem %s7, 48
    %v2210 = vld [vmem:[%s2209] sm:$0xf]
    %v2211 = vld [vmem:[%s2209 + $0x4] sm:$0xf]
    %v2212 = vld [vmem:[%s2209 + $0x8] sm:$0xf]
    %v2213 = vld [vmem:[%s2209 + $0xc] sm:$0xf]
    %v2218 = vunpack.c.l.b16 %v2210
    %v2219 = vunpack.c.l.b16 %v2211
    %v2220 = vunpack.c.l.b16 %v2212
    %v2221 = vunpack.c.l.b16 %v2213
    %v2222 = vpack.c.b16 %v2219, %v2218
    %v2223 = vpack.c.b16 %v2221, %v2220
    %2226 = vmatprep.subr.bf16.mxu0 0
    %2227 = vmatpush1.bf16.msra.mxu0 %v2222
    %2228 = vmatprep.subr.bf16.mxu0 0
    %2229 = vmatpush1.bf16.msra.mxu0 %v2223
    %2230 = vmatprep.subr.bf16.mxu0 0
    %2231 = vmatpush1.bf16.msra.mxu0 0
    %2232 = vmatprep.subr.bf16.mxu0 0
    %2233 = vmatpush1.bf16.msra.mxu0 0
    %2234 = vmatprep.subr.bf16.mxu0 0
    %2235 = vmatpush1.bf16.msra.mxu0 0
    %2236 = vmatprep.subr.bf16.mxu0 0
    %2237 = vmatpush1.bf16.msra.mxu0 0
    %2238 = vmatprep.subr.bf16.mxu0 0
    %2239 = vmatpush1.bf16.msra.mxu0 0
    %2240 = vmatprep.subr.bf16.mxu0 0
    %2241 = vmatpush1.bf16.msra.mxu0 0
    %2242 = vmatprep.subr.bf16.mxu0 0
    %2243 = vmatpush1.bf16.msra.mxu0 0
    %2244 = vmatprep.subr.bf16.mxu0 0
    %2245 = vmatpush1.bf16.msra.mxu0 0
    %2246 = vmatprep.subr.bf16.mxu0 0
    %2247 = vmatpush1.bf16.msra.mxu0 0
    %2248 = vmatprep.subr.bf16.mxu0 0
    %2249 = vmatpush1.bf16.msra.mxu0 0
    %2250 = vmatprep.subr.bf16.mxu0 0
    %2251 = vmatpush1.bf16.msra.mxu0 0
    %2252 = vmatprep.subr.bf16.mxu0 0
    %2253 = vmatpush1.bf16.msra.mxu0 0
    %2254 = vmatprep.subr.bf16.mxu0 0
    %2255 = vmatpush1.bf16.msra.mxu0 0
    %2256 = vmatprep.subr.bf16.mxu0 0
    %2257 = vmatpush1.bf16.msra.mxu0 0
    %2258 = vmatprep.mubr.bf16.mxu0 0
    %2259 = vmatmul.mubr.bf16.gmra.mrb[0].mxu0 %v711
    %v2260 = vpop.f32.mrb[0].mxu0
    %v2261 = vadd.f32 0.0, %v2260
    %v2262 = vpop.f32.mrb[0].mxu0
    %v2263 = vpop.f32.mrb[0].mxu0
    %v2264 = vadd.f32 0.0, %v2263
    %v2265 = vpop.f32.mrb[0].mxu0
    %2266 = vmatprep.mubr.bf16.mxu0 0
    %2267 = vmatmul.mubr.bf16.gmra.mrb[0].mxu0 %v714
    %v2268 = vpop.f32.mrb[0].mxu0
    %v2269 = vadd.f32 0.0, %v2268
    %v2270 = vpop.f32.mrb[0].mxu0
    %v2271 = vpop.f32.mrb[0].mxu0
    %v2272 = vadd.f32 0.0, %v2271
    %v2273 = vpop.f32.mrb[0].mxu0
    %2274 = vdwg.mxu0
    %s2275 = scalar_lea.vmem %s8, 48
    %v2276 = vld [vmem:[%s2275] sm:$0xf]
    %v2277 = vld [vmem:[%s2275 + $0x4] sm:$0xf]
    %v2278 = vld [vmem:[%s2275 + $0x8] sm:$0xf]
    %v2279 = vld [vmem:[%s2275 + $0xc] sm:$0xf]
    %v2284 = vunpack.c.l.b16 %v2276
    %v2285 = vunpack.c.l.b16 %v2277
    %v2286 = vunpack.c.l.b16 %v2278
    %v2287 = vunpack.c.l.b16 %v2279
    %v2288 = vpack.c.b16 %v2285, %v2284
    %v2289 = vpack.c.b16 %v2287, %v2286
    %2292 = vmatprep.subr.bf16.mxu0 0
    %2293 = vmatpush1.bf16.msra.mxu0 %v2288
    %2294 = vmatprep.subr.bf16.mxu0 0
    %2295 = vmatpush1.bf16.msra.mxu0 %v2289
    %2296 = vmatprep.subr.bf16.mxu0 0
    %2297 = vmatpush1.bf16.msra.mxu0 0
    %2298 = vmatprep.subr.bf16.mxu0 0
    %2299 = vmatpush1.bf16.msra.mxu0 0
    %2300 = vmatprep.subr.bf16.mxu0 0
    %2301 = vmatpush1.bf16.msra.mxu0 0
    %2302 = vmatprep.subr.bf16.mxu0 0
    %2303 = vmatpush1.bf16.msra.mxu0 0
    %2304 = vmatprep.subr.bf16.mxu0 0
    %2305 = vmatpush1.bf16.msra.mxu0 0
    %2306 = vmatprep.subr.bf16.mxu0 0
    %2307 = vmatpush1.bf16.msra.mxu0 0
    %2308 = vmatprep.subr.bf16.mxu0 0
    %2309 = vmatpush1.bf16.msra.mxu0 0
    %2310 = vmatprep.subr.bf16.mxu0 0
    %2311 = vmatpush1.bf16.msra.mxu0 0
    %2312 = vmatprep.subr.bf16.mxu0 0
    %2313 = vmatpush1.bf16.msra.mxu0 0
    %2314 = vmatprep.subr.bf16.mxu0 0
    %2315 = vmatpush1.bf16.msra.mxu0 0
    %2316 = vmatprep.subr.bf16.mxu0 0
    %2317 = vmatpush1.bf16.msra.mxu0 0
    %2318 = vmatprep.subr.bf16.mxu0 0
    %2319 = vmatpush1.bf16.msra.mxu0 0
    %2320 = vmatprep.subr.bf16.mxu0 0
    %2321 = vmatpush1.bf16.msra.mxu0 0
    %2322 = vmatprep.subr.bf16.mxu0 0
    %2323 = vmatpush1.bf16.msra.mxu0 0
    %2324 = vmatprep.mubr.bf16.mxu0 0
    %2325 = vmatmul.mubr.bf16.gmra.mrb[0].mxu0 %v711
    %v2326 = vpop.f32.mrb[0].mxu0
    %v2327 = vadd.f32 0.0, %v2326
    %v2328 = vpop.f32.mrb[0].mxu0
    %v2329 = vpop.f32.mrb[0].mxu0
    %v2330 = vadd.f32 0.0, %v2329
    %v2331 = vpop.f32.mrb[0].mxu0
    %2332 = vmatprep.mubr.bf16.mxu0 0
    %2333 = vmatmul.mubr.bf16.gmra.mrb[0].mxu0 %v714
    %v2334 = vpop.f32.mrb[0].mxu0
    %v2335 = vadd.f32 0.0, %v2334
    %v2336 = vpop.f32.mrb[0].mxu0
    %v2337 = vpop.f32.mrb[0].mxu0
    %v2338 = vadd.f32 0.0, %v2337
    %v2339 = vpop.f32.mrb[0].mxu0
    %2340 = vdwg.mxu0
    %s2341 = scalar_lea.vmem %s9, 48
    %v2342 = vld [vmem:[%s2341] sm:$0xf]
    %v2343 = vld [vmem:[%s2341 + $0x4] sm:$0xf]
    %v2344 = vld [vmem:[%s2341 + $0x8] sm:$0xf]
    %v2345 = vld [vmem:[%s2341 + $0xc] sm:$0xf]
    %v2350 = vunpack.c.l.b16 %v2342
    %v2351 = vunpack.c.l.b16 %v2343
    %v2352 = vunpack.c.l.b16 %v2344
    %v2353 = vunpack.c.l.b16 %v2345
    %v2354 = vpack.c.b16 %v2351, %v2350
    %v2355 = vpack.c.b16 %v2353, %v2352
    %2358 = vmatprep.subr.bf16.mxu0 0
    %2359 = vmatpush1.bf16.msra.mxu0 %v2354
    %2360 = vmatprep.subr.bf16.mxu0 0
    %2361 = vmatpush1.bf16.msra.mxu0 %v2355
    %2362 = vmatprep.subr.bf16.mxu0 0
    %2363 = vmatpush1.bf16.msra.mxu0 0
    %2364 = vmatprep.subr.bf16.mxu0 0
    %2365 = vmatpush1.bf16.msra.mxu0 0
    %2366 = vmatprep.subr.bf16.mxu0 0
    %2367 = vmatpush1.bf16.msra.mxu0 0
    %2368 = vmatprep.subr.bf16.mxu0 0
    %2369 = vmatpush1.bf16.msra.mxu0 0
    %2370 = vmatprep.subr.bf16.mxu0 0
    %2371 = vmatpush1.bf16.msra.mxu0 0
    %2372 = vmatprep.subr.bf16.mxu0 0
    %2373 = vmatpush1.bf16.msra.mxu0 0
    %2374 = vmatprep.subr.bf16.mxu0 0
    %2375 = vmatpush1.bf16.msra.mxu0 0
    %2376 = vmatprep.subr.bf16.mxu0 0
    %2377 = vmatpush1.bf16.msra.mxu0 0
    %2378 = vmatprep.subr.bf16.mxu0 0
    %2379 = vmatpush1.bf16.msra.mxu0 0
    %2380 = vmatprep.subr.bf16.mxu0 0
    %2381 = vmatpush1.bf16.msra.mxu0 0
    %2382 = vmatprep.subr.bf16.mxu0 0
    %2383 = vmatpush1.bf16.msra.mxu0 0
    %2384 = vmatprep.subr.bf16.mxu0 0
    %2385 = vmatpush1.bf16.msra.mxu0 0
    %2386 = vmatprep.subr.bf16.mxu0 0
    %2387 = vmatpush1.bf16.msra.mxu0 0
    %2388 = vmatprep.subr.bf16.mxu0 0
    %2389 = vmatpush1.bf16.msra.mxu0 0
    %2390 = vmatprep.mubr.bf16.mxu0 0
    %2391 = vmatmul.mubr.bf16.gmra.mrb[0].mxu0 %v711
    %v2392 = vpop.f32.mrb[0].mxu0
    %v2393 = vadd.f32 0.0, %v2392
    %v2394 = vpop.f32.mrb[0].mxu0
    %v2395 = vpop.f32.mrb[0].mxu0
    %v2396 = vadd.f32 0.0, %v2395
    %v2397 = vpop.f32.mrb[0].mxu0
    %2398 = vmatprep.mubr.bf16.mxu0 0
    %2399 = vmatmul.mubr.bf16.gmra.mrb[0].mxu0 %v714
    %v2400 = vpop.f32.mrb[0].mxu0
    %v2401 = vadd.f32 0.0, %v2400
    %v2402 = vpop.f32.mrb[0].mxu0
    %v2403 = vpop.f32.mrb[0].mxu0
    %v2404 = vadd.f32 0.0, %v2403
    %v2405 = vpop.f32.mrb[0].mxu0
    %2406 = vdwg.mxu0
    %v2407 = vpack.c.bf16 %v2264, %v2261
    %v2408 = vpack.c.bf16 %v2272, %v2269
    %v2409 = vpack.c.bf16 %v2330, %v2327
    %v2410 = vpack.c.bf16 %v2338, %v2335
    %v2412 = vsel %vm899, %v2407, 0
    %v2415 = vsel %vm899, %v2409, 0
    %2417 = vmatprep.subr.bf16.mxu0 0
    %2418 = vmatpush1.bf16.xpose.msra.mxu0 %v2415
    %2419 = vmatprep.subr.bf16.mxu0 0
    %2420 = vmatpush1.bf16.xpose.msra.mxu0 0
    %2421 = vmatprep.subr.bf16.mxu0 0
    %2422 = vmatpush1.bf16.xpose.msra.mxu0 0
    %2423 = vmatprep.subr.bf16.mxu0 0
    %2424 = vmatpush1.bf16.xpose.msra.mxu0 0
    %2425 = vmatprep.subr.bf16.mxu0 0
    %2426 = vmatpush1.bf16.xpose.msra.mxu0 0
    %2427 = vmatprep.subr.bf16.mxu0 0
    %2428 = vmatpush1.bf16.xpose.msra.mxu0 0
    %2429 = vmatprep.subr.bf16.mxu0 0
    %2430 = vmatpush1.bf16.xpose.msra.mxu0 0
    %2431 = vmatprep.subr.bf16.mxu0 0
    %2432 = vmatpush1.bf16.xpose.msra.mxu0 0
    %2433 = vmatprep.subr.bf16.mxu0 0
    %2434 = vmatpush1.bf16.xpose.msra.mxu0 0
    %2435 = vmatprep.subr.bf16.mxu0 0
    %2436 = vmatpush1.bf16.xpose.msra.mxu0 0
    %2437 = vmatprep.subr.bf16.mxu0 0
    %2438 = vmatpush1.bf16.xpose.msra.mxu0 0
    %2439 = vmatprep.subr.bf16.mxu0 0
    %2440 = vmatpush1.bf16.xpose.msra.mxu0 0
    %2441 = vmatprep.subr.bf16.mxu0 0
    %2442 = vmatpush1.bf16.xpose.msra.mxu0 0
    %2443 = vmatprep.subr.bf16.mxu0 0
    %2444 = vmatpush1.bf16.xpose.msra.mxu0 0
    %2445 = vmatprep.subr.bf16.mxu0 0
    %2446 = vmatpush1.bf16.xpose.msra.mxu0 0
    %2447 = vmatprep.subr.bf16.mxu0 0
    %2448 = vmatpush1.bf16.xpose.msra.mxu0 0
    %2449 = vmatprep.mubr.bf16.mxu0 0
    %2450 = vmatmul.mubr.bf16.gmra.mrb[0].mxu0 %v2412
    %v2451 = vpop.f32.mrb[0].mxu0
    %v2452 = vadd.f32 0.0, %v2451
    %v2453 = vpop.f32.mrb[0].mxu0
    %v2454 = vpop.f32.mrb[0].mxu0
    %v2455 = vadd.f32 0.0, %v2454
    %v2456 = vpop.f32.mrb[0].mxu0
    %2457 = vdwg.mxu0
    %v2459 = vsel %vm899, %v2408, 0
    %v2462 = vsel %vm899, %v2410, 0
    %2464 = vmatprep.subr.bf16.mxu0 0
    %2465 = vmatpush1.bf16.xpose.msra.mxu0 %v2462
    %2466 = vmatprep.subr.bf16.mxu0 0
    %2467 = vmatpush1.bf16.xpose.msra.mxu0 0
    %2468 = vmatprep.subr.bf16.mxu0 0
    %2469 = vmatpush1.bf16.xpose.msra.mxu0 0
    %2470 = vmatprep.subr.bf16.mxu0 0
    %2471 = vmatpush1.bf16.xpose.msra.mxu0 0
    %2472 = vmatprep.subr.bf16.mxu0 0
    %2473 = vmatpush1.bf16.xpose.msra.mxu0 0
    %2474 = vmatprep.subr.bf16.mxu0 0
    %2475 = vmatpush1.bf16.xpose.msra.mxu0 0
    %2476 = vmatprep.subr.bf16.mxu0 0
    %2477 = vmatpush1.bf16.xpose.msra.mxu0 0
    %2478 = vmatprep.subr.bf16.mxu0 0
    %2479 = vmatpush1.bf16.xpose.msra.mxu0 0
    %2480 = vmatprep.subr.bf16.mxu0 0
    %2481 = vmatpush1.bf16.xpose.msra.mxu0 0
    %2482 = vmatprep.subr.bf16.mxu0 0
    %2483 = vmatpush1.bf16.xpose.msra.mxu0 0
    %2484 = vmatprep.subr.bf16.mxu0 0
    %2485 = vmatpush1.bf16.xpose.msra.mxu0 0
    %2486 = vmatprep.subr.bf16.mxu0 0
    %2487 = vmatpush1.bf16.xpose.msra.mxu0 0
    %2488 = vmatprep.subr.bf16.mxu0 0
    %2489 = vmatpush1.bf16.xpose.msra.mxu0 0
    %2490 = vmatprep.subr.bf16.mxu0 0
    %2491 = vmatpush1.bf16.xpose.msra.mxu0 0
    %2492 = vmatprep.subr.bf16.mxu0 0
    %2493 = vmatpush1.bf16.xpose.msra.mxu0 0
    %2494 = vmatprep.subr.bf16.mxu0 0
    %2495 = vmatpush1.bf16.xpose.msra.mxu0 0
    %2496 = vmatprep.mubr.bf16.mxu0 0
    %2497 = vmatmul.mubr.bf16.gmra.mrb[0].mxu0 %v2459
    %v2498 = vpop.f32.mrb[0].mxu0
    %v2499 = vadd.f32 0.0, %v2498
    %v2500 = vpop.f32.mrb[0].mxu0
    %v2501 = vpop.f32.mrb[0].mxu0
    %v2502 = vadd.f32 0.0, %v2501
    %v2503 = vpop.f32.mrb[0].mxu0
    %2504 = vdwg.mxu0
    %v2505 = vmul.f32 %v2452, 0.35355338
    %v2506 = vmul.f32 %v2455, 0.35355338
    %v2507 = vmul.f32 %v2499, 0.35355338
    %v2508 = vmul.f32 %v2502, 0.35355338
    %v2509 = vadd.f32 %v2505, %v647
    %v2510 = vadd.f32 %v2506, %v648
    %v2511 = vadd.f32 %v2507, %v647
    %v2512 = vadd.f32 %v2508, %v648
    %v2513 = vsel %vm1002, %v2509, -inf
    %2514 = vmax.xlane.f32.xlu0 %v2513
    %v2515 = vpop.xlane.xlu0 %2514
    %v2516 = vsel %vm1002, %v2510, -inf
    %2517 = vmax.xlane.f32.xlu0 %v2516
    %v2518 = vpop.xlane.xlu0 %2517
    %v2519 = vsel %vm1002, %v2511, -inf
    %2520 = vmax.xlane.f32.xlu0 %v2519
    %v2521 = vpop.xlane.xlu0 %2520
    %v2522 = vsel %vm1002, %v2512, -inf
    %2523 = vmax.xlane.f32.xlu0 %v2522
    %v2524 = vpop.xlane.xlu0 %2523
    %v2525 = vsub.f32 %v2509, %v2515
    %v2526 = vsub.f32 %v2510, %v2518
    %v2527 = vsub.f32 %v2511, %v2521
    %v2528 = vsub.f32 %v2512, %v2524
    %v2529 = vmul.f32 %v2525, 1.442695
    %v2530 = vpow.pop %v2529
    %v2531 = vmul.f32 %v2526, 1.442695
    %v2532 = vpow.pop %v2531
    %v2533 = vmul.f32 %v2527, 1.442695
    %v2534 = vpow.pop %v2533
    %v2535 = vmul.f32 %v2528, 1.442695
    %v2536 = vpow.pop %v2535
    %v2537 = vsel %vm1002, %v2530, 0.0
    %2538 = vadd.xlane.f32.xlu0 %v2537
    %v2539 = vpop.xlane.xlu0 %2538
    %v2540 = vsel %vm1002, %v2532, 0.0
    %2541 = vadd.xlane.f32.xlu0 %v2540
    %v2542 = vpop.xlane.xlu0 %2541
    %v2543 = vsel %vm1002, %v2534, 0.0
    %2544 = vadd.xlane.f32.xlu0 %v2543
    %v2545 = vpop.xlane.xlu0 %2544
    %v2546 = vsel %vm1002, %v2536, 0.0
    %2547 = vadd.xlane.f32.xlu0 %v2546
    %v2548 = vpop.xlane.xlu0 %2547
    %v2549 = vrcp.pop %v2539
    %v2550 = vrcp.pop %v2542
    %v2551 = vrcp.pop %v2545
    %v2552 = vrcp.pop %v2548
    %v2553 = vmul.f32 %v2530, %v2549
    %v2554 = vmul.f32 %v2532, %v2550
    %v2555 = vmul.f32 %v2534, %v2551
    %v2556 = vmul.f32 %v2536, %v2552
    %v2557 = vpack.c.bf16 %v2554, %v2553
    %v2558 = vpack.c.bf16 %v2556, %v2555
    %v2559 = vpack.c.bf16 %v2396, %v2393
    %v2560 = vpack.c.bf16 %v2404, %v2401
    %v2562 = vsel %vm1002, %v2557, 0
    %2564 = vmatprep.subr.bf16.mxu0 0
    %2565 = vmatpush1.bf16.msra.mxu0 %v2559
    %2566 = vmatprep.subr.bf16.mxu0 0
    %2567 = vmatpush1.bf16.msra.mxu0 0
    %2568 = vmatprep.subr.bf16.mxu0 0
    %2569 = vmatpush1.bf16.msra.mxu0 0
    %2570 = vmatprep.subr.bf16.mxu0 0
    %2571 = vmatpush1.bf16.msra.mxu0 0
    %2572 = vmatprep.subr.bf16.mxu0 0
    %2573 = vmatpush1.bf16.msra.mxu0 0
    %2574 = vmatprep.subr.bf16.mxu0 0
    %2575 = vmatpush1.bf16.msra.mxu0 0
    %2576 = vmatprep.subr.bf16.mxu0 0
    %2577 = vmatpush1.bf16.msra.mxu0 0
    %2578 = vmatprep.subr.bf16.mxu0 0
    %2579 = vmatpush1.bf16.msra.mxu0 0
    %2580 = vmatprep.subr.bf16.mxu0 0
    %2581 = vmatpush1.bf16.msra.mxu0 0
    %2582 = vmatprep.subr.bf16.mxu0 0
    %2583 = vmatpush1.bf16.msra.mxu0 0
    %2584 = vmatprep.subr.bf16.mxu0 0
    %2585 = vmatpush1.bf16.msra.mxu0 0
    %2586 = vmatprep.subr.bf16.mxu0 0
    %2587 = vmatpush1.bf16.msra.mxu0 0
    %2588 = vmatprep.subr.bf16.mxu0 0
    %2589 = vmatpush1.bf16.msra.mxu0 0
    %2590 = vmatprep.subr.bf16.mxu0 0
    %2591 = vmatpush1.bf16.msra.mxu0 0
    %2592 = vmatprep.subr.bf16.mxu0 0
    %2593 = vmatpush1.bf16.msra.mxu0 0
    %2594 = vmatprep.subr.bf16.mxu0 0
    %2595 = vmatpush1.bf16.msra.mxu0 0
    %2596 = vmatprep.mubr.bf16.mxu0 0
    %2597 = vmatmul.mubr.bf16.gmra.mrb[0].mxu0 %v2562
    %v2598 = vpop.f32.mrb[0].mxu0
    %v2599 = vadd.f32 0.0, %v2598
    %v2600 = vpop.f32.mrb[0].mxu0
    %v2601 = vpop.f32.mrb[0].mxu0
    %v2602 = vadd.f32 0.0, %v2601
    %v2603 = vpop.f32.mrb[0].mxu0
    %2604 = vdwg.mxu0
    %v2606 = vsel %vm1002, %v2558, 0
    %2608 = vmatprep.subr.bf16.mxu0 0
    %2609 = vmatpush1.bf16.msra.mxu0 %v2560
    %2610 = vmatprep.subr.bf16.mxu0 0
    %2611 = vmatpush1.bf16.msra.mxu0 0
    %2612 = vmatprep.subr.bf16.mxu0 0
    %2613 = vmatpush1.bf16.msra.mxu0 0
    %2614 = vmatprep.subr.bf16.mxu0 0
    %2615 = vmatpush1.bf16.msra.mxu0 0
    %2616 = vmatprep.subr.bf16.mxu0 0
    %2617 = vmatpush1.bf16.msra.mxu0 0
    %2618 = vmatprep.subr.bf16.mxu0 0
    %2619 = vmatpush1.bf16.msra.mxu0 0
    %2620 = vmatprep.subr.bf16.mxu0 0
    %2621 = vmatpush1.bf16.msra.mxu0 0
    %2622 = vmatprep.subr.bf16.mxu0 0
    %2623 = vmatpush1.bf16.msra.mxu0 0
    %2624 = vmatprep.subr.bf16.mxu0 0
    %2625 = vmatpush1.bf16.msra.mxu0 0
    %2626 = vmatprep.subr.bf16.mxu0 0
    %2627 = vmatpush1.bf16.msra.mxu0 0
    %2628 = vmatprep.subr.bf16.mxu0 0
    %2629 = vmatpush1.bf16.msra.mxu0 0
    %2630 = vmatprep.subr.bf16.mxu0 0
    %2631 = vmatpush1.bf16.msra.mxu0 0
    %2632 = vmatprep.subr.bf16.mxu0 0
    %2633 = vmatpush1.bf16.msra.mxu0 0
    %2634 = vmatprep.subr.bf16.mxu0 0
    %2635 = vmatpush1.bf16.msra.mxu0 0
    %2636 = vmatprep.subr.bf16.mxu0 0
    %2637 = vmatpush1.bf16.msra.mxu0 0
    %2638 = vmatprep.subr.bf16.mxu0 0
    %2639 = vmatpush1.bf16.msra.mxu0 0
    %2640 = vmatprep.mubr.bf16.mxu0 0
    %2641 = vmatmul.mubr.bf16.gmra.mrb[0].mxu0 %v2606
    %v2642 = vpop.f32.mrb[0].mxu0
    %v2643 = vadd.f32 0.0, %v2642
    %v2644 = vpop.f32.mrb[0].mxu0
    %v2645 = vpop.f32.mrb[0].mxu0
    %v2646 = vadd.f32 0.0, %v2645
    %v2647 = vpop.f32.mrb[0].mxu0
    %2648 = vdwg.mxu0
    %s2649 = scalar_lea.vmem %s10, 12
    %v2650 = vld [vmem:[%s2649] sm:$0xf]
    %v2651 = vpack.c.bf16 %v2602, %v2599
    %v2652 = vpack.c.bf16 %v2646, %v2643
    %v2654 = vsel %vm899, %v2651, 0
    %v2657 = vsel %vm899, %v2652, 0
    %v2660 = vsel %vm1592, %v2650, 0
    %2662 = vmatprep.subr.bf16.mxu0 0
    %2663 = vmatpush1.bf16.msra.mxu0 %v2660
    %2664 = vmatprep.subr.bf16.mxu0 0
    %2665 = vmatpush1.bf16.msra.mxu0 0
    %2666 = vmatprep.subr.bf16.mxu0 0
    %2667 = vmatpush1.bf16.msra.mxu0 0
    %2668 = vmatprep.subr.bf16.mxu0 0
    %2669 = vmatpush1.bf16.msra.mxu0 0
    %2670 = vmatprep.subr.bf16.mxu0 0
    %2671 = vmatpush1.bf16.msra.mxu0 0
    %2672 = vmatprep.subr.bf16.mxu0 0
    %2673 = vmatpush1.bf16.msra.mxu0 0
    %2674 = vmatprep.subr.bf16.mxu0 0
    %2675 = vmatpush1.bf16.msra.mxu0 0
    %2676 = vmatprep.subr.bf16.mxu0 0
    %2677 = vmatpush1.bf16.msra.mxu0 0
    %2678 = vmatprep.subr.bf16.mxu0 0
    %2679 = vmatpush1.bf16.msra.mxu0 0
    %2680 = vmatprep.subr.bf16.mxu0 0
    %2681 = vmatpush1.bf16.msra.mxu0 0
    %2682 = vmatprep.subr.bf16.mxu0 0
    %2683 = vmatpush1.bf16.msra.mxu0 0
    %2684 = vmatprep.subr.bf16.mxu0 0
    %2685 = vmatpush1.bf16.msra.mxu0 0
    %2686 = vmatprep.subr.bf16.mxu0 0
    %2687 = vmatpush1.bf16.msra.mxu0 0
    %2688 = vmatprep.subr.bf16.mxu0 0
    %2689 = vmatpush1.bf16.msra.mxu0 0
    %2690 = vmatprep.subr.bf16.mxu0 0
    %2691 = vmatpush1.bf16.msra.mxu0 0
    %2692 = vmatprep.subr.bf16.mxu0 0
    %2693 = vmatpush1.bf16.msra.mxu0 0
    %2694 = vmatprep.mubr.bf16.mxu0 0
    %2695 = vmatmul.mubr.bf16.gmra.mrb[0].mxu0 %v2654
    %v2696 = vpop.f32.mrb[0].mxu0
    %v2697 = vadd.f32 0.0, %v2696
    %v2698 = vpop.f32.mrb[0].mxu0
    %v2699 = vpop.f32.mrb[0].mxu0
    %v2700 = vadd.f32 0.0, %v2699
    %v2701 = vpop.f32.mrb[0].mxu0
    %2702 = vmatprep.mubr.bf16.mxu0 0
    %2703 = vmatmul.mubr.bf16.gmra.mrb[0].mxu0 %v2657
    %v2704 = vpop.f32.mrb[0].mxu0
    %v2705 = vadd.f32 0.0, %v2704
    %v2706 = vpop.f32.mrb[0].mxu0
    %v2707 = vpop.f32.mrb[0].mxu0
    %v2708 = vadd.f32 0.0, %v2707
    %v2709 = vpop.f32.mrb[0].mxu0
    %2710 = vdwg.mxu0
    %v2711 = vadd.f32 %v2205, %v2697
    %v2712 = vadd.f32 %v2206, %v2700
    %v2713 = vadd.f32 %v2207, %v2705
    %v2714 = vadd.f32 %v2208, %v2708
    %v2715 = vadd.f32 %v641, %v2711
    %v2716 = vadd.f32 %v642, %v2712
    %v2717 = vadd.f32 %v643, %v2713
    %v2718 = vadd.f32 %v644, %v2714
    %v2719 = vld [vmem:[%s11] sm:$0x1]
    %v2720 = vmul.f32 %v2715, %v2715
    %v2721 = vmul.f32 %v2716, %v2716
    %v2722 = vmul.f32 %v2717, %v2717
    %v2723 = vmul.f32 %v2718, %v2718
    %v2724 = vsel %vm357, %v2720, 0.0
    %2725 = vadd.xlane.f32.xlu0 %v2724
    %v2726 = vpop.xlane.xlu0 %2725
    %v2727 = vsel %vm357, %v2721, 0.0
    %2728 = vadd.xlane.f32.xlu0 %v2727
    %v2729 = vpop.xlane.xlu0 %2728
    %v2730 = vsel %vm357, %v2722, 0.0
    %2731 = vadd.xlane.f32.xlu0 %v2730
    %v2732 = vpop.xlane.xlu0 %2731
    %v2733 = vsel %vm357, %v2723, 0.0
    %2734 = vadd.xlane.f32.xlu0 %v2733
    %v2735 = vpop.xlane.xlu0 %2734
    %v2736 = vmul.f32 %v2726, %v361
    %v2737 = vmul.f32 %v2729, %v361
    %v2738 = vmul.f32 %v2732, %v361
    %v2739 = vmul.f32 %v2735, %v361
    %v2740 = vadd.f32 %v2736, 1e-06
    %v2741 = vadd.f32 %v2737, 1e-06
    %v2742 = vadd.f32 %v2738, 1e-06
    %v2743 = vadd.f32 %v2739, 1e-06
    %v2744 = vrsqrt.pop %v2740
    %v2745 = vrsqrt.pop %v2741
    %v2746 = vrsqrt.pop %v2742
    %v2747 = vrsqrt.pop %v2743
    %v2748 = vmul.f32 %v2715, %v2744
    %v2749 = vmul.f32 %v2716, %v2745
    %v2750 = vmul.f32 %v2717, %v2746
    %v2751 = vmul.f32 %v2718, %v2747
    %v2753 = vlaneseq
    %v2754 = vshrl.u32 %v2753, 7
    %v2755 = vsub.s32 0, %v2754
    %v2756 = vrot.slane %v2719, %v2755
    %v2758 = vmul.f32 %v2748, %v2756
    %v2759 = vmul.f32 %v2749, %v2756
    %v2760 = vmul.f32 %v2750, %v2756
    %v2761 = vmul.f32 %v2751, %v2756
    %v2762 = vld [vmem:[%s12] sm:$0xff]
    %v2763 = vld [vmem:[%s12 + $0x8] sm:$0xff]
    %v2764 = vld [vmem:[%s12 + $0x10] sm:$0xff]
    %v2765 = vld [vmem:[%s12 + $0x18] sm:$0xff]
    %v2766 = vpack.c.bf16 %v2759, %v2758
    %v2767 = vpack.c.bf16 %v2761, %v2760
    %v2772 = vunpack.c.l.b16 %v2762
    %v2773 = vunpack.c.h.b16 %v2762
    %v2774 = vunpack.c.l.b16 %v2763
    %v2775 = vunpack.c.h.b16 %v2763
    %v2776 = vunpack.c.l.b16 %v2764
    %v2777 = vunpack.c.h.b16 %v2764
    %v2778 = vunpack.c.l.b16 %v2765
    %v2779 = vunpack.c.h.b16 %v2765
    %v2780 = vpack.c.b16 %v2774, %v2772
    %v2781 = vpack.c.b16 %v2775, %v2773
    %v2782 = vpack.c.b16 %v2778, %v2776
    %v2783 = vpack.c.b16 %v2779, %v2777
    %v2789 = vsel %vm357, %v2766, 0
    %v2792 = vsel %vm357, %v2767, 0
    %2794 = vmatprep.subr.bf16.mxu0 %v2781
    %2795 = vmatpush1.bf16.msra.mxu0 %v2780
    %2796 = vmatprep.subr.bf16.mxu0 %v2783
    %2797 = vmatpush1.bf16.msra.mxu0 %v2782
    %2798 = vmatprep.subr.bf16.mxu0 0
    %2799 = vmatpush1.bf16.msra.mxu0 0
    %2800 = vmatprep.subr.bf16.mxu0 0
    %2801 = vmatpush1.bf16.msra.mxu0 0
    %2802 = vmatprep.subr.bf16.mxu0 0
    %2803 = vmatpush1.bf16.msra.mxu0 0
    %2804 = vmatprep.subr.bf16.mxu0 0
    %2805 = vmatpush1.bf16.msra.mxu0 0
    %2806 = vmatprep.subr.bf16.mxu0 0
    %2807 = vmatpush1.bf16.msra.mxu0 0
    %2808 = vmatprep.subr.bf16.mxu0 0
    %2809 = vmatpush1.bf16.msra.mxu0 0
    %2810 = vmatprep.subr.bf16.mxu0 0
    %2811 = vmatpush1.bf16.msra.mxu0 0
    %2812 = vmatprep.subr.bf16.mxu0 0
    %2813 = vmatpush1.bf16.msra.mxu0 0
    %2814 = vmatprep.subr.bf16.mxu0 0
    %2815 = vmatpush1.bf16.msra.mxu0 0
    %2816 = vmatprep.subr.bf16.mxu0 0
    %2817 = vmatpush1.bf16.msra.mxu0 0
    %2818 = vmatprep.subr.bf16.mxu0 0
    %2819 = vmatpush1.bf16.msra.mxu0 0
    %2820 = vmatprep.subr.bf16.mxu0 0
    %2821 = vmatpush1.bf16.msra.mxu0 0
    %2822 = vmatprep.subr.bf16.mxu0 0
    %2823 = vmatpush1.bf16.msra.mxu0 0
    %2824 = vmatprep.subr.bf16.mxu0 0
    %2825 = vmatpush1.bf16.msra.mxu0 0
    %2826 = vmatprep.mubr.bf16.mxu0 0
    %2827 = vmatmul.mubr.bf16.gmra.mrb[0].mxu0 %v2789
    %v2828 = vpop.f32.mrb[0].mxu0
    %v2829 = vadd.f32 0.0, %v2828
    %v2830 = vpop.f32.mrb[0].mxu0
    %v2831 = vadd.f32 0.0, %v2830
    %v2832 = vpop.f32.mrb[0].mxu0
    %v2833 = vadd.f32 0.0, %v2832
    %v2834 = vpop.f32.mrb[0].mxu0
    %v2835 = vadd.f32 0.0, %v2834
    %2836 = vmatprep.mubr.bf16.mxu0 0
    %2837 = vmatmul.mubr.bf16.gmra.mrb[0].mxu0 %v2792
    %v2838 = vpop.f32.mrb[0].mxu0
    %v2839 = vadd.f32 0.0, %v2838
    %v2840 = vpop.f32.mrb[0].mxu0
    %v2841 = vadd.f32 0.0, %v2840
    %v2842 = vpop.f32.mrb[0].mxu0
    %v2843 = vadd.f32 0.0, %v2842
    %v2844 = vpop.f32.mrb[0].mxu0
    %v2845 = vadd.f32 0.0, %v2844
    %2846 = vdwg.mxu0
    %v2847 = vxor.u32 %v2829, 2147483648
    %v2848 = vxor.u32 %v2833, 2147483648
    %v2849 = vxor.u32 %v2839, 2147483648
    %v2850 = vxor.u32 %v2843, 2147483648
    %v2851 = vmul.f32 %v2847, 1.442695
    %v2852 = vpow.pop %v2851
    %v2853 = vmul.f32 %v2848, 1.442695
    %v2854 = vpow.pop %v2853
    %v2855 = vmul.f32 %v2849, 1.442695
    %v2856 = vpow.pop %v2855
    %v2857 = vmul.f32 %v2850, 1.442695
    %v2858 = vpow.pop %v2857
    %v2859 = vadd.f32 %v2852, 1.0
    %v2860 = vadd.f32 %v2854, 1.0
    %v2861 = vadd.f32 %v2856, 1.0
    %v2862 = vadd.f32 %v2858, 1.0
    %v2863 = vrcp.pop %v2859
    %v2864 = vmul.f32 1.0, %v2863
    %v2865 = vrcp.pop %v2860
    %v2866 = vmul.f32 1.0, %v2865
    %v2867 = vrcp.pop %v2861
    %v2868 = vmul.f32 1.0, %v2867
    %v2869 = vrcp.pop %v2862
    %v2870 = vmul.f32 1.0, %v2869
    %v2871 = vmul.f32 %v2829, %v2864
    %v2872 = vmul.f32 %v2833, %v2866
    %v2873 = vmul.f32 %v2839, %v2868
    %v2874 = vmul.f32 %v2843, %v2870
    %v2875 = vmul.f32 %v2871, %v2831
    %v2876 = vmul.f32 %v2872, %v2835
    %v2877 = vmul.f32 %v2873, %v2841
    %v2878 = vmul.f32 %v2874, %v2845
    %v2879 = vld [vmem:[%s13] sm:$0xf]
    %v2880 = vld [vmem:[%s13 + $0x4] sm:$0xf]
    %v2881 = vld [vmem:[%s13 + $0x8] sm:$0xf]
    %v2882 = vld [vmem:[%s13 + $0xc] sm:$0xf]
    %v2883 = vld [vmem:[%s13 + $0x10] sm:$0xf]
    %v2884 = vld [vmem:[%s13 + $0x14] sm:$0xf]
    %v2885 = vld [vmem:[%s13 + $0x18] sm:$0xf]
    %v2886 = vld [vmem:[%s13 + $0x1c] sm:$0xf]
    %v2887 = vpack.c.bf16 %v2876, %v2875
    %v2888 = vpack.c.bf16 %v2878, %v2877
    %v2897 = vunpack.c.l.b16 %v2879
    %v2898 = vunpack.c.l.b16 %v2880
    %v2899 = vunpack.c.l.b16 %v2881
    %v2900 = vunpack.c.l.b16 %v2882
    %v2901 = vunpack.c.l.b16 %v2883
    %v2902 = vunpack.c.l.b16 %v2884
    %v2903 = vunpack.c.l.b16 %v2885
    %v2904 = vunpack.c.l.b16 %v2886
    %v2905 = vpack.c.b16 %v2898, %v2897
    %v2906 = vpack.c.b16 %v2900, %v2899
    %v2907 = vpack.c.b16 %v2902, %v2901
    %v2908 = vpack.c.b16 %v2904, %v2903
    %v2914 = vsel %vm300, %v2887, 0
    %v2917 = vsel %vm300, %v2888, 0
    %2919 = vmatprep.subr.bf16.mxu0 0
    %2920 = vmatpush1.bf16.msra.mxu0 %v2905
    %2921 = vmatprep.subr.bf16.mxu0 0
    %2922 = vmatpush1.bf16.msra.mxu0 %v2906
    %2923 = vmatprep.subr.bf16.mxu0 0
    %2924 = vmatpush1.bf16.msra.mxu0 %v2907
    %2925 = vmatprep.subr.bf16.mxu0 0
    %2926 = vmatpush1.bf16.msra.mxu0 %v2908
    %2927 = vmatprep.subr.bf16.mxu0 0
    %2928 = vmatpush1.bf16.msra.mxu0 0
    %2929 = vmatprep.subr.bf16.mxu0 0
    %2930 = vmatpush1.bf16.msra.mxu0 0
    %2931 = vmatprep.subr.bf16.mxu0 0
    %2932 = vmatpush1.bf16.msra.mxu0 0
    %2933 = vmatprep.subr.bf16.mxu0 0
    %2934 = vmatpush1.bf16.msra.mxu0 0
    %2935 = vmatprep.subr.bf16.mxu0 0
    %2936 = vmatpush1.bf16.msra.mxu0 0
    %2937 = vmatprep.subr.bf16.mxu0 0
    %2938 = vmatpush1.bf16.msra.mxu0 0
    %2939 = vmatprep.subr.bf16.mxu0 0
    %2940 = vmatpush1.bf16.msra.mxu0 0
    %2941 = vmatprep.subr.bf16.mxu0 0
    %2942 = vmatpush1.bf16.msra.mxu0 0
    %2943 = vmatprep.subr.bf16.mxu0 0
    %2944 = vmatpush1.bf16.msra.mxu0 0
    %2945 = vmatprep.subr.bf16.mxu0 0
    %2946 = vmatpush1.bf16.msra.mxu0 0
    %2947 = vmatprep.subr.bf16.mxu0 0
    %2948 = vmatpush1.bf16.msra.mxu0 0
    %2949 = vmatprep.subr.bf16.mxu0 0
    %2950 = vmatpush1.bf16.msra.mxu0 0
    %2951 = vmatprep.mubr.bf16.mxu0 0
    %2952 = vmatmul.mubr.bf16.gmra.mrb[0].mxu0 %v2914
    %v2953 = vpop.f32.mrb[0].mxu0
    %v2954 = vadd.f32 0.0, %v2953
    %v2955 = vpop.f32.mrb[0].mxu0
    %v2956 = vpop.f32.mrb[0].mxu0
    %v2957 = vadd.f32 0.0, %v2956
    %v2958 = vpop.f32.mrb[0].mxu0
    %2959 = vmatprep.mubr.bf16.mxu0 0
    %2960 = vmatmul.mubr.bf16.gmra.mrb[0].mxu0 %v2917
    %v2961 = vpop.f32.mrb[0].mxu0
    %v2962 = vadd.f32 0.0, %v2961
    %v2963 = vpop.f32.mrb[0].mxu0
    %v2964 = vpop.f32.mrb[0].mxu0
    %v2965 = vadd.f32 0.0, %v2964
    %v2966 = vpop.f32.mrb[0].mxu0
    %2967 = vdwg.mxu0
    %v2968 = vadd.f32 %v2715, %v2954
    %v2969 = vadd.f32 %v2716, %v2957
    %v2970 = vadd.f32 %v2717, %v2962
    %v2971 = vadd.f32 %v2718, %v2965
    %s2972 = scalar_lea.vmem %s6, 1
    %v2973 = vld [vmem:[%s2972] sm:$0x1]
    %v2974 = vmul.f32 %v2968, %v2968
    %v2975 = vmul.f32 %v2969, %v2969
    %v2976 = vmul.f32 %v2970, %v2970
    %v2977 = vmul.f32 %v2971, %v2971
    %v2978 = vsel %vm357, %v2974, 0.0
    %2979 = vadd.xlane.f32.xlu0 %v2978
    %v2980 = vpop.xlane.xlu0 %2979
    %v2981 = vsel %vm357, %v2975, 0.0
    %2982 = vadd.xlane.f32.xlu0 %v2981
    %v2983 = vpop.xlane.xlu0 %2982
    %v2984 = vsel %vm357, %v2976, 0.0
    %2985 = vadd.xlane.f32.xlu0 %v2984
    %v2986 = vpop.xlane.xlu0 %2985
    %v2987 = vsel %vm357, %v2977, 0.0
    %2988 = vadd.xlane.f32.xlu0 %v2987
    %v2989 = vpop.xlane.xlu0 %2988
    %v2990 = vmul.f32 %v2980, %v361
    %v2991 = vmul.f32 %v2983, %v361
    %v2992 = vmul.f32 %v2986, %v361
    %v2993 = vmul.f32 %v2989, %v361
    %v2994 = vadd.f32 %v2990, 1e-06
    %v2995 = vadd.f32 %v2991, 1e-06
    %v2996 = vadd.f32 %v2992, 1e-06
    %v2997 = vadd.f32 %v2993, 1e-06
    %v2998 = vrsqrt.pop %v2994
    %v2999 = vrsqrt.pop %v2995
    %v3000 = vrsqrt.pop %v2996
    %v3001 = vrsqrt.pop %v2997
    %v3002 = vmul.f32 %v2968, %v2998
    %v3003 = vmul.f32 %v2969, %v2999
    %v3004 = vmul.f32 %v2970, %v3000
    %v3005 = vmul.f32 %v2971, %v3001
    %v3007 = vlaneseq
    %v3008 = vshrl.u32 %v3007, 7
    %v3009 = vsub.s32 0, %v3008
    %v3010 = vrot.slane %v2973, %v3009
    %v3012 = vmul.f32 %v3002, %v3010
    %v3013 = vmul.f32 %v3003, %v3010
    %v3014 = vmul.f32 %v3004, %v3010
    %v3015 = vmul.f32 %v3005, %v3010
    %v3016 = vpack.c.bf16 %v3013, %v3012
    %v3017 = vpack.c.bf16 %v3015, %v3014
    %s3018 = scalar_lea.vmem %s7, 64
    %v3019 = vld [vmem:[%s3018] sm:$0xf]
    %v3020 = vld [vmem:[%s3018 + $0x4] sm:$0xf]
    %v3021 = vld [vmem:[%s3018 + $0x8] sm:$0xf]
    %v3022 = vld [vmem:[%s3018 + $0xc] sm:$0xf]
    %v3027 = vunpack.c.l.b16 %v3019
    %v3028 = vunpack.c.l.b16 %v3020
    %v3029 = vunpack.c.l.b16 %v3021
    %v3030 = vunpack.c.l.b16 %v3022
    %v3031 = vpack.c.b16 %v3028, %v3027
    %v3032 = vpack.c.b16 %v3030, %v3029
    %v3036 = vsel %vm357, %v3016, 0
    %v3039 = vsel %vm357, %v3017, 0
    %3041 = vmatprep.subr.bf16.mxu0 0
    %3042 = vmatpush1.bf16.msra.mxu0 %v3031
    %3043 = vmatprep.subr.bf16.mxu0 0
    %3044 = vmatpush1.bf16.msra.mxu0 %v3032
    %3045 = vmatprep.subr.bf16.mxu0 0
    %3046 = vmatpush1.bf16.msra.mxu0 0
    %3047 = vmatprep.subr.bf16.mxu0 0
    %3048 = vmatpush1.bf16.msra.mxu0 0
    %3049 = vmatprep.subr.bf16.mxu0 0
    %3050 = vmatpush1.bf16.msra.mxu0 0
    %3051 = vmatprep.subr.bf16.mxu0 0
    %3052 = vmatpush1.bf16.msra.mxu0 0
    %3053 = vmatprep.subr.bf16.mxu0 0
    %3054 = vmatpush1.bf16.msra.mxu0 0
    %3055 = vmatprep.subr.bf16.mxu0 0
    %3056 = vmatpush1.bf16.msra.mxu0 0
    %3057 = vmatprep.subr.bf16.mxu0 0
    %3058 = vmatpush1.bf16.msra.mxu0 0
    %3059 = vmatprep.subr.bf16.mxu0 0
    %3060 = vmatpush1.bf16.msra.mxu0 0
    %3061 = vmatprep.subr.bf16.mxu0 0
    %3062 = vmatpush1.bf16.msra.mxu0 0
    %3063 = vmatprep.subr.bf16.mxu0 0
    %3064 = vmatpush1.bf16.msra.mxu0 0
    %3065 = vmatprep.subr.bf16.mxu0 0
    %3066 = vmatpush1.bf16.msra.mxu0 0
    %3067 = vmatprep.subr.bf16.mxu0 0
    %3068 = vmatpush1.bf16.msra.mxu0 0
    %3069 = vmatprep.subr.bf16.mxu0 0
    %3070 = vmatpush1.bf16.msra.mxu0 0
    %3071 = vmatprep.subr.bf16.mxu0 0
    %3072 = vmatpush1.bf16.msra.mxu0 0
    %3073 = vmatprep.mubr.bf16.mxu0 0
    %3074 = vmatmul.mubr.bf16.gmra.mrb[0].mxu0 %v3036
    %v3075 = vpop.f32.mrb[0].mxu0
    %v3076 = vadd.f32 0.0, %v3075
    %v3077 = vpop.f32.mrb[0].mxu0
    %v3078 = vpop.f32.mrb[0].mxu0
    %v3079 = vadd.f32 0.0, %v3078
    %v3080 = vpop.f32.mrb[0].mxu0
    %3081 = vmatprep.mubr.bf16.mxu0 0
    %3082 = vmatmul.mubr.bf16.gmra.mrb[0].mxu0 %v3039
    %v3083 = vpop.f32.mrb[0].mxu0
    %v3084 = vadd.f32 0.0, %v3083
    %v3085 = vpop.f32.mrb[0].mxu0
    %v3086 = vpop.f32.mrb[0].mxu0
    %v3087 = vadd.f32 0.0, %v3086
    %v3088 = vpop.f32.mrb[0].mxu0
    %3089 = vdwg.mxu0
    %s3090 = scalar_lea.vmem %s8, 64
    %v3091 = vld [vmem:[%s3090] sm:$0xf]
    %v3092 = vld [vmem:[%s3090 + $0x4] sm:$0xf]
    %v3093 = vld [vmem:[%s3090 + $0x8] sm:$0xf]
    %v3094 = vld [vmem:[%s3090 + $0xc] sm:$0xf]
    %v3099 = vunpack.c.l.b16 %v3091
    %v3100 = vunpack.c.l.b16 %v3092
    %v3101 = vunpack.c.l.b16 %v3093
    %v3102 = vunpack.c.l.b16 %v3094
    %v3103 = vpack.c.b16 %v3100, %v3099
    %v3104 = vpack.c.b16 %v3102, %v3101
    %3107 = vmatprep.subr.bf16.mxu0 0
    %3108 = vmatpush1.bf16.msra.mxu0 %v3103
    %3109 = vmatprep.subr.bf16.mxu0 0
    %3110 = vmatpush1.bf16.msra.mxu0 %v3104
    %3111 = vmatprep.subr.bf16.mxu0 0
    %3112 = vmatpush1.bf16.msra.mxu0 0
    %3113 = vmatprep.subr.bf16.mxu0 0
    %3114 = vmatpush1.bf16.msra.mxu0 0
    %3115 = vmatprep.subr.bf16.mxu0 0
    %3116 = vmatpush1.bf16.msra.mxu0 0
    %3117 = vmatprep.subr.bf16.mxu0 0
    %3118 = vmatpush1.bf16.msra.mxu0 0
    %3119 = vmatprep.subr.bf16.mxu0 0
    %3120 = vmatpush1.bf16.msra.mxu0 0
    %3121 = vmatprep.subr.bf16.mxu0 0
    %3122 = vmatpush1.bf16.msra.mxu0 0
    %3123 = vmatprep.subr.bf16.mxu0 0
    %3124 = vmatpush1.bf16.msra.mxu0 0
    %3125 = vmatprep.subr.bf16.mxu0 0
    %3126 = vmatpush1.bf16.msra.mxu0 0
    %3127 = vmatprep.subr.bf16.mxu0 0
    %3128 = vmatpush1.bf16.msra.mxu0 0
    %3129 = vmatprep.subr.bf16.mxu0 0
    %3130 = vmatpush1.bf16.msra.mxu0 0
    %3131 = vmatprep.subr.bf16.mxu0 0
    %3132 = vmatpush1.bf16.msra.mxu0 0
    %3133 = vmatprep.subr.bf16.mxu0 0
    %3134 = vmatpush1.bf16.msra.mxu0 0
    %3135 = vmatprep.subr.bf16.mxu0 0
    %3136 = vmatpush1.bf16.msra.mxu0 0
    %3137 = vmatprep.subr.bf16.mxu0 0
    %3138 = vmatpush1.bf16.msra.mxu0 0
    %3139 = vmatprep.mubr.bf16.mxu0 0
    %3140 = vmatmul.mubr.bf16.gmra.mrb[0].mxu0 %v3036
    %v3141 = vpop.f32.mrb[0].mxu0
    %v3142 = vadd.f32 0.0, %v3141
    %v3143 = vpop.f32.mrb[0].mxu0
    %v3144 = vpop.f32.mrb[0].mxu0
    %v3145 = vadd.f32 0.0, %v3144
    %v3146 = vpop.f32.mrb[0].mxu0
    %3147 = vmatprep.mubr.bf16.mxu0 0
    %3148 = vmatmul.mubr.bf16.gmra.mrb[0].mxu0 %v3039
    %v3149 = vpop.f32.mrb[0].mxu0
    %v3150 = vadd.f32 0.0, %v3149
    %v3151 = vpop.f32.mrb[0].mxu0
    %v3152 = vpop.f32.mrb[0].mxu0
    %v3153 = vadd.f32 0.0, %v3152
    %v3154 = vpop.f32.mrb[0].mxu0
    %3155 = vdwg.mxu0
    %s3156 = scalar_lea.vmem %s9, 64
    %v3157 = vld [vmem:[%s3156] sm:$0xf]
    %v3158 = vld [vmem:[%s3156 + $0x4] sm:$0xf]
    %v3159 = vld [vmem:[%s3156 + $0x8] sm:$0xf]
    %v3160 = vld [vmem:[%s3156 + $0xc] sm:$0xf]
    %v3165 = vunpack.c.l.b16 %v3157
    %v3166 = vunpack.c.l.b16 %v3158
    %v3167 = vunpack.c.l.b16 %v3159
    %v3168 = vunpack.c.l.b16 %v3160
    %v3169 = vpack.c.b16 %v3166, %v3165
    %v3170 = vpack.c.b16 %v3168, %v3167
    %3173 = vmatprep.subr.bf16.mxu0 0
    %3174 = vmatpush1.bf16.msra.mxu0 %v3169
    %3175 = vmatprep.subr.bf16.mxu0 0
    %3176 = vmatpush1.bf16.msra.mxu0 %v3170
    %3177 = vmatprep.subr.bf16.mxu0 0
    %3178 = vmatpush1.bf16.msra.mxu0 0
    %3179 = vmatprep.subr.bf16.mxu0 0
    %3180 = vmatpush1.bf16.msra.mxu0 0
    %3181 = vmatprep.subr.bf16.mxu0 0
    %3182 = vmatpush1.bf16.msra.mxu0 0
    %3183 = vmatprep.subr.bf16.mxu0 0
    %3184 = vmatpush1.bf16.msra.mxu0 0
    %3185 = vmatprep.subr.bf16.mxu0 0
    %3186 = vmatpush1.bf16.msra.mxu0 0
    %3187 = vmatprep.subr.bf16.mxu0 0
    %3188 = vmatpush1.bf16.msra.mxu0 0
    %3189 = vmatprep.subr.bf16.mxu0 0
    %3190 = vmatpush1.bf16.msra.mxu0 0
    %3191 = vmatprep.subr.bf16.mxu0 0
    %3192 = vmatpush1.bf16.msra.mxu0 0
    %3193 = vmatprep.subr.bf16.mxu0 0
    %3194 = vmatpush1.bf16.msra.mxu0 0
    %3195 = vmatprep.subr.bf16.mxu0 0
    %3196 = vmatpush1.bf16.msra.mxu0 0
    %3197 = vmatprep.subr.bf16.mxu0 0
    %3198 = vmatpush1.bf16.msra.mxu0 0
    %3199 = vmatprep.subr.bf16.mxu0 0
    %3200 = vmatpush1.bf16.msra.mxu0 0
    %3201 = vmatprep.subr.bf16.mxu0 0
    %3202 = vmatpush1.bf16.msra.mxu0 0
    %3203 = vmatprep.subr.bf16.mxu0 0
    %3204 = vmatpush1.bf16.msra.mxu0 0
    %3205 = vmatprep.mubr.bf16.mxu0 0
    %3206 = vmatmul.mubr.bf16.gmra.mrb[0].mxu0 %v3036
    %v3207 = vpop.f32.mrb[0].mxu0
    %v3208 = vadd.f32 0.0, %v3207
    %v3209 = vpop.f32.mrb[0].mxu0
    %v3210 = vpop.f32.mrb[0].mxu0
    %v3211 = vadd.f32 0.0, %v3210
    %v3212 = vpop.f32.mrb[0].mxu0
    %3213 = vmatprep.mubr.bf16.mxu0 0
    %3214 = vmatmul.mubr.bf16.gmra.mrb[0].mxu0 %v3039
    %v3215 = vpop.f32.mrb[0].mxu0
    %v3216 = vadd.f32 0.0, %v3215
    %v3217 = vpop.f32.mrb[0].mxu0
    %v3218 = vpop.f32.mrb[0].mxu0
    %v3219 = vadd.f32 0.0, %v3218
    %v3220 = vpop.f32.mrb[0].mxu0
    %3221 = vdwg.mxu0
    %v3222 = vpack.c.bf16 %v3079, %v3076
    %v3223 = vpack.c.bf16 %v3087, %v3084
    %v3224 = vpack.c.bf16 %v3145, %v3142
    %v3225 = vpack.c.bf16 %v3153, %v3150
    %v3227 = vsel %vm899, %v3222, 0
    %v3230 = vsel %vm899, %v3224, 0
    %3232 = vmatprep.subr.bf16.mxu0 0
    %3233 = vmatpush1.bf16.xpose.msra.mxu0 %v3230
    %3234 = vmatprep.subr.bf16.mxu0 0
    %3235 = vmatpush1.bf16.xpose.msra.mxu0 0
    %3236 = vmatprep.subr.bf16.mxu0 0
    %3237 = vmatpush1.bf16.xpose.msra.mxu0 0
    %3238 = vmatprep.subr.bf16.mxu0 0
    %3239 = vmatpush1.bf16.xpose.msra.mxu0 0
    %3240 = vmatprep.subr.bf16.mxu0 0
    %3241 = vmatpush1.bf16.xpose.msra.mxu0 0
    %3242 = vmatprep.subr.bf16.mxu0 0
    %3243 = vmatpush1.bf16.xpose.msra.mxu0 0
    %3244 = vmatprep.subr.bf16.mxu0 0
    %3245 = vmatpush1.bf16.xpose.msra.mxu0 0
    %3246 = vmatprep.subr.bf16.mxu0 0
    %3247 = vmatpush1.bf16.xpose.msra.mxu0 0
    %3248 = vmatprep.subr.bf16.mxu0 0
    %3249 = vmatpush1.bf16.xpose.msra.mxu0 0
    %3250 = vmatprep.subr.bf16.mxu0 0
    %3251 = vmatpush1.bf16.xpose.msra.mxu0 0
    %3252 = vmatprep.subr.bf16.mxu0 0
    %3253 = vmatpush1.bf16.xpose.msra.mxu0 0
    %3254 = vmatprep.subr.bf16.mxu0 0
    %3255 = vmatpush1.bf16.xpose.msra.mxu0 0
    %3256 = vmatprep.subr.bf16.mxu0 0
    %3257 = vmatpush1.bf16.xpose.msra.mxu0 0
    %3258 = vmatprep.subr.bf16.mxu0 0
    %3259 = vmatpush1.bf16.xpose.msra.mxu0 0
    %3260 = vmatprep.subr.bf16.mxu0 0
    %3261 = vmatpush1.bf16.xpose.msra.mxu0 0
    %3262 = vmatprep.subr.bf16.mxu0 0
    %3263 = vmatpush1.bf16.xpose.msra.mxu0 0
    %3264 = vmatprep.mubr.bf16.mxu0 0
    %3265 = vmatmul.mubr.bf16.gmra.mrb[0].mxu0 %v3227
    %v3266 = vpop.f32.mrb[0].mxu0
    %v3267 = vadd.f32 0.0, %v3266
    %v3268 = vpop.f32.mrb[0].mxu0
    %v3269 = vpop.f32.mrb[0].mxu0
    %v3270 = vadd.f32 0.0, %v3269
    %v3271 = vpop.f32.mrb[0].mxu0
    %3272 = vdwg.mxu0
    %v3274 = vsel %vm899, %v3223, 0
    %v3277 = vsel %vm899, %v3225, 0
    %3279 = vmatprep.subr.bf16.mxu0 0
    %3280 = vmatpush1.bf16.xpose.msra.mxu0 %v3277
    %3281 = vmatprep.subr.bf16.mxu0 0
    %3282 = vmatpush1.bf16.xpose.msra.mxu0 0
    %3283 = vmatprep.subr.bf16.mxu0 0
    %3284 = vmatpush1.bf16.xpose.msra.mxu0 0
    %3285 = vmatprep.subr.bf16.mxu0 0
    %3286 = vmatpush1.bf16.xpose.msra.mxu0 0
    %3287 = vmatprep.subr.bf16.mxu0 0
    %3288 = vmatpush1.bf16.xpose.msra.mxu0 0
    %3289 = vmatprep.subr.bf16.mxu0 0
    %3290 = vmatpush1.bf16.xpose.msra.mxu0 0
    %3291 = vmatprep.subr.bf16.mxu0 0
    %3292 = vmatpush1.bf16.xpose.msra.mxu0 0
    %3293 = vmatprep.subr.bf16.mxu0 0
    %3294 = vmatpush1.bf16.xpose.msra.mxu0 0
    %3295 = vmatprep.subr.bf16.mxu0 0
    %3296 = vmatpush1.bf16.xpose.msra.mxu0 0
    %3297 = vmatprep.subr.bf16.mxu0 0
    %3298 = vmatpush1.bf16.xpose.msra.mxu0 0
    %3299 = vmatprep.subr.bf16.mxu0 0
    %3300 = vmatpush1.bf16.xpose.msra.mxu0 0
    %3301 = vmatprep.subr.bf16.mxu0 0
    %3302 = vmatpush1.bf16.xpose.msra.mxu0 0
    %3303 = vmatprep.subr.bf16.mxu0 0
    %3304 = vmatpush1.bf16.xpose.msra.mxu0 0
    %3305 = vmatprep.subr.bf16.mxu0 0
    %3306 = vmatpush1.bf16.xpose.msra.mxu0 0
    %3307 = vmatprep.subr.bf16.mxu0 0
    %3308 = vmatpush1.bf16.xpose.msra.mxu0 0
    %3309 = vmatprep.subr.bf16.mxu0 0
    %3310 = vmatpush1.bf16.xpose.msra.mxu0 0
    %3311 = vmatprep.mubr.bf16.mxu0 0
    %3312 = vmatmul.mubr.bf16.gmra.mrb[0].mxu0 %v3274
    %v3313 = vpop.f32.mrb[0].mxu0
    %v3314 = vadd.f32 0.0, %v3313
    %v3315 = vpop.f32.mrb[0].mxu0
    %v3316 = vpop.f32.mrb[0].mxu0
    %v3317 = vadd.f32 0.0, %v3316
    %v3318 = vpop.f32.mrb[0].mxu0
    %3319 = vdwg.mxu0
    %v3320 = vmul.f32 %v3267, 0.35355338
    %v3321 = vmul.f32 %v3270, 0.35355338
    %v3322 = vmul.f32 %v3314, 0.35355338
    %v3323 = vmul.f32 %v3317, 0.35355338
    %v3324 = vadd.f32 %v3320, %v647
    %v3325 = vadd.f32 %v3321, %v648
    %v3326 = vadd.f32 %v3322, %v647
    %v3327 = vadd.f32 %v3323, %v648
    %v3328 = vsel %vm1002, %v3324, -inf
    %3329 = vmax.xlane.f32.xlu0 %v3328
    %v3330 = vpop.xlane.xlu0 %3329
    %v3331 = vsel %vm1002, %v3325, -inf
    %3332 = vmax.xlane.f32.xlu0 %v3331
    %v3333 = vpop.xlane.xlu0 %3332
    %v3334 = vsel %vm1002, %v3326, -inf
    %3335 = vmax.xlane.f32.xlu0 %v3334
    %v3336 = vpop.xlane.xlu0 %3335
    %v3337 = vsel %vm1002, %v3327, -inf
    %3338 = vmax.xlane.f32.xlu0 %v3337
    %v3339 = vpop.xlane.xlu0 %3338
    %v3340 = vsub.f32 %v3324, %v3330
    %v3341 = vsub.f32 %v3325, %v3333
    %v3342 = vsub.f32 %v3326, %v3336
    %v3343 = vsub.f32 %v3327, %v3339
    %v3344 = vmul.f32 %v3340, 1.442695
    %v3345 = vpow.pop %v3344
    %v3346 = vmul.f32 %v3341, 1.442695
    %v3347 = vpow.pop %v3346
    %v3348 = vmul.f32 %v3342, 1.442695
    %v3349 = vpow.pop %v3348
    %v3350 = vmul.f32 %v3343, 1.442695
    %v3351 = vpow.pop %v3350
    %v3352 = vsel %vm1002, %v3345, 0.0
    %3353 = vadd.xlane.f32.xlu0 %v3352
    %v3354 = vpop.xlane.xlu0 %3353
    %v3355 = vsel %vm1002, %v3347, 0.0
    %3356 = vadd.xlane.f32.xlu0 %v3355
    %v3357 = vpop.xlane.xlu0 %3356
    %v3358 = vsel %vm1002, %v3349, 0.0
    %3359 = vadd.xlane.f32.xlu0 %v3358
    %v3360 = vpop.xlane.xlu0 %3359
    %v3361 = vsel %vm1002, %v3351, 0.0
    %3362 = vadd.xlane.f32.xlu0 %v3361
    %v3363 = vpop.xlane.xlu0 %3362
    %v3364 = vrcp.pop %v3354
    %v3365 = vrcp.pop %v3357
    %v3366 = vrcp.pop %v3360
    %v3367 = vrcp.pop %v3363
    %v3368 = vmul.f32 %v3345, %v3364
    %v3369 = vmul.f32 %v3347, %v3365
    %v3370 = vmul.f32 %v3349, %v3366
    %v3371 = vmul.f32 %v3351, %v3367
    %v3372 = vpack.c.bf16 %v3369, %v3368
    %v3373 = vpack.c.bf16 %v3371, %v3370
    %v3374 = vpack.c.bf16 %v3211, %v3208
    %v3375 = vpack.c.bf16 %v3219, %v3216
    %v3377 = vsel %vm1002, %v3372, 0
    %3379 = vmatprep.subr.bf16.mxu0 0
    %3380 = vmatpush1.bf16.msra.mxu0 %v3374
    %3381 = vmatprep.subr.bf16.mxu0 0
    %3382 = vmatpush1.bf16.msra.mxu0 0
    %3383 = vmatprep.subr.bf16.mxu0 0
    %3384 = vmatpush1.bf16.msra.mxu0 0
    %3385 = vmatprep.subr.bf16.mxu0 0
    %3386 = vmatpush1.bf16.msra.mxu0 0
    %3387 = vmatprep.subr.bf16.mxu0 0
    %3388 = vmatpush1.bf16.msra.mxu0 0
    %3389 = vmatprep.subr.bf16.mxu0 0
    %3390 = vmatpush1.bf16.msra.mxu0 0
    %3391 = vmatprep.subr.bf16.mxu0 0
    %3392 = vmatpush1.bf16.msra.mxu0 0
    %3393 = vmatprep.subr.bf16.mxu0 0
    %3394 = vmatpush1.bf16.msra.mxu0 0
    %3395 = vmatprep.subr.bf16.mxu0 0
    %3396 = vmatpush1.bf16.msra.mxu0 0
    %3397 = vmatprep.subr.bf16.mxu0 0
    %3398 = vmatpush1.bf16.msra.mxu0 0
    %3399 = vmatprep.subr.bf16.mxu0 0
    %3400 = vmatpush1.bf16.msra.mxu0 0
    %3401 = vmatprep.subr.bf16.mxu0 0
    %3402 = vmatpush1.bf16.msra.mxu0 0
    %3403 = vmatprep.subr.bf16.mxu0 0
    %3404 = vmatpush1.bf16.msra.mxu0 0
    %3405 = vmatprep.subr.bf16.mxu0 0
    %3406 = vmatpush1.bf16.msra.mxu0 0
    %3407 = vmatprep.subr.bf16.mxu0 0
    %3408 = vmatpush1.bf16.msra.mxu0 0
    %3409 = vmatprep.subr.bf16.mxu0 0
    %3410 = vmatpush1.bf16.msra.mxu0 0
    %3411 = vmatprep.mubr.bf16.mxu0 0
    %3412 = vmatmul.mubr.bf16.gmra.mrb[0].mxu0 %v3377
    %v3413 = vpop.f32.mrb[0].mxu0
    %v3414 = vadd.f32 0.0, %v3413
    %v3415 = vpop.f32.mrb[0].mxu0
    %v3416 = vpop.f32.mrb[0].mxu0
    %v3417 = vadd.f32 0.0, %v3416
    %v3418 = vpop.f32.mrb[0].mxu0
    %3419 = vdwg.mxu0
    %v3421 = vsel %vm1002, %v3373, 0
    %3423 = vmatprep.subr.bf16.mxu0 0
    %3424 = vmatpush1.bf16.msra.mxu0 %v3375
    %3425 = vmatprep.subr.bf16.mxu0 0
    %3426 = vmatpush1.bf16.msra.mxu0 0
    %3427 = vmatprep.subr.bf16.mxu0 0
    %3428 = vmatpush1.bf16.msra.mxu0 0
    %3429 = vmatprep.subr.bf16.mxu0 0
    %3430 = vmatpush1.bf16.msra.mxu0 0
    %3431 = vmatprep.subr.bf16.mxu0 0
    %3432 = vmatpush1.bf16.msra.mxu0 0
    %3433 = vmatprep.subr.bf16.mxu0 0
    %3434 = vmatpush1.bf16.msra.mxu0 0
    %3435 = vmatprep.subr.bf16.mxu0 0
    %3436 = vmatpush1.bf16.msra.mxu0 0
    %3437 = vmatprep.subr.bf16.mxu0 0
    %3438 = vmatpush1.bf16.msra.mxu0 0
    %3439 = vmatprep.subr.bf16.mxu0 0
    %3440 = vmatpush1.bf16.msra.mxu0 0
    %3441 = vmatprep.subr.bf16.mxu0 0
    %3442 = vmatpush1.bf16.msra.mxu0 0
    %3443 = vmatprep.subr.bf16.mxu0 0
    %3444 = vmatpush1.bf16.msra.mxu0 0
    %3445 = vmatprep.subr.bf16.mxu0 0
    %3446 = vmatpush1.bf16.msra.mxu0 0
    %3447 = vmatprep.subr.bf16.mxu0 0
    %3448 = vmatpush1.bf16.msra.mxu0 0
    %3449 = vmatprep.subr.bf16.mxu0 0
    %3450 = vmatpush1.bf16.msra.mxu0 0
    %3451 = vmatprep.subr.bf16.mxu0 0
    %3452 = vmatpush1.bf16.msra.mxu0 0
    %3453 = vmatprep.subr.bf16.mxu0 0
    %3454 = vmatpush1.bf16.msra.mxu0 0
    %3455 = vmatprep.mubr.bf16.mxu0 0
    %3456 = vmatmul.mubr.bf16.gmra.mrb[0].mxu0 %v3421
    %v3457 = vpop.f32.mrb[0].mxu0
    %v3458 = vadd.f32 0.0, %v3457
    %v3459 = vpop.f32.mrb[0].mxu0
    %v3460 = vpop.f32.mrb[0].mxu0
    %v3461 = vadd.f32 0.0, %v3460
    %v3462 = vpop.f32.mrb[0].mxu0
    %3463 = vdwg.mxu0
    %s3464 = scalar_lea.vmem %s10, 16
    %v3465 = vld [vmem:[%s3464] sm:$0xf]
    %v3466 = vpack.c.bf16 %v3417, %v3414
    %v3467 = vpack.c.bf16 %v3461, %v3458
    %s3468 = scalar_lea.vmem %s7, 80
    %v3469 = vld [vmem:[%s3468] sm:$0xf]
    %v3470 = vld [vmem:[%s3468 + $0x4] sm:$0xf]
    %v3471 = vld [vmem:[%s3468 + $0x8] sm:$0xf]
    %v3472 = vld [vmem:[%s3468 + $0xc] sm:$0xf]
    %v3477 = vunpack.c.l.b16 %v3469
    %v3478 = vunpack.c.l.b16 %v3470
    %v3479 = vunpack.c.l.b16 %v3471
    %v3480 = vunpack.c.l.b16 %v3472
    %v3481 = vpack.c.b16 %v3478, %v3477
    %v3482 = vpack.c.b16 %v3480, %v3479
    %3485 = vmatprep.subr.bf16.mxu0 0
    %3486 = vmatpush1.bf16.msra.mxu0 %v3481
    %3487 = vmatprep.subr.bf16.mxu0 0
    %3488 = vmatpush1.bf16.msra.mxu0 %v3482
    %3489 = vmatprep.subr.bf16.mxu0 0
    %3490 = vmatpush1.bf16.msra.mxu0 0
    %3491 = vmatprep.subr.bf16.mxu0 0
    %3492 = vmatpush1.bf16.msra.mxu0 0
    %3493 = vmatprep.subr.bf16.mxu0 0
    %3494 = vmatpush1.bf16.msra.mxu0 0
    %3495 = vmatprep.subr.bf16.mxu0 0
    %3496 = vmatpush1.bf16.msra.mxu0 0
    %3497 = vmatprep.subr.bf16.mxu0 0
    %3498 = vmatpush1.bf16.msra.mxu0 0
    %3499 = vmatprep.subr.bf16.mxu0 0
    %3500 = vmatpush1.bf16.msra.mxu0 0
    %3501 = vmatprep.subr.bf16.mxu0 0
    %3502 = vmatpush1.bf16.msra.mxu0 0
    %3503 = vmatprep.subr.bf16.mxu0 0
    %3504 = vmatpush1.bf16.msra.mxu0 0
    %3505 = vmatprep.subr.bf16.mxu0 0
    %3506 = vmatpush1.bf16.msra.mxu0 0
    %3507 = vmatprep.subr.bf16.mxu0 0
    %3508 = vmatpush1.bf16.msra.mxu0 0
    %3509 = vmatprep.subr.bf16.mxu0 0
    %3510 = vmatpush1.bf16.msra.mxu0 0
    %3511 = vmatprep.subr.bf16.mxu0 0
    %3512 = vmatpush1.bf16.msra.mxu0 0
    %3513 = vmatprep.subr.bf16.mxu0 0
    %3514 = vmatpush1.bf16.msra.mxu0 0
    %3515 = vmatprep.subr.bf16.mxu0 0
    %3516 = vmatpush1.bf16.msra.mxu0 0
    %3517 = vmatprep.mubr.bf16.mxu0 0
    %3518 = vmatmul.mubr.bf16.gmra.mrb[0].mxu0 %v3036
    %v3519 = vpop.f32.mrb[0].mxu0
    %v3520 = vadd.f32 0.0, %v3519
    %v3521 = vpop.f32.mrb[0].mxu0
    %v3522 = vpop.f32.mrb[0].mxu0
    %v3523 = vadd.f32 0.0, %v3522
    %v3524 = vpop.f32.mrb[0].mxu0
    %3525 = vmatprep.mubr.bf16.mxu0 0
    %3526 = vmatmul.mubr.bf16.gmra.mrb[0].mxu0 %v3039
    %v3527 = vpop.f32.mrb[0].mxu0
    %v3528 = vadd.f32 0.0, %v3527
    %v3529 = vpop.f32.mrb[0].mxu0
    %v3530 = vpop.f32.mrb[0].mxu0
    %v3531 = vadd.f32 0.0, %v3530
    %v3532 = vpop.f32.mrb[0].mxu0
    %3533 = vdwg.mxu0
    %s3534 = scalar_lea.vmem %s8, 80
    %v3535 = vld [vmem:[%s3534] sm:$0xf]
    %v3536 = vld [vmem:[%s3534 + $0x4] sm:$0xf]
    %v3537 = vld [vmem:[%s3534 + $0x8] sm:$0xf]
    %v3538 = vld [vmem:[%s3534 + $0xc] sm:$0xf]
    %v3543 = vunpack.c.l.b16 %v3535
    %v3544 = vunpack.c.l.b16 %v3536
    %v3545 = vunpack.c.l.b16 %v3537
    %v3546 = vunpack.c.l.b16 %v3538
    %v3547 = vpack.c.b16 %v3544, %v3543
    %v3548 = vpack.c.b16 %v3546, %v3545
    %3551 = vmatprep.subr.bf16.mxu0 0
    %3552 = vmatpush1.bf16.msra.mxu0 %v3547
    %3553 = vmatprep.subr.bf16.mxu0 0
    %3554 = vmatpush1.bf16.msra.mxu0 %v3548
    %3555 = vmatprep.subr.bf16.mxu0 0
    %3556 = vmatpush1.bf16.msra.mxu0 0
    %3557 = vmatprep.subr.bf16.mxu0 0
    %3558 = vmatpush1.bf16.msra.mxu0 0
    %3559 = vmatprep.subr.bf16.mxu0 0
    %3560 = vmatpush1.bf16.msra.mxu0 0
    %3561 = vmatprep.subr.bf16.mxu0 0
    %3562 = vmatpush1.bf16.msra.mxu0 0
    %3563 = vmatprep.subr.bf16.mxu0 0
    %3564 = vmatpush1.bf16.msra.mxu0 0
    %3565 = vmatprep.subr.bf16.mxu0 0
    %3566 = vmatpush1.bf16.msra.mxu0 0
    %3567 = vmatprep.subr.bf16.mxu0 0
    %3568 = vmatpush1.bf16.msra.mxu0 0
    %3569 = vmatprep.subr.bf16.mxu0 0
    %3570 = vmatpush1.bf16.msra.mxu0 0
    %3571 = vmatprep.subr.bf16.mxu0 0
    %3572 = vmatpush1.bf16.msra.mxu0 0
    %3573 = vmatprep.subr.bf16.mxu0 0
    %3574 = vmatpush1.bf16.msra.mxu0 0
    %3575 = vmatprep.subr.bf16.mxu0 0
    %3576 = vmatpush1.bf16.msra.mxu0 0
    %3577 = vmatprep.subr.bf16.mxu0 0
    %3578 = vmatpush1.bf16.msra.mxu0 0
    %3579 = vmatprep.subr.bf16.mxu0 0
    %3580 = vmatpush1.bf16.msra.mxu0 0
    %3581 = vmatprep.subr.bf16.mxu0 0
    %3582 = vmatpush1.bf16.msra.mxu0 0
    %3583 = vmatprep.mubr.bf16.mxu0 0
    %3584 = vmatmul.mubr.bf16.gmra.mrb[0].mxu0 %v3036
    %v3585 = vpop.f32.mrb[0].mxu0
    %v3586 = vadd.f32 0.0, %v3585
    %v3587 = vpop.f32.mrb[0].mxu0
    %v3588 = vpop.f32.mrb[0].mxu0
    %v3589 = vadd.f32 0.0, %v3588
    %v3590 = vpop.f32.mrb[0].mxu0
    %3591 = vmatprep.mubr.bf16.mxu0 0
    %3592 = vmatmul.mubr.bf16.gmra.mrb[0].mxu0 %v3039
    %v3593 = vpop.f32.mrb[0].mxu0
    %v3594 = vadd.f32 0.0, %v3593
    %v3595 = vpop.f32.mrb[0].mxu0
    %v3596 = vpop.f32.mrb[0].mxu0
    %v3597 = vadd.f32 0.0, %v3596
    %v3598 = vpop.f32.mrb[0].mxu0
    %3599 = vdwg.mxu0
    %s3600 = scalar_lea.vmem %s9, 80
    %v3601 = vld [vmem:[%s3600] sm:$0xf]
    %v3602 = vld [vmem:[%s3600 + $0x4] sm:$0xf]
    %v3603 = vld [vmem:[%s3600 + $0x8] sm:$0xf]
    %v3604 = vld [vmem:[%s3600 + $0xc] sm:$0xf]
    %v3609 = vunpack.c.l.b16 %v3601
    %v3610 = vunpack.c.l.b16 %v3602
    %v3611 = vunpack.c.l.b16 %v3603
    %v3612 = vunpack.c.l.b16 %v3604
    %v3613 = vpack.c.b16 %v3610, %v3609
    %v3614 = vpack.c.b16 %v3612, %v3611
    %3617 = vmatprep.subr.bf16.mxu0 0
    %3618 = vmatpush1.bf16.msra.mxu0 %v3613
    %3619 = vmatprep.subr.bf16.mxu0 0
    %3620 = vmatpush1.bf16.msra.mxu0 %v3614
    %3621 = vmatprep.subr.bf16.mxu0 0
    %3622 = vmatpush1.bf16.msra.mxu0 0
    %3623 = vmatprep.subr.bf16.mxu0 0
    %3624 = vmatpush1.bf16.msra.mxu0 0
    %3625 = vmatprep.subr.bf16.mxu0 0
    %3626 = vmatpush1.bf16.msra.mxu0 0
    %3627 = vmatprep.subr.bf16.mxu0 0
    %3628 = vmatpush1.bf16.msra.mxu0 0
    %3629 = vmatprep.subr.bf16.mxu0 0
    %3630 = vmatpush1.bf16.msra.mxu0 0
    %3631 = vmatprep.subr.bf16.mxu0 0
    %3632 = vmatpush1.bf16.msra.mxu0 0
    %3633 = vmatprep.subr.bf16.mxu0 0
    %3634 = vmatpush1.bf16.msra.mxu0 0
    %3635 = vmatprep.subr.bf16.mxu0 0
    %3636 = vmatpush1.bf16.msra.mxu0 0
    %3637 = vmatprep.subr.bf16.mxu0 0
    %3638 = vmatpush1.bf16.msra.mxu0 0
    %3639 = vmatprep.subr.bf16.mxu0 0
    %3640 = vmatpush1.bf16.msra.mxu0 0
    %3641 = vmatprep.subr.bf16.mxu0 0
    %3642 = vmatpush1.bf16.msra.mxu0 0
    %3643 = vmatprep.subr.bf16.mxu0 0
    %3644 = vmatpush1.bf16.msra.mxu0 0
    %3645 = vmatprep.subr.bf16.mxu0 0
    %3646 = vmatpush1.bf16.msra.mxu0 0
    %3647 = vmatprep.subr.bf16.mxu0 0
    %3648 = vmatpush1.bf16.msra.mxu0 0
    %3649 = vmatprep.mubr.bf16.mxu0 0
    %3650 = vmatmul.mubr.bf16.gmra.mrb[0].mxu0 %v3036
    %v3651 = vpop.f32.mrb[0].mxu0
    %v3652 = vadd.f32 0.0, %v3651
    %v3653 = vpop.f32.mrb[0].mxu0
    %v3654 = vpop.f32.mrb[0].mxu0
    %v3655 = vadd.f32 0.0, %v3654
    %v3656 = vpop.f32.mrb[0].mxu0
    %3657 = vmatprep.mubr.bf16.mxu0 0
    %3658 = vmatmul.mubr.bf16.gmra.mrb[0].mxu0 %v3039
    %v3659 = vpop.f32.mrb[0].mxu0
    %v3660 = vadd.f32 0.0, %v3659
    %v3661 = vpop.f32.mrb[0].mxu0
    %v3662 = vpop.f32.mrb[0].mxu0
    %v3663 = vadd.f32 0.0, %v3662
    %v3664 = vpop.f32.mrb[0].mxu0
    %3665 = vdwg.mxu0
    %v3666 = vpack.c.bf16 %v3523, %v3520
    %v3667 = vpack.c.bf16 %v3531, %v3528
    %v3668 = vpack.c.bf16 %v3589, %v3586
    %v3669 = vpack.c.bf16 %v3597, %v3594
    %v3671 = vsel %vm899, %v3666, 0
    %v3674 = vsel %vm899, %v3668, 0
    %3676 = vmatprep.subr.bf16.mxu0 0
    %3677 = vmatpush1.bf16.xpose.msra.mxu0 %v3674
    %3678 = vmatprep.subr.bf16.mxu0 0
    %3679 = vmatpush1.bf16.xpose.msra.mxu0 0
    %3680 = vmatprep.subr.bf16.mxu0 0
    %3681 = vmatpush1.bf16.xpose.msra.mxu0 0
    %3682 = vmatprep.subr.bf16.mxu0 0
    %3683 = vmatpush1.bf16.xpose.msra.mxu0 0
    %3684 = vmatprep.subr.bf16.mxu0 0
    %3685 = vmatpush1.bf16.xpose.msra.mxu0 0
    %3686 = vmatprep.subr.bf16.mxu0 0
    %3687 = vmatpush1.bf16.xpose.msra.mxu0 0
    %3688 = vmatprep.subr.bf16.mxu0 0
    %3689 = vmatpush1.bf16.xpose.msra.mxu0 0
    %3690 = vmatprep.subr.bf16.mxu0 0
    %3691 = vmatpush1.bf16.xpose.msra.mxu0 0
    %3692 = vmatprep.subr.bf16.mxu0 0
    %3693 = vmatpush1.bf16.xpose.msra.mxu0 0
    %3694 = vmatprep.subr.bf16.mxu0 0
    %3695 = vmatpush1.bf16.xpose.msra.mxu0 0
    %3696 = vmatprep.subr.bf16.mxu0 0
    %3697 = vmatpush1.bf16.xpose.msra.mxu0 0
    %3698 = vmatprep.subr.bf16.mxu0 0
    %3699 = vmatpush1.bf16.xpose.msra.mxu0 0
    %3700 = vmatprep.subr.bf16.mxu0 0
    %3701 = vmatpush1.bf16.xpose.msra.mxu0 0
    %3702 = vmatprep.subr.bf16.mxu0 0
    %3703 = vmatpush1.bf16.xpose.msra.mxu0 0
    %3704 = vmatprep.subr.bf16.mxu0 0
    %3705 = vmatpush1.bf16.xpose.msra.mxu0 0
    %3706 = vmatprep.subr.bf16.mxu0 0
    %3707 = vmatpush1.bf16.xpose.msra.mxu0 0
    %3708 = vmatprep.mubr.bf16.mxu0 0
    %3709 = vmatmul.mubr.bf16.gmra.mrb[0].mxu0 %v3671
    %v3710 = vpop.f32.mrb[0].mxu0
    %v3711 = vadd.f32 0.0, %v3710
    %v3712 = vpop.f32.mrb[0].mxu0
    %v3713 = vpop.f32.mrb[0].mxu0
    %v3714 = vadd.f32 0.0, %v3713
    %v3715 = vpop.f32.mrb[0].mxu0
    %3716 = vdwg.mxu0
    %v3718 = vsel %vm899, %v3667, 0
    %v3721 = vsel %vm899, %v3669, 0
    %3723 = vmatprep.subr.bf16.mxu0 0
    %3724 = vmatpush1.bf16.xpose.msra.mxu0 %v3721
    %3725 = vmatprep.subr.bf16.mxu0 0
    %3726 = vmatpush1.bf16.xpose.msra.mxu0 0
    %3727 = vmatprep.subr.bf16.mxu0 0
    %3728 = vmatpush1.bf16.xpose.msra.mxu0 0
    %3729 = vmatprep.subr.bf16.mxu0 0
    %3730 = vmatpush1.bf16.xpose.msra.mxu0 0
    %3731 = vmatprep.subr.bf16.mxu0 0
    %3732 = vmatpush1.bf16.xpose.msra.mxu0 0
    %3733 = vmatprep.subr.bf16.mxu0 0
    %3734 = vmatpush1.bf16.xpose.msra.mxu0 0
    %3735 = vmatprep.subr.bf16.mxu0 0
    %3736 = vmatpush1.bf16.xpose.msra.mxu0 0
    %3737 = vmatprep.subr.bf16.mxu0 0
    %3738 = vmatpush1.bf16.xpose.msra.mxu0 0
    %3739 = vmatprep.subr.bf16.mxu0 0
    %3740 = vmatpush1.bf16.xpose.msra.mxu0 0
    %3741 = vmatprep.subr.bf16.mxu0 0
    %3742 = vmatpush1.bf16.xpose.msra.mxu0 0
    %3743 = vmatprep.subr.bf16.mxu0 0
    %3744 = vmatpush1.bf16.xpose.msra.mxu0 0
    %3745 = vmatprep.subr.bf16.mxu0 0
    %3746 = vmatpush1.bf16.xpose.msra.mxu0 0
    %3747 = vmatprep.subr.bf16.mxu0 0
    %3748 = vmatpush1.bf16.xpose.msra.mxu0 0
    %3749 = vmatprep.subr.bf16.mxu0 0
    %3750 = vmatpush1.bf16.xpose.msra.mxu0 0
    %3751 = vmatprep.subr.bf16.mxu0 0
    %3752 = vmatpush1.bf16.xpose.msra.mxu0 0
    %3753 = vmatprep.subr.bf16.mxu0 0
    %3754 = vmatpush1.bf16.xpose.msra.mxu0 0
    %3755 = vmatprep.mubr.bf16.mxu0 0
    %3756 = vmatmul.mubr.bf16.gmra.mrb[0].mxu0 %v3718
    %v3757 = vpop.f32.mrb[0].mxu0
    %v3758 = vadd.f32 0.0, %v3757
    %v3759 = vpop.f32.mrb[0].mxu0
    %v3760 = vpop.f32.mrb[0].mxu0
    %v3761 = vadd.f32 0.0, %v3760
    %v3762 = vpop.f32.mrb[0].mxu0
    %3763 = vdwg.mxu0
    %v3764 = vmul.f32 %v3711, 0.35355338
    %v3765 = vmul.f32 %v3714, 0.35355338
    %v3766 = vmul.f32 %v3758, 0.35355338
    %v3767 = vmul.f32 %v3761, 0.35355338
    %v3768 = vadd.f32 %v3764, %v647
    %v3769 = vadd.f32 %v3765, %v648
    %v3770 = vadd.f32 %v3766, %v647
    %v3771 = vadd.f32 %v3767, %v648
    %v3772 = vsel %vm1002, %v3768, -inf
    %3773 = vmax.xlane.f32.xlu0 %v3772
    %v3774 = vpop.xlane.xlu0 %3773
    %v3775 = vsel %vm1002, %v3769, -inf
    %3776 = vmax.xlane.f32.xlu0 %v3775
    %v3777 = vpop.xlane.xlu0 %3776
    %v3778 = vsel %vm1002, %v3770, -inf
    %3779 = vmax.xlane.f32.xlu0 %v3778
    %v3780 = vpop.xlane.xlu0 %3779
    %v3781 = vsel %vm1002, %v3771, -inf
    %3782 = vmax.xlane.f32.xlu0 %v3781
    %v3783 = vpop.xlane.xlu0 %3782
    %v3784 = vsub.f32 %v3768, %v3774
    %v3785 = vsub.f32 %v3769, %v3777
    %v3786 = vsub.f32 %v3770, %v3780
    %v3787 = vsub.f32 %v3771, %v3783
    %v3788 = vmul.f32 %v3784, 1.442695
    %v3789 = vpow.pop %v3788
    %v3790 = vmul.f32 %v3785, 1.442695
    %v3791 = vpow.pop %v3790
    %v3792 = vmul.f32 %v3786, 1.442695
    %v3793 = vpow.pop %v3792
    %v3794 = vmul.f32 %v3787, 1.442695
    %v3795 = vpow.pop %v3794
    %v3796 = vsel %vm1002, %v3789, 0.0
    %3797 = vadd.xlane.f32.xlu0 %v3796
    %v3798 = vpop.xlane.xlu0 %3797
    %v3799 = vsel %vm1002, %v3791, 0.0
    %3800 = vadd.xlane.f32.xlu0 %v3799
    %v3801 = vpop.xlane.xlu0 %3800
    %v3802 = vsel %vm1002, %v3793, 0.0
    %3803 = vadd.xlane.f32.xlu0 %v3802
    %v3804 = vpop.xlane.xlu0 %3803
    %v3805 = vsel %vm1002, %v3795, 0.0
    %3806 = vadd.xlane.f32.xlu0 %v3805
    %v3807 = vpop.xlane.xlu0 %3806
    %v3808 = vrcp.pop %v3798
    %v3809 = vrcp.pop %v3801
    %v3810 = vrcp.pop %v3804
    %v3811 = vrcp.pop %v3807
    %v3812 = vmul.f32 %v3789, %v3808
    %v3813 = vmul.f32 %v3791, %v3809
    %v3814 = vmul.f32 %v3793, %v3810
    %v3815 = vmul.f32 %v3795, %v3811
    %v3816 = vpack.c.bf16 %v3813, %v3812
    %v3817 = vpack.c.bf16 %v3815, %v3814
    %v3818 = vpack.c.bf16 %v3655, %v3652
    %v3819 = vpack.c.bf16 %v3663, %v3660
    %v3821 = vsel %vm1002, %v3816, 0
    %3823 = vmatprep.subr.bf16.mxu0 0
    %3824 = vmatpush1.bf16.msra.mxu0 %v3818
    %3825 = vmatprep.subr.bf16.mxu0 0
    %3826 = vmatpush1.bf16.msra.mxu0 0
    %3827 = vmatprep.subr.bf16.mxu0 0
    %3828 = vmatpush1.bf16.msra.mxu0 0
    %3829 = vmatprep.subr.bf16.mxu0 0
    %3830 = vmatpush1.bf16.msra.mxu0 0
    %3831 = vmatprep.subr.bf16.mxu0 0
    %3832 = vmatpush1.bf16.msra.mxu0 0
    %3833 = vmatprep.subr.bf16.mxu0 0
    %3834 = vmatpush1.bf16.msra.mxu0 0
    %3835 = vmatprep.subr.bf16.mxu0 0
    %3836 = vmatpush1.bf16.msra.mxu0 0
    %3837 = vmatprep.subr.bf16.mxu0 0
    %3838 = vmatpush1.bf16.msra.mxu0 0
    %3839 = vmatprep.subr.bf16.mxu0 0
    %3840 = vmatpush1.bf16.msra.mxu0 0
    %3841 = vmatprep.subr.bf16.mxu0 0
    %3842 = vmatpush1.bf16.msra.mxu0 0
    %3843 = vmatprep.subr.bf16.mxu0 0
    %3844 = vmatpush1.bf16.msra.mxu0 0
    %3845 = vmatprep.subr.bf16.mxu0 0
    %3846 = vmatpush1.bf16.msra.mxu0 0
    %3847 = vmatprep.subr.bf16.mxu0 0
    %3848 = vmatpush1.bf16.msra.mxu0 0
    %3849 = vmatprep.subr.bf16.mxu0 0
    %3850 = vmatpush1.bf16.msra.mxu0 0
    %3851 = vmatprep.subr.bf16.mxu0 0
    %3852 = vmatpush1.bf16.msra.mxu0 0
    %3853 = vmatprep.subr.bf16.mxu0 0
    %3854 = vmatpush1.bf16.msra.mxu0 0
    %3855 = vmatprep.mubr.bf16.mxu0 0
    %3856 = vmatmul.mubr.bf16.gmra.mrb[0].mxu0 %v3821
    %v3857 = vpop.f32.mrb[0].mxu0
    %v3858 = vadd.f32 0.0, %v3857
    %v3859 = vpop.f32.mrb[0].mxu0
    %v3860 = vpop.f32.mrb[0].mxu0
    %v3861 = vadd.f32 0.0, %v3860
    %v3862 = vpop.f32.mrb[0].mxu0
    %3863 = vdwg.mxu0
    %v3865 = vsel %vm1002, %v3817, 0
    %3867 = vmatprep.subr.bf16.mxu0 0
    %3868 = vmatpush1.bf16.msra.mxu0 %v3819
    %3869 = vmatprep.subr.bf16.mxu0 0
    %3870 = vmatpush1.bf16.msra.mxu0 0
    %3871 = vmatprep.subr.bf16.mxu0 0
    %3872 = vmatpush1.bf16.msra.mxu0 0
    %3873 = vmatprep.subr.bf16.mxu0 0
    %3874 = vmatpush1.bf16.msra.mxu0 0
    %3875 = vmatprep.subr.bf16.mxu0 0
    %3876 = vmatpush1.bf16.msra.mxu0 0
    %3877 = vmatprep.subr.bf16.mxu0 0
    %3878 = vmatpush1.bf16.msra.mxu0 0
    %3879 = vmatprep.subr.bf16.mxu0 0
    %3880 = vmatpush1.bf16.msra.mxu0 0
    %3881 = vmatprep.subr.bf16.mxu0 0
    %3882 = vmatpush1.bf16.msra.mxu0 0
    %3883 = vmatprep.subr.bf16.mxu0 0
    %3884 = vmatpush1.bf16.msra.mxu0 0
    %3885 = vmatprep.subr.bf16.mxu0 0
    %3886 = vmatpush1.bf16.msra.mxu0 0
    %3887 = vmatprep.subr.bf16.mxu0 0
    %3888 = vmatpush1.bf16.msra.mxu0 0
    %3889 = vmatprep.subr.bf16.mxu0 0
    %3890 = vmatpush1.bf16.msra.mxu0 0
    %3891 = vmatprep.subr.bf16.mxu0 0
    %3892 = vmatpush1.bf16.msra.mxu0 0
    %3893 = vmatprep.subr.bf16.mxu0 0
    %3894 = vmatpush1.bf16.msra.mxu0 0
    %3895 = vmatprep.subr.bf16.mxu0 0
    %3896 = vmatpush1.bf16.msra.mxu0 0
    %3897 = vmatprep.subr.bf16.mxu0 0
    %3898 = vmatpush1.bf16.msra.mxu0 0
    %3899 = vmatprep.mubr.bf16.mxu0 0
    %3900 = vmatmul.mubr.bf16.gmra.mrb[0].mxu0 %v3865
    %v3901 = vpop.f32.mrb[0].mxu0
    %v3902 = vadd.f32 0.0, %v3901
    %v3903 = vpop.f32.mrb[0].mxu0
    %v3904 = vpop.f32.mrb[0].mxu0
    %v3905 = vadd.f32 0.0, %v3904
    %v3906 = vpop.f32.mrb[0].mxu0
    %3907 = vdwg.mxu0
    %s3908 = scalar_lea.vmem %s10, 20
    %v3909 = vld [vmem:[%s3908] sm:$0xf]
    %v3910 = vpack.c.bf16 %v3861, %v3858
    %v3911 = vpack.c.bf16 %v3905, %v3902
    %v3913 = vsel %vm899, %v3910, 0
    %v3916 = vsel %vm899, %v3911, 0
    %v3919 = vsel %vm1592, %v3909, 0
    %3921 = vmatprep.subr.bf16.mxu0 0
    %3922 = vmatpush1.bf16.msra.mxu0 %v3919
    %3923 = vmatprep.subr.bf16.mxu0 0
    %3924 = vmatpush1.bf16.msra.mxu0 0
    %3925 = vmatprep.subr.bf16.mxu0 0
    %3926 = vmatpush1.bf16.msra.mxu0 0
    %3927 = vmatprep.subr.bf16.mxu0 0
    %3928 = vmatpush1.bf16.msra.mxu0 0
    %3929 = vmatprep.subr.bf16.mxu0 0
    %3930 = vmatpush1.bf16.msra.mxu0 0
    %3931 = vmatprep.subr.bf16.mxu0 0
    %3932 = vmatpush1.bf16.msra.mxu0 0
    %3933 = vmatprep.subr.bf16.mxu0 0
    %3934 = vmatpush1.bf16.msra.mxu0 0
    %3935 = vmatprep.subr.bf16.mxu0 0
    %3936 = vmatpush1.bf16.msra.mxu0 0
    %3937 = vmatprep.subr.bf16.mxu0 0
    %3938 = vmatpush1.bf16.msra.mxu0 0
    %3939 = vmatprep.subr.bf16.mxu0 0
    %3940 = vmatpush1.bf16.msra.mxu0 0
    %3941 = vmatprep.subr.bf16.mxu0 0
    %3942 = vmatpush1.bf16.msra.mxu0 0
    %3943 = vmatprep.subr.bf16.mxu0 0
    %3944 = vmatpush1.bf16.msra.mxu0 0
    %3945 = vmatprep.subr.bf16.mxu0 0
    %3946 = vmatpush1.bf16.msra.mxu0 0
    %3947 = vmatprep.subr.bf16.mxu0 0
    %3948 = vmatpush1.bf16.msra.mxu0 0
    %3949 = vmatprep.subr.bf16.mxu0 0
    %3950 = vmatpush1.bf16.msra.mxu0 0
    %3951 = vmatprep.subr.bf16.mxu0 0
    %3952 = vmatpush1.bf16.msra.mxu0 0
    %3953 = vmatprep.mubr.bf16.mxu0 0
    %3954 = vmatmul.mubr.bf16.gmra.mrb[0].mxu0 %v3913
    %v3955 = vpop.f32.mrb[0].mxu0
    %v3956 = vadd.f32 0.0, %v3955
    %v3957 = vpop.f32.mrb[0].mxu0
    %v3958 = vpop.f32.mrb[0].mxu0
    %v3959 = vadd.f32 0.0, %v3958
    %v3960 = vpop.f32.mrb[0].mxu0
    %3961 = vmatprep.mubr.bf16.mxu0 0
    %3962 = vmatmul.mubr.bf16.gmra.mrb[0].mxu0 %v3916
    %v3963 = vpop.f32.mrb[0].mxu0
    %v3964 = vadd.f32 0.0, %v3963
    %v3965 = vpop.f32.mrb[0].mxu0
    %v3966 = vpop.f32.mrb[0].mxu0
    %v3967 = vadd.f32 0.0, %v3966
    %v3968 = vpop.f32.mrb[0].mxu0
    %3969 = vdwg.mxu0
    %v3971 = vsel %vm899, %v3466, 0
    %v3974 = vsel %vm899, %v3467, 0
    %v3977 = vsel %vm1592, %v3465, 0
    %3979 = vmatprep.subr.bf16.mxu0 0
    %3980 = vmatpush1.bf16.msra.mxu0 %v3977
    %3981 = vmatprep.subr.bf16.mxu0 0
    %3982 = vmatpush1.bf16.msra.mxu0 0
    %3983 = vmatprep.subr.bf16.mxu0 0
    %3984 = vmatpush1.bf16.msra.mxu0 0
    %3985 = vmatprep.subr.bf16.mxu0 0
    %3986 = vmatpush1.bf16.msra.mxu0 0
    %3987 = vmatprep.subr.bf16.mxu0 0
    %3988 = vmatpush1.bf16.msra.mxu0 0
    %3989 = vmatprep.subr.bf16.mxu0 0
    %3990 = vmatpush1.bf16.msra.mxu0 0
    %3991 = vmatprep.subr.bf16.mxu0 0
    %3992 = vmatpush1.bf16.msra.mxu0 0
    %3993 = vmatprep.subr.bf16.mxu0 0
    %3994 = vmatpush1.bf16.msra.mxu0 0
    %3995 = vmatprep.subr.bf16.mxu0 0
    %3996 = vmatpush1.bf16.msra.mxu0 0
    %3997 = vmatprep.subr.bf16.mxu0 0
    %3998 = vmatpush1.bf16.msra.mxu0 0
    %3999 = vmatprep.subr.bf16.mxu0 0
    %4000 = vmatpush1.bf16.msra.mxu0 0
    %4001 = vmatprep.subr.bf16.mxu0 0
    %4002 = vmatpush1.bf16.msra.mxu0 0
    %4003 = vmatprep.subr.bf16.mxu0 0
    %4004 = vmatpush1.bf16.msra.mxu0 0
    %4005 = vmatprep.subr.bf16.mxu0 0
    %4006 = vmatpush1.bf16.msra.mxu0 0
    %4007 = vmatprep.subr.bf16.mxu0 0
    %4008 = vmatpush1.bf16.msra.mxu0 0
    %4009 = vmatprep.subr.bf16.mxu0 0
    %4010 = vmatpush1.bf16.msra.mxu0 0
    %4011 = vmatprep.mubr.bf16.mxu0 0
    %4012 = vmatmul.mubr.bf16.gmra.mrb[0].mxu0 %v3971
    %v4013 = vpop.f32.mrb[0].mxu0
    %v4014 = vadd.f32 %v3956, %v4013
    %v4015 = vpop.f32.mrb[0].mxu0
    %v4016 = vpop.f32.mrb[0].mxu0
    %v4017 = vadd.f32 %v3959, %v4016
    %v4018 = vpop.f32.mrb[0].mxu0
    %4019 = vmatprep.mubr.bf16.mxu0 0
    %4020 = vmatmul.mubr.bf16.gmra.mrb[0].mxu0 %v3974
    %v4021 = vpop.f32.mrb[0].mxu0
    %v4022 = vadd.f32 %v3964, %v4021
    %v4023 = vpop.f32.mrb[0].mxu0
    %v4024 = vpop.f32.mrb[0].mxu0
    %v4025 = vadd.f32 %v3967, %v4024
    %v4026 = vpop.f32.mrb[0].mxu0
    %4027 = vdwg.mxu0
    %s4028 = scalar_lea.vmem %s7, 96
    %v4029 = vld [vmem:[%s4028] sm:$0xf]
    %v4030 = vld [vmem:[%s4028 + $0x4] sm:$0xf]
    %v4031 = vld [vmem:[%s4028 + $0x8] sm:$0xf]
    %v4032 = vld [vmem:[%s4028 + $0xc] sm:$0xf]
    %v4037 = vunpack.c.l.b16 %v4029
    %v4038 = vunpack.c.l.b16 %v4030
    %v4039 = vunpack.c.l.b16 %v4031
    %v4040 = vunpack.c.l.b16 %v4032
    %v4041 = vpack.c.b16 %v4038, %v4037
    %v4042 = vpack.c.b16 %v4040, %v4039
    %4045 = vmatprep.subr.bf16.mxu0 0
    %4046 = vmatpush1.bf16.msra.mxu0 %v4041
    %4047 = vmatprep.subr.bf16.mxu0 0
    %4048 = vmatpush1.bf16.msra.mxu0 %v4042
    %4049 = vmatprep.subr.bf16.mxu0 0
    %4050 = vmatpush1.bf16.msra.mxu0 0
    %4051 = vmatprep.subr.bf16.mxu0 0
    %4052 = vmatpush1.bf16.msra.mxu0 0
    %4053 = vmatprep.subr.bf16.mxu0 0
    %4054 = vmatpush1.bf16.msra.mxu0 0
    %4055 = vmatprep.subr.bf16.mxu0 0
    %4056 = vmatpush1.bf16.msra.mxu0 0
    %4057 = vmatprep.subr.bf16.mxu0 0
    %4058 = vmatpush1.bf16.msra.mxu0 0
    %4059 = vmatprep.subr.bf16.mxu0 0
    %4060 = vmatpush1.bf16.msra.mxu0 0
    %4061 = vmatprep.subr.bf16.mxu0 0
    %4062 = vmatpush1.bf16.msra.mxu0 0
    %4063 = vmatprep.subr.bf16.mxu0 0
    %4064 = vmatpush1.bf16.msra.mxu0 0
    %4065 = vmatprep.subr.bf16.mxu0 0
    %4066 = vmatpush1.bf16.msra.mxu0 0
    %4067 = vmatprep.subr.bf16.mxu0 0
    %4068 = vmatpush1.bf16.msra.mxu0 0
    %4069 = vmatprep.subr.bf16.mxu0 0
    %4070 = vmatpush1.bf16.msra.mxu0 0
    %4071 = vmatprep.subr.bf16.mxu0 0
    %4072 = vmatpush1.bf16.msra.mxu0 0
    %4073 = vmatprep.subr.bf16.mxu0 0
    %4074 = vmatpush1.bf16.msra.mxu0 0
    %4075 = vmatprep.subr.bf16.mxu0 0
    %4076 = vmatpush1.bf16.msra.mxu0 0
    %4077 = vmatprep.mubr.bf16.mxu0 0
    %4078 = vmatmul.mubr.bf16.gmra.mrb[0].mxu0 %v3036
    %v4079 = vpop.f32.mrb[0].mxu0
    %v4080 = vadd.f32 0.0, %v4079
    %v4081 = vpop.f32.mrb[0].mxu0
    %v4082 = vpop.f32.mrb[0].mxu0
    %v4083 = vadd.f32 0.0, %v4082
    %v4084 = vpop.f32.mrb[0].mxu0
    %4085 = vmatprep.mubr.bf16.mxu0 0
    %4086 = vmatmul.mubr.bf16.gmra.mrb[0].mxu0 %v3039
    %v4087 = vpop.f32.mrb[0].mxu0
    %v4088 = vadd.f32 0.0, %v4087
    %v4089 = vpop.f32.mrb[0].mxu0
    %v4090 = vpop.f32.mrb[0].mxu0
    %v4091 = vadd.f32 0.0, %v4090
    %v4092 = vpop.f32.mrb[0].mxu0
    %4093 = vdwg.mxu0
    %s4094 = scalar_lea.vmem %s8, 96
    %v4095 = vld [vmem:[%s4094] sm:$0xf]
    %v4096 = vld [vmem:[%s4094 + $0x4] sm:$0xf]
    %v4097 = vld [vmem:[%s4094 + $0x8] sm:$0xf]
    %v4098 = vld [vmem:[%s4094 + $0xc] sm:$0xf]
    %v4103 = vunpack.c.l.b16 %v4095
    %v4104 = vunpack.c.l.b16 %v4096
    %v4105 = vunpack.c.l.b16 %v4097
    %v4106 = vunpack.c.l.b16 %v4098
    %v4107 = vpack.c.b16 %v4104, %v4103
    %v4108 = vpack.c.b16 %v4106, %v4105
    %4111 = vmatprep.subr.bf16.mxu0 0
    %4112 = vmatpush1.bf16.msra.mxu0 %v4107
    %4113 = vmatprep.subr.bf16.mxu0 0
    %4114 = vmatpush1.bf16.msra.mxu0 %v4108
    %4115 = vmatprep.subr.bf16.mxu0 0
    %4116 = vmatpush1.bf16.msra.mxu0 0
    %4117 = vmatprep.subr.bf16.mxu0 0
    %4118 = vmatpush1.bf16.msra.mxu0 0
    %4119 = vmatprep.subr.bf16.mxu0 0
    %4120 = vmatpush1.bf16.msra.mxu0 0
    %4121 = vmatprep.subr.bf16.mxu0 0
    %4122 = vmatpush1.bf16.msra.mxu0 0
    %4123 = vmatprep.subr.bf16.mxu0 0
    %4124 = vmatpush1.bf16.msra.mxu0 0
    %4125 = vmatprep.subr.bf16.mxu0 0
    %4126 = vmatpush1.bf16.msra.mxu0 0
    %4127 = vmatprep.subr.bf16.mxu0 0
    %4128 = vmatpush1.bf16.msra.mxu0 0
    %4129 = vmatprep.subr.bf16.mxu0 0
    %4130 = vmatpush1.bf16.msra.mxu0 0
    %4131 = vmatprep.subr.bf16.mxu0 0
    %4132 = vmatpush1.bf16.msra.mxu0 0
    %4133 = vmatprep.subr.bf16.mxu0 0
    %4134 = vmatpush1.bf16.msra.mxu0 0
    %4135 = vmatprep.subr.bf16.mxu0 0
    %4136 = vmatpush1.bf16.msra.mxu0 0
    %4137 = vmatprep.subr.bf16.mxu0 0
    %4138 = vmatpush1.bf16.msra.mxu0 0
    %4139 = vmatprep.subr.bf16.mxu0 0
    %4140 = vmatpush1.bf16.msra.mxu0 0
    %4141 = vmatprep.subr.bf16.mxu0 0
    %4142 = vmatpush1.bf16.msra.mxu0 0
    %4143 = vmatprep.mubr.bf16.mxu0 0
    %4144 = vmatmul.mubr.bf16.gmra.mrb[0].mxu0 %v3036
    %v4145 = vpop.f32.mrb[0].mxu0
    %v4146 = vadd.f32 0.0, %v4145
    %v4147 = vpop.f32.mrb[0].mxu0
    %v4148 = vpop.f32.mrb[0].mxu0
    %v4149 = vadd.f32 0.0, %v4148
    %v4150 = vpop.f32.mrb[0].mxu0
    %4151 = vmatprep.mubr.bf16.mxu0 0
    %4152 = vmatmul.mubr.bf16.gmra.mrb[0].mxu0 %v3039
    %v4153 = vpop.f32.mrb[0].mxu0
    %v4154 = vadd.f32 0.0, %v4153
    %v4155 = vpop.f32.mrb[0].mxu0
    %v4156 = vpop.f32.mrb[0].mxu0
    %v4157 = vadd.f32 0.0, %v4156
    %v4158 = vpop.f32.mrb[0].mxu0
    %4159 = vdwg.mxu0
    %s4160 = scalar_lea.vmem %s9, 96
    %v4161 = vld [vmem:[%s4160] sm:$0xf]
    %v4162 = vld [vmem:[%s4160 + $0x4] sm:$0xf]
    %v4163 = vld [vmem:[%s4160 + $0x8] sm:$0xf]
    %v4164 = vld [vmem:[%s4160 + $0xc] sm:$0xf]
    %v4169 = vunpack.c.l.b16 %v4161
    %v4170 = vunpack.c.l.b16 %v4162
    %v4171 = vunpack.c.l.b16 %v4163
    %v4172 = vunpack.c.l.b16 %v4164
    %v4173 = vpack.c.b16 %v4170, %v4169
    %v4174 = vpack.c.b16 %v4172, %v4171
    %4177 = vmatprep.subr.bf16.mxu0 0
    %4178 = vmatpush1.bf16.msra.mxu0 %v4173
    %4179 = vmatprep.subr.bf16.mxu0 0
    %4180 = vmatpush1.bf16.msra.mxu0 %v4174
    %4181 = vmatprep.subr.bf16.mxu0 0
    %4182 = vmatpush1.bf16.msra.mxu0 0
    %4183 = vmatprep.subr.bf16.mxu0 0
    %4184 = vmatpush1.bf16.msra.mxu0 0
    %4185 = vmatprep.subr.bf16.mxu0 0
    %4186 = vmatpush1.bf16.msra.mxu0 0
    %4187 = vmatprep.subr.bf16.mxu0 0
    %4188 = vmatpush1.bf16.msra.mxu0 0
    %4189 = vmatprep.subr.bf16.mxu0 0
    %4190 = vmatpush1.bf16.msra.mxu0 0
    %4191 = vmatprep.subr.bf16.mxu0 0
    %4192 = vmatpush1.bf16.msra.mxu0 0
    %4193 = vmatprep.subr.bf16.mxu0 0
    %4194 = vmatpush1.bf16.msra.mxu0 0
    %4195 = vmatprep.subr.bf16.mxu0 0
    %4196 = vmatpush1.bf16.msra.mxu0 0
    %4197 = vmatprep.subr.bf16.mxu0 0
    %4198 = vmatpush1.bf16.msra.mxu0 0
    %4199 = vmatprep.subr.bf16.mxu0 0
    %4200 = vmatpush1.bf16.msra.mxu0 0
    %4201 = vmatprep.subr.bf16.mxu0 0
    %4202 = vmatpush1.bf16.msra.mxu0 0
    %4203 = vmatprep.subr.bf16.mxu0 0
    %4204 = vmatpush1.bf16.msra.mxu0 0
    %4205 = vmatprep.subr.bf16.mxu0 0
    %4206 = vmatpush1.bf16.msra.mxu0 0
    %4207 = vmatprep.subr.bf16.mxu0 0
    %4208 = vmatpush1.bf16.msra.mxu0 0
    %4209 = vmatprep.mubr.bf16.mxu0 0
    %4210 = vmatmul.mubr.bf16.gmra.mrb[0].mxu0 %v3036
    %v4211 = vpop.f32.mrb[0].mxu0
    %v4212 = vadd.f32 0.0, %v4211
    %v4213 = vpop.f32.mrb[0].mxu0
    %v4214 = vpop.f32.mrb[0].mxu0
    %v4215 = vadd.f32 0.0, %v4214
    %v4216 = vpop.f32.mrb[0].mxu0
    %4217 = vmatprep.mubr.bf16.mxu0 0
    %4218 = vmatmul.mubr.bf16.gmra.mrb[0].mxu0 %v3039
    %v4219 = vpop.f32.mrb[0].mxu0
    %v4220 = vadd.f32 0.0, %v4219
    %v4221 = vpop.f32.mrb[0].mxu0
    %v4222 = vpop.f32.mrb[0].mxu0
    %v4223 = vadd.f32 0.0, %v4222
    %v4224 = vpop.f32.mrb[0].mxu0
    %4225 = vdwg.mxu0
    %v4226 = vpack.c.bf16 %v4083, %v4080
    %v4227 = vpack.c.bf16 %v4091, %v4088
    %v4228 = vpack.c.bf16 %v4149, %v4146
    %v4229 = vpack.c.bf16 %v4157, %v4154
    %v4231 = vsel %vm899, %v4226, 0
    %v4234 = vsel %vm899, %v4228, 0
    %4236 = vmatprep.subr.bf16.mxu0 0
    %4237 = vmatpush1.bf16.xpose.msra.mxu0 %v4234
    %4238 = vmatprep.subr.bf16.mxu0 0
    %4239 = vmatpush1.bf16.xpose.msra.mxu0 0
    %4240 = vmatprep.subr.bf16.mxu0 0
    %4241 = vmatpush1.bf16.xpose.msra.mxu0 0
    %4242 = vmatprep.subr.bf16.mxu0 0
    %4243 = vmatpush1.bf16.xpose.msra.mxu0 0
    %4244 = vmatprep.subr.bf16.mxu0 0
    %4245 = vmatpush1.bf16.xpose.msra.mxu0 0
    %4246 = vmatprep.subr.bf16.mxu0 0
    %4247 = vmatpush1.bf16.xpose.msra.mxu0 0
    %4248 = vmatprep.subr.bf16.mxu0 0
    %4249 = vmatpush1.bf16.xpose.msra.mxu0 0
    %4250 = vmatprep.subr.bf16.mxu0 0
    %4251 = vmatpush1.bf16.xpose.msra.mxu0 0
    %4252 = vmatprep.subr.bf16.mxu0 0
    %4253 = vmatpush1.bf16.xpose.msra.mxu0 0
    %4254 = vmatprep.subr.bf16.mxu0 0
    %4255 = vmatpush1.bf16.xpose.msra.mxu0 0
    %4256 = vmatprep.subr.bf16.mxu0 0
    %4257 = vmatpush1.bf16.xpose.msra.mxu0 0
    %4258 = vmatprep.subr.bf16.mxu0 0
    %4259 = vmatpush1.bf16.xpose.msra.mxu0 0
    %4260 = vmatprep.subr.bf16.mxu0 0
    %4261 = vmatpush1.bf16.xpose.msra.mxu0 0
    %4262 = vmatprep.subr.bf16.mxu0 0
    %4263 = vmatpush1.bf16.xpose.msra.mxu0 0
    %4264 = vmatprep.subr.bf16.mxu0 0
    %4265 = vmatpush1.bf16.xpose.msra.mxu0 0
    %4266 = vmatprep.subr.bf16.mxu0 0
    %4267 = vmatpush1.bf16.xpose.msra.mxu0 0
    %4268 = vmatprep.mubr.bf16.mxu0 0
    %4269 = vmatmul.mubr.bf16.gmra.mrb[0].mxu0 %v4231
    %v4270 = vpop.f32.mrb[0].mxu0
    %v4271 = vadd.f32 0.0, %v4270
    %v4272 = vpop.f32.mrb[0].mxu0
    %v4273 = vpop.f32.mrb[0].mxu0
    %v4274 = vadd.f32 0.0, %v4273
    %v4275 = vpop.f32.mrb[0].mxu0
    %4276 = vdwg.mxu0
    %v4278 = vsel %vm899, %v4227, 0
    %v4281 = vsel %vm899, %v4229, 0
    %4283 = vmatprep.subr.bf16.mxu0 0
    %4284 = vmatpush1.bf16.xpose.msra.mxu0 %v4281
    %4285 = vmatprep.subr.bf16.mxu0 0
    %4286 = vmatpush1.bf16.xpose.msra.mxu0 0
    %4287 = vmatprep.subr.bf16.mxu0 0
    %4288 = vmatpush1.bf16.xpose.msra.mxu0 0
    %4289 = vmatprep.subr.bf16.mxu0 0
    %4290 = vmatpush1.bf16.xpose.msra.mxu0 0
    %4291 = vmatprep.subr.bf16.mxu0 0
    %4292 = vmatpush1.bf16.xpose.msra.mxu0 0
    %4293 = vmatprep.subr.bf16.mxu0 0
    %4294 = vmatpush1.bf16.xpose.msra.mxu0 0
    %4295 = vmatprep.subr.bf16.mxu0 0
    %4296 = vmatpush1.bf16.xpose.msra.mxu0 0
    %4297 = vmatprep.subr.bf16.mxu0 0
    %4298 = vmatpush1.bf16.xpose.msra.mxu0 0
    %4299 = vmatprep.subr.bf16.mxu0 0
    %4300 = vmatpush1.bf16.xpose.msra.mxu0 0
    %4301 = vmatprep.subr.bf16.mxu0 0
    %4302 = vmatpush1.bf16.xpose.msra.mxu0 0
    %4303 = vmatprep.subr.bf16.mxu0 0
    %4304 = vmatpush1.bf16.xpose.msra.mxu0 0
    %4305 = vmatprep.subr.bf16.mxu0 0
    %4306 = vmatpush1.bf16.xpose.msra.mxu0 0
    %4307 = vmatprep.subr.bf16.mxu0 0
    %4308 = vmatpush1.bf16.xpose.msra.mxu0 0
    %4309 = vmatprep.subr.bf16.mxu0 0
    %4310 = vmatpush1.bf16.xpose.msra.mxu0 0
    %4311 = vmatprep.subr.bf16.mxu0 0
    %4312 = vmatpush1.bf16.xpose.msra.mxu0 0
    %4313 = vmatprep.subr.bf16.mxu0 0
    %4314 = vmatpush1.bf16.xpose.msra.mxu0 0
    %4315 = vmatprep.mubr.bf16.mxu0 0
    %4316 = vmatmul.mubr.bf16.gmra.mrb[0].mxu0 %v4278
    %v4317 = vpop.f32.mrb[0].mxu0
    %v4318 = vadd.f32 0.0, %v4317
    %v4319 = vpop.f32.mrb[0].mxu0
    %v4320 = vpop.f32.mrb[0].mxu0
    %v4321 = vadd.f32 0.0, %v4320
    %v4322 = vpop.f32.mrb[0].mxu0
    %4323 = vdwg.mxu0
    %v4324 = vmul.f32 %v4271, 0.35355338
    %v4325 = vmul.f32 %v4274, 0.35355338
    %v4326 = vmul.f32 %v4318, 0.35355338
    %v4327 = vmul.f32 %v4321, 0.35355338
    %v4328 = vadd.f32 %v4324, %v647
    %v4329 = vadd.f32 %v4325, %v648
    %v4330 = vadd.f32 %v4326, %v647
    %v4331 = vadd.f32 %v4327, %v648
    %v4332 = vsel %vm1002, %v4328, -inf
    %4333 = vmax.xlane.f32.xlu0 %v4332
    %v4334 = vpop.xlane.xlu0 %4333
    %v4335 = vsel %vm1002, %v4329, -inf
    %4336 = vmax.xlane.f32.xlu0 %v4335
    %v4337 = vpop.xlane.xlu0 %4336
    %v4338 = vsel %vm1002, %v4330, -inf
    %4339 = vmax.xlane.f32.xlu0 %v4338
    %v4340 = vpop.xlane.xlu0 %4339
    %v4341 = vsel %vm1002, %v4331, -inf
    %4342 = vmax.xlane.f32.xlu0 %v4341
    %v4343 = vpop.xlane.xlu0 %4342
    %v4344 = vsub.f32 %v4328, %v4334
    %v4345 = vsub.f32 %v4329, %v4337
    %v4346 = vsub.f32 %v4330, %v4340
    %v4347 = vsub.f32 %v4331, %v4343
    %v4348 = vmul.f32 %v4344, 1.442695
    %v4349 = vpow.pop %v4348
    %v4350 = vmul.f32 %v4345, 1.442695
    %v4351 = vpow.pop %v4350
    %v4352 = vmul.f32 %v4346, 1.442695
    %v4353 = vpow.pop %v4352
    %v4354 = vmul.f32 %v4347, 1.442695
    %v4355 = vpow.pop %v4354
    %v4356 = vsel %vm1002, %v4349, 0.0
    %4357 = vadd.xlane.f32.xlu0 %v4356
    %v4358 = vpop.xlane.xlu0 %4357
    %v4359 = vsel %vm1002, %v4351, 0.0
    %4360 = vadd.xlane.f32.xlu0 %v4359
    %v4361 = vpop.xlane.xlu0 %4360
    %v4362 = vsel %vm1002, %v4353, 0.0
    %4363 = vadd.xlane.f32.xlu0 %v4362
    %v4364 = vpop.xlane.xlu0 %4363
    %v4365 = vsel %vm1002, %v4355, 0.0
    %4366 = vadd.xlane.f32.xlu0 %v4365
    %v4367 = vpop.xlane.xlu0 %4366
    %v4368 = vrcp.pop %v4358
    %v4369 = vrcp.pop %v4361
    %v4370 = vrcp.pop %v4364
    %v4371 = vrcp.pop %v4367
    %v4372 = vmul.f32 %v4349, %v4368
    %v4373 = vmul.f32 %v4351, %v4369
    %v4374 = vmul.f32 %v4353, %v4370
    %v4375 = vmul.f32 %v4355, %v4371
    %v4376 = vpack.c.bf16 %v4373, %v4372
    %v4377 = vpack.c.bf16 %v4375, %v4374
    %v4378 = vpack.c.bf16 %v4215, %v4212
    %v4379 = vpack.c.bf16 %v4223, %v4220
    %v4381 = vsel %vm1002, %v4376, 0
    %4383 = vmatprep.subr.bf16.mxu0 0
    %4384 = vmatpush1.bf16.msra.mxu0 %v4378
    %4385 = vmatprep.subr.bf16.mxu0 0
    %4386 = vmatpush1.bf16.msra.mxu0 0
    %4387 = vmatprep.subr.bf16.mxu0 0
    %4388 = vmatpush1.bf16.msra.mxu0 0
    %4389 = vmatprep.subr.bf16.mxu0 0
    %4390 = vmatpush1.bf16.msra.mxu0 0
    %4391 = vmatprep.subr.bf16.mxu0 0
    %4392 = vmatpush1.bf16.msra.mxu0 0
    %4393 = vmatprep.subr.bf16.mxu0 0
    %4394 = vmatpush1.bf16.msra.mxu0 0
    %4395 = vmatprep.subr.bf16.mxu0 0
    %4396 = vmatpush1.bf16.msra.mxu0 0
    %4397 = vmatprep.subr.bf16.mxu0 0
    %4398 = vmatpush1.bf16.msra.mxu0 0
    %4399 = vmatprep.subr.bf16.mxu0 0
    %4400 = vmatpush1.bf16.msra.mxu0 0
    %4401 = vmatprep.subr.bf16.mxu0 0
    %4402 = vmatpush1.bf16.msra.mxu0 0
    %4403 = vmatprep.subr.bf16.mxu0 0
    %4404 = vmatpush1.bf16.msra.mxu0 0
    %4405 = vmatprep.subr.bf16.mxu0 0
    %4406 = vmatpush1.bf16.msra.mxu0 0
    %4407 = vmatprep.subr.bf16.mxu0 0
    %4408 = vmatpush1.bf16.msra.mxu0 0
    %4409 = vmatprep.subr.bf16.mxu0 0
    %4410 = vmatpush1.bf16.msra.mxu0 0
    %4411 = vmatprep.subr.bf16.mxu0 0
    %4412 = vmatpush1.bf16.msra.mxu0 0
    %4413 = vmatprep.subr.bf16.mxu0 0
    %4414 = vmatpush1.bf16.msra.mxu0 0
    %4415 = vmatprep.mubr.bf16.mxu0 0
    %4416 = vmatmul.mubr.bf16.gmra.mrb[0].mxu0 %v4381
    %v4417 = vpop.f32.mrb[0].mxu0
    %v4418 = vadd.f32 0.0, %v4417
    %v4419 = vpop.f32.mrb[0].mxu0
    %v4420 = vpop.f32.mrb[0].mxu0
    %v4421 = vadd.f32 0.0, %v4420
    %v4422 = vpop.f32.mrb[0].mxu0
    %4423 = vdwg.mxu0
    %v4425 = vsel %vm1002, %v4377, 0
    %4427 = vmatprep.subr.bf16.mxu0 0
    %4428 = vmatpush1.bf16.msra.mxu0 %v4379
    %4429 = vmatprep.subr.bf16.mxu0 0
    %4430 = vmatpush1.bf16.msra.mxu0 0
    %4431 = vmatprep.subr.bf16.mxu0 0
    %4432 = vmatpush1.bf16.msra.mxu0 0
    %4433 = vmatprep.subr.bf16.mxu0 0
    %4434 = vmatpush1.bf16.msra.mxu0 0
    %4435 = vmatprep.subr.bf16.mxu0 0
    %4436 = vmatpush1.bf16.msra.mxu0 0
    %4437 = vmatprep.subr.bf16.mxu0 0
    %4438 = vmatpush1.bf16.msra.mxu0 0
    %4439 = vmatprep.subr.bf16.mxu0 0
    %4440 = vmatpush1.bf16.msra.mxu0 0
    %4441 = vmatprep.subr.bf16.mxu0 0
    %4442 = vmatpush1.bf16.msra.mxu0 0
    %4443 = vmatprep.subr.bf16.mxu0 0
    %4444 = vmatpush1.bf16.msra.mxu0 0
    %4445 = vmatprep.subr.bf16.mxu0 0
    %4446 = vmatpush1.bf16.msra.mxu0 0
    %4447 = vmatprep.subr.bf16.mxu0 0
    %4448 = vmatpush1.bf16.msra.mxu0 0
    %4449 = vmatprep.subr.bf16.mxu0 0
    %4450 = vmatpush1.bf16.msra.mxu0 0
    %4451 = vmatprep.subr.bf16.mxu0 0
    %4452 = vmatpush1.bf16.msra.mxu0 0
    %4453 = vmatprep.subr.bf16.mxu0 0
    %4454 = vmatpush1.bf16.msra.mxu0 0
    %4455 = vmatprep.subr.bf16.mxu0 0
    %4456 = vmatpush1.bf16.msra.mxu0 0
    %4457 = vmatprep.subr.bf16.mxu0 0
    %4458 = vmatpush1.bf16.msra.mxu0 0
    %4459 = vmatprep.mubr.bf16.mxu0 0
    %4460 = vmatmul.mubr.bf16.gmra.mrb[0].mxu0 %v4425
    %v4461 = vpop.f32.mrb[0].mxu0
    %v4462 = vadd.f32 0.0, %v4461
    %v4463 = vpop.f32.mrb[0].mxu0
    %v4464 = vpop.f32.mrb[0].mxu0
    %v4465 = vadd.f32 0.0, %v4464
    %v4466 = vpop.f32.mrb[0].mxu0
    %4467 = vdwg.mxu0
    %s4468 = scalar_lea.vmem %s10, 24
    %v4469 = vld [vmem:[%s4468] sm:$0xf]
    %v4470 = vpack.c.bf16 %v4421, %v4418
    %v4471 = vpack.c.bf16 %v4465, %v4462
    %v4473 = vsel %vm899, %v4470, 0
    %v4476 = vsel %vm899, %v4471, 0
    %v4479 = vsel %vm1592, %v4469, 0
    %4481 = vmatprep.subr.bf16.mxu0 0
    %4482 = vmatpush1.bf16.msra.mxu0 %v4479
    %4483 = vmatprep.subr.bf16.mxu0 0
    %4484 = vmatpush1.bf16.msra.mxu0 0
    %4485 = vmatprep.subr.bf16.mxu0 0
    %4486 = vmatpush1.bf16.msra.mxu0 0
    %4487 = vmatprep.subr.bf16.mxu0 0
    %4488 = vmatpush1.bf16.msra.mxu0 0
    %4489 = vmatprep.subr.bf16.mxu0 0
    %4490 = vmatpush1.bf16.msra.mxu0 0
    %4491 = vmatprep.subr.bf16.mxu0 0
    %4492 = vmatpush1.bf16.msra.mxu0 0
    %4493 = vmatprep.subr.bf16.mxu0 0
    %4494 = vmatpush1.bf16.msra.mxu0 0
    %4495 = vmatprep.subr.bf16.mxu0 0
    %4496 = vmatpush1.bf16.msra.mxu0 0
    %4497 = vmatprep.subr.bf16.mxu0 0
    %4498 = vmatpush1.bf16.msra.mxu0 0
    %4499 = vmatprep.subr.bf16.mxu0 0
    %4500 = vmatpush1.bf16.msra.mxu0 0
    %4501 = vmatprep.subr.bf16.mxu0 0
    %4502 = vmatpush1.bf16.msra.mxu0 0
    %4503 = vmatprep.subr.bf16.mxu0 0
    %4504 = vmatpush1.bf16.msra.mxu0 0
    %4505 = vmatprep.subr.bf16.mxu0 0
    %4506 = vmatpush1.bf16.msra.mxu0 0
    %4507 = vmatprep.subr.bf16.mxu0 0
    %4508 = vmatpush1.bf16.msra.mxu0 0
    %4509 = vmatprep.subr.bf16.mxu0 0
    %4510 = vmatpush1.bf16.msra.mxu0 0
    %4511 = vmatprep.subr.bf16.mxu0 0
    %4512 = vmatpush1.bf16.msra.mxu0 0
    %4513 = vmatprep.mubr.bf16.mxu0 0
    %4514 = vmatmul.mubr.bf16.gmra.mrb[0].mxu0 %v4473
    %v4515 = vpop.f32.mrb[0].mxu0
    %v4516 = vadd.f32 0.0, %v4515
    %v4517 = vpop.f32.mrb[0].mxu0
    %v4518 = vpop.f32.mrb[0].mxu0
    %v4519 = vadd.f32 0.0, %v4518
    %v4520 = vpop.f32.mrb[0].mxu0
    %4521 = vmatprep.mubr.bf16.mxu0 0
    %4522 = vmatmul.mubr.bf16.gmra.mrb[0].mxu0 %v4476
    %v4523 = vpop.f32.mrb[0].mxu0
    %v4524 = vadd.f32 0.0, %v4523
    %v4525 = vpop.f32.mrb[0].mxu0
    %v4526 = vpop.f32.mrb[0].mxu0
    %v4527 = vadd.f32 0.0, %v4526
    %v4528 = vpop.f32.mrb[0].mxu0
    %4529 = vdwg.mxu0
    %v4530 = vadd.f32 %v4014, %v4516
    %v4531 = vadd.f32 %v4017, %v4519
    %v4532 = vadd.f32 %v4022, %v4524
    %v4533 = vadd.f32 %v4025, %v4527
    %s4534 = scalar_lea.vmem %s7, 112
    %v4535 = vld [vmem:[%s4534] sm:$0xf]
    %v4536 = vld [vmem:[%s4534 + $0x4] sm:$0xf]
    %v4537 = vld [vmem:[%s4534 + $0x8] sm:$0xf]
    %v4538 = vld [vmem:[%s4534 + $0xc] sm:$0xf]
    %v4543 = vunpack.c.l.b16 %v4535
    %v4544 = vunpack.c.l.b16 %v4536
    %v4545 = vunpack.c.l.b16 %v4537
    %v4546 = vunpack.c.l.b16 %v4538
    %v4547 = vpack.c.b16 %v4544, %v4543
    %v4548 = vpack.c.b16 %v4546, %v4545
    %4551 = vmatprep.subr.bf16.mxu0 0
    %4552 = vmatpush1.bf16.msra.mxu0 %v4547
    %4553 = vmatprep.subr.bf16.mxu0 0
    %4554 = vmatpush1.bf16.msra.mxu0 %v4548
    %4555 = vmatprep.subr.bf16.mxu0 0
    %4556 = vmatpush1.bf16.msra.mxu0 0
    %4557 = vmatprep.subr.bf16.mxu0 0
    %4558 = vmatpush1.bf16.msra.mxu0 0
    %4559 = vmatprep.subr.bf16.mxu0 0
    %4560 = vmatpush1.bf16.msra.mxu0 0
    %4561 = vmatprep.subr.bf16.mxu0 0
    %4562 = vmatpush1.bf16.msra.mxu0 0
    %4563 = vmatprep.subr.bf16.mxu0 0
    %4564 = vmatpush1.bf16.msra.mxu0 0
    %4565 = vmatprep.subr.bf16.mxu0 0
    %4566 = vmatpush1.bf16.msra.mxu0 0
    %4567 = vmatprep.subr.bf16.mxu0 0
    %4568 = vmatpush1.bf16.msra.mxu0 0
    %4569 = vmatprep.subr.bf16.mxu0 0
    %4570 = vmatpush1.bf16.msra.mxu0 0
    %4571 = vmatprep.subr.bf16.mxu0 0
    %4572 = vmatpush1.bf16.msra.mxu0 0
    %4573 = vmatprep.subr.bf16.mxu0 0
    %4574 = vmatpush1.bf16.msra.mxu0 0
    %4575 = vmatprep.subr.bf16.mxu0 0
    %4576 = vmatpush1.bf16.msra.mxu0 0
    %4577 = vmatprep.subr.bf16.mxu0 0
    %4578 = vmatpush1.bf16.msra.mxu0 0
    %4579 = vmatprep.subr.bf16.mxu0 0
    %4580 = vmatpush1.bf16.msra.mxu0 0
    %4581 = vmatprep.subr.bf16.mxu0 0
    %4582 = vmatpush1.bf16.msra.mxu0 0
    %4583 = vmatprep.mubr.bf16.mxu0 0
    %4584 = vmatmul.mubr.bf16.gmra.mrb[0].mxu0 %v3036
    %v4585 = vpop.f32.mrb[0].mxu0
    %v4586 = vadd.f32 0.0, %v4585
    %v4587 = vpop.f32.mrb[0].mxu0
    %v4588 = vpop.f32.mrb[0].mxu0
    %v4589 = vadd.f32 0.0, %v4588
    %v4590 = vpop.f32.mrb[0].mxu0
    %4591 = vmatprep.mubr.bf16.mxu0 0
    %4592 = vmatmul.mubr.bf16.gmra.mrb[0].mxu0 %v3039
    %v4593 = vpop.f32.mrb[0].mxu0
    %v4594 = vadd.f32 0.0, %v4593
    %v4595 = vpop.f32.mrb[0].mxu0
    %v4596 = vpop.f32.mrb[0].mxu0
    %v4597 = vadd.f32 0.0, %v4596
    %v4598 = vpop.f32.mrb[0].mxu0
    %4599 = vdwg.mxu0
    %s4600 = scalar_lea.vmem %s8, 112
    %v4601 = vld [vmem:[%s4600] sm:$0xf]
    %v4602 = vld [vmem:[%s4600 + $0x4] sm:$0xf]
    %v4603 = vld [vmem:[%s4600 + $0x8] sm:$0xf]
    %v4604 = vld [vmem:[%s4600 + $0xc] sm:$0xf]
    %v4609 = vunpack.c.l.b16 %v4601
    %v4610 = vunpack.c.l.b16 %v4602
    %v4611 = vunpack.c.l.b16 %v4603
    %v4612 = vunpack.c.l.b16 %v4604
    %v4613 = vpack.c.b16 %v4610, %v4609
    %v4614 = vpack.c.b16 %v4612, %v4611
    %4617 = vmatprep.subr.bf16.mxu0 0
    %4618 = vmatpush1.bf16.msra.mxu0 %v4613
    %4619 = vmatprep.subr.bf16.mxu0 0
    %4620 = vmatpush1.bf16.msra.mxu0 %v4614
    %4621 = vmatprep.subr.bf16.mxu0 0
    %4622 = vmatpush1.bf16.msra.mxu0 0
    %4623 = vmatprep.subr.bf16.mxu0 0
    %4624 = vmatpush1.bf16.msra.mxu0 0
    %4625 = vmatprep.subr.bf16.mxu0 0
    %4626 = vmatpush1.bf16.msra.mxu0 0
    %4627 = vmatprep.subr.bf16.mxu0 0
    %4628 = vmatpush1.bf16.msra.mxu0 0
    %4629 = vmatprep.subr.bf16.mxu0 0
    %4630 = vmatpush1.bf16.msra.mxu0 0
    %4631 = vmatprep.subr.bf16.mxu0 0
    %4632 = vmatpush1.bf16.msra.mxu0 0
    %4633 = vmatprep.subr.bf16.mxu0 0
    %4634 = vmatpush1.bf16.msra.mxu0 0
    %4635 = vmatprep.subr.bf16.mxu0 0
    %4636 = vmatpush1.bf16.msra.mxu0 0
    %4637 = vmatprep.subr.bf16.mxu0 0
    %4638 = vmatpush1.bf16.msra.mxu0 0
    %4639 = vmatprep.subr.bf16.mxu0 0
    %4640 = vmatpush1.bf16.msra.mxu0 0
    %4641 = vmatprep.subr.bf16.mxu0 0
    %4642 = vmatpush1.bf16.msra.mxu0 0
    %4643 = vmatprep.subr.bf16.mxu0 0
    %4644 = vmatpush1.bf16.msra.mxu0 0
    %4645 = vmatprep.subr.bf16.mxu0 0
    %4646 = vmatpush1.bf16.msra.mxu0 0
    %4647 = vmatprep.subr.bf16.mxu0 0
    %4648 = vmatpush1.bf16.msra.mxu0 0
    %4649 = vmatprep.mubr.bf16.mxu0 0
    %4650 = vmatmul.mubr.bf16.gmra.mrb[0].mxu0 %v3036
    %v4651 = vpop.f32.mrb[0].mxu0
    %v4652 = vadd.f32 0.0, %v4651
    %v4653 = vpop.f32.mrb[0].mxu0
    %v4654 = vpop.f32.mrb[0].mxu0
    %v4655 = vadd.f32 0.0, %v4654
    %v4656 = vpop.f32.mrb[0].mxu0
    %4657 = vmatprep.mubr.bf16.mxu0 0
    %4658 = vmatmul.mubr.bf16.gmra.mrb[0].mxu0 %v3039
    %v4659 = vpop.f32.mrb[0].mxu0
    %v4660 = vadd.f32 0.0, %v4659
    %v4661 = vpop.f32.mrb[0].mxu0
    %v4662 = vpop.f32.mrb[0].mxu0
    %v4663 = vadd.f32 0.0, %v4662
    %v4664 = vpop.f32.mrb[0].mxu0
    %4665 = vdwg.mxu0
    %s4666 = scalar_lea.vmem %s9, 112
    %v4667 = vld [vmem:[%s4666] sm:$0xf]
    %v4668 = vld [vmem:[%s4666 + $0x4] sm:$0xf]
    %v4669 = vld [vmem:[%s4666 + $0x8] sm:$0xf]
    %v4670 = vld [vmem:[%s4666 + $0xc] sm:$0xf]
    %v4675 = vunpack.c.l.b16 %v4667
    %v4676 = vunpack.c.l.b16 %v4668
    %v4677 = vunpack.c.l.b16 %v4669
    %v4678 = vunpack.c.l.b16 %v4670
    %v4679 = vpack.c.b16 %v4676, %v4675
    %v4680 = vpack.c.b16 %v4678, %v4677
    %4683 = vmatprep.subr.bf16.mxu0 0
    %4684 = vmatpush1.bf16.msra.mxu0 %v4679
    %4685 = vmatprep.subr.bf16.mxu0 0
    %4686 = vmatpush1.bf16.msra.mxu0 %v4680
    %4687 = vmatprep.subr.bf16.mxu0 0
    %4688 = vmatpush1.bf16.msra.mxu0 0
    %4689 = vmatprep.subr.bf16.mxu0 0
    %4690 = vmatpush1.bf16.msra.mxu0 0
    %4691 = vmatprep.subr.bf16.mxu0 0
    %4692 = vmatpush1.bf16.msra.mxu0 0
    %4693 = vmatprep.subr.bf16.mxu0 0
    %4694 = vmatpush1.bf16.msra.mxu0 0
    %4695 = vmatprep.subr.bf16.mxu0 0
    %4696 = vmatpush1.bf16.msra.mxu0 0
    %4697 = vmatprep.subr.bf16.mxu0 0
    %4698 = vmatpush1.bf16.msra.mxu0 0
    %4699 = vmatprep.subr.bf16.mxu0 0
    %4700 = vmatpush1.bf16.msra.mxu0 0
    %4701 = vmatprep.subr.bf16.mxu0 0
    %4702 = vmatpush1.bf16.msra.mxu0 0
    %4703 = vmatprep.subr.bf16.mxu0 0
    %4704 = vmatpush1.bf16.msra.mxu0 0
    %4705 = vmatprep.subr.bf16.mxu0 0
    %4706 = vmatpush1.bf16.msra.mxu0 0
    %4707 = vmatprep.subr.bf16.mxu0 0
    %4708 = vmatpush1.bf16.msra.mxu0 0
    %4709 = vmatprep.subr.bf16.mxu0 0
    %4710 = vmatpush1.bf16.msra.mxu0 0
    %4711 = vmatprep.subr.bf16.mxu0 0
    %4712 = vmatpush1.bf16.msra.mxu0 0
    %4713 = vmatprep.subr.bf16.mxu0 0
    %4714 = vmatpush1.bf16.msra.mxu0 0
    %4715 = vmatprep.mubr.bf16.mxu0 0
    %4716 = vmatmul.mubr.bf16.gmra.mrb[0].mxu0 %v3036
    %v4717 = vpop.f32.mrb[0].mxu0
    %v4718 = vadd.f32 0.0, %v4717
    %v4719 = vpop.f32.mrb[0].mxu0
    %v4720 = vpop.f32.mrb[0].mxu0
    %v4721 = vadd.f32 0.0, %v4720
    %v4722 = vpop.f32.mrb[0].mxu0
    %4723 = vmatprep.mubr.bf16.mxu0 0
    %4724 = vmatmul.mubr.bf16.gmra.mrb[0].mxu0 %v3039
    %v4725 = vpop.f32.mrb[0].mxu0
    %v4726 = vadd.f32 0.0, %v4725
    %v4727 = vpop.f32.mrb[0].mxu0
    %v4728 = vpop.f32.mrb[0].mxu0
    %v4729 = vadd.f32 0.0, %v4728
    %v4730 = vpop.f32.mrb[0].mxu0
    %4731 = vdwg.mxu0
    %v4732 = vpack.c.bf16 %v4589, %v4586
    %v4733 = vpack.c.bf16 %v4597, %v4594
    %v4734 = vpack.c.bf16 %v4655, %v4652
    %v4735 = vpack.c.bf16 %v4663, %v4660
    %v4737 = vsel %vm899, %v4732, 0
    %v4740 = vsel %vm899, %v4734, 0
    %4742 = vmatprep.subr.bf16.mxu0 0
    %4743 = vmatpush1.bf16.xpose.msra.mxu0 %v4740
    %4744 = vmatprep.subr.bf16.mxu0 0
    %4745 = vmatpush1.bf16.xpose.msra.mxu0 0
    %4746 = vmatprep.subr.bf16.mxu0 0
    %4747 = vmatpush1.bf16.xpose.msra.mxu0 0
    %4748 = vmatprep.subr.bf16.mxu0 0
    %4749 = vmatpush1.bf16.xpose.msra.mxu0 0
    %4750 = vmatprep.subr.bf16.mxu0 0
    %4751 = vmatpush1.bf16.xpose.msra.mxu0 0
    %4752 = vmatprep.subr.bf16.mxu0 0
    %4753 = vmatpush1.bf16.xpose.msra.mxu0 0
    %4754 = vmatprep.subr.bf16.mxu0 0
    %4755 = vmatpush1.bf16.xpose.msra.mxu0 0
    %4756 = vmatprep.subr.bf16.mxu0 0
    %4757 = vmatpush1.bf16.xpose.msra.mxu0 0
    %4758 = vmatprep.subr.bf16.mxu0 0
    %4759 = vmatpush1.bf16.xpose.msra.mxu0 0
    %4760 = vmatprep.subr.bf16.mxu0 0
    %4761 = vmatpush1.bf16.xpose.msra.mxu0 0
    %4762 = vmatprep.subr.bf16.mxu0 0
    %4763 = vmatpush1.bf16.xpose.msra.mxu0 0
    %4764 = vmatprep.subr.bf16.mxu0 0
    %4765 = vmatpush1.bf16.xpose.msra.mxu0 0
    %4766 = vmatprep.subr.bf16.mxu0 0
    %4767 = vmatpush1.bf16.xpose.msra.mxu0 0
    %4768 = vmatprep.subr.bf16.mxu0 0
    %4769 = vmatpush1.bf16.xpose.msra.mxu0 0
    %4770 = vmatprep.subr.bf16.mxu0 0
    %4771 = vmatpush1.bf16.xpose.msra.mxu0 0
    %4772 = vmatprep.subr.bf16.mxu0 0
    %4773 = vmatpush1.bf16.xpose.msra.mxu0 0
    %4774 = vmatprep.mubr.bf16.mxu0 0
    %4775 = vmatmul.mubr.bf16.gmra.mrb[0].mxu0 %v4737
    %v4776 = vpop.f32.mrb[0].mxu0
    %v4777 = vadd.f32 0.0, %v4776
    %v4778 = vpop.f32.mrb[0].mxu0
    %v4779 = vpop.f32.mrb[0].mxu0
    %v4780 = vadd.f32 0.0, %v4779
    %v4781 = vpop.f32.mrb[0].mxu0
    %4782 = vdwg.mxu0
    %v4784 = vsel %vm899, %v4733, 0
    %v4787 = vsel %vm899, %v4735, 0
    %4789 = vmatprep.subr.bf16.mxu0 0
    %4790 = vmatpush1.bf16.xpose.msra.mxu0 %v4787
    %4791 = vmatprep.subr.bf16.mxu0 0
    %4792 = vmatpush1.bf16.xpose.msra.mxu0 0
    %4793 = vmatprep.subr.bf16.mxu0 0
    %4794 = vmatpush1.bf16.xpose.msra.mxu0 0
    %4795 = vmatprep.subr.bf16.mxu0 0
    %4796 = vmatpush1.bf16.xpose.msra.mxu0 0
    %4797 = vmatprep.subr.bf16.mxu0 0
    %4798 = vmatpush1.bf16.xpose.msra.mxu0 0
    %4799 = vmatprep.subr.bf16.mxu0 0
    %4800 = vmatpush1.bf16.xpose.msra.mxu0 0
    %4801 = vmatprep.subr.bf16.mxu0 0
    %4802 = vmatpush1.bf16.xpose.msra.mxu0 0
    %4803 = vmatprep.subr.bf16.mxu0 0
    %4804 = vmatpush1.bf16.xpose.msra.mxu0 0
    %4805 = vmatprep.subr.bf16.mxu0 0
    %4806 = vmatpush1.bf16.xpose.msra.mxu0 0
    %4807 = vmatprep.subr.bf16.mxu0 0
    %4808 = vmatpush1.bf16.xpose.msra.mxu0 0
    %4809 = vmatprep.subr.bf16.mxu0 0
    %4810 = vmatpush1.bf16.xpose.msra.mxu0 0
    %4811 = vmatprep.subr.bf16.mxu0 0
    %4812 = vmatpush1.bf16.xpose.msra.mxu0 0
    %4813 = vmatprep.subr.bf16.mxu0 0
    %4814 = vmatpush1.bf16.xpose.msra.mxu0 0
    %4815 = vmatprep.subr.bf16.mxu0 0
    %4816 = vmatpush1.bf16.xpose.msra.mxu0 0
    %4817 = vmatprep.subr.bf16.mxu0 0
    %4818 = vmatpush1.bf16.xpose.msra.mxu0 0
    %4819 = vmatprep.subr.bf16.mxu0 0
    %4820 = vmatpush1.bf16.xpose.msra.mxu0 0
    %4821 = vmatprep.mubr.bf16.mxu0 0
    %4822 = vmatmul.mubr.bf16.gmra.mrb[0].mxu0 %v4784
    %v4823 = vpop.f32.mrb[0].mxu0
    %v4824 = vadd.f32 0.0, %v4823
    %v4825 = vpop.f32.mrb[0].mxu0
    %v4826 = vpop.f32.mrb[0].mxu0
    %v4827 = vadd.f32 0.0, %v4826
    %v4828 = vpop.f32.mrb[0].mxu0
    %4829 = vdwg.mxu0
    %v4830 = vmul.f32 %v4777, 0.35355338
    %v4831 = vmul.f32 %v4780, 0.35355338
    %v4832 = vmul.f32 %v4824, 0.35355338
    %v4833 = vmul.f32 %v4827, 0.35355338
    %v4834 = vadd.f32 %v4830, %v647
    %v4835 = vadd.f32 %v4831, %v648
    %v4836 = vadd.f32 %v4832, %v647
    %v4837 = vadd.f32 %v4833, %v648
    %v4838 = vsel %vm1002, %v4834, -inf
    %4839 = vmax.xlane.f32.xlu0 %v4838
    %v4840 = vpop.xlane.xlu0 %4839
    %v4841 = vsel %vm1002, %v4835, -inf
    %4842 = vmax.xlane.f32.xlu0 %v4841
    %v4843 = vpop.xlane.xlu0 %4842
    %v4844 = vsel %vm1002, %v4836, -inf
    %4845 = vmax.xlane.f32.xlu0 %v4844
    %v4846 = vpop.xlane.xlu0 %4845
    %v4847 = vsel %vm1002, %v4837, -inf
    %4848 = vmax.xlane.f32.xlu0 %v4847
    %v4849 = vpop.xlane.xlu0 %4848
    %v4850 = vsub.f32 %v4834, %v4840
    %v4851 = vsub.f32 %v4835, %v4843
    %v4852 = vsub.f32 %v4836, %v4846
    %v4853 = vsub.f32 %v4837, %v4849
    %v4854 = vmul.f32 %v4850, 1.442695
    %v4855 = vpow.pop %v4854
    %v4856 = vmul.f32 %v4851, 1.442695
    %v4857 = vpow.pop %v4856
    %v4858 = vmul.f32 %v4852, 1.442695
    %v4859 = vpow.pop %v4858
    %v4860 = vmul.f32 %v4853, 1.442695
    %v4861 = vpow.pop %v4860
    %v4862 = vsel %vm1002, %v4855, 0.0
    %4863 = vadd.xlane.f32.xlu0 %v4862
    %v4864 = vpop.xlane.xlu0 %4863
    %v4865 = vsel %vm1002, %v4857, 0.0
    %4866 = vadd.xlane.f32.xlu0 %v4865
    %v4867 = vpop.xlane.xlu0 %4866
    %v4868 = vsel %vm1002, %v4859, 0.0
    %4869 = vadd.xlane.f32.xlu0 %v4868
    %v4870 = vpop.xlane.xlu0 %4869
    %v4871 = vsel %vm1002, %v4861, 0.0
    %4872 = vadd.xlane.f32.xlu0 %v4871
    %v4873 = vpop.xlane.xlu0 %4872
    %v4874 = vrcp.pop %v4864
    %v4875 = vrcp.pop %v4867
    %v4876 = vrcp.pop %v4870
    %v4877 = vrcp.pop %v4873
    %v4878 = vmul.f32 %v4855, %v4874
    %v4879 = vmul.f32 %v4857, %v4875
    %v4880 = vmul.f32 %v4859, %v4876
    %v4881 = vmul.f32 %v4861, %v4877
    %v4882 = vpack.c.bf16 %v4879, %v4878
    %v4883 = vpack.c.bf16 %v4881, %v4880
    %v4884 = vpack.c.bf16 %v4721, %v4718
    %v4885 = vpack.c.bf16 %v4729, %v4726
    %v4887 = vsel %vm1002, %v4882, 0
    %4889 = vmatprep.subr.bf16.mxu0 0
    %4890 = vmatpush1.bf16.msra.mxu0 %v4884
    %4891 = vmatprep.subr.bf16.mxu0 0
    %4892 = vmatpush1.bf16.msra.mxu0 0
    %4893 = vmatprep.subr.bf16.mxu0 0
    %4894 = vmatpush1.bf16.msra.mxu0 0
    %4895 = vmatprep.subr.bf16.mxu0 0
    %4896 = vmatpush1.bf16.msra.mxu0 0
    %4897 = vmatprep.subr.bf16.mxu0 0
    %4898 = vmatpush1.bf16.msra.mxu0 0
    %4899 = vmatprep.subr.bf16.mxu0 0
    %4900 = vmatpush1.bf16.msra.mxu0 0
    %4901 = vmatprep.subr.bf16.mxu0 0
    %4902 = vmatpush1.bf16.msra.mxu0 0
    %4903 = vmatprep.subr.bf16.mxu0 0
    %4904 = vmatpush1.bf16.msra.mxu0 0
    %4905 = vmatprep.subr.bf16.mxu0 0
    %4906 = vmatpush1.bf16.msra.mxu0 0
    %4907 = vmatprep.subr.bf16.mxu0 0
    %4908 = vmatpush1.bf16.msra.mxu0 0
    %4909 = vmatprep.subr.bf16.mxu0 0
    %4910 = vmatpush1.bf16.msra.mxu0 0
    %4911 = vmatprep.subr.bf16.mxu0 0
    %4912 = vmatpush1.bf16.msra.mxu0 0
    %4913 = vmatprep.subr.bf16.mxu0 0
    %4914 = vmatpush1.bf16.msra.mxu0 0
    %4915 = vmatprep.subr.bf16.mxu0 0
    %4916 = vmatpush1.bf16.msra.mxu0 0
    %4917 = vmatprep.subr.bf16.mxu0 0
    %4918 = vmatpush1.bf16.msra.mxu0 0
    %4919 = vmatprep.subr.bf16.mxu0 0
    %4920 = vmatpush1.bf16.msra.mxu0 0
    %4921 = vmatprep.mubr.bf16.mxu0 0
    %4922 = vmatmul.mubr.bf16.gmra.mrb[0].mxu0 %v4887
    %v4923 = vpop.f32.mrb[0].mxu0
    %v4924 = vadd.f32 0.0, %v4923
    %v4925 = vpop.f32.mrb[0].mxu0
    %v4926 = vpop.f32.mrb[0].mxu0
    %v4927 = vadd.f32 0.0, %v4926
    %v4928 = vpop.f32.mrb[0].mxu0
    %4929 = vdwg.mxu0
    %v4931 = vsel %vm1002, %v4883, 0
    %4933 = vmatprep.subr.bf16.mxu0 0
    %4934 = vmatpush1.bf16.msra.mxu0 %v4885
    %4935 = vmatprep.subr.bf16.mxu0 0
    %4936 = vmatpush1.bf16.msra.mxu0 0
    %4937 = vmatprep.subr.bf16.mxu0 0
    %4938 = vmatpush1.bf16.msra.mxu0 0
    %4939 = vmatprep.subr.bf16.mxu0 0
    %4940 = vmatpush1.bf16.msra.mxu0 0
    %4941 = vmatprep.subr.bf16.mxu0 0
    %4942 = vmatpush1.bf16.msra.mxu0 0
    %4943 = vmatprep.subr.bf16.mxu0 0
    %4944 = vmatpush1.bf16.msra.mxu0 0
    %4945 = vmatprep.subr.bf16.mxu0 0
    %4946 = vmatpush1.bf16.msra.mxu0 0
    %4947 = vmatprep.subr.bf16.mxu0 0
    %4948 = vmatpush1.bf16.msra.mxu0 0
    %4949 = vmatprep.subr.bf16.mxu0 0
    %4950 = vmatpush1.bf16.msra.mxu0 0
    %4951 = vmatprep.subr.bf16.mxu0 0
    %4952 = vmatpush1.bf16.msra.mxu0 0
    %4953 = vmatprep.subr.bf16.mxu0 0
    %4954 = vmatpush1.bf16.msra.mxu0 0
    %4955 = vmatprep.subr.bf16.mxu0 0
    %4956 = vmatpush1.bf16.msra.mxu0 0
    %4957 = vmatprep.subr.bf16.mxu0 0
    %4958 = vmatpush1.bf16.msra.mxu0 0
    %4959 = vmatprep.subr.bf16.mxu0 0
    %4960 = vmatpush1.bf16.msra.mxu0 0
    %4961 = vmatprep.subr.bf16.mxu0 0
    %4962 = vmatpush1.bf16.msra.mxu0 0
    %4963 = vmatprep.subr.bf16.mxu0 0
    %4964 = vmatpush1.bf16.msra.mxu0 0
    %4965 = vmatprep.mubr.bf16.mxu0 0
    %4966 = vmatmul.mubr.bf16.gmra.mrb[0].mxu0 %v4931
    %v4967 = vpop.f32.mrb[0].mxu0
    %v4968 = vadd.f32 0.0, %v4967
    %v4969 = vpop.f32.mrb[0].mxu0
    %v4970 = vpop.f32.mrb[0].mxu0
    %v4971 = vadd.f32 0.0, %v4970
    %v4972 = vpop.f32.mrb[0].mxu0
    %4973 = vdwg.mxu0
    %s4974 = scalar_lea.vmem %s10, 28
    %v4975 = vld [vmem:[%s4974] sm:$0xf]
    %v4976 = vpack.c.bf16 %v4927, %v4924
    %v4977 = vpack.c.bf16 %v4971, %v4968
    %v4979 = vsel %vm899, %v4976, 0
    %v4982 = vsel %vm899, %v4977, 0
    %v4985 = vsel %vm1592, %v4975, 0
    %4987 = vmatprep.subr.bf16.mxu0 0
    %4988 = vmatpush1.bf16.msra.mxu0 %v4985
    %4989 = vmatprep.subr.bf16.mxu0 0
    %4990 = vmatpush1.bf16.msra.mxu0 0
    %4991 = vmatprep.subr.bf16.mxu0 0
    %4992 = vmatpush1.bf16.msra.mxu0 0
    %4993 = vmatprep.subr.bf16.mxu0 0
    %4994 = vmatpush1.bf16.msra.mxu0 0
    %4995 = vmatprep.subr.bf16.mxu0 0
    %4996 = vmatpush1.bf16.msra.mxu0 0
    %4997 = vmatprep.subr.bf16.mxu0 0
    %4998 = vmatpush1.bf16.msra.mxu0 0
    %4999 = vmatprep.subr.bf16.mxu0 0
    %5000 = vmatpush1.bf16.msra.mxu0 0
    %5001 = vmatprep.subr.bf16.mxu0 0
    %5002 = vmatpush1.bf16.msra.mxu0 0
    %5003 = vmatprep.subr.bf16.mxu0 0
    %5004 = vmatpush1.bf16.msra.mxu0 0
    %5005 = vmatprep.subr.bf16.mxu0 0
    %5006 = vmatpush1.bf16.msra.mxu0 0
    %5007 = vmatprep.subr.bf16.mxu0 0
    %5008 = vmatpush1.bf16.msra.mxu0 0
    %5009 = vmatprep.subr.bf16.mxu0 0
    %5010 = vmatpush1.bf16.msra.mxu0 0
    %5011 = vmatprep.subr.bf16.mxu0 0
    %5012 = vmatpush1.bf16.msra.mxu0 0
    %5013 = vmatprep.subr.bf16.mxu0 0
    %5014 = vmatpush1.bf16.msra.mxu0 0
    %5015 = vmatprep.subr.bf16.mxu0 0
    %5016 = vmatpush1.bf16.msra.mxu0 0
    %5017 = vmatprep.subr.bf16.mxu0 0
    %5018 = vmatpush1.bf16.msra.mxu0 0
    %5019 = vmatprep.mubr.bf16.mxu0 0
    %5020 = vmatmul.mubr.bf16.gmra.mrb[0].mxu0 %v4979
    %v5021 = vpop.f32.mrb[0].mxu0
    %v5022 = vadd.f32 0.0, %v5021
    %v5023 = vpop.f32.mrb[0].mxu0
    %v5024 = vpop.f32.mrb[0].mxu0
    %v5025 = vadd.f32 0.0, %v5024
    %v5026 = vpop.f32.mrb[0].mxu0
    %5027 = vmatprep.mubr.bf16.mxu0 0
    %5028 = vmatmul.mubr.bf16.gmra.mrb[0].mxu0 %v4982
    %v5029 = vpop.f32.mrb[0].mxu0
    %v5030 = vadd.f32 0.0, %v5029
    %v5031 = vpop.f32.mrb[0].mxu0
    %v5032 = vpop.f32.mrb[0].mxu0
    %v5033 = vadd.f32 0.0, %v5032
    %v5034 = vpop.f32.mrb[0].mxu0
    %5035 = vdwg.mxu0
    %v5036 = vadd.f32 %v4530, %v5022
    %v5037 = vadd.f32 %v4531, %v5025
    %v5038 = vadd.f32 %v4532, %v5030
    %v5039 = vadd.f32 %v4533, %v5033
    %v5040 = vadd.f32 %v2968, %v5036
    %v5041 = vadd.f32 %v2969, %v5037
    %v5042 = vadd.f32 %v2970, %v5038
    %v5043 = vadd.f32 %v2971, %v5039
    %s5044 = scalar_lea.vmem %s11, 1
    %v5045 = vld [vmem:[%s5044] sm:$0x1]
    %v5046 = vmul.f32 %v5040, %v5040
    %v5047 = vmul.f32 %v5041, %v5041
    %v5048 = vmul.f32 %v5042, %v5042
    %v5049 = vmul.f32 %v5043, %v5043
    %v5050 = vsel %vm357, %v5046, 0.0
    %5051 = vadd.xlane.f32.xlu0 %v5050
    %v5052 = vpop.xlane.xlu0 %5051
    %v5053 = vsel %vm357, %v5047, 0.0
    %5054 = vadd.xlane.f32.xlu0 %v5053
    %v5055 = vpop.xlane.xlu0 %5054
    %v5056 = vsel %vm357, %v5048, 0.0
    %5057 = vadd.xlane.f32.xlu0 %v5056
    %v5058 = vpop.xlane.xlu0 %5057
    %v5059 = vsel %vm357, %v5049, 0.0
    %5060 = vadd.xlane.f32.xlu0 %v5059
    %v5061 = vpop.xlane.xlu0 %5060
    %v5062 = vmul.f32 %v5052, %v361
    %v5063 = vmul.f32 %v5055, %v361
    %v5064 = vmul.f32 %v5058, %v361
    %v5065 = vmul.f32 %v5061, %v361
    %v5066 = vadd.f32 %v5062, 1e-06
    %v5067 = vadd.f32 %v5063, 1e-06
    %v5068 = vadd.f32 %v5064, 1e-06
    %v5069 = vadd.f32 %v5065, 1e-06
    %v5070 = vrsqrt.pop %v5066
    %v5071 = vrsqrt.pop %v5067
    %v5072 = vrsqrt.pop %v5068
    %v5073 = vrsqrt.pop %v5069
    %v5074 = vmul.f32 %v5040, %v5070
    %v5075 = vmul.f32 %v5041, %v5071
    %v5076 = vmul.f32 %v5042, %v5072
    %v5077 = vmul.f32 %v5043, %v5073
    %v5079 = vlaneseq
    %v5080 = vshrl.u32 %v5079, 7
    %v5081 = vsub.s32 0, %v5080
    %v5082 = vrot.slane %v5045, %v5081
    %v5084 = vmul.f32 %v5074, %v5082
    %v5085 = vmul.f32 %v5075, %v5082
    %v5086 = vmul.f32 %v5076, %v5082
    %v5087 = vmul.f32 %v5077, %v5082
    %s5088 = scalar_lea.vmem %s12, 32
    %v5089 = vld [vmem:[%s5088] sm:$0xff]
    %v5090 = vld [vmem:[%s5088 + $0x8] sm:$0xff]
    %v5091 = vld [vmem:[%s5088 + $0x10] sm:$0xff]
    %v5092 = vld [vmem:[%s5088 + $0x18] sm:$0xff]
    %v5093 = vpack.c.bf16 %v5085, %v5084
    %v5094 = vpack.c.bf16 %v5087, %v5086
    %v5099 = vunpack.c.l.b16 %v5089
    %v5100 = vunpack.c.h.b16 %v5089
    %v5101 = vunpack.c.l.b16 %v5090
    %v5102 = vunpack.c.h.b16 %v5090
    %v5103 = vunpack.c.l.b16 %v5091
    %v5104 = vunpack.c.h.b16 %v5091
    %v5105 = vunpack.c.l.b16 %v5092
    %v5106 = vunpack.c.h.b16 %v5092
    %v5107 = vpack.c.b16 %v5101, %v5099
    %v5108 = vpack.c.b16 %v5102, %v5100
    %v5109 = vpack.c.b16 %v5105, %v5103
    %v5110 = vpack.c.b16 %v5106, %v5104
    %v5116 = vsel %vm357, %v5093, 0
    %v5119 = vsel %vm357, %v5094, 0
    %5121 = vmatprep.subr.bf16.mxu0 %v5108
    %5122 = vmatpush1.bf16.msra.mxu0 %v5107
    %5123 = vmatprep.subr.bf16.mxu0 %v5110
    %5124 = vmatpush1.bf16.msra.mxu0 %v5109
    %5125 = vmatprep.subr.bf16.mxu0 0
    %5126 = vmatpush1.bf16.msra.mxu0 0
    %5127 = vmatprep.subr.bf16.mxu0 0
    %5128 = vmatpush1.bf16.msra.mxu0 0
    %5129 = vmatprep.subr.bf16.mxu0 0
    %5130 = vmatpush1.bf16.msra.mxu0 0
    %5131 = vmatprep.subr.bf16.mxu0 0
    %5132 = vmatpush1.bf16.msra.mxu0 0
    %5133 = vmatprep.subr.bf16.mxu0 0
    %5134 = vmatpush1.bf16.msra.mxu0 0
    %5135 = vmatprep.subr.bf16.mxu0 0
    %5136 = vmatpush1.bf16.msra.mxu0 0
    %5137 = vmatprep.subr.bf16.mxu0 0
    %5138 = vmatpush1.bf16.msra.mxu0 0
    %5139 = vmatprep.subr.bf16.mxu0 0
    %5140 = vmatpush1.bf16.msra.mxu0 0
    %5141 = vmatprep.subr.bf16.mxu0 0
    %5142 = vmatpush1.bf16.msra.mxu0 0
    %5143 = vmatprep.subr.bf16.mxu0 0
    %5144 = vmatpush1.bf16.msra.mxu0 0
    %5145 = vmatprep.subr.bf16.mxu0 0
    %5146 = vmatpush1.bf16.msra.mxu0 0
    %5147 = vmatprep.subr.bf16.mxu0 0
    %5148 = vmatpush1.bf16.msra.mxu0 0
    %5149 = vmatprep.subr.bf16.mxu0 0
    %5150 = vmatpush1.bf16.msra.mxu0 0
    %5151 = vmatprep.subr.bf16.mxu0 0
    %5152 = vmatpush1.bf16.msra.mxu0 0
    %5153 = vmatprep.mubr.bf16.mxu0 0
    %5154 = vmatmul.mubr.bf16.gmra.mrb[0].mxu0 %v5116
    %v5155 = vpop.f32.mrb[0].mxu0
    %v5156 = vadd.f32 0.0, %v5155
    %v5157 = vpop.f32.mrb[0].mxu0
    %v5158 = vadd.f32 0.0, %v5157
    %v5159 = vpop.f32.mrb[0].mxu0
    %v5160 = vadd.f32 0.0, %v5159
    %v5161 = vpop.f32.mrb[0].mxu0
    %v5162 = vadd.f32 0.0, %v5161
    %5163 = vmatprep.mubr.bf16.mxu0 0
    %5164 = vmatmul.mubr.bf16.gmra.mrb[0].mxu0 %v5119
    %v5165 = vpop.f32.mrb[0].mxu0
    %v5166 = vadd.f32 0.0, %v5165
    %v5167 = vpop.f32.mrb[0].mxu0
    %v5168 = vadd.f32 0.0, %v5167
    %v5169 = vpop.f32.mrb[0].mxu0
    %v5170 = vadd.f32 0.0, %v5169
    %v5171 = vpop.f32.mrb[0].mxu0
    %v5172 = vadd.f32 0.0, %v5171
    %5173 = vdwg.mxu0
    %v5174 = vxor.u32 %v5156, 2147483648
    %v5175 = vxor.u32 %v5160, 2147483648
    %v5176 = vxor.u32 %v5166, 2147483648
    %v5177 = vxor.u32 %v5170, 2147483648
    %v5178 = vmul.f32 %v5174, 1.442695
    %v5179 = vpow.pop %v5178
    %v5180 = vmul.f32 %v5175, 1.442695
    %v5181 = vpow.pop %v5180
    %v5182 = vmul.f32 %v5176, 1.442695
    %v5183 = vpow.pop %v5182
    %v5184 = vmul.f32 %v5177, 1.442695
    %v5185 = vpow.pop %v5184
    %v5186 = vadd.f32 %v5179, 1.0
    %v5187 = vadd.f32 %v5181, 1.0
    %v5188 = vadd.f32 %v5183, 1.0
    %v5189 = vadd.f32 %v5185, 1.0
    %v5190 = vrcp.pop %v5186
    %v5191 = vmul.f32 1.0, %v5190
    %v5192 = vrcp.pop %v5187
    %v5193 = vmul.f32 1.0, %v5192
    %v5194 = vrcp.pop %v5188
    %v5195 = vmul.f32 1.0, %v5194
    %v5196 = vrcp.pop %v5189
    %v5197 = vmul.f32 1.0, %v5196
    %v5198 = vmul.f32 %v5156, %v5191
    %v5199 = vmul.f32 %v5160, %v5193
    %v5200 = vmul.f32 %v5166, %v5195
    %v5201 = vmul.f32 %v5170, %v5197
    %v5202 = vmul.f32 %v5198, %v5158
    %v5203 = vmul.f32 %v5199, %v5162
    %v5204 = vmul.f32 %v5200, %v5168
    %v5205 = vmul.f32 %v5201, %v5172
    %s5206 = scalar_lea.vmem %s13, 32
    %v5207 = vld [vmem:[%s5206] sm:$0xf]
    %v5208 = vld [vmem:[%s5206 + $0x4] sm:$0xf]
    %v5209 = vld [vmem:[%s5206 + $0x8] sm:$0xf]
    %v5210 = vld [vmem:[%s5206 + $0xc] sm:$0xf]
    %v5211 = vld [vmem:[%s5206 + $0x10] sm:$0xf]
    %v5212 = vld [vmem:[%s5206 + $0x14] sm:$0xf]
    %v5213 = vld [vmem:[%s5206 + $0x18] sm:$0xf]
    %v5214 = vld [vmem:[%s5206 + $0x1c] sm:$0xf]
    %v5215 = vpack.c.bf16 %v5203, %v5202
    %v5216 = vpack.c.bf16 %v5205, %v5204
    %v5225 = vunpack.c.l.b16 %v5207
    %v5226 = vunpack.c.l.b16 %v5208
    %v5227 = vunpack.c.l.b16 %v5209
    %v5228 = vunpack.c.l.b16 %v5210
    %v5229 = vunpack.c.l.b16 %v5211
    %v5230 = vunpack.c.l.b16 %v5212
    %v5231 = vunpack.c.l.b16 %v5213
    %v5232 = vunpack.c.l.b16 %v5214
    %v5233 = vpack.c.b16 %v5226, %v5225
    %v5234 = vpack.c.b16 %v5228, %v5227
    %v5235 = vpack.c.b16 %v5230, %v5229
    %v5236 = vpack.c.b16 %v5232, %v5231
    %v5242 = vsel %vm300, %v5215, 0
    %v5245 = vsel %vm300, %v5216, 0
    %5247 = vmatprep.subr.bf16.mxu0 0
    %5248 = vmatpush1.bf16.msra.mxu0 %v5233
    %5249 = vmatprep.subr.bf16.mxu0 0
    %5250 = vmatpush1.bf16.msra.mxu0 %v5234
    %5251 = vmatprep.subr.bf16.mxu0 0
    %5252 = vmatpush1.bf16.msra.mxu0 %v5235
    %5253 = vmatprep.subr.bf16.mxu0 0
    %5254 = vmatpush1.bf16.msra.mxu0 %v5236
    %5255 = vmatprep.subr.bf16.mxu0 0
    %5256 = vmatpush1.bf16.msra.mxu0 0
    %5257 = vmatprep.subr.bf16.mxu0 0
    %5258 = vmatpush1.bf16.msra.mxu0 0
    %5259 = vmatprep.subr.bf16.mxu0 0
    %5260 = vmatpush1.bf16.msra.mxu0 0
    %5261 = vmatprep.subr.bf16.mxu0 0
    %5262 = vmatpush1.bf16.msra.mxu0 0
    %5263 = vmatprep.subr.bf16.mxu0 0
    %5264 = vmatpush1.bf16.msra.mxu0 0
    %5265 = vmatprep.subr.bf16.mxu0 0
    %5266 = vmatpush1.bf16.msra.mxu0 0
    %5267 = vmatprep.subr.bf16.mxu0 0
    %5268 = vmatpush1.bf16.msra.mxu0 0
    %5269 = vmatprep.subr.bf16.mxu0 0
    %5270 = vmatpush1.bf16.msra.mxu0 0
    %5271 = vmatprep.subr.bf16.mxu0 0
    %5272 = vmatpush1.bf16.msra.mxu0 0
    %5273 = vmatprep.subr.bf16.mxu0 0
    %5274 = vmatpush1.bf16.msra.mxu0 0
    %5275 = vmatprep.subr.bf16.mxu0 0
    %5276 = vmatpush1.bf16.msra.mxu0 0
    %5277 = vmatprep.subr.bf16.mxu0 0
    %5278 = vmatpush1.bf16.msra.mxu0 0
    %5279 = vmatprep.mubr.bf16.mxu0 0
    %5280 = vmatmul.mubr.bf16.gmra.mrb[0].mxu0 %v5242
    %v5281 = vpop.f32.mrb[0].mxu0
    %v5282 = vadd.f32 0.0, %v5281
    %v5283 = vpop.f32.mrb[0].mxu0
    %v5284 = vpop.f32.mrb[0].mxu0
    %v5285 = vadd.f32 0.0, %v5284
    %v5286 = vpop.f32.mrb[0].mxu0
    %5287 = vmatprep.mubr.bf16.mxu0 0
    %5288 = vmatmul.mubr.bf16.gmra.mrb[0].mxu0 %v5245
    %v5289 = vpop.f32.mrb[0].mxu0
    %v5290 = vadd.f32 0.0, %v5289
    %v5291 = vpop.f32.mrb[0].mxu0
    %v5292 = vpop.f32.mrb[0].mxu0
    %v5293 = vadd.f32 0.0, %v5292
    %v5294 = vpop.f32.mrb[0].mxu0
    %5295 = vdwg.mxu0
    %v5296 = vadd.f32 %v5040, %v5282
    %v5297 = vadd.f32 %v5041, %v5285
    %v5298 = vadd.f32 %v5042, %v5290
    %v5299 = vadd.f32 %v5043, %v5293
    %v5300 = vld [vmem:[%s14] sm:$0x1]
    %v5301 = vmul.f32 %v5296, %v5296
    %v5302 = vmul.f32 %v5297, %v5297
    %v5303 = vmul.f32 %v5298, %v5298
    %v5304 = vmul.f32 %v5299, %v5299
    %v5305 = vsel %vm357, %v5301, 0.0
    %5306 = vadd.xlane.f32.xlu0 %v5305
    %v5307 = vpop.xlane.xlu0 %5306
    %v5308 = vsel %vm357, %v5302, 0.0
    %5309 = vadd.xlane.f32.xlu0 %v5308
    %v5310 = vpop.xlane.xlu0 %5309
    %v5311 = vsel %vm357, %v5303, 0.0
    %5312 = vadd.xlane.f32.xlu0 %v5311
    %v5313 = vpop.xlane.xlu0 %5312
    %v5314 = vsel %vm357, %v5304, 0.0
    %5315 = vadd.xlane.f32.xlu0 %v5314
    %v5316 = vpop.xlane.xlu0 %5315
    %v5317 = vmul.f32 %v5307, %v361
    %v5318 = vmul.f32 %v5310, %v361
    %v5319 = vmul.f32 %v5313, %v361
    %v5320 = vmul.f32 %v5316, %v361
    %v5321 = vadd.f32 %v5317, 1e-06
    %v5322 = vadd.f32 %v5318, 1e-06
    %v5323 = vadd.f32 %v5319, 1e-06
    %v5324 = vadd.f32 %v5320, 1e-06
    %v5325 = vrsqrt.pop %v5321
    %v5326 = vrsqrt.pop %v5322
    %v5327 = vrsqrt.pop %v5323
    %v5328 = vrsqrt.pop %v5324
    %v5329 = vmul.f32 %v5296, %v5325
    %v5330 = vmul.f32 %v5297, %v5326
    %v5331 = vmul.f32 %v5298, %v5327
    %v5332 = vmul.f32 %v5299, %v5328
    %v5334 = vlaneseq
    %v5335 = vshrl.u32 %v5334, 7
    %v5336 = vsub.s32 0, %v5335
    %v5337 = vrot.slane %v5300, %v5336
    %v5339 = vmul.f32 %v5329, %v5337
    %v5340 = vmul.f32 %v5330, %v5337
    %v5341 = vmul.f32 %v5331, %v5337
    %v5342 = vmul.f32 %v5332, %v5337
    %v5343 = vpack.c.bf16 %v5340, %v5339
    %v5344 = vpack.c.bf16 %v5342, %v5341
    %v5345 = vld [vmem:[%s15] sm:$0xf]
    %v5346 = vld [vmem:[%s15 + $0x4] sm:$0xf]
    %v5347 = vld [vmem:[%s15 + $0x8] sm:$0xf]
    %v5348 = vld [vmem:[%s15 + $0xc] sm:$0xf]
    %v5349 = vld [vmem:[%s15 + $0x10] sm:$0xf]
    %v5350 = vld [vmem:[%s15 + $0x14] sm:$0xf]
    %v5351 = vld [vmem:[%s15 + $0x18] sm:$0xf]
    %v5352 = vld [vmem:[%s15 + $0x1c] sm:$0xf]
    %v5353 = vld [vmem:[%s15 + $0x20] sm:$0xf]
    %v5354 = vld [vmem:[%s15 + $0x24] sm:$0xf]
    %v5355 = vld [vmem:[%s15 + $0x28] sm:$0xf]
    %v5356 = vld [vmem:[%s15 + $0x2c] sm:$0xf]
    %v5357 = vld [vmem:[%s15 + $0x30] sm:$0xf]
    %v5358 = vld [vmem:[%s15 + $0x34] sm:$0xf]
    %v5359 = vld [vmem:[%s15 + $0x38] sm:$0xf]
    %v5360 = vld [vmem:[%s15 + $0x3c] sm:$0xf]
    %v5377 = vunpack.c.l.b16 %v5345
    %v5378 = vunpack.c.l.b16 %v5346
    %v5379 = vunpack.c.l.b16 %v5347
    %v5380 = vunpack.c.l.b16 %v5348
    %v5381 = vunpack.c.l.b16 %v5349
    %v5382 = vunpack.c.l.b16 %v5350
    %v5383 = vunpack.c.l.b16 %v5351
    %v5384 = vunpack.c.l.b16 %v5352
    %v5385 = vunpack.c.l.b16 %v5353
    %v5386 = vunpack.c.l.b16 %v5354
    %v5387 = vunpack.c.l.b16 %v5355
    %v5388 = vunpack.c.l.b16 %v5356
    %v5389 = vunpack.c.l.b16 %v5357
    %v5390 = vunpack.c.l.b16 %v5358
    %v5391 = vunpack.c.l.b16 %v5359
    %v5392 = vunpack.c.l.b16 %v5360
    %v5393 = vpack.c.b16 %v5378, %v5377
    %v5394 = vpack.c.b16 %v5380, %v5379
    %v5395 = vpack.c.b16 %v5382, %v5381
    %v5396 = vpack.c.b16 %v5384, %v5383
    %v5397 = vpack.c.b16 %v5386, %v5385
    %v5398 = vpack.c.b16 %v5388, %v5387
    %v5399 = vpack.c.b16 %v5390, %v5389
    %v5400 = vpack.c.b16 %v5392, %v5391
    %v5402 = vsel %vm357, %v5343, 0
    %v5405 = vsel %vm357, %v5344, 0
    %v5408 = vsel %vm357, %v5393, 0
    %v5411 = vsel %vm357, %v5394, 0
    %v5414 = vsel %vm357, %v5395, 0
    %v5417 = vsel %vm357, %v5396, 0
    %v5420 = vsel %vm357, %v5397, 0
    %v5423 = vsel %vm357, %v5398, 0
    %v5426 = vsel %vm357, %v5399, 0
    %v5429 = vsel %vm357, %v5400, 0
    %5431 = vmatprep.subr.bf16.mxu0 0
    %5432 = vmatpush1.bf16.xpose.msra.mxu0 %v5408
    %5433 = vmatprep.subr.bf16.mxu0 0
    %5434 = vmatpush1.bf16.xpose.msra.mxu0 %v5411
    %5435 = vmatprep.subr.bf16.mxu0 0
    %5436 = vmatpush1.bf16.xpose.msra.mxu0 %v5414
    %5437 = vmatprep.subr.bf16.mxu0 0
    %5438 = vmatpush1.bf16.xpose.msra.mxu0 %v5417
    %5439 = vmatprep.subr.bf16.mxu0 0
    %5440 = vmatpush1.bf16.xpose.msra.mxu0 %v5420
    %5441 = vmatprep.subr.bf16.mxu0 0
    %5442 = vmatpush1.bf16.xpose.msra.mxu0 %v5423
    %5443 = vmatprep.subr.bf16.mxu0 0
    %5444 = vmatpush1.bf16.xpose.msra.mxu0 %v5426
    %5445 = vmatprep.subr.bf16.mxu0 0
    %5446 = vmatpush1.bf16.xpose.msra.mxu0 %v5429
    %5447 = vmatprep.subr.bf16.mxu0 0
    %5448 = vmatpush1.bf16.xpose.msra.mxu0 0
    %5449 = vmatprep.subr.bf16.mxu0 0
    %5450 = vmatpush1.bf16.xpose.msra.mxu0 0
    %5451 = vmatprep.subr.bf16.mxu0 0
    %5452 = vmatpush1.bf16.xpose.msra.mxu0 0
    %5453 = vmatprep.subr.bf16.mxu0 0
    %5454 = vmatpush1.bf16.xpose.msra.mxu0 0
    %5455 = vmatprep.subr.bf16.mxu0 0
    %5456 = vmatpush1.bf16.xpose.msra.mxu0 0
    %5457 = vmatprep.subr.bf16.mxu0 0
    %5458 = vmatpush1.bf16.xpose.msra.mxu0 0
    %5459 = vmatprep.subr.bf16.mxu0 0
    %5460 = vmatpush1.bf16.xpose.msra.mxu0 0
    %5461 = vmatprep.subr.bf16.mxu0 0
    %5462 = vmatpush1.bf16.xpose.msra.mxu0 0
    %5463 = vmatprep.mubr.bf16.mxu0 0
    %5464 = vmatmul.mubr.bf16.gmra.mrb[0].mxu0 %v5402
    %v5465 = vpop.f32.mrb[0].mxu0
    %v5466 = vadd.f32 0.0, %v5465
    %v5467 = vpop.f32.mrb[0].mxu0
    %v5468 = vpop.f32.mrb[0].mxu0
    %v5469 = vadd.f32 0.0, %v5468
    %v5470 = vpop.f32.mrb[0].mxu0
    %5471 = vmatprep.mubr.bf16.mxu0 0
    %5472 = vmatmul.mubr.bf16.gmra.mrb[0].mxu0 %v5405
    %v5473 = vpop.f32.mrb[0].mxu0
    %v5474 = vadd.f32 0.0, %v5473
    %v5475 = vpop.f32.mrb[0].mxu0
    %v5476 = vpop.f32.mrb[0].mxu0
    %v5477 = vadd.f32 0.0, %v5476
    %v5478 = vpop.f32.mrb[0].mxu0
    %5479 = vdwg.mxu0
    %5480 = vst [vmem:[#allocation2] sm:$0xff] %v5466
    %5481 = vst [vmem:[#allocation2 + $0x8] sm:$0xff] %v5469
    %5482 = vst [vmem:[#allocation2 + $0x10] sm:$0xff] %v5474
    %5483 = vst [vmem:[#allocation2 + $0x18] sm:$0xff] %v5477
    // Predicated region
    $region66: #{blinky_forward.1} parent=1 // pred_check
      _
    $region67: #{blinky_forward.1} parent=1 // pred_check_branch
      %5485 = sbr.rel (0) target = $region69
    $region68: #{blinky_forward.1} parent=1 // pred_region
      %s5487 = ssub.s32 512, 512
      %5488 = vsyncadd [#allocation3], %s5487
      %s5489 = sshll.u32 [#allocation2], 4
      %s5490 = int_to_ptr.vmem [resolvable:$true] %s5489
      %5495 = dma.vmem_to_hbm [thread:$0]  %s5490, 512, %s16, [#allocation3], 128, 128, 8
    $region69: #{blinky_forward.1} parent=1 // pred_fallthru
      _
    // Predicated region
    $region70: #{blinky_forward.1} parent=1 // pred_check
      _
    $region71: #{blinky_forward.1} parent=1 // pred_check_branch
      %5497 = sbr.rel (0) target = $region73
    $region72: #{blinky_forward.1} parent=1 // pred_region
      %5498 = dma.done [#allocation3], 512
    $region73: #{blinky_forward.1} parent=1 // pred_fallthru
      _
    %5499 = vsyncpa [#allocation3], 1

</llo_original>
